<compile_context>
chip_gen: v7x
topology: tpu7x:2x2x1
jax: 0.10.0
libtpu: 0.0.40
codegen_flags: <defaults>
</compile_context>

<pallas_src>
import math
import functools

import jax
import jax.numpy as jnp
from jax.experimental import pallas as pl
from jax.experimental.pallas import tpu as pltpu


# ----------------------------------------------------------------------------- utils
def _round_up(x, m):
    return (x + m - 1) // m * m


def _choose_tm(M):
    """M tile: multiple of 16 (bf16 sublane pack), <=128, >=2 grid steps when M allows
    (so both TensorCores on v7x get work via the 'parallel' grid axis)."""
    m16 = _round_up(M, 16)
    if m16 <= 16:
        return 16
    half = _round_up(m16 // 2, 16)
    return min(128, half)


# ------------------------------------------------------------------ Pallas kernels
def _mm_single_kernel(a_ref, w_ref, b_ref, o_ref, *, relu):
    acc = jnp.dot(a_ref[...], w_ref[...], preferred_element_type=jnp.float32)
    out = acc + b_ref[...]
    if relu:
        out = jnp.maximum(out, 0.0)
    o_ref[...] = out


def _mm_single_res_kernel(a_ref, w_ref, b_ref, r_ref, o_ref):
    acc = jnp.dot(a_ref[...], w_ref[...], preferred_element_type=jnp.float32)
    o_ref[...] = jnp.maximum(acc + b_ref[...] + r_ref[...], 0.0)


def _mm_ktiled_kernel(a_ref, w_ref, b_ref, o_ref, acc_ref, *, relu):
    k = pl.program_id(1)

    @pl.when(k == 0)
    def _():
        acc_ref[...] = jnp.zeros_like(acc_ref)

    acc_ref[...] += jnp.dot(a_ref[...], w_ref[...], preferred_element_type=jnp.float32)

    @pl.when(k == pl.num_programs(1) - 1)
    def _():
        out = acc_ref[...] + b_ref[...]
        if relu:
            out = jnp.maximum(out, 0.0)
        o_ref[...] = out


def _mm_ktiled_res_kernel(a_ref, w_ref, b_ref, r_ref, o_ref, acc_ref):
    k = pl.program_id(1)

    @pl.when(k == 0)
    def _():
        acc_ref[...] = jnp.zeros_like(acc_ref)

    acc_ref[...] += jnp.dot(a_ref[...], w_ref[...], preferred_element_type=jnp.float32)

    @pl.when(k == pl.num_programs(1) - 1)
    def _():
        o_ref[...] = jnp.maximum(acc_ref[...] + b_ref[...] + r_ref[...], 0.0)


def _qscale_concat_kernel(x_ref, q_ref, o_ref):
    # lane-dense: x (tm, 256), q (tm, 256), out (tm, 512) = [x | x*q]
    x = x_ref[...]
    c = x.shape[-1]
    o_ref[:, :c] = x
    o_ref[:, c:] = x * q_ref[...]


# ------------------------------------------------------------ fused matmul wrapper
def fused_matmul_bias_act(a, p, residual=None, relu=True):
    """out = act((a @ W) + bias [+ residual]);  a:(M,K) bf16, W prebuilt (Kp,Np) bf16."""
    M, K = a.shape
    Kp, Np, N, tk = p['Kp'], p['Np'], p['cout'], p['tk']
    tm = _choose_tm(M)
    Mp = _round_up(M, tm)
    nk = Kp // tk

    a_p = jnp.pad(a, ((0, Mp - M), (0, Kp - K)))          # bf16, fuses under jit
    w_p = p['w_mat']                                      # (Kp, Np) bf16, built once
    b_p = p['bias']                                       # (1, Np)  f32, built once

    cost = pl.CostEstimate(
        flops=2 * Mp * Kp * Np,
        transcendentals=0,
        bytes_accessed=(Mp * Kp + Kp * Np) * 2 + Mp * Np * 4,
    )
    cparams_1d = pltpu.CompilerParams(dimension_semantics=("parallel",),
                                      vmem_limit_bytes=32 * 1024 * 1024)
    cparams_2d = pltpu.CompilerParams(dimension_semantics=("parallel", "arbitrary"),
                                      vmem_limit_bytes=32 * 1024 * 1024)

    if nk == 1:
        in_specs = [
            pl.BlockSpec((tm, Kp), lambda i: (i, 0)),
            pl.BlockSpec((Kp, Np), lambda i: (0, 0)),
            pl.BlockSpec((1, Np), lambda i: (0, 0)),
        ]
        args = [a_p, w_p, b_p]
        if residual is not None:
            r_p = jnp.pad(residual.astype(jnp.float32), ((0, Mp - M), (0, Np - N)))
            in_specs.append(pl.BlockSpec((tm, Np), lambda i: (i, 0)))
            args.append(r_p)
            kernel = _mm_single_res_kernel
        else:
            kernel = functools.partial(_mm_single_kernel, relu=relu)
        out = pl.pallas_call(
            kernel,
            out_shape=jax.ShapeDtypeStruct((Mp, Np), jnp.float32),
            grid=(Mp // tm,),
            in_specs=in_specs,
            out_specs=pl.BlockSpec((tm, Np), lambda i: (i, 0)),
            compiler_params=cparams_1d,
            cost_estimate=cost,
        )(*args)
    else:
        # K-tiled reduction grid (reduction axis last, "arbitrary"), f32 VMEM accumulator
        in_specs = [
            pl.BlockSpec((tm, tk), lambda i, k: (i, k)),
            pl.BlockSpec((tk, Np), lambda i, k: (k, 0)),
            pl.BlockSpec((1, Np), lambda i, k: (0, 0)),
        ]
        args = [a_p, w_p, b_p]
        if residual is not None:
            r_p = jnp.pad(residual.astype(jnp.float32), ((0, Mp - M), (0, Np - N)))
            in_specs.append(pl.BlockSpec((tm, Np), lambda i, k: (i, 0)))
            args.append(r_p)
            kernel = _mm_ktiled_res_kernel
        else:
            kernel = functools.partial(_mm_ktiled_kernel, relu=relu)
        out = pl.pallas_call(
            kernel,
            out_shape=jax.ShapeDtypeStruct((Mp, Np), jnp.float32),
            grid=(Mp // tm, nk),
            in_specs=in_specs,
            out_specs=pl.BlockSpec((tm, Np), lambda i, k: (i, 0)),
            scratch_shapes=[pltpu.VMEM((tm, Np), jnp.float32)],
            compiler_params=cparams_2d,
            cost_estimate=cost,
        )(*args)
    return out[:M, :N]


def qscale_concat(x2d, q2d):
    """x2d:(M,C) f32, q2d:(M,C) f32 -> (M, 2C) = [x | x*q] (lane-dense Pallas kernel)."""
    M, C = x2d.shape
    tm = min(512, _round_up(M, 8))
    Mp = _round_up(M, tm)
    x_p = jnp.pad(x2d, ((0, Mp - M), (0, 0)))
    q_p = jnp.pad(q2d, ((0, Mp - M), (0, 0)))
    out = pl.pallas_call(
        _qscale_concat_kernel,
        out_shape=jax.ShapeDtypeStruct((Mp, 2 * C), jnp.float32),
        grid=(Mp // tm,),
        in_specs=[pl.BlockSpec((tm, C), lambda i: (i, 0)),
                  pl.BlockSpec((tm, C), lambda i: (i, 0))],
        out_specs=pl.BlockSpec((tm, 2 * C), lambda i: (i, 0)),
        compiler_params=pltpu.CompilerParams(dimension_semantics=("parallel",)),
    )(x_p, q_p)
    return out[:M]


# ------------------------------------------------------------ conv = im2col + kernel
def conv_bn_act(x, p, stride=1, dilation=1, padding=0, relu=True, residual=None):
    """x: NHWC f32.  p: prebuilt conv+BN params (scale folded into W, W padded bf16)."""
    k, cin, cout = p['k'], p['cin'], p['cout']
    B, H, W, C = x.shape
    assert C == cin, (C, cin)

    # TODO(synk): im2col is materialized by XLA (fused under jit); folding the kh*kw tap
    # loop into the Pallas kernel as an extra reduction axis would avoid the kxk HBM
    # expansion for very large inputs.
    xb = x.astype(jnp.bfloat16)
    xp = jnp.pad(xb, ((0, 0), (padding, padding), (padding, padding), (0, 0)))
    Ho = (H + 2 * padding - dilation * (k - 1) - 1) // stride + 1
    Wo = (W + 2 * padding - dilation * (k - 1) - 1) // stride + 1

    cols = []
    for i in range(k):
        for j in range(k):
            hs, ws = i * dilation, j * dilation
            sl = xp[:, hs:hs + stride * (Ho - 1) + 1:stride,
                       ws:ws + stride * (Wo - 1) + 1:stride, :]
            cols.append(sl)
    a = jnp.concatenate(cols, axis=-1).reshape(B * Ho * Wo, k * k * cin)

    res2d = None
    if residual is not None:
        res2d = residual.reshape(B * Ho * Wo, cout)

    out = fused_matmul_bias_act(a, p, residual=res2d, relu=relu)
    return out.reshape(B, Ho, Wo, cout)


# ------------------------------------------------------------------- parameters
class ParamGen:
    def __init__(self, seed=0):
        self._key = jax.random.PRNGKey(seed)

    def normal(self, shape, scale=1.0):
        self._key, k = jax.random.split(self._key)
        return scale * jax.random.normal(k, shape, dtype=jnp.float32)


def make_conv_bn(pg, cin, cout, k, conv_bias=False):
    """Conv + BN (eval mode). BN scale folded into W; W pre-reshaped / zero-padded to
    the (Kp, Np) bf16 matmul layout; K-tile size chosen at build time."""
    fan_in = cin * k * k
    w = pg.normal((k, k, cin, cout), scale=1.0 / math.sqrt(fan_in))
    cb = pg.normal((cout,), 0.05) if conv_bias else jnp.zeros((cout,), jnp.float32)
    gamma = 1.0 + pg.normal((cout,), 0.05)
    beta = pg.normal((cout,), 0.05)
    rmean = pg.normal((cout,), 0.05)
    rvar = 1.0 + jnp.abs(pg.normal((cout,), 0.05))
    eps = 1e-5
    scale = gamma / jnp.sqrt(rvar + eps)
    bias = (cb - rmean) * scale + beta

    w_fold = w * scale                                   # fold BN scale into out-channels
    K = k * k * cin
    if K > 1024:
        Kp, tk = _round_up(K, 512), 512                  # K-tiled reduction path
    else:
        Kp = _round_up(K, 128)
        tk = Kp                                          # single-shot path
    Np = _round_up(cout, 128)
    w_mat = jnp.pad(w_fold.reshape(K, cout),
                    ((0, Kp - K), (0, Np - cout))).astype(jnp.bfloat16)
    b_row = jnp.pad(bias.reshape(1, -1), ((0, 0), (0, Np - cout))).astype(jnp.float32)
    return {'w_mat': w_mat, 'bias': b_row, 'k': k, 'cin': cin, 'cout': cout,
            'K': K, 'Kp': Kp, 'Np': Np, 'tk': tk}


def make_basic_block(pg, inplanes, planes, stride=1):
    down = None
    if stride != 1 or inplanes != planes:                # BasicBlock.expansion == 1
        down = make_conv_bn(pg, inplanes, planes, 1)
    return {'conv1': make_conv_bn(pg, inplanes, planes, 3),
            'conv2': make_conv_bn(pg, planes, planes, 3),
            'down': down, 'stride': stride}


def basic_block(x, p):
    stride = p['stride']
    if p['down'] is not None:
        identity = conv_bn_act(x, p['down'], stride=stride, padding=0, relu=False)
    else:
        identity = x
    out = conv_bn_act(x, p['conv1'], stride=stride, padding=1, relu=True)
    # conv2 + bn2 + residual add + ReLU fused into one Pallas matmul kernel
    out = conv_bn_act(out, p['conv2'], stride=1, padding=1, relu=True, residual=identity)
    return out


# ------------------------------------------------------------- HRNet building blocks
def make_transition(pg, pre, cur):
    layers = []
    for i in range(len(cur)):
        if i < len(pre):
            if cur[i] != pre[i]:
                layers.append({'type': 'same', 'conv': make_conv_bn(pg, pre[i], cur[i], 3)})
            else:
                layers.append(None)
        else:
            convs = []
            for j in range(i + 1 - len(pre)):
                inch = pre[-1]
                outch = cur[i] if j == i - len(pre) else inch
                convs.append(make_conv_bn(pg, inch, outch, 3))
            layers.append({'type': 'down', 'convs': convs})
    return layers


def apply_transition(layer, x):
    if layer is None:
        return x
    if layer['type'] == 'same':
        return conv_bn_act(x, layer['conv'], stride=1, padding=1, relu=True)
    t = x
    for c in layer['convs']:
        t = conv_bn_act(t, c, stride=2, padding=1, relu=True)
    return t


def make_hr_module(pg, num_branches, num_blocks, num_inchannels, num_channels,
                   multi_scale_output=True):
    branches = []
    for i in range(num_branches):
        blocks, inch = [], num_inchannels[i]
        for _ in range(num_blocks[i]):
            blocks.append(make_basic_block(pg, inch, num_channels[i], stride=1))
            inch = num_channels[i]
        branches.append(blocks)
    out_channels = list(num_channels)

    fuse = []
    n_out = num_branches if multi_scale_output else 1
    for i in range(n_out):
        row = []
        for j in range(num_branches):
            if j > i:
                row.append({'type': 'up',
                            'conv': make_conv_bn(pg, out_channels[j], out_channels[i], 1),
                            'scale': 2 ** (j - i)})
            elif j == i:
                row.append(None)
            else:
                convs = []
                for k in range(i - j):
                    if k == i - j - 1:
                        convs.append({'conv': make_conv_bn(pg, out_channels[j], out_channels[i], 3),
                                      'relu': False})
                    else:
                        convs.append({'conv': make_conv_bn(pg, out_channels[j], out_channels[j], 3),
                                      'relu': True})
                row.append({'type': 'down', 'convs': convs})
        fuse.append(row)
    return {'branches': branches, 'fuse': fuse, 'num_branches': num_branches,
            'out_channels': out_channels}


def upsample_nearest(x, factor):
    # broadcast + reshape: single fused XLA data-movement op (no Pallas needed)
    B, H, W, C = x.shape
    x = jnp.broadcast_to(x[:, :, None, :, None, :], (B, H, factor, W, factor, C))
    return x.reshape(B, H * factor, W * factor, C)


def hr_module_forward(xs, m):
    nb = m['num_branches']
    ys = []
    for i in range(nb):
        t = xs[i]
        for blk in m['branches'][i]:
            t = basic_block(t, blk)
        ys.append(t)

    outs = []
    for i, row in enumerate(m['fuse']):
        acc = None
        for j in range(nb):
            if j == i:
                t = ys[j]
            else:
                f = row[j]
                if f['type'] == 'up':
                    t = conv_bn_act(ys[j], f['conv'], stride=1, padding=0, relu=False)
                    t = upsample_nearest(t, f['scale'])
                else:
                    t = ys[j]
                    for c in f['convs']:
                        t = conv_bn_act(t, c['conv'], stride=2, padding=1, relu=c['relu'])
            acc = t if acc is None else acc + t
        outs.append(jnp.maximum(acc, 0.0))
    return outs


# ----------------------------------------------------------------------- DCTStream
DC_EXTRA = {
    'DC_STAGE3': {'NUM_MODULES': 1, 'NUM_BRANCHES': 2, 'NUM_BLOCKS': [2, 2],
                  'NUM_CHANNELS': [32, 64], 'BLOCK': 'BASIC', 'FUSE_METHOD': 'SUM'},
    'DC_STAGE4': {'NUM_MODULES': 1, 'NUM_BRANCHES': 3, 'NUM_BLOCKS': [2, 2, 2],
                  'NUM_CHANNELS': [32, 64, 128], 'BLOCK': 'BASIC', 'FUSE_METHOD': 'SUM'},
}


def build_dct_stream(seed=0, dc_extra=DC_EXTRA):
    pg = ParamGen(seed)
    out_channels = 64  # no 'dc_other_layer' in dc_extra -> default 64
    params = {'cfg': dc_extra}
    params['layer0'] = make_conv_bn(pg, 21, out_channels, 3, conv_bias=True)
    params['layer1'] = make_conv_bn(pg, out_channels, 4, 1, conv_bias=False)

    # dc_layer2: BasicBlock, inplanes = 4*64*2 = 512, planes = 96, blocks = 4
    blocks, inpl = [], 4 * 64 * 2
    for _ in range(4):
        blocks.append(make_basic_block(pg, inpl, 96, stride=1))
        inpl = 96
    params['layer2'] = blocks

    s3, s4 = dc_extra['DC_STAGE3'], dc_extra['DC_STAGE4']
    c3 = list(s3['NUM_CHANNELS'])                        # BASIC expansion == 1
    params['transition2'] = make_transition(pg, [96], c3)
    mods3, inch = [], list(c3)
    for _ in range(s3['NUM_MODULES']):
        mod = make_hr_module(pg, s3['NUM_BRANCHES'], s3['NUM_BLOCKS'], inch, c3, True)
        inch = mod['out_channels']
        mods3.append(mod)
    params['stage3'] = mods3

    c4 = list(s4['NUM_CHANNELS'])
    params['transition3'] = make_transition(pg, inch, c4)
    mods4, inch4 = [], list(c4)
    for _ in range(s4['NUM_MODULES']):
        mod = make_hr_module(pg, s4['NUM_BRANCHES'], s4['NUM_BLOCKS'], inch4, c4, True)
        inch4 = mod['out_channels']
        mods4.append(mod)
    params['stage4'] = mods4
    return params


def dct_stream_forward(params, x_nchw, qtable):
    """x_nchw: (B, 21, H, W) float32, H,W multiples of 32; qtable: (B, 1, 8, 8)."""
    x = jnp.transpose(x_nchw, (0, 2, 3, 1)).astype(jnp.float32)        # NHWC
    x = conv_bn_act(x, params['layer0'], stride=1, dilation=8, padding=8, relu=True)
    x = conv_bn_act(x, params['layer1'], stride=1, padding=0, relu=True)

    B, H, W, C = x.shape
    Hb, Wb = H // 8, W // 8
    # 8x8 block-to-channel (NHWC): channel index = c*64 + i*8 + j, matching torch's
    # reshape(B, C, Hb, 8, Wb, 8).permute(0,1,3,5,2,4).reshape(B, 64*C, Hb, Wb)
    xr = jnp.transpose(x.reshape(B, Hb, 8, Wb, 8, C), (0, 1, 3, 5, 2, 4))  # (B,Hb,Wb,C,8,8)
    x0 = xr.reshape(B, Hb, Wb, 64 * C)

    q_flat = qtable.reshape(B, 64).astype(jnp.float32)
    q_vec = jnp.tile(q_flat, (1, C))                                    # (B, 64*C)
    q_full = jnp.broadcast_to(q_vec[:, None, :], (B, Hb * Wb, 64 * C)
                              ).reshape(B * Hb * Wb, 64 * C)
    x0_flat = x0.reshape(B * Hb * Wb, 64 * C)
    # lane-dense Pallas kernel producing cat([x0, x0*q], channel axis) in one pass
    x = qscale_concat(x0_flat, q_full).reshape(B, Hb, Wb, 2 * 64 * C)   # (B,Hb,Wb,512)

    for blk in params['layer2']:
        x = basic_block(x, blk)

    cfg3, cfg4 = params['cfg']['DC_STAGE3'], params['cfg']['DC_STAGE4']

    x_list = []
    for i in range(cfg3['NUM_BRANCHES']):
        t = params['transition2'][i]
        x_list.append(apply_transition(t, x) if t is not None else x)
    y_list = x_list
    for mod in params['stage3']:
        y_list = hr_module_forward(y_list, mod)

    x_list = []
    for i in range(cfg4['NUM_BRANCHES']):
        t = params['transition3'][i]
        if t is not None:
            x_list.append(apply_transition(t, y_list[-1]))
        else:
            x_list.append(y_list[i])
    dc_list = x_list
    for mod in params['stage4']:
        dc_list = hr_module_forward(dc_list, mod)

    # return NCHW, matching PyTorch output convention
    return [jnp.transpose(t, (0, 3, 1, 2)) for t in dc_list]


# ------------------------------------------------------------------------- main
if __name__ == "__main__":
    key = jax.random.PRNGKey(0)
    k1, k2 = jax.random.split(key)
    B, H, W = 2, 32, 32
    x = jax.random.normal(k1, (B, 21, H, W), dtype=jnp.float32)
    qtable = jax.random.uniform(k2, (B, 1, 8, 8), dtype=jnp.float32,
                                minval=0.5, maxval=2.0)

    params = build_dct_stream(seed=0)
    # jit the whole forward; params are closure constants -> weight/bias pads fold
    fwd = jax.jit(functools.partial(dct_stream_forward, params))
    outs = fwd(x, qtable)
    outs = [jax.block_until_ready(o) for o in outs]

    # sanity: 3-branch multi-scale output of stage4
    assert outs[0].shape == (B, 32, H // 8, W // 8)
    assert outs[1].shape == (B, 64, H // 16, W // 16)
    assert outs[2].shape == (B, 128, H // 32, W // 32)
    assert all(bool(jnp.all(jnp.isfinite(o))) for o in outs)
    print("KERNEL_OK")
</pallas_src>

<mosaic_0001>
module attributes {stable_mosaic.version = 11 : i64} {
  func.func @_mm_single_kernel(%arg0: i32, %arg1: memref<128x256xbf16, #tpu.memory_space<vmem>>, %arg2: memref<256x128xbf16, #tpu.memory_space<vmem>>, %arg3: memref<1x128xf32, #tpu.memory_space<vmem>>, %arg4: memref<128x128xf32, #tpu.memory_space<vmem>>) attributes {dimension_semantics = [#tpu.dimension_semantics<parallel>], iteration_bounds = array<i64: 16>, scalar_prefetch = 0 : i64, scratch_operands = 0 : i64, tpu.core_type = #tpu.core_type<tc>, window_params = [{transform_indices = @transform_0, window_bounds = array<i64: 128, 256>}, {pipeline_mode = #tpu.pipeline_mode<synchronous>, transform_indices = @transform_1, window_bounds = array<i64: 256, 128>}, {pipeline_mode = #tpu.pipeline_mode<synchronous>, transform_indices = @transform_2, window_bounds = array<i64: 1, 128>}, {transform_indices = @transform_3, window_bounds = array<i64: 128, 128>}]} {
    %c0 = arith.constant 0 : index
    %c0_0 = arith.constant 0 : index
    %0 = vector.load %arg1[%c0, %c0_0] : memref<128x256xbf16, #tpu.memory_space<vmem>>, vector<128x256xbf16>
    %c0_1 = arith.constant 0 : index
    %c0_2 = arith.constant 0 : index
    %1 = vector.load %arg2[%c0_1, %c0_2] : memref<256x128xbf16, #tpu.memory_space<vmem>>, vector<256x128xbf16>
    %cst = arith.constant dense<0.000000e+00> : vector<128x128xf32>
    %2 = tpu.matmul %0, %1, %cst {dimension_numbers = #tpu.dot_dimension_numbers<[1], [0], [0], [1], [0, 0, 1, 1], [], []>} : vector<128x256xbf16>, vector<256x128xbf16>, vector<128x128xf32> -> vector<128x128xf32>
    %c0_3 = arith.constant 0 : index
    %c0_4 = arith.constant 0 : index
    %3 = vector.load %arg3[%c0_3, %c0_4] : memref<1x128xf32, #tpu.memory_space<vmem>>, vector<1x128xf32>
    %4 = vector.broadcast %3 : vector<1x128xf32> to vector<128x128xf32>
    %5 = arith.addf %2, %4 : vector<128x128xf32>
    %cst_5 = arith.constant 0.000000e+00 : f32
    %6 = vector.broadcast %cst_5 : f32 to vector<128x128xf32>
    %7 = arith.maximumf %5, %6 : vector<128x128xf32>
    %c0_6 = arith.constant 0 : index
    %c0_7 = arith.constant 0 : index
    %8 = vector.load %arg4[%c0_6, %c0_7] : memref<128x128xf32, #tpu.memory_space<vmem>>, vector<128x128xf32>
    tpu.vector_store %arg4[%c0_6, %c0_7], %7 {strides = array<i32>} : memref<128x128xf32, #tpu.memory_space<vmem>>, vector<128x128xf32>,
    return
  }
  func.func @transform_0(%arg0: i32) -> (i32, i32) {
    %c0_i32 = arith.constant 0 : i32
    %c0_i32_0 = arith.constant 0 : i32
    return %arg0, %c0_i32 : i32, i32
  }
  func.func @transform_1(%arg0: i32) -> (i32, i32) {
    %c0_i32 = arith.constant 0 : i32
    %c0_i32_0 = arith.constant 0 : i32
    %c0_i32_1 = arith.constant 0 : i32
    return %c0_i32, %c0_i32_0 : i32, i32
  }
  func.func @transform_2(%arg0: i32) -> (i32, i32) {
    %c0_i32 = arith.constant 0 : i32
    %c0_i32_0 = arith.constant 0 : i32
    %c0_i32_1 = arith.constant 0 : i32
    return %c0_i32, %c0_i32_0 : i32, i32
  }
  func.func @transform_3(%arg0: i32) -> (i32, i32) {
    %c0_i32 = arith.constant 0 : i32
    %c0_i32_0 = arith.constant 0 : i32
    return %arg0, %c0_i32 : i32, i32
  }
}

module attributes {stable_mosaic.version = 11 : i64} {
  func.func @_mm_single_kernel(%arg0: i32, %arg1: memref<128x128xbf16, #tpu.memory_space<vmem>>, %arg2: memref<128x128xbf16, #tpu.memory_space<vmem>>, %arg3: memref<1x128xf32, #tpu.memory_space<vmem>>, %arg4: memref<128x128xf32, #tpu.memory_space<vmem>>) attributes {dimension_semantics = [#tpu.dimension_semantics<parallel>], iteration_bounds = array<i64: 16>, scalar_prefetch = 0 : i64, scratch_operands = 0 : i64, tpu.core_type = #tpu.core_type<tc>, window_params = [{transform_indices = @transform_0, window_bounds = array<i64: 128, 128>}, {pipeline_mode = #tpu.pipeline_mode<synchronous>, transform_indices = @transform_1, window_bounds = array<i64: 128, 128>}, {pipeline_mode = #tpu.pipeline_mode<synchronous>, transform_indices = @transform_2, window_bounds = array<i64: 1, 128>}, {transform_indices = @transform_3, window_bounds = array<i64: 128, 128>}]} {
    %c0 = arith.constant 0 : index
    %c0_0 = arith.constant 0 : index
    %0 = vector.load %arg1[%c0, %c0_0] : memref<128x128xbf16, #tpu.memory_space<vmem>>, vector<128x128xbf16>
    %c0_1 = arith.constant 0 : index
    %c0_2 = arith.constant 0 : index
    %1 = vector.load %arg2[%c0_1, %c0_2] : memref<128x128xbf16, #tpu.memory_space<vmem>>, vector<128x128xbf16>
    %cst = arith.constant dense<0.000000e+00> : vector<128x128xf32>
    %2 = tpu.matmul %0, %1, %cst {dimension_numbers = #tpu.dot_dimension_numbers<[1], [0], [0], [1], [0, 0, 1, 1], [], []>} : vector<128x128xbf16>, vector<128x128xbf16>, vector<128x128xf32> -> vector<128x128xf32>
    %c0_3 = arith.constant 0 : index
    %c0_4 = arith.constant 0 : index
    %3 = vector.load %arg3[%c0_3, %c0_4] : memref<1x128xf32, #tpu.memory_space<vmem>>, vector<1x128xf32>
    %4 = vector.broadcast %3 : vector<1x128xf32> to vector<128x128xf32>
    %5 = arith.addf %2, %4 : vector<128x128xf32>
    %cst_5 = arith.constant 0.000000e+00 : f32
    %6 = vector.broadcast %cst_5 : f32 to vector<128x128xf32>
    %7 = arith.maximumf %5, %6 : vector<128x128xf32>
    %c0_6 = arith.constant 0 : index
    %c0_7 = arith.constant 0 : index
    %8 = vector.load %arg4[%c0_6, %c0_7] : memref<128x128xf32, #tpu.memory_space<vmem>>, vector<128x128xf32>
    tpu.vector_store %arg4[%c0_6, %c0_7], %7 {strides = array<i32>} : memref<128x128xf32, #tpu.memory_space<vmem>>, vector<128x128xf32>,
    return
  }
  func.func @transform_0(%arg0: i32) -> (i32, i32) {
    %c0_i32 = arith.constant 0 : i32
    %c0_i32_0 = arith.constant 0 : i32
    return %arg0, %c0_i32 : i32, i32
  }
  func.func @transform_1(%arg0: i32) -> (i32, i32) {
    %c0_i32 = arith.constant 0 : i32
    %c0_i32_0 = arith.constant 0 : i32
    %c0_i32_1 = arith.constant 0 : i32
    return %c0_i32, %c0_i32_0 : i32, i32
  }
  func.func @transform_2(%arg0: i32) -> (i32, i32) {
    %c0_i32 = arith.constant 0 : i32
    %c0_i32_0 = arith.constant 0 : i32
    %c0_i32_1 = arith.constant 0 : i32
    return %c0_i32, %c0_i32_0 : i32, i32
  }
  func.func @transform_3(%arg0: i32) -> (i32, i32) {
    %c0_i32 = arith.constant 0 : i32
    %c0_i32_0 = arith.constant 0 : i32
    return %arg0, %c0_i32 : i32, i32
  }
}

module attributes {stable_mosaic.version = 11 : i64} {
  func.func @_qscale_concat_kernel(%arg0: i32, %arg1: memref<32x256xf32, #tpu.memory_space<vmem>>, %arg2: memref<32x256xf32, #tpu.memory_space<vmem>>, %arg3: memref<32x512xf32, #tpu.memory_space<vmem>>) attributes {dimension_semantics = [#tpu.dimension_semantics<parallel>], iteration_bounds = array<i64: 1>, scalar_prefetch = 0 : i64, scratch_operands = 0 : i64, tpu.core_type = #tpu.core_type<tc>, window_params = [{transform_indices = @transform_0, window_bounds = array<i64: 32, 256>}, {transform_indices = @transform_1, window_bounds = array<i64: 32, 256>}, {transform_indices = @transform_2, window_bounds = array<i64: 32, 512>}]} {
    %c0 = arith.constant 0 : index
    %c0_0 = arith.constant 0 : index
    %0 = vector.load %arg1[%c0, %c0_0] : memref<32x256xf32, #tpu.memory_space<vmem>>, vector<32x256xf32>
    %c0_1 = arith.constant 0 : index
    %c0_2 = arith.constant 0 : index
    %1 = vector.load %arg3[%c0_1, %c0_2] : memref<32x512xf32, #tpu.memory_space<vmem>>, vector<32x256xf32>
    tpu.vector_store %arg3[%c0_1, %c0_2], %0 {strides = array<i32>} : memref<32x512xf32, #tpu.memory_space<vmem>>, vector<32x256xf32>,
    %c0_3 = arith.constant 0 : index
    %c0_4 = arith.constant 0 : index
    %2 = vector.load %arg2[%c0_3, %c0_4] : memref<32x256xf32, #tpu.memory_space<vmem>>, vector<32x256xf32>
    %3 = arith.mulf %0, %2 : vector<32x256xf32>
    %c0_5 = arith.constant 0 : index
    %c256 = arith.constant 256 : index
    %4 = vector.load %arg3[%c0_5, %c256] : memref<32x512xf32, #tpu.memory_space<vmem>>, vector<32x256xf32>
    tpu.vector_store %arg3[%c0_5, %c256], %3 {strides = array<i32>} : memref<32x512xf32, #tpu.memory_space<vmem>>, vector<32x256xf32>,
    return
  }
  func.func @transform_0(%arg0: i32) -> (i32, i32) {
    %c0_i32 = arith.constant 0 : i32
    %c0_i32_0 = arith.constant 0 : i32
    return %arg0, %c0_i32 : i32, i32
  }
  func.func @transform_1(%arg0: i32) -> (i32, i32) {
    %c0_i32 = arith.constant 0 : i32
    %c0_i32_0 = arith.constant 0 : i32
    return %arg0, %c0_i32 : i32, i32
  }
  func.func @transform_2(%arg0: i32) -> (i32, i32) {
    %c0_i32 = arith.constant 0 : i32
    %c0_i32_0 = arith.constant 0 : i32
    return %arg0, %c0_i32 : i32, i32
  }
}

module attributes {stable_mosaic.version = 11 : i64} {
  func.func @_mm_ktiled_kernel(%arg0: i32, %arg1: i32, %arg2: memref<16x512xbf16, #tpu.memory_space<vmem>>, %arg3: memref<512x128xbf16, #tpu.memory_space<vmem>>, %arg4: memref<1x128xf32, #tpu.memory_space<vmem>>, %arg5: memref<16x128xf32, #tpu.memory_space<vmem>>, %arg6: memref<16x128xf32, #tpu.memory_space<vmem>>) attributes {dimension_semantics = [#tpu.dimension_semantics<parallel>, #tpu.dimension_semantics<arbitrary>], iteration_bounds = array<i64: 2, 9>, scalar_prefetch = 0 : i64, scratch_operands = 1 : i64, tpu.core_type = #tpu.core_type<tc>, window_params = [{transform_indices = @transform_0, window_bounds = array<i64: 16, 512>}, {transform_indices = @transform_1, window_bounds = array<i64: 512, 128>}, {pipeline_mode = #tpu.pipeline_mode<synchronous>, transform_indices = @transform_2, window_bounds = array<i64: 1, 128>}, {transform_indices = @transform_3, window_bounds = array<i64: 16, 128>}]} {
    %c0_i32 = arith.constant 0 : i32
    %0 = arith.cmpi eq, %arg1, %c0_i32 : i32
    %1 = arith.extui %0 : i1 to i32
    %c0_i32_0 = arith.constant 0 : i32
    %2 = arith.cmpi ne, %1, %c0_i32_0 : i32
    scf.if %2 {
      %cst_9 = arith.constant 0.000000e+00 : f32
      %12 = vector.broadcast %cst_9 : f32 to vector<16x128xf32>
      %c0_10 = arith.constant 0 : index
      %c0_11 = arith.constant 0 : index
      %13 = vector.load %arg6[%c0_10, %c0_11] : memref<16x128xf32, #tpu.memory_space<vmem>>, vector<16x128xf32>
      tpu.vector_store %arg6[%c0_10, %c0_11], %12 {strides = array<i32>} : memref<16x128xf32, #tpu.memory_space<vmem>>, vector<16x128xf32>,
    } else {
    }
    %c0 = arith.constant 0 : index
    %c0_1 = arith.constant 0 : index
    %3 = vector.load %arg6[%c0, %c0_1] : memref<16x128xf32, #tpu.memory_space<vmem>>, vector<16x128xf32>
    %c0_2 = arith.constant 0 : index
    %c0_3 = arith.constant 0 : index
    %4 = vector.load %arg2[%c0_2, %c0_3] : memref<16x512xbf16, #tpu.memory_space<vmem>>, vector<16x512xbf16>
    %c0_4 = arith.constant 0 : index
    %c0_5 = arith.constant 0 : index
    %5 = vector.load %arg3[%c0_4, %c0_5] : memref<512x128xbf16, #tpu.memory_space<vmem>>, vector<512x128xbf16>
    %cst = arith.constant dense<0.000000e+00> : vector<16x128xf32>
    %6 = tpu.matmul %4, %5, %cst {dimension_numbers = #tpu.dot_dimension_numbers<[1], [0], [0], [1], [0, 0, 1, 1], [], []>} : vector<16x512xbf16>, vector<512x128xbf16>, vector<16x128xf32> -> vector<16x128xf32>
    %7 = arith.addf %3, %6 : vector<16x128xf32>
    %c0_6 = arith.constant 0 : index
    %c0_7 = arith.constant 0 : index
    %8 = vector.load %arg6[%c0_6, %c0_7] : memref<16x128xf32, #tpu.memory_space<vmem>>, vector<16x128xf32>
    tpu.vector_store %arg6[%c0_6, %c0_7], %7 {strides = array<i32>} : memref<16x128xf32, #tpu.memory_space<vmem>>, vector<16x128xf32>,
    %c8_i32 = arith.constant 8 : i32
    %9 = arith.cmpi eq, %arg1, %c8_i32 : i32
    %10 = arith.extui %9 : i1 to i32
    %c0_i32_8 = arith.constant 0 : i32
    %11 = arith.cmpi ne, %10, %c0_i32_8 : i32
    scf.if %11 {
      %c0_9 = arith.constant 0 : index
      %c0_10 = arith.constant 0 : index
      %12 = vector.load %arg6[%c0_9, %c0_10] : memref<16x128xf32, #tpu.memory_space<vmem>>, vector<16x128xf32>
      %c0_11 = arith.constant 0 : index
      %c0_12 = arith.constant 0 : index
      %13 = vector.load %arg4[%c0_11, %c0_12] : memref<1x128xf32, #tpu.memory_space<vmem>>, vector<1x128xf32>
      %14 = vector.broadcast %13 : vector<1x128xf32> to vector<16x128xf32>
      %15 = arith.addf %12, %14 : vector<16x128xf32>
      %cst_13 = arith.constant 0.000000e+00 : f32
      %16 = vector.broadcast %cst_13 : f32 to vector<16x128xf32>
      %17 = arith.maximumf %15, %16 : vector<16x128xf32>
      %c0_14 = arith.constant 0 : index
      %c0_15 = arith.constant 0 : index
      %18 = vector.load %arg5[%c0_14, %c0_15] : memref<16x128xf32, #tpu.memory_space<vmem>>, vector<16x128xf32>
      tpu.vector_store %arg5[%c0_14, %c0_15], %17 {strides = array<i32>} : memref<16x128xf32, #tpu.memory_space<vmem>>, vector<16x128xf32>,
    } else {
    }
    return
  }
  func.func @transform_0(%arg0: i32, %arg1: i32) -> (i32, i32) {
    %c0_i32 = arith.constant 0 : i32
    return %arg0, %arg1 : i32, i32
  }
  func.func @transform_1(%arg0: i32, %arg1: i32) -> (i32, i32) {
    %c0_i32 = arith.constant 0 : i32
    %c0_i32_0 = arith.constant 0 : i32
    return %arg1, %c0_i32 : i32, i32
  }
  func.func @transform_2(%arg0: i32, %arg1: i32) -> (i32, i32) {
    %c0_i32 = arith.constant 0 : i32
    %c0_i32_0 = arith.constant 0 : i32
    %c0_i32_1 = arith.constant 0 : i32
    return %c0_i32, %c0_i32_0 : i32, i32
  }
  func.func @transform_3(%arg0: i32, %arg1: i32) -> (i32, i32) {
    %c0_i32 = arith.constant 0 : i32
    %c0_i32_0 = arith.constant 0 : i32
    return %arg0, %c0_i32 : i32, i32
  }
}

module attributes {stable_mosaic.version = 11 : i64} {
  func.func @_mm_single_kernel(%arg0: i32, %arg1: memref<16x512xbf16, #tpu.memory_space<vmem>>, %arg2: memref<512x128xbf16, #tpu.memory_space<vmem>>, %arg3: memref<1x128xf32, #tpu.memory_space<vmem>>, %arg4: memref<16x128xf32, #tpu.memory_space<vmem>>) attributes {dimension_semantics = [#tpu.dimension_semantics<parallel>], iteration_bounds = array<i64: 2>, scalar_prefetch = 0 : i64, scratch_operands = 0 : i64, tpu.core_type = #tpu.core_type<tc>, window_params = [{transform_indices = @transform_0, window_bounds = array<i64: 16, 512>}, {pipeline_mode = #tpu.pipeline_mode<synchronous>, transform_indices = @transform_1, window_bounds = array<i64: 512, 128>}, {pipeline_mode = #tpu.pipeline_mode<synchronous>, transform_indices = @transform_2, window_bounds = array<i64: 1, 128>}, {transform_indices = @transform_3, window_bounds = array<i64: 16, 128>}]} {
    %c0 = arith.constant 0 : index
    %c0_0 = arith.constant 0 : index
    %0 = vector.load %arg1[%c0, %c0_0] : memref<16x512xbf16, #tpu.memory_space<vmem>>, vector<16x512xbf16>
    %c0_1 = arith.constant 0 : index
    %c0_2 = arith.constant 0 : index
    %1 = vector.load %arg2[%c0_1, %c0_2] : memref<512x128xbf16, #tpu.memory_space<vmem>>, vector<512x128xbf16>
    %cst = arith.constant dense<0.000000e+00> : vector<16x128xf32>
    %2 = tpu.matmul %0, %1, %cst {dimension_numbers = #tpu.dot_dimension_numbers<[1], [0], [0], [1], [0, 0, 1, 1], [], []>} : vector<16x512xbf16>, vector<512x128xbf16>, vector<16x128xf32> -> vector<16x128xf32>
    %c0_3 = arith.constant 0 : index
    %c0_4 = arith.constant 0 : index
    %3 = vector.load %arg3[%c0_3, %c0_4] : memref<1x128xf32, #tpu.memory_space<vmem>>, vector<1x128xf32>
    %4 = vector.broadcast %3 : vector<1x128xf32> to vector<16x128xf32>
    %5 = arith.addf %2, %4 : vector<16x128xf32>
    %c0_5 = arith.constant 0 : index
    %c0_6 = arith.constant 0 : index
    %6 = vector.load %arg4[%c0_5, %c0_6] : memref<16x128xf32, #tpu.memory_space<vmem>>, vector<16x128xf32>
    tpu.vector_store %arg4[%c0_5, %c0_6], %5 {strides = array<i32>} : memref<16x128xf32, #tpu.memory_space<vmem>>, vector<16x128xf32>,
    return
  }
  func.func @transform_0(%arg0: i32) -> (i32, i32) {
    %c0_i32 = arith.constant 0 : i32
    %c0_i32_0 = arith.constant 0 : i32
    return %arg0, %c0_i32 : i32, i32
  }
  func.func @transform_1(%arg0: i32) -> (i32, i32) {
    %c0_i32 = arith.constant 0 : i32
    %c0_i32_0 = arith.constant 0 : i32
    %c0_i32_1 = arith.constant 0 : i32
    return %c0_i32, %c0_i32_0 : i32, i32
  }
  func.func @transform_2(%arg0: i32) -> (i32, i32) {
    %c0_i32 = arith.constant 0 : i32
    %c0_i32_0 = arith.constant 0 : i32
    %c0_i32_1 = arith.constant 0 : i32
    return %c0_i32, %c0_i32_0 : i32, i32
  }
  func.func @transform_3(%arg0: i32) -> (i32, i32) {
    %c0_i32 = arith.constant 0 : i32
    %c0_i32_0 = arith.constant 0 : i32
    return %arg0, %c0_i32 : i32, i32
  }
}

module attributes {stable_mosaic.version = 11 : i64} {
  func.func @_mm_single_kernel(%arg0: i32, %arg1: memref<16x896xbf16, #tpu.memory_space<vmem>>, %arg2: memref<896x128xbf16, #tpu.memory_space<vmem>>, %arg3: memref<1x128xf32, #tpu.memory_space<vmem>>, %arg4: memref<16x128xf32, #tpu.memory_space<vmem>>) attributes {dimension_semantics = [#tpu.dimension_semantics<parallel>], iteration_bounds = array<i64: 2>, scalar_prefetch = 0 : i64, scratch_operands = 0 : i64, tpu.core_type = #tpu.core_type<tc>, window_params = [{transform_indices = @transform_0, window_bounds = array<i64: 16, 896>}, {pipeline_mode = #tpu.pipeline_mode<synchronous>, transform_indices = @transform_1, window_bounds = array<i64: 896, 128>}, {pipeline_mode = #tpu.pipeline_mode<synchronous>, transform_indices = @transform_2, window_bounds = array<i64: 1, 128>}, {transform_indices = @transform_3, window_bounds = array<i64: 16, 128>}]} {
    %c0 = arith.constant 0 : index
    %c0_0 = arith.constant 0 : index
    %0 = vector.load %arg1[%c0, %c0_0] : memref<16x896xbf16, #tpu.memory_space<vmem>>, vector<16x896xbf16>
    %c0_1 = arith.constant 0 : index
    %c0_2 = arith.constant 0 : index
    %1 = vector.load %arg2[%c0_1, %c0_2] : memref<896x128xbf16, #tpu.memory_space<vmem>>, vector<896x128xbf16>
    %cst = arith.constant dense<0.000000e+00> : vector<16x128xf32>
    %2 = tpu.matmul %0, %1, %cst {dimension_numbers = #tpu.dot_dimension_numbers<[1], [0], [0], [1], [0, 0, 1, 1], [], []>} : vector<16x896xbf16>, vector<896x128xbf16>, vector<16x128xf32> -> vector<16x128xf32>
    %c0_3 = arith.constant 0 : index
    %c0_4 = arith.constant 0 : index
    %3 = vector.load %arg3[%c0_3, %c0_4] : memref<1x128xf32, #tpu.memory_space<vmem>>, vector<1x128xf32>
    %4 = vector.broadcast %3 : vector<1x128xf32> to vector<16x128xf32>
    %5 = arith.addf %2, %4 : vector<16x128xf32>
    %cst_5 = arith.constant 0.000000e+00 : f32
    %6 = vector.broadcast %cst_5 : f32 to vector<16x128xf32>
    %7 = arith.maximumf %5, %6 : vector<16x128xf32>
    %c0_6 = arith.constant 0 : index
    %c0_7 = arith.constant 0 : index
    %8 = vector.load %arg4[%c0_6, %c0_7] : memref<16x128xf32, #tpu.memory_space<vmem>>, vector<16x128xf32>
    tpu.vector_store %arg4[%c0_6, %c0_7], %7 {strides = array<i32>} : memref<16x128xf32, #tpu.memory_space<vmem>>, vector<16x128xf32>,
    return
  }
  func.func @transform_0(%arg0: i32) -> (i32, i32) {
    %c0_i32 = arith.constant 0 : i32
    %c0_i32_0 = arith.constant 0 : i32
    return %arg0, %c0_i32 : i32, i32
  }
  func.func @transform_1(%arg0: i32) -> (i32, i32) {
    %c0_i32 = arith.constant 0 : i32
    %c0_i32_0 = arith.constant 0 : i32
    %c0_i32_1 = arith.constant 0 : i32
    return %c0_i32, %c0_i32_0 : i32, i32
  }
  func.func @transform_2(%arg0: i32) -> (i32, i32) {
    %c0_i32 = arith.constant 0 : i32
    %c0_i32_0 = arith.constant 0 : i32
    %c0_i32_1 = arith.constant 0 : i32
    return %c0_i32, %c0_i32_0 : i32, i32
  }
  func.func @transform_3(%arg0: i32) -> (i32, i32) {
    %c0_i32 = arith.constant 0 : i32
    %c0_i32_0 = arith.constant 0 : i32
    return %arg0, %c0_i32 : i32, i32
  }
}

module attributes {stable_mosaic.version = 11 : i64} {
  func.func @_mm_single_res_kernel(%arg0: i32, %arg1: memref<16x896xbf16, #tpu.memory_space<vmem>>, %arg2: memref<896x128xbf16, #tpu.memory_space<vmem>>, %arg3: memref<1x128xf32, #tpu.memory_space<vmem>>, %arg4: memref<16x128xf32, #tpu.memory_space<vmem>>, %arg5: memref<16x128xf32, #tpu.memory_space<vmem>>) attributes {dimension_semantics = [#tpu.dimension_semantics<parallel>], iteration_bounds = array<i64: 2>, scalar_prefetch = 0 : i64, scratch_operands = 0 : i64, tpu.core_type = #tpu.core_type<tc>, window_params = [{transform_indices = @transform_0, window_bounds = array<i64: 16, 896>}, {pipeline_mode = #tpu.pipeline_mode<synchronous>, transform_indices = @transform_1, window_bounds = array<i64: 896, 128>}, {pipeline_mode = #tpu.pipeline_mode<synchronous>, transform_indices = @transform_2, window_bounds = array<i64: 1, 128>}, {transform_indices = @transform_3, window_bounds = array<i64: 16, 128>}, {transform_indices = @transform_4, window_bounds = array<i64: 16, 128>}]} {
    %c0 = arith.constant 0 : index
    %c0_0 = arith.constant 0 : index
    %0 = vector.load %arg1[%c0, %c0_0] : memref<16x896xbf16, #tpu.memory_space<vmem>>, vector<16x896xbf16>
    %c0_1 = arith.constant 0 : index
    %c0_2 = arith.constant 0 : index
    %1 = vector.load %arg2[%c0_1, %c0_2] : memref<896x128xbf16, #tpu.memory_space<vmem>>, vector<896x128xbf16>
    %cst = arith.constant dense<0.000000e+00> : vector<16x128xf32>
    %2 = tpu.matmul %0, %1, %cst {dimension_numbers = #tpu.dot_dimension_numbers<[1], [0], [0], [1], [0, 0, 1, 1], [], []>} : vector<16x896xbf16>, vector<896x128xbf16>, vector<16x128xf32> -> vector<16x128xf32>
    %c0_3 = arith.constant 0 : index
    %c0_4 = arith.constant 0 : index
    %3 = vector.load %arg3[%c0_3, %c0_4] : memref<1x128xf32, #tpu.memory_space<vmem>>, vector<1x128xf32>
    %4 = vector.broadcast %3 : vector<1x128xf32> to vector<16x128xf32>
    %5 = arith.addf %2, %4 : vector<16x128xf32>
    %c0_5 = arith.constant 0 : index
    %c0_6 = arith.constant 0 : index
    %6 = vector.load %arg4[%c0_5, %c0_6] : memref<16x128xf32, #tpu.memory_space<vmem>>, vector<16x128xf32>
    %7 = arith.addf %5, %6 : vector<16x128xf32>
    %cst_7 = arith.constant 0.000000e+00 : f32
    %8 = vector.broadcast %cst_7 : f32 to vector<16x128xf32>
    %9 = arith.maximumf %7, %8 : vector<16x128xf32>
    %c0_8 = arith.constant 0 : index
    %c0_9 = arith.constant 0 : index
    %10 = vector.load %arg5[%c0_8, %c0_9] : memref<16x128xf32, #tpu.memory_space<vmem>>, vector<16x128xf32>
    tpu.vector_store %arg5[%c0_8, %c0_9], %9 {strides = array<i32>} : memref<16x128xf32, #tpu.memory_space<vmem>>, vector<16x128xf32>,
    return
  }
  func.func @transform_0(%arg0: i32) -> (i32, i32) {
    %c0_i32 = arith.constant 0 : i32
    %c0_i32_0 = arith.constant 0 : i32
    return %arg0, %c0_i32 : i32, i32
  }
  func.func @transform_1(%arg0: i32) -> (i32, i32) {
    %c0_i32 = arith.constant 0 : i32
    %c0_i32_0 = arith.constant 0 : i32
    %c0_i32_1 = arith.constant 0 : i32
    return %c0_i32, %c0_i32_0 : i32, i32
  }
  func.func @transform_2(%arg0: i32) -> (i32, i32) {
    %c0_i32 = arith.constant 0 : i32
    %c0_i32_0 = arith.constant 0 : i32
    %c0_i32_1 = arith.constant 0 : i32
    return %c0_i32, %c0_i32_0 : i32, i32
  }
  func.func @transform_3(%arg0: i32) -> (i32, i32) {
    %c0_i32 = arith.constant 0 : i32
    %c0_i32_0 = arith.constant 0 : i32
    return %arg0, %c0_i32 : i32, i32
  }
  func.func @transform_4(%arg0: i32) -> (i32, i32) {
    %c0_i32 = arith.constant 0 : i32
    %c0_i32_0 = arith.constant 0 : i32
    return %arg0, %c0_i32 : i32, i32
  }
}

module attributes {stable_mosaic.version = 11 : i64} {
  func.func @_mm_single_kernel(%arg0: i32, %arg1: memref<16x384xbf16, #tpu.memory_space<vmem>>, %arg2: memref<384x128xbf16, #tpu.memory_space<vmem>>, %arg3: memref<1x128xf32, #tpu.memory_space<vmem>>, %arg4: memref<16x128xf32, #tpu.memory_space<vmem>>) attributes {dimension_semantics = [#tpu.dimension_semantics<parallel>], iteration_bounds = array<i64: 2>, scalar_prefetch = 0 : i64, scratch_operands = 0 : i64, tpu.core_type = #tpu.core_type<tc>, window_params = [{transform_indices = @transform_0, window_bounds = array<i64: 16, 384>}, {pipeline_mode = #tpu.pipeline_mode<synchronous>, transform_indices = @transform_1, window_bounds = array<i64: 384, 128>}, {pipeline_mode = #tpu.pipeline_mode<synchronous>, transform_indices = @transform_2, window_bounds = array<i64: 1, 128>}, {transform_indices = @transform_3, window_bounds = array<i64: 16, 128>}]} {
    %c0 = arith.constant 0 : index
    %c0_0 = arith.constant 0 : index
    %0 = vector.load %arg1[%c0, %c0_0] : memref<16x384xbf16, #tpu.memory_space<vmem>>, vector<16x384xbf16>
    %c0_1 = arith.constant 0 : index
    %c0_2 = arith.constant 0 : index
    %1 = vector.load %arg2[%c0_1, %c0_2] : memref<384x128xbf16, #tpu.memory_space<vmem>>, vector<384x128xbf16>
    %cst = arith.constant dense<0.000000e+00> : vector<16x128xf32>
    %2 = tpu.matmul %0, %1, %cst {dimension_numbers = #tpu.dot_dimension_numbers<[1], [0], [0], [1], [0, 0, 1, 1], [], []>} : vector<16x384xbf16>, vector<384x128xbf16>, vector<16x128xf32> -> vector<16x128xf32>
    %c0_3 = arith.constant 0 : index
    %c0_4 = arith.constant 0 : index
    %3 = vector.load %arg3[%c0_3, %c0_4] : memref<1x128xf32, #tpu.memory_space<vmem>>, vector<1x128xf32>
    %4 = vector.broadcast %3 : vector<1x128xf32> to vector<16x128xf32>
    %5 = arith.addf %2, %4 : vector<16x128xf32>
    %cst_5 = arith.constant 0.000000e+00 : f32
    %6 = vector.broadcast %cst_5 : f32 to vector<16x128xf32>
    %7 = arith.maximumf %5, %6 : vector<16x128xf32>
    %c0_6 = arith.constant 0 : index
    %c0_7 = arith.constant 0 : index
    %8 = vector.load %arg4[%c0_6, %c0_7] : memref<16x128xf32, #tpu.memory_space<vmem>>, vector<16x128xf32>
    tpu.vector_store %arg4[%c0_6, %c0_7], %7 {strides = array<i32>} : memref<16x128xf32, #tpu.memory_space<vmem>>, vector<16x128xf32>,
    return
  }
  func.func @transform_0(%arg0: i32) -> (i32, i32) {
    %c0_i32 = arith.constant 0 : i32
    %c0_i32_0 = arith.constant 0 : i32
    return %arg0, %c0_i32 : i32, i32
  }
  func.func @transform_1(%arg0: i32) -> (i32, i32) {
    %c0_i32 = arith.constant 0 : i32
    %c0_i32_0 = arith.constant 0 : i32
    %c0_i32_1 = arith.constant 0 : i32
    return %c0_i32, %c0_i32_0 : i32, i32
  }
  func.func @transform_2(%arg0: i32) -> (i32, i32) {
    %c0_i32 = arith.constant 0 : i32
    %c0_i32_0 = arith.constant 0 : i32
    %c0_i32_1 = arith.constant 0 : i32
    return %c0_i32, %c0_i32_0 : i32, i32
  }
  func.func @transform_3(%arg0: i32) -> (i32, i32) {
    %c0_i32 = arith.constant 0 : i32
    %c0_i32_0 = arith.constant 0 : i32
    return %arg0, %c0_i32 : i32, i32
  }
}

module attributes {stable_mosaic.version = 11 : i64} {
  func.func @_mm_single_res_kernel(%arg0: i32, %arg1: memref<16x384xbf16, #tpu.memory_space<vmem>>, %arg2: memref<384x128xbf16, #tpu.memory_space<vmem>>, %arg3: memref<1x128xf32, #tpu.memory_space<vmem>>, %arg4: memref<16x128xf32, #tpu.memory_space<vmem>>, %arg5: memref<16x128xf32, #tpu.memory_space<vmem>>) attributes {dimension_semantics = [#tpu.dimension_semantics<parallel>], iteration_bounds = array<i64: 2>, scalar_prefetch = 0 : i64, scratch_operands = 0 : i64, tpu.core_type = #tpu.core_type<tc>, window_params = [{transform_indices = @transform_0, window_bounds = array<i64: 16, 384>}, {pipeline_mode = #tpu.pipeline_mode<synchronous>, transform_indices = @transform_1, window_bounds = array<i64: 384, 128>}, {pipeline_mode = #tpu.pipeline_mode<synchronous>, transform_indices = @transform_2, window_bounds = array<i64: 1, 128>}, {transform_indices = @transform_3, window_bounds = array<i64: 16, 128>}, {transform_indices = @transform_4, window_bounds = array<i64: 16, 128>}]} {
    %c0 = arith.constant 0 : index
    %c0_0 = arith.constant 0 : index
    %0 = vector.load %arg1[%c0, %c0_0] : memref<16x384xbf16, #tpu.memory_space<vmem>>, vector<16x384xbf16>
    %c0_1 = arith.constant 0 : index
    %c0_2 = arith.constant 0 : index
    %1 = vector.load %arg2[%c0_1, %c0_2] : memref<384x128xbf16, #tpu.memory_space<vmem>>, vector<384x128xbf16>
    %cst = arith.constant dense<0.000000e+00> : vector<16x128xf32>
    %2 = tpu.matmul %0, %1, %cst {dimension_numbers = #tpu.dot_dimension_numbers<[1], [0], [0], [1], [0, 0, 1, 1], [], []>} : vector<16x384xbf16>, vector<384x128xbf16>, vector<16x128xf32> -> vector<16x128xf32>
    %c0_3 = arith.constant 0 : index
    %c0_4 = arith.constant 0 : index
    %3 = vector.load %arg3[%c0_3, %c0_4] : memref<1x128xf32, #tpu.memory_space<vmem>>, vector<1x128xf32>
    %4 = vector.broadcast %3 : vector<1x128xf32> to vector<16x128xf32>
    %5 = arith.addf %2, %4 : vector<16x128xf32>
    %c0_5 = arith.constant 0 : index
    %c0_6 = arith.constant 0 : index
    %6 = vector.load %arg4[%c0_5, %c0_6] : memref<16x128xf32, #tpu.memory_space<vmem>>, vector<16x128xf32>
    %7 = arith.addf %5, %6 : vector<16x128xf32>
    %cst_7 = arith.constant 0.000000e+00 : f32
    %8 = vector.broadcast %cst_7 : f32 to vector<16x128xf32>
    %9 = arith.maximumf %7, %8 : vector<16x128xf32>
    %c0_8 = arith.constant 0 : index
    %c0_9 = arith.constant 0 : index
    %10 = vector.load %arg5[%c0_8, %c0_9] : memref<16x128xf32, #tpu.memory_space<vmem>>, vector<16x128xf32>
    tpu.vector_store %arg5[%c0_8, %c0_9], %9 {strides = array<i32>} : memref<16x128xf32, #tpu.memory_space<vmem>>, vector<16x128xf32>,
    return
  }
  func.func @transform_0(%arg0: i32) -> (i32, i32) {
    %c0_i32 = arith.constant 0 : i32
    %c0_i32_0 = arith.constant 0 : i32
    return %arg0, %c0_i32 : i32, i32
  }
  func.func @transform_1(%arg0: i32) -> (i32, i32) {
    %c0_i32 = arith.constant 0 : i32
    %c0_i32_0 = arith.constant 0 : i32
    %c0_i32_1 = arith.constant 0 : i32
    return %c0_i32, %c0_i32_0 : i32, i32
  }
  func.func @transform_2(%arg0: i32) -> (i32, i32) {
    %c0_i32 = arith.constant 0 : i32
    %c0_i32_0 = arith.constant 0 : i32
    %c0_i32_1 = arith.constant 0 : i32
    return %c0_i32, %c0_i32_0 : i32, i32
  }
  func.func @transform_3(%arg0: i32) -> (i32, i32) {
    %c0_i32 = arith.constant 0 : i32
    %c0_i32_0 = arith.constant 0 : i32
    return %arg0, %c0_i32 : i32, i32
  }
  func.func @transform_4(%arg0: i32) -> (i32, i32) {
    %c0_i32 = arith.constant 0 : i32
    %c0_i32_0 = arith.constant 0 : i32
    return %arg0, %c0_i32 : i32, i32
  }
}

module attributes {stable_mosaic.version = 11 : i64} {
  func.func @_mm_single_kernel(%arg0: i32, %arg1: memref<16x896xbf16, #tpu.memory_space<vmem>>, %arg2: memref<896x128xbf16, #tpu.memory_space<vmem>>, %arg3: memref<1x128xf32, #tpu.memory_space<vmem>>, %arg4: memref<16x128xf32, #tpu.memory_space<vmem>>) attributes {dimension_semantics = [#tpu.dimension_semantics<parallel>], iteration_bounds = array<i64: 1>, scalar_prefetch = 0 : i64, scratch_operands = 0 : i64, tpu.core_type = #tpu.core_type<tc>, window_params = [{transform_indices = @transform_0, window_bounds = array<i64: 16, 896>}, {pipeline_mode = #tpu.pipeline_mode<synchronous>, transform_indices = @transform_1, window_bounds = array<i64: 896, 128>}, {pipeline_mode = #tpu.pipeline_mode<synchronous>, transform_indices = @transform_2, window_bounds = array<i64: 1, 128>}, {transform_indices = @transform_3, window_bounds = array<i64: 16, 128>}]} {
    %c0 = arith.constant 0 : index
    %c0_0 = arith.constant 0 : index
    %0 = vector.load %arg1[%c0, %c0_0] : memref<16x896xbf16, #tpu.memory_space<vmem>>, vector<16x896xbf16>
    %c0_1 = arith.constant 0 : index
    %c0_2 = arith.constant 0 : index
    %1 = vector.load %arg2[%c0_1, %c0_2] : memref<896x128xbf16, #tpu.memory_space<vmem>>, vector<896x128xbf16>
    %cst = arith.constant dense<0.000000e+00> : vector<16x128xf32>
    %2 = tpu.matmul %0, %1, %cst {dimension_numbers = #tpu.dot_dimension_numbers<[1], [0], [0], [1], [0, 0, 1, 1], [], []>} : vector<16x896xbf16>, vector<896x128xbf16>, vector<16x128xf32> -> vector<16x128xf32>
    %c0_3 = arith.constant 0 : index
    %c0_4 = arith.constant 0 : index
    %3 = vector.load %arg3[%c0_3, %c0_4] : memref<1x128xf32, #tpu.memory_space<vmem>>, vector<1x128xf32>
    %4 = vector.broadcast %3 : vector<1x128xf32> to vector<16x128xf32>
    %5 = arith.addf %2, %4 : vector<16x128xf32>
    %cst_5 = arith.constant 0.000000e+00 : f32
    %6 = vector.broadcast %cst_5 : f32 to vector<16x128xf32>
    %7 = arith.maximumf %5, %6 : vector<16x128xf32>
    %c0_6 = arith.constant 0 : index
    %c0_7 = arith.constant 0 : index
    %8 = vector.load %arg4[%c0_6, %c0_7] : memref<16x128xf32, #tpu.memory_space<vmem>>, vector<16x128xf32>
    tpu.vector_store %arg4[%c0_6, %c0_7], %7 {strides = array<i32>} : memref<16x128xf32, #tpu.memory_space<vmem>>, vector<16x128xf32>,
    return
  }
  func.func @transform_0(%arg0: i32) -> (i32, i32) {
    %c0_i32 = arith.constant 0 : i32
    %c0_i32_0 = arith.constant 0 : i32
    return %arg0, %c0_i32 : i32, i32
  }
  func.func @transform_1(%arg0: i32) -> (i32, i32) {
    %c0_i32 = arith.constant 0 : i32
    %c0_i32_0 = arith.constant 0 : i32
    %c0_i32_1 = arith.constant 0 : i32
    return %c0_i32, %c0_i32_0 : i32, i32
  }
  func.func @transform_2(%arg0: i32) -> (i32, i32) {
    %c0_i32 = arith.constant 0 : i32
    %c0_i32_0 = arith.constant 0 : i32
    %c0_i32_1 = arith.constant 0 : i32
    return %c0_i32, %c0_i32_0 : i32, i32
  }
  func.func @transform_3(%arg0: i32) -> (i32, i32) {
    %c0_i32 = arith.constant 0 : i32
    %c0_i32_0 = arith.constant 0 : i32
    return %arg0, %c0_i32 : i32, i32
  }
}

module attributes {stable_mosaic.version = 11 : i64} {
  func.func @_mm_single_kernel(%arg0: i32, %arg1: memref<16x640xbf16, #tpu.memory_space<vmem>>, %arg2: memref<640x128xbf16, #tpu.memory_space<vmem>>, %arg3: memref<1x128xf32, #tpu.memory_space<vmem>>, %arg4: memref<16x128xf32, #tpu.memory_space<vmem>>) attributes {dimension_semantics = [#tpu.dimension_semantics<parallel>], iteration_bounds = array<i64: 1>, scalar_prefetch = 0 : i64, scratch_operands = 0 : i64, tpu.core_type = #tpu.core_type<tc>, window_params = [{transform_indices = @transform_0, window_bounds = array<i64: 16, 640>}, {pipeline_mode = #tpu.pipeline_mode<synchronous>, transform_indices = @transform_1, window_bounds = array<i64: 640, 128>}, {pipeline_mode = #tpu.pipeline_mode<synchronous>, transform_indices = @transform_2, window_bounds = array<i64: 1, 128>}, {transform_indices = @transform_3, window_bounds = array<i64: 16, 128>}]} {
    %c0 = arith.constant 0 : index
    %c0_0 = arith.constant 0 : index
    %0 = vector.load %arg1[%c0, %c0_0] : memref<16x640xbf16, #tpu.memory_space<vmem>>, vector<16x640xbf16>
    %c0_1 = arith.constant 0 : index
    %c0_2 = arith.constant 0 : index
    %1 = vector.load %arg2[%c0_1, %c0_2] : memref<640x128xbf16, #tpu.memory_space<vmem>>, vector<640x128xbf16>
    %cst = arith.constant dense<0.000000e+00> : vector<16x128xf32>
    %2 = tpu.matmul %0, %1, %cst {dimension_numbers = #tpu.dot_dimension_numbers<[1], [0], [0], [1], [0, 0, 1, 1], [], []>} : vector<16x640xbf16>, vector<640x128xbf16>, vector<16x128xf32> -> vector<16x128xf32>
    %c0_3 = arith.constant 0 : index
    %c0_4 = arith.constant 0 : index
    %3 = vector.load %arg3[%c0_3, %c0_4] : memref<1x128xf32, #tpu.memory_space<vmem>>, vector<1x128xf32>
    %4 = vector.broadcast %3 : vector<1x128xf32> to vector<16x128xf32>
    %5 = arith.addf %2, %4 : vector<16x128xf32>
    %cst_5 = arith.constant 0.000000e+00 : f32
    %6 = vector.broadcast %cst_5 : f32 to vector<16x128xf32>
    %7 = arith.maximumf %5, %6 : vector<16x128xf32>
    %c0_6 = arith.constant 0 : index
    %c0_7 = arith.constant 0 : index
    %8 = vector.load %arg4[%c0_6, %c0_7] : memref<16x128xf32, #tpu.memory_space<vmem>>, vector<16x128xf32>
    tpu.vector_store %arg4[%c0_6, %c0_7], %7 {strides = array<i32>} : memref<16x128xf32, #tpu.memory_space<vmem>>, vector<16x128xf32>,
    return
  }
  func.func @transform_0(%arg0: i32) -> (i32, i32) {
    %c0_i32 = arith.constant 0 : i32
    %c0_i32_0 = arith.constant 0 : i32
    return %arg0, %c0_i32 : i32, i32
  }
  func.func @transform_1(%arg0: i32) -> (i32, i32) {
    %c0_i32 = arith.constant 0 : i32
    %c0_i32_0 = arith.constant 0 : i32
    %c0_i32_1 = arith.constant 0 : i32
    return %c0_i32, %c0_i32_0 : i32, i32
  }
  func.func @transform_2(%arg0: i32) -> (i32, i32) {
    %c0_i32 = arith.constant 0 : i32
    %c0_i32_0 = arith.constant 0 : i32
    %c0_i32_1 = arith.constant 0 : i32
    return %c0_i32, %c0_i32_0 : i32, i32
  }
  func.func @transform_3(%arg0: i32) -> (i32, i32) {
    %c0_i32 = arith.constant 0 : i32
    %c0_i32_0 = arith.constant 0 : i32
    return %arg0, %c0_i32 : i32, i32
  }
}

module attributes {stable_mosaic.version = 11 : i64} {
  func.func @_mm_single_res_kernel(%arg0: i32, %arg1: memref<16x640xbf16, #tpu.memory_space<vmem>>, %arg2: memref<640x128xbf16, #tpu.memory_space<vmem>>, %arg3: memref<1x128xf32, #tpu.memory_space<vmem>>, %arg4: memref<16x128xf32, #tpu.memory_space<vmem>>, %arg5: memref<16x128xf32, #tpu.memory_space<vmem>>) attributes {dimension_semantics = [#tpu.dimension_semantics<parallel>], iteration_bounds = array<i64: 1>, scalar_prefetch = 0 : i64, scratch_operands = 0 : i64, tpu.core_type = #tpu.core_type<tc>, window_params = [{transform_indices = @transform_0, window_bounds = array<i64: 16, 640>}, {pipeline_mode = #tpu.pipeline_mode<synchronous>, transform_indices = @transform_1, window_bounds = array<i64: 640, 128>}, {pipeline_mode = #tpu.pipeline_mode<synchronous>, transform_indices = @transform_2, window_bounds = array<i64: 1, 128>}, {transform_indices = @transform_3, window_bounds = array<i64: 16, 128>}, {transform_indices = @transform_4, window_bounds = array<i64: 16, 128>}]} {
    %c0 = arith.constant 0 : index
    %c0_0 = arith.constant 0 : index
    %0 = vector.load %arg1[%c0, %c0_0] : memref<16x640xbf16, #tpu.memory_space<vmem>>, vector<16x640xbf16>
    %c0_1 = arith.constant 0 : index
    %c0_2 = arith.constant 0 : index
    %1 = vector.load %arg2[%c0_1, %c0_2] : memref<640x128xbf16, #tpu.memory_space<vmem>>, vector<640x128xbf16>
    %cst = arith.constant dense<0.000000e+00> : vector<16x128xf32>
    %2 = tpu.matmul %0, %1, %cst {dimension_numbers = #tpu.dot_dimension_numbers<[1], [0], [0], [1], [0, 0, 1, 1], [], []>} : vector<16x640xbf16>, vector<640x128xbf16>, vector<16x128xf32> -> vector<16x128xf32>
    %c0_3 = arith.constant 0 : index
    %c0_4 = arith.constant 0 : index
    %3 = vector.load %arg3[%c0_3, %c0_4] : memref<1x128xf32, #tpu.memory_space<vmem>>, vector<1x128xf32>
    %4 = vector.broadcast %3 : vector<1x128xf32> to vector<16x128xf32>
    %5 = arith.addf %2, %4 : vector<16x128xf32>
    %c0_5 = arith.constant 0 : index
    %c0_6 = arith.constant 0 : index
    %6 = vector.load %arg4[%c0_5, %c0_6] : memref<16x128xf32, #tpu.memory_space<vmem>>, vector<16x128xf32>
    %7 = arith.addf %5, %6 : vector<16x128xf32>
    %cst_7 = arith.constant 0.000000e+00 : f32
    %8 = vector.broadcast %cst_7 : f32 to vector<16x128xf32>
    %9 = arith.maximumf %7, %8 : vector<16x128xf32>
    %c0_8 = arith.constant 0 : index
    %c0_9 = arith.constant 0 : index
    %10 = vector.load %arg5[%c0_8, %c0_9] : memref<16x128xf32, #tpu.memory_space<vmem>>, vector<16x128xf32>
    tpu.vector_store %arg5[%c0_8, %c0_9], %9 {strides = array<i32>} : memref<16x128xf32, #tpu.memory_space<vmem>>, vector<16x128xf32>,
    return
  }
  func.func @transform_0(%arg0: i32) -> (i32, i32) {
    %c0_i32 = arith.constant 0 : i32
    %c0_i32_0 = arith.constant 0 : i32
    return %arg0, %c0_i32 : i32, i32
  }
  func.func @transform_1(%arg0: i32) -> (i32, i32) {
    %c0_i32 = arith.constant 0 : i32
    %c0_i32_0 = arith.constant 0 : i32
    %c0_i32_1 = arith.constant 0 : i32
    return %c0_i32, %c0_i32_0 : i32, i32
  }
  func.func @transform_2(%arg0: i32) -> (i32, i32) {
    %c0_i32 = arith.constant 0 : i32
    %c0_i32_0 = arith.constant 0 : i32
    %c0_i32_1 = arith.constant 0 : i32
    return %c0_i32, %c0_i32_0 : i32, i32
  }
  func.func @transform_3(%arg0: i32) -> (i32, i32) {
    %c0_i32 = arith.constant 0 : i32
    %c0_i32_0 = arith.constant 0 : i32
    return %arg0, %c0_i32 : i32, i32
  }
  func.func @transform_4(%arg0: i32) -> (i32, i32) {
    %c0_i32 = arith.constant 0 : i32
    %c0_i32_0 = arith.constant 0 : i32
    return %arg0, %c0_i32 : i32, i32
  }
}

module attributes {stable_mosaic.version = 11 : i64} {
  func.func @_mm_single_kernel(%arg0: i32, %arg1: memref<16x128xbf16, #tpu.memory_space<vmem>>, %arg2: memref<128x128xbf16, #tpu.memory_space<vmem>>, %arg3: memref<1x128xf32, #tpu.memory_space<vmem>>, %arg4: memref<16x128xf32, #tpu.memory_space<vmem>>) attributes {dimension_semantics = [#tpu.dimension_semantics<parallel>], iteration_bounds = array<i64: 1>, scalar_prefetch = 0 : i64, scratch_operands = 0 : i64, tpu.core_type = #tpu.core_type<tc>, window_params = [{transform_indices = @transform_0, window_bounds = array<i64: 16, 128>}, {pipeline_mode = #tpu.pipeline_mode<synchronous>, transform_indices = @transform_1, window_bounds = array<i64: 128, 128>}, {pipeline_mode = #tpu.pipeline_mode<synchronous>, transform_indices = @transform_2, window_bounds = array<i64: 1, 128>}, {transform_indices = @transform_3, window_bounds = array<i64: 16, 128>}]} {
    %c0 = arith.constant 0 : index
    %c0_0 = arith.constant 0 : index
    %0 = vector.load %arg1[%c0, %c0_0] : memref<16x128xbf16, #tpu.memory_space<vmem>>, vector<16x128xbf16>
    %c0_1 = arith.constant 0 : index
    %c0_2 = arith.constant 0 : index
    %1 = vector.load %arg2[%c0_1, %c0_2] : memref<128x128xbf16, #tpu.memory_space<vmem>>, vector<128x128xbf16>
    %cst = arith.constant dense<0.000000e+00> : vector<16x128xf32>
    %2 = tpu.matmul %0, %1, %cst {dimension_numbers = #tpu.dot_dimension_numbers<[1], [0], [0], [1], [0, 0, 1, 1], [], []>} : vector<16x128xbf16>, vector<128x128xbf16>, vector<16x128xf32> -> vector<16x128xf32>
    %c0_3 = arith.constant 0 : index
    %c0_4 = arith.constant 0 : index
    %3 = vector.load %arg3[%c0_3, %c0_4] : memref<1x128xf32, #tpu.memory_space<vmem>>, vector<1x128xf32>
    %4 = vector.broadcast %3 : vector<1x128xf32> to vector<16x128xf32>
    %5 = arith.addf %2, %4 : vector<16x128xf32>
    %c0_5 = arith.constant 0 : index
    %c0_6 = arith.constant 0 : index
    %6 = vector.load %arg4[%c0_5, %c0_6] : memref<16x128xf32, #tpu.memory_space<vmem>>, vector<16x128xf32>
    tpu.vector_store %arg4[%c0_5, %c0_6], %5 {strides = array<i32>} : memref<16x128xf32, #tpu.memory_space<vmem>>, vector<16x128xf32>,
    return
  }
  func.func @transform_0(%arg0: i32) -> (i32, i32) {
    %c0_i32 = arith.constant 0 : i32
    %c0_i32_0 = arith.constant 0 : i32
    return %arg0, %c0_i32 : i32, i32
  }
  func.func @transform_1(%arg0: i32) -> (i32, i32) {
    %c0_i32 = arith.constant 0 : i32
    %c0_i32_0 = arith.constant 0 : i32
    %c0_i32_1 = arith.constant 0 : i32
    return %c0_i32, %c0_i32_0 : i32, i32
  }
  func.func @transform_2(%arg0: i32) -> (i32, i32) {
    %c0_i32 = arith.constant 0 : i32
    %c0_i32_0 = arith.constant 0 : i32
    %c0_i32_1 = arith.constant 0 : i32
    return %c0_i32, %c0_i32_0 : i32, i32
  }
  func.func @transform_3(%arg0: i32) -> (i32, i32) {
    %c0_i32 = arith.constant 0 : i32
    %c0_i32_0 = arith.constant 0 : i32
    return %arg0, %c0_i32 : i32, i32
  }
}

module attributes {stable_mosaic.version = 11 : i64} {
  func.func @_mm_single_kernel(%arg0: i32, %arg1: memref<16x384xbf16, #tpu.memory_space<vmem>>, %arg2: memref<384x128xbf16, #tpu.memory_space<vmem>>, %arg3: memref<1x128xf32, #tpu.memory_space<vmem>>, %arg4: memref<16x128xf32, #tpu.memory_space<vmem>>) attributes {dimension_semantics = [#tpu.dimension_semantics<parallel>], iteration_bounds = array<i64: 1>, scalar_prefetch = 0 : i64, scratch_operands = 0 : i64, tpu.core_type = #tpu.core_type<tc>, window_params = [{transform_indices = @transform_0, window_bounds = array<i64: 16, 384>}, {pipeline_mode = #tpu.pipeline_mode<synchronous>, transform_indices = @transform_1, window_bounds = array<i64: 384, 128>}, {pipeline_mode = #tpu.pipeline_mode<synchronous>, transform_indices = @transform_2, window_bounds = array<i64: 1, 128>}, {transform_indices = @transform_3, window_bounds = array<i64: 16, 128>}]} {
    %c0 = arith.constant 0 : index
    %c0_0 = arith.constant 0 : index
    %0 = vector.load %arg1[%c0, %c0_0] : memref<16x384xbf16, #tpu.memory_space<vmem>>, vector<16x384xbf16>
    %c0_1 = arith.constant 0 : index
    %c0_2 = arith.constant 0 : index
    %1 = vector.load %arg2[%c0_1, %c0_2] : memref<384x128xbf16, #tpu.memory_space<vmem>>, vector<384x128xbf16>
    %cst = arith.constant dense<0.000000e+00> : vector<16x128xf32>
    %2 = tpu.matmul %0, %1, %cst {dimension_numbers = #tpu.dot_dimension_numbers<[1], [0], [0], [1], [0, 0, 1, 1], [], []>} : vector<16x384xbf16>, vector<384x128xbf16>, vector<16x128xf32> -> vector<16x128xf32>
    %c0_3 = arith.constant 0 : index
    %c0_4 = arith.constant 0 : index
    %3 = vector.load %arg3[%c0_3, %c0_4] : memref<1x128xf32, #tpu.memory_space<vmem>>, vector<1x128xf32>
    %4 = vector.broadcast %3 : vector<1x128xf32> to vector<16x128xf32>
    %5 = arith.addf %2, %4 : vector<16x128xf32>
    %cst_5 = arith.constant 0.000000e+00 : f32
    %6 = vector.broadcast %cst_5 : f32 to vector<16x128xf32>
    %7 = arith.maximumf %5, %6 : vector<16x128xf32>
    %c0_6 = arith.constant 0 : index
    %c0_7 = arith.constant 0 : index
    %8 = vector.load %arg4[%c0_6, %c0_7] : memref<16x128xf32, #tpu.memory_space<vmem>>, vector<16x128xf32>
    tpu.vector_store %arg4[%c0_6, %c0_7], %7 {strides = array<i32>} : memref<16x128xf32, #tpu.memory_space<vmem>>, vector<16x128xf32>,
    return
  }
  func.func @transform_0(%arg0: i32) -> (i32, i32) {
    %c0_i32 = arith.constant 0 : i32
    %c0_i32_0 = arith.constant 0 : i32
    return %arg0, %c0_i32 : i32, i32
  }
  func.func @transform_1(%arg0: i32) -> (i32, i32) {
    %c0_i32 = arith.constant 0 : i32
    %c0_i32_0 = arith.constant 0 : i32
    %c0_i32_1 = arith.constant 0 : i32
    return %c0_i32, %c0_i32_0 : i32, i32
  }
  func.func @transform_2(%arg0: i32) -> (i32, i32) {
    %c0_i32 = arith.constant 0 : i32
    %c0_i32_0 = arith.constant 0 : i32
    %c0_i32_1 = arith.constant 0 : i32
    return %c0_i32, %c0_i32_0 : i32, i32
  }
  func.func @transform_3(%arg0: i32) -> (i32, i32) {
    %c0_i32 = arith.constant 0 : i32
    %c0_i32_0 = arith.constant 0 : i32
    return %arg0, %c0_i32 : i32, i32
  }
}

module attributes {stable_mosaic.version = 11 : i64} {
  func.func @_mm_single_kernel(%arg0: i32, %arg1: memref<16x384xbf16, #tpu.memory_space<vmem>>, %arg2: memref<384x128xbf16, #tpu.memory_space<vmem>>, %arg3: memref<1x128xf32, #tpu.memory_space<vmem>>, %arg4: memref<16x128xf32, #tpu.memory_space<vmem>>) attributes {dimension_semantics = [#tpu.dimension_semantics<parallel>], iteration_bounds = array<i64: 1>, scalar_prefetch = 0 : i64, scratch_operands = 0 : i64, tpu.core_type = #tpu.core_type<tc>, window_params = [{transform_indices = @transform_0, window_bounds = array<i64: 16, 384>}, {pipeline_mode = #tpu.pipeline_mode<synchronous>, transform_indices = @transform_1, window_bounds = array<i64: 384, 128>}, {pipeline_mode = #tpu.pipeline_mode<synchronous>, transform_indices = @transform_2, window_bounds = array<i64: 1, 128>}, {transform_indices = @transform_3, window_bounds = array<i64: 16, 128>}]} {
    %c0 = arith.constant 0 : index
    %c0_0 = arith.constant 0 : index
    %0 = vector.load %arg1[%c0, %c0_0] : memref<16x384xbf16, #tpu.memory_space<vmem>>, vector<16x384xbf16>
    %c0_1 = arith.constant 0 : index
    %c0_2 = arith.constant 0 : index
    %1 = vector.load %arg2[%c0_1, %c0_2] : memref<384x128xbf16, #tpu.memory_space<vmem>>, vector<384x128xbf16>
    %cst = arith.constant dense<0.000000e+00> : vector<16x128xf32>
    %2 = tpu.matmul %0, %1, %cst {dimension_numbers = #tpu.dot_dimension_numbers<[1], [0], [0], [1], [0, 0, 1, 1], [], []>} : vector<16x384xbf16>, vector<384x128xbf16>, vector<16x128xf32> -> vector<16x128xf32>
    %c0_3 = arith.constant 0 : index
    %c0_4 = arith.constant 0 : index
    %3 = vector.load %arg3[%c0_3, %c0_4] : memref<1x128xf32, #tpu.memory_space<vmem>>, vector<1x128xf32>
    %4 = vector.broadcast %3 : vector<1x128xf32> to vector<16x128xf32>
    %5 = arith.addf %2, %4 : vector<16x128xf32>
    %c0_5 = arith.constant 0 : index
    %c0_6 = arith.constant 0 : index
    %6 = vector.load %arg4[%c0_5, %c0_6] : memref<16x128xf32, #tpu.memory_space<vmem>>, vector<16x128xf32>
    tpu.vector_store %arg4[%c0_5, %c0_6], %5 {strides = array<i32>} : memref<16x128xf32, #tpu.memory_space<vmem>>, vector<16x128xf32>,
    return
  }
  func.func @transform_0(%arg0: i32) -> (i32, i32) {
    %c0_i32 = arith.constant 0 : i32
    %c0_i32_0 = arith.constant 0 : i32
    return %arg0, %c0_i32 : i32, i32
  }
  func.func @transform_1(%arg0: i32) -> (i32, i32) {
    %c0_i32 = arith.constant 0 : i32
    %c0_i32_0 = arith.constant 0 : i32
    %c0_i32_1 = arith.constant 0 : i32
    return %c0_i32, %c0_i32_0 : i32, i32
  }
  func.func @transform_2(%arg0: i32) -> (i32, i32) {
    %c0_i32 = arith.constant 0 : i32
    %c0_i32_0 = arith.constant 0 : i32
    %c0_i32_1 = arith.constant 0 : i32
    return %c0_i32, %c0_i32_0 : i32, i32
  }
  func.func @transform_3(%arg0: i32) -> (i32, i32) {
    %c0_i32 = arith.constant 0 : i32
    %c0_i32_0 = arith.constant 0 : i32
    return %arg0, %c0_i32 : i32, i32
  }
}

module attributes {stable_mosaic.version = 11 : i64} {
  func.func @_mm_single_kernel(%arg0: i32, %arg1: memref<16x640xbf16, #tpu.memory_space<vmem>>, %arg2: memref<640x128xbf16, #tpu.memory_space<vmem>>, %arg3: memref<1x128xf32, #tpu.memory_space<vmem>>, %arg4: memref<16x128xf32, #tpu.memory_space<vmem>>) attributes {dimension_semantics = [#tpu.dimension_semantics<parallel>], iteration_bounds = array<i64: 1>, scalar_prefetch = 0 : i64, scratch_operands = 0 : i64, tpu.core_type = #tpu.core_type<tc>, window_params = [{transform_indices = @transform_0, window_bounds = array<i64: 16, 640>}, {pipeline_mode = #tpu.pipeline_mode<synchronous>, transform_indices = @transform_1, window_bounds = array<i64: 640, 128>}, {pipeline_mode = #tpu.pipeline_mode<synchronous>, transform_indices = @transform_2, window_bounds = array<i64: 1, 128>}, {transform_indices = @transform_3, window_bounds = array<i64: 16, 128>}]} {
    %c0 = arith.constant 0 : index
    %c0_0 = arith.constant 0 : index
    %0 = vector.load %arg1[%c0, %c0_0] : memref<16x640xbf16, #tpu.memory_space<vmem>>, vector<16x640xbf16>
    %c0_1 = arith.constant 0 : index
    %c0_2 = arith.constant 0 : index
    %1 = vector.load %arg2[%c0_1, %c0_2] : memref<640x128xbf16, #tpu.memory_space<vmem>>, vector<640x128xbf16>
    %cst = arith.constant dense<0.000000e+00> : vector<16x128xf32>
    %2 = tpu.matmul %0, %1, %cst {dimension_numbers = #tpu.dot_dimension_numbers<[1], [0], [0], [1], [0, 0, 1, 1], [], []>} : vector<16x640xbf16>, vector<640x128xbf16>, vector<16x128xf32> -> vector<16x128xf32>
    %c0_3 = arith.constant 0 : index
    %c0_4 = arith.constant 0 : index
    %3 = vector.load %arg3[%c0_3, %c0_4] : memref<1x128xf32, #tpu.memory_space<vmem>>, vector<1x128xf32>
    %4 = vector.broadcast %3 : vector<1x128xf32> to vector<16x128xf32>
    %5 = arith.addf %2, %4 : vector<16x128xf32>
    %c0_5 = arith.constant 0 : index
    %c0_6 = arith.constant 0 : index
    %6 = vector.load %arg4[%c0_5, %c0_6] : memref<16x128xf32, #tpu.memory_space<vmem>>, vector<16x128xf32>
    tpu.vector_store %arg4[%c0_5, %c0_6], %5 {strides = array<i32>} : memref<16x128xf32, #tpu.memory_space<vmem>>, vector<16x128xf32>,
    return
  }
  func.func @transform_0(%arg0: i32) -> (i32, i32) {
    %c0_i32 = arith.constant 0 : i32
    %c0_i32_0 = arith.constant 0 : i32
    return %arg0, %c0_i32 : i32, i32
  }
  func.func @transform_1(%arg0: i32) -> (i32, i32) {
    %c0_i32 = arith.constant 0 : i32
    %c0_i32_0 = arith.constant 0 : i32
    %c0_i32_1 = arith.constant 0 : i32
    return %c0_i32, %c0_i32_0 : i32, i32
  }
  func.func @transform_2(%arg0: i32) -> (i32, i32) {
    %c0_i32 = arith.constant 0 : i32
    %c0_i32_0 = arith.constant 0 : i32
    %c0_i32_1 = arith.constant 0 : i32
    return %c0_i32, %c0_i32_0 : i32, i32
  }
  func.func @transform_3(%arg0: i32) -> (i32, i32) {
    %c0_i32 = arith.constant 0 : i32
    %c0_i32_0 = arith.constant 0 : i32
    return %arg0, %c0_i32 : i32, i32
  }
}

module attributes {stable_mosaic.version = 11 : i64} {
  func.func @_mm_ktiled_kernel(%arg0: i32, %arg1: i32, %arg2: memref<16x512xbf16, #tpu.memory_space<vmem>>, %arg3: memref<512x128xbf16, #tpu.memory_space<vmem>>, %arg4: memref<1x128xf32, #tpu.memory_space<vmem>>, %arg5: memref<16x128xf32, #tpu.memory_space<vmem>>, %arg6: memref<16x128xf32, #tpu.memory_space<vmem>>) attributes {dimension_semantics = [#tpu.dimension_semantics<parallel>, #tpu.dimension_semantics<arbitrary>], iteration_bounds = array<i64: 1, 3>, scalar_prefetch = 0 : i64, scratch_operands = 1 : i64, tpu.core_type = #tpu.core_type<tc>, window_params = [{transform_indices = @transform_0, window_bounds = array<i64: 16, 512>}, {transform_indices = @transform_1, window_bounds = array<i64: 512, 128>}, {pipeline_mode = #tpu.pipeline_mode<synchronous>, transform_indices = @transform_2, window_bounds = array<i64: 1, 128>}, {transform_indices = @transform_3, window_bounds = array<i64: 16, 128>}]} {
    %c0_i32 = arith.constant 0 : i32
    %0 = arith.cmpi eq, %arg1, %c0_i32 : i32
    %1 = arith.extui %0 : i1 to i32
    %c0_i32_0 = arith.constant 0 : i32
    %2 = arith.cmpi ne, %1, %c0_i32_0 : i32
    scf.if %2 {
      %cst_9 = arith.constant 0.000000e+00 : f32
      %12 = vector.broadcast %cst_9 : f32 to vector<16x128xf32>
      %c0_10 = arith.constant 0 : index
      %c0_11 = arith.constant 0 : index
      %13 = vector.load %arg6[%c0_10, %c0_11] : memref<16x128xf32, #tpu.memory_space<vmem>>, vector<16x128xf32>
      tpu.vector_store %arg6[%c0_10, %c0_11], %12 {strides = array<i32>} : memref<16x128xf32, #tpu.memory_space<vmem>>, vector<16x128xf32>,
    } else {
    }
    %c0 = arith.constant 0 : index
    %c0_1 = arith.constant 0 : index
    %3 = vector.load %arg6[%c0, %c0_1] : memref<16x128xf32, #tpu.memory_space<vmem>>, vector<16x128xf32>
    %c0_2 = arith.constant 0 : index
    %c0_3 = arith.constant 0 : index
    %4 = vector.load %arg2[%c0_2, %c0_3] : memref<16x512xbf16, #tpu.memory_space<vmem>>, vector<16x512xbf16>
    %c0_4 = arith.constant 0 : index
    %c0_5 = arith.constant 0 : index
    %5 = vector.load %arg3[%c0_4, %c0_5] : memref<512x128xbf16, #tpu.memory_space<vmem>>, vector<512x128xbf16>
    %cst = arith.constant dense<0.000000e+00> : vector<16x128xf32>
    %6 = tpu.matmul %4, %5, %cst {dimension_numbers = #tpu.dot_dimension_numbers<[1], [0], [0], [1], [0, 0, 1, 1], [], []>} : vector<16x512xbf16>, vector<512x128xbf16>, vector<16x128xf32> -> vector<16x128xf32>
    %7 = arith.addf %3, %6 : vector<16x128xf32>
    %c0_6 = arith.constant 0 : index
    %c0_7 = arith.constant 0 : index
    %8 = vector.load %arg6[%c0_6, %c0_7] : memref<16x128xf32, #tpu.memory_space<vmem>>, vector<16x128xf32>
    tpu.vector_store %arg6[%c0_6, %c0_7], %7 {strides = array<i32>} : memref<16x128xf32, #tpu.memory_space<vmem>>, vector<16x128xf32>,
    %c2_i32 = arith.constant 2 : i32
    %9 = arith.cmpi eq, %arg1, %c2_i32 : i32
    %10 = arith.extui %9 : i1 to i32
    %c0_i32_8 = arith.constant 0 : i32
    %11 = arith.cmpi ne, %10, %c0_i32_8 : i32
    scf.if %11 {
      %c0_9 = arith.constant 0 : index
      %c0_10 = arith.constant 0 : index
      %12 = vector.load %arg6[%c0_9, %c0_10] : memref<16x128xf32, #tpu.memory_space<vmem>>, vector<16x128xf32>
      %c0_11 = arith.constant 0 : index
      %c0_12 = arith.constant 0 : index
      %13 = vector.load %arg4[%c0_11, %c0_12] : memref<1x128xf32, #tpu.memory_space<vmem>>, vector<1x128xf32>
      %14 = vector.broadcast %13 : vector<1x128xf32> to vector<16x128xf32>
      %15 = arith.addf %12, %14 : vector<16x128xf32>
      %cst_13 = arith.constant 0.000000e+00 : f32
      %16 = vector.broadcast %cst_13 : f32 to vector<16x128xf32>
      %17 = arith.maximumf %15, %16 : vector<16x128xf32>
      %c0_14 = arith.constant 0 : index
      %c0_15 = arith.constant 0 : index
      %18 = vector.load %arg5[%c0_14, %c0_15] : memref<16x128xf32, #tpu.memory_space<vmem>>, vector<16x128xf32>
      tpu.vector_store %arg5[%c0_14, %c0_15], %17 {strides = array<i32>} : memref<16x128xf32, #tpu.memory_space<vmem>>, vector<16x128xf32>,
    } else {
    }
    return
  }
  func.func @transform_0(%arg0: i32, %arg1: i32) -> (i32, i32) {
    %c0_i32 = arith.constant 0 : i32
    return %arg0, %arg1 : i32, i32
  }
  func.func @transform_1(%arg0: i32, %arg1: i32) -> (i32, i32) {
    %c0_i32 = arith.constant 0 : i32
    %c0_i32_0 = arith.constant 0 : i32
    return %arg1, %c0_i32 : i32, i32
  }
  func.func @transform_2(%arg0: i32, %arg1: i32) -> (i32, i32) {
    %c0_i32 = arith.constant 0 : i32
    %c0_i32_0 = arith.constant 0 : i32
    %c0_i32_1 = arith.constant 0 : i32
    return %c0_i32, %c0_i32_0 : i32, i32
  }
  func.func @transform_3(%arg0: i32, %arg1: i32) -> (i32, i32) {
    %c0_i32 = arith.constant 0 : i32
    %c0_i32_0 = arith.constant 0 : i32
    return %arg0, %c0_i32 : i32, i32
  }
}

module attributes {stable_mosaic.version = 11 : i64} {
  func.func @_mm_ktiled_res_kernel(%arg0: i32, %arg1: i32, %arg2: memref<16x512xbf16, #tpu.memory_space<vmem>>, %arg3: memref<512x128xbf16, #tpu.memory_space<vmem>>, %arg4: memref<1x128xf32, #tpu.memory_space<vmem>>, %arg5: memref<16x128xf32, #tpu.memory_space<vmem>>, %arg6: memref<16x128xf32, #tpu.memory_space<vmem>>, %arg7: memref<16x128xf32, #tpu.memory_space<vmem>>) attributes {dimension_semantics = [#tpu.dimension_semantics<parallel>, #tpu.dimension_semantics<arbitrary>], iteration_bounds = array<i64: 1, 3>, scalar_prefetch = 0 : i64, scratch_operands = 1 : i64, tpu.core_type = #tpu.core_type<tc>, window_params = [{transform_indices = @transform_0, window_bounds = array<i64: 16, 512>}, {transform_indices = @transform_1, window_bounds = array<i64: 512, 128>}, {pipeline_mode = #tpu.pipeline_mode<synchronous>, transform_indices = @transform_2, window_bounds = array<i64: 1, 128>}, {transform_indices = @transform_3, window_bounds = array<i64: 16, 128>}, {transform_indices = @transform_4, window_bounds = array<i64: 16, 128>}]} {
    %c0_i32 = arith.constant 0 : i32
    %0 = arith.cmpi eq, %arg1, %c0_i32 : i32
    %1 = arith.extui %0 : i1 to i32
    %c0_i32_0 = arith.constant 0 : i32
    %2 = arith.cmpi ne, %1, %c0_i32_0 : i32
    scf.if %2 {
      %cst_9 = arith.constant 0.000000e+00 : f32
      %12 = vector.broadcast %cst_9 : f32 to vector<16x128xf32>
      %c0_10 = arith.constant 0 : index
      %c0_11 = arith.constant 0 : index
      %13 = vector.load %arg7[%c0_10, %c0_11] : memref<16x128xf32, #tpu.memory_space<vmem>>, vector<16x128xf32>
      tpu.vector_store %arg7[%c0_10, %c0_11], %12 {strides = array<i32>} : memref<16x128xf32, #tpu.memory_space<vmem>>, vector<16x128xf32>,
    } else {
    }
    %c0 = arith.constant 0 : index
    %c0_1 = arith.constant 0 : index
    %3 = vector.load %arg7[%c0, %c0_1] : memref<16x128xf32, #tpu.memory_space<vmem>>, vector<16x128xf32>
    %c0_2 = arith.constant 0 : index
    %c0_3 = arith.constant 0 : index
    %4 = vector.load %arg2[%c0_2, %c0_3] : memref<16x512xbf16, #tpu.memory_space<vmem>>, vector<16x512xbf16>
    %c0_4 = arith.constant 0 : index
    %c0_5 = arith.constant 0 : index
    %5 = vector.load %arg3[%c0_4, %c0_5] : memref<512x128xbf16, #tpu.memory_space<vmem>>, vector<512x128xbf16>
    %cst = arith.constant dense<0.000000e+00> : vector<16x128xf32>
    %6 = tpu.matmul %4, %5, %cst {dimension_numbers = #tpu.dot_dimension_numbers<[1], [0], [0], [1], [0, 0, 1, 1], [], []>} : vector<16x512xbf16>, vector<512x128xbf16>, vector<16x128xf32> -> vector<16x128xf32>
    %7 = arith.addf %3, %6 : vector<16x128xf32>
    %c0_6 = arith.constant 0 : index
    %c0_7 = arith.constant 0 : index
    %8 = vector.load %arg7[%c0_6, %c0_7] : memref<16x128xf32, #tpu.memory_space<vmem>>, vector<16x128xf32>
    tpu.vector_store %arg7[%c0_6, %c0_7], %7 {strides = array<i32>} : memref<16x128xf32, #tpu.memory_space<vmem>>, vector<16x128xf32>,
    %c2_i32 = arith.constant 2 : i32
    %9 = arith.cmpi eq, %arg1, %c2_i32 : i32
    %10 = arith.extui %9 : i1 to i32
    %c0_i32_8 = arith.constant 0 : i32
    %11 = arith.cmpi ne, %10, %c0_i32_8 : i32
    scf.if %11 {
      %c0_9 = arith.constant 0 : index
      %c0_10 = arith.constant 0 : index
      %12 = vector.load %arg7[%c0_9, %c0_10] : memref<16x128xf32, #tpu.memory_space<vmem>>, vector<16x128xf32>
      %c0_11 = arith.constant 0 : index
      %c0_12 = arith.constant 0 : index
      %13 = vector.load %arg4[%c0_11, %c0_12] : memref<1x128xf32, #tpu.memory_space<vmem>>, vector<1x128xf32>
      %14 = vector.broadcast %13 : vector<1x128xf32> to vector<16x128xf32>
      %15 = arith.addf %12, %14 : vector<16x128xf32>
      %c0_13 = arith.constant 0 : index
      %c0_14 = arith.constant 0 : index
      %16 = vector.load %arg5[%c0_13, %c0_14] : memref<16x128xf32, #tpu.memory_space<vmem>>, vector<16x128xf32>
      %17 = arith.addf %15, %16 : vector<16x128xf32>
      %cst_15 = arith.constant 0.000000e+00 : f32
      %18 = vector.broadcast %cst_15 : f32 to vector<16x128xf32>
      %19 = arith.maximumf %17, %18 : vector<16x128xf32>
      %c0_16 = arith.constant 0 : index
      %c0_17 = arith.constant 0 : index
      %20 = vector.load %arg6[%c0_16, %c0_17] : memref<16x128xf32, #tpu.memory_space<vmem>>, vector<16x128xf32>
      tpu.vector_store %arg6[%c0_16, %c0_17], %19 {strides = array<i32>} : memref<16x128xf32, #tpu.memory_space<vmem>>, vector<16x128xf32>,
    } else {
    }
    return
  }
  func.func @transform_0(%arg0: i32, %arg1: i32) -> (i32, i32) {
    %c0_i32 = arith.constant 0 : i32
    return %arg0, %arg1 : i32, i32
  }
  func.func @transform_1(%arg0: i32, %arg1: i32) -> (i32, i32) {
    %c0_i32 = arith.constant 0 : i32
    %c0_i32_0 = arith.constant 0 : i32
    return %arg1, %c0_i32 : i32, i32
  }
  func.func @transform_2(%arg0: i32, %arg1: i32) -> (i32, i32) {
    %c0_i32 = arith.constant 0 : i32
    %c0_i32_0 = arith.constant 0 : i32
    %c0_i32_1 = arith.constant 0 : i32
    return %c0_i32, %c0_i32_0 : i32, i32
  }
  func.func @transform_3(%arg0: i32, %arg1: i32) -> (i32, i32) {
    %c0_i32 = arith.constant 0 : i32
    %c0_i32_0 = arith.constant 0 : i32
    return %arg0, %c0_i32 : i32, i32
  }
  func.func @transform_4(%arg0: i32, %arg1: i32) -> (i32, i32) {
    %c0_i32 = arith.constant 0 : i32
    %c0_i32_0 = arith.constant 0 : i32
    return %arg0, %c0_i32 : i32, i32
  }
}

</mosaic_0001>

<llo_original>
// kernel: dct_stream_forward.44
$region0: #{dct_stream_forward.44}
  #allocation0 [shape = 'u32[]', space=smem, size = 0x4, offset = 0x4, fixed_abs, tag = 'smem constant byte address 0x4 - core index']
  #allocation1 [shape = 'u32[144,128]{1,0:T(1,128)}', space=vmem, size = 0x12000, scoped, tag = 'internal scratch']
  %s0 = inlined_call_operand.vmem [shape: bf16[2048,256], index: 0, kind: input, shape index: {}]
  %s1 = inlined_call_operand.vmem [shape: bf16[256,128], index: 1, kind: input, shape index: {}]
  %s2 = inlined_call_operand.vmem [shape: f32[1,128], index: 2, kind: input, shape index: {}]
  %s3 = inlined_call_operand.vmem [shape: f32[2048,128], index: 3, kind: output, shape index: {}]
  %s4 = sld [smem:[#allocation0]]
  $region45: #{dct_stream_forward.44} parent=0
    _
  %s6 = ssub.s32 1, %s4
  %s7 = scalar_select 0, %s6, %s4
  loop: start=0, step=1, limit=18
  $region2: #{dct_stream_forward.44} parent=0 // loop_pre_header
    _
  $region3: #{dct_stream_forward.44} parent=0 // loop_header
    %s9 = sphi 0, %s13
    %p10 = scmp.ge.s32.totalorder %s9, 18
    %s19 = sphi 0, %s21
    %s22 = sphi 0, %s19
    %s23 = sphi 0, %s22
    %s39 = sphi 0, %s23
    %s43 = sphi 0, %s43
    %s45 = sphi 0, %s43
    %s46 = sphi 0, %s45
    %s60 = sphi 0, %s46
    %s64 = sphi 0, %s64
    %s66 = sphi 0, %s64
    %s67 = sphi 0, %s66
    %s81 = sphi 0, %s67
    %s87 = sphi 0, %s89
    %s90 = sphi 0, %s87
    %s91 = sphi 0, %s90
    %s107 = sphi 0, %s91
  $region4: #{dct_stream_forward.44} parent=0 // loop_header_branch
    %12 = sbr.rel (%p10) target = $region8
  $region5: #{dct_stream_forward.44} parent=0 // loop_body
    %s14 = ssub.s32 %s9, 1
    %s15 = ssub.s32 %s9, 2
    %s16 = sadd.s32 %s9, 1
    %s17 = ssub.s32 %s9, %s16
    %p18 = scmp.eq.s32.totalorder %s17, 0
    %s20 = sadd.s32 %s19, 1
    %s21 = scalar_select %p18, %s19, %s20
    %p24 = pneg %p18
    %p25 = scmp.eq.s32.totalorder %s9, 15
    %p26 = por %p24, %p25
    %p27 = scmp.ne.s32.totalorder %s19, %s22
    %p28 = scmp.eq.s32.totalorder %s9, 0
    %p29 = por %p27, %p28
    %p30 = scmp.ne.s32.totalorder %s19, %s22
    %p31 = scmp.eq.s32.totalorder %s14, 15
    %p32 = por %p30, %p31
    %p33 = scmp.ne.s32.totalorder %s22, %s23
    %p34 = scmp.eq.s32.totalorder %s14, 0
    %p35 = por %p33, %p34
    %p36 = scmp.ne.s32.totalorder %s22, %s23
    %p37 = scmp.eq.s32.totalorder %s15, 15
    %p38 = por %p36, %p37
    %p40 = scmp.ne.s32.totalorder %s23, %s39
    %p41 = scmp.eq.s32.totalorder %s15, 0
    %p42 = por %p40, %p41
    %s44 = sadd.s32 %s43, 1
    %p47 = scmp.eq.s32.totalorder %s9, 15
    %p48 = scmp.ne.s32.totalorder %s43, %s45
    %p49 = scmp.eq.s32.totalorder %s9, 0
    %p50 = por %p48, %p49
    %p51 = scmp.ne.s32.totalorder %s43, %s45
    %p52 = scmp.eq.s32.totalorder %s14, 15
    %p53 = por %p51, %p52
    %p54 = scmp.ne.s32.totalorder %s45, %s46
    %p55 = scmp.eq.s32.totalorder %s14, 0
    %p56 = por %p54, %p55
    %p57 = scmp.ne.s32.totalorder %s45, %s46
    %p58 = scmp.eq.s32.totalorder %s15, 15
    %p59 = por %p57, %p58
    %p61 = scmp.ne.s32.totalorder %s46, %s60
    %p62 = scmp.eq.s32.totalorder %s15, 0
    %p63 = por %p61, %p62
    %s65 = sadd.s32 %s64, 1
    %p68 = scmp.eq.s32.totalorder %s9, 15
    %p69 = scmp.ne.s32.totalorder %s64, %s66
    %p70 = scmp.eq.s32.totalorder %s9, 0
    %p71 = por %p69, %p70
    %p72 = scmp.ne.s32.totalorder %s64, %s66
    %p73 = scmp.eq.s32.totalorder %s14, 15
    %p74 = por %p72, %p73
    %p75 = scmp.ne.s32.totalorder %s66, %s67
    %p76 = scmp.eq.s32.totalorder %s14, 0
    %p77 = por %p75, %p76
    %p78 = scmp.ne.s32.totalorder %s66, %s67
    %p79 = scmp.eq.s32.totalorder %s15, 15
    %p80 = por %p78, %p79
    %p82 = scmp.ne.s32.totalorder %s67, %s81
    %p83 = scmp.eq.s32.totalorder %s15, 0
    %p84 = por %p82, %p83
    %s85 = ssub.s32 %s9, %s16
    %p86 = scmp.eq.s32.totalorder %s85, 0
    %s88 = sadd.s32 %s87, 1
    %s89 = scalar_select %p86, %s87, %s88
    %p92 = pneg %p86
    %p93 = scmp.eq.s32.totalorder %s9, 15
    %p94 = por %p92, %p93
    %p95 = scmp.ne.s32.totalorder %s87, %s90
    %p96 = scmp.eq.s32.totalorder %s9, 0
    %p97 = por %p95, %p96
    %p98 = scmp.ne.s32.totalorder %s87, %s90
    %p99 = scmp.eq.s32.totalorder %s14, 15
    %p100 = por %p98, %p99
    %p101 = scmp.ne.s32.totalorder %s90, %s91
    %p102 = scmp.eq.s32.totalorder %s14, 0
    %p103 = por %p101, %p102
    %p104 = scmp.ne.s32.totalorder %s90, %s91
    %p105 = scmp.eq.s32.totalorder %s15, 15
    %p106 = por %p104, %p105
    %p108 = scmp.ne.s32.totalorder %s91, %s107
    %p109 = scmp.eq.s32.totalorder %s15, 0
    %p110 = por %p108, %p109
    %p111 = scmp.le.s32.totalorder 1, %s9
    %p112 = scmp.lt.s32.totalorder %s9, 17
    %p113 = pnand %p111, %p112
    %p114 = pneg %p113
    // Predicated region
    $region9: #{dct_stream_forward.44} parent=5 // pred_check
      _
    $region10: #{dct_stream_forward.44} parent=5 // pred_check_branch
      %116 = sbr.rel (%p113) target = $region12
    $region11: #{dct_stream_forward.44} parent=5 // pred_region
      %s117 = ssub.s32 %s9, 1
      // Predicated region
      $region13: #{dct_stream_forward.44} parent=11 // pred_check
        %p118 = pneg %p56
      $region14: #{dct_stream_forward.44} parent=11 // pred_check_branch
        %120 = sbr.rel (%p118) target = $region16
      $region15: #{dct_stream_forward.44} parent=11 // pred_region
        _
      $region16: #{dct_stream_forward.44} parent=11 // pred_fallthru
        _
      // Predicated region
      $region17: #{dct_stream_forward.44} parent=11 // pred_check
        %p121 = pneg %p77
      $region18: #{dct_stream_forward.44} parent=11 // pred_check_branch
        %123 = sbr.rel (%p121) target = $region20
      $region19: #{dct_stream_forward.44} parent=11 // pred_region
        _
      $region20: #{dct_stream_forward.44} parent=11 // pred_fallthru
        _
    $region12: #{dct_stream_forward.44} parent=5 // pred_fallthru
      _
    %p124 = scmp.lt.s32.totalorder %s9, 16
    // Predicated region
    $region21: #{dct_stream_forward.44} parent=5 // pred_check
      %p125 = pneg %p124
    $region22: #{dct_stream_forward.44} parent=5 // pred_check_branch
      %127 = sbr.rel (%p125) target = $region24
    $region23: #{dct_stream_forward.44} parent=5 // pred_region
      // Predicated region
      $region25: #{dct_stream_forward.44} parent=23 // pred_check
        %p128 = pneg %p29
      $region26: #{dct_stream_forward.44} parent=23 // pred_check_branch
        %130 = sbr.rel (%p128) target = $region28
      $region27: #{dct_stream_forward.44} parent=23 // pred_region
        %s131 = smul.u32 16, %s9
        %p132 = scmp.lt.s32.totalorder %s131, 255
        %s133 = scalar_select %p132, %s131, 255
        %s134 = smul.addr %s133, 2
        %s135 = smul.addr %s134, 4
        %s136 = scalar_lea.vmem %s0, %s135
        %s137 = smul.u32 16, %s9
      $region28: #{dct_stream_forward.44} parent=23 // pred_fallthru
        _
    $region24: #{dct_stream_forward.44} parent=5 // pred_fallthru
      _
    %p138 = scmp.le.s32.totalorder 1, %s9
    %p139 = scmp.lt.s32.totalorder %s9, 17
    %p140 = pnand %p138, %p139
    %p141 = pneg %p140
    // Predicated region
    $region29: #{dct_stream_forward.44} parent=5 // pred_check
      _
    $region30: #{dct_stream_forward.44} parent=5 // pred_check_branch
      %143 = sbr.rel (%p140) target = $region32
    $region31: #{dct_stream_forward.44} parent=5 // pred_region
      %s144 = ssub.s32 %s9, 1
      %s145 = smul.u32 16, %s14
      %p146 = scmp.lt.s32.totalorder %s145, 255
      %s147 = scalar_select %p146, %s145, 255
      %s148 = smul.addr %s147, 2
      %s149 = smul.addr %s148, 4
      %s150 = scalar_lea.vmem %s0, %s149
      %p151 = pneg %p35
      %p152 = pneg %p32
      %p153 = pneg %p56
      %p154 = pneg %p53
      %p155 = pneg %p77
      %p156 = pneg %p74
      %p157 = pneg %p103
      %p158 = pneg %p100
      %s159 = smul.u32 16, %s14
      %p160 = scmp.lt.s32.totalorder %s159, 255
      %s161 = scalar_select %p160, %s159, 255
      %s162 = smul.addr %s161, 8
      %s163 = scalar_lea.vmem %s3, %s162
      %s164 = smul.u32 16, %s14
      %p165 = scmp.lt.s32.totalorder %s164, 255
      %s166 = scalar_select %p165, %s164, 255
      %s167 = smul.addr %s166, 2
      %s168 = smul.addr %s167, 4
      %s169 = scalar_lea.vmem %s0, %s168
      %s170 = smul.u32 16, %s14
      %s171 = smul.u32 16, %s14
      %p172 = scmp.lt.s32.totalorder %s171, 255
      %s173 = scalar_select %p172, %s171, 255
      %s174 = smul.addr %s173, 8
      %s175 = scalar_lea.vmem %s3, %s174
      %s176 = smul.u32 16, %s14
      %v178 = vld [vmem:[%s169] sm:$0xff]
      %v179 = vld [vmem:[%s169 + $0x8] sm:$0xff]
      %v180 = vld [vmem:[%s169 + $0x10] sm:$0xff]
      %v181 = vld [vmem:[%s169 + $0x18] sm:$0xff]
      %v182 = vld [vmem:[%s169 + $0x20] sm:$0xff]
      %v183 = vld [vmem:[%s169 + $0x28] sm:$0xff]
      %v184 = vld [vmem:[%s169 + $0x30] sm:$0xff]
      %v185 = vld [vmem:[%s169 + $0x38] sm:$0xff]
      %v186 = vld [vmem:[%s169 + $0x40] sm:$0xff]
      %v187 = vld [vmem:[%s169 + $0x48] sm:$0xff]
      %v188 = vld [vmem:[%s169 + $0x50] sm:$0xff]
      %v189 = vld [vmem:[%s169 + $0x58] sm:$0xff]
      %v190 = vld [vmem:[%s169 + $0x60] sm:$0xff]
      %v191 = vld [vmem:[%s169 + $0x68] sm:$0xff]
      %v192 = vld [vmem:[%s169 + $0x70] sm:$0xff]
      %v193 = vld [vmem:[%s169 + $0x78] sm:$0xff]
      %v194 = vld [vmem:[%s1] sm:$0xf]
      %v195 = vld [vmem:[%s1 + $0x4] sm:$0xf]
      %v196 = vld [vmem:[%s1 + $0x8] sm:$0xf]
      %v197 = vld [vmem:[%s1 + $0xc] sm:$0xf]
      %v198 = vld [vmem:[%s1 + $0x10] sm:$0xf]
      %v199 = vld [vmem:[%s1 + $0x14] sm:$0xf]
      %v200 = vld [vmem:[%s1 + $0x18] sm:$0xf]
      %v201 = vld [vmem:[%s1 + $0x1c] sm:$0xf]
      %v202 = vld [vmem:[%s1 + $0x20] sm:$0xf]
      %v203 = vld [vmem:[%s1 + $0x24] sm:$0xf]
      %v204 = vld [vmem:[%s1 + $0x28] sm:$0xf]
      %v205 = vld [vmem:[%s1 + $0x2c] sm:$0xf]
      %v206 = vld [vmem:[%s1 + $0x30] sm:$0xf]
      %v207 = vld [vmem:[%s1 + $0x34] sm:$0xf]
      %v208 = vld [vmem:[%s1 + $0x38] sm:$0xf]
      %v209 = vld [vmem:[%s1 + $0x3c] sm:$0xf]
      %v210 = vld [vmem:[%s1 + $0x40] sm:$0xf]
      %v211 = vld [vmem:[%s1 + $0x44] sm:$0xf]
      %v212 = vld [vmem:[%s1 + $0x48] sm:$0xf]
      %v213 = vld [vmem:[%s1 + $0x4c] sm:$0xf]
      %v214 = vld [vmem:[%s1 + $0x50] sm:$0xf]
      %v215 = vld [vmem:[%s1 + $0x54] sm:$0xf]
      %v216 = vld [vmem:[%s1 + $0x58] sm:$0xf]
      %v217 = vld [vmem:[%s1 + $0x5c] sm:$0xf]
      %v218 = vld [vmem:[%s1 + $0x60] sm:$0xf]
      %v219 = vld [vmem:[%s1 + $0x64] sm:$0xf]
      %v220 = vld [vmem:[%s1 + $0x68] sm:$0xf]
      %v221 = vld [vmem:[%s1 + $0x6c] sm:$0xf]
      %v222 = vld [vmem:[%s1 + $0x70] sm:$0xf]
      %v223 = vld [vmem:[%s1 + $0x74] sm:$0xf]
      %v224 = vld [vmem:[%s1 + $0x78] sm:$0xf]
      %v225 = vld [vmem:[%s1 + $0x7c] sm:$0xf]
      %v226 = vld [vmem:[%s2] sm:$0x1]
      %v228 = vlaneseq
      %v229 = vshrl.u32 %v228, 7
      %v230 = vsub.s32 0, %v229
      %v231 = vrot.slane %v226, %v230
      %v249 = vunpack.c.l.b16 %v178
      %v250 = vunpack.c.h.b16 %v178
      %v251 = vunpack.c.l.b16 %v179
      %v252 = vunpack.c.h.b16 %v179
      %v253 = vunpack.c.l.b16 %v180
      %v254 = vunpack.c.h.b16 %v180
      %v255 = vunpack.c.l.b16 %v181
      %v256 = vunpack.c.h.b16 %v181
      %v257 = vunpack.c.l.b16 %v182
      %v258 = vunpack.c.h.b16 %v182
      %v259 = vunpack.c.l.b16 %v183
      %v260 = vunpack.c.h.b16 %v183
      %v261 = vunpack.c.l.b16 %v184
      %v262 = vunpack.c.h.b16 %v184
      %v263 = vunpack.c.l.b16 %v185
      %v264 = vunpack.c.h.b16 %v185
      %v265 = vunpack.c.l.b16 %v186
      %v266 = vunpack.c.h.b16 %v186
      %v267 = vunpack.c.l.b16 %v187
      %v268 = vunpack.c.h.b16 %v187
      %v269 = vunpack.c.l.b16 %v188
      %v270 = vunpack.c.h.b16 %v188
      %v271 = vunpack.c.l.b16 %v189
      %v272 = vunpack.c.h.b16 %v189
      %v273 = vunpack.c.l.b16 %v190
      %v274 = vunpack.c.h.b16 %v190
      %v275 = vunpack.c.l.b16 %v191
      %v276 = vunpack.c.h.b16 %v191
      %v277 = vunpack.c.l.b16 %v192
      %v278 = vunpack.c.h.b16 %v192
      %v279 = vunpack.c.l.b16 %v193
      %v280 = vunpack.c.h.b16 %v193
      %v281 = vpack.c.b16 %v251, %v249
      %v282 = vpack.c.b16 %v252, %v250
      %v283 = vpack.c.b16 %v255, %v253
      %v284 = vpack.c.b16 %v256, %v254
      %v285 = vpack.c.b16 %v259, %v257
      %v286 = vpack.c.b16 %v260, %v258
      %v287 = vpack.c.b16 %v263, %v261
      %v288 = vpack.c.b16 %v264, %v262
      %v289 = vpack.c.b16 %v267, %v265
      %v290 = vpack.c.b16 %v268, %v266
      %v291 = vpack.c.b16 %v271, %v269
      %v292 = vpack.c.b16 %v272, %v270
      %v293 = vpack.c.b16 %v275, %v273
      %v294 = vpack.c.b16 %v276, %v274
      %v295 = vpack.c.b16 %v279, %v277
      %v296 = vpack.c.b16 %v280, %v278
      %v345 = vunpack.c.l.b16 %v194
      %v346 = vunpack.c.l.b16 %v195
      %v347 = vunpack.c.l.b16 %v196
      %v348 = vunpack.c.l.b16 %v197
      %v349 = vunpack.c.l.b16 %v198
      %v350 = vunpack.c.l.b16 %v199
      %v351 = vunpack.c.l.b16 %v200
      %v352 = vunpack.c.l.b16 %v201
      %v353 = vunpack.c.l.b16 %v202
      %v354 = vunpack.c.l.b16 %v203
      %v355 = vunpack.c.l.b16 %v204
      %v356 = vunpack.c.l.b16 %v205
      %v357 = vunpack.c.l.b16 %v206
      %v358 = vunpack.c.l.b16 %v207
      %v359 = vunpack.c.l.b16 %v208
      %v360 = vunpack.c.l.b16 %v209
      %v361 = vunpack.c.l.b16 %v210
      %v362 = vunpack.c.l.b16 %v211
      %v363 = vunpack.c.l.b16 %v212
      %v364 = vunpack.c.l.b16 %v213
      %v365 = vunpack.c.l.b16 %v214
      %v366 = vunpack.c.l.b16 %v215
      %v367 = vunpack.c.l.b16 %v216
      %v368 = vunpack.c.l.b16 %v217
      %v369 = vunpack.c.l.b16 %v218
      %v370 = vunpack.c.l.b16 %v219
      %v371 = vunpack.c.l.b16 %v220
      %v372 = vunpack.c.l.b16 %v221
      %v373 = vunpack.c.l.b16 %v222
      %v374 = vunpack.c.l.b16 %v223
      %v375 = vunpack.c.l.b16 %v224
      %v376 = vunpack.c.l.b16 %v225
      %v377 = vpack.c.b16 %v346, %v345
      %v378 = vpack.c.b16 %v348, %v347
      %v379 = vpack.c.b16 %v350, %v349
      %v380 = vpack.c.b16 %v352, %v351
      %v381 = vpack.c.b16 %v354, %v353
      %v382 = vpack.c.b16 %v356, %v355
      %v383 = vpack.c.b16 %v358, %v357
      %v384 = vpack.c.b16 %v360, %v359
      %v385 = vpack.c.b16 %v362, %v361
      %v386 = vpack.c.b16 %v364, %v363
      %v387 = vpack.c.b16 %v366, %v365
      %v388 = vpack.c.b16 %v368, %v367
      %v389 = vpack.c.b16 %v370, %v369
      %v390 = vpack.c.b16 %v372, %v371
      %v391 = vpack.c.b16 %v374, %v373
      %v392 = vpack.c.b16 %v376, %v375
      %409 = vmatprep.subr.bf16.mxu0 0
      %410 = vmatpush1.bf16.msra.mxu0 %v377
      %411 = vmatprep.subr.bf16.mxu0 0
      %412 = vmatpush1.bf16.msra.mxu0 %v378
      %413 = vmatprep.subr.bf16.mxu0 0
      %414 = vmatpush1.bf16.msra.mxu0 %v379
      %415 = vmatprep.subr.bf16.mxu0 0
      %416 = vmatpush1.bf16.msra.mxu0 %v380
      %417 = vmatprep.subr.bf16.mxu0 0
      %418 = vmatpush1.bf16.msra.mxu0 %v381
      %419 = vmatprep.subr.bf16.mxu0 0
      %420 = vmatpush1.bf16.msra.mxu0 %v382
      %421 = vmatprep.subr.bf16.mxu0 0
      %422 = vmatpush1.bf16.msra.mxu0 %v383
      %423 = vmatprep.subr.bf16.mxu0 0
      %424 = vmatpush1.bf16.msra.mxu0 %v384
      %425 = vmatprep.subr.bf16.mxu0 0
      %426 = vmatpush1.bf16.msra.mxu0 %v385
      %427 = vmatprep.subr.bf16.mxu0 0
      %428 = vmatpush1.bf16.msra.mxu0 %v386
      %429 = vmatprep.subr.bf16.mxu0 0
      %430 = vmatpush1.bf16.msra.mxu0 %v387
      %431 = vmatprep.subr.bf16.mxu0 0
      %432 = vmatpush1.bf16.msra.mxu0 %v388
      %433 = vmatprep.subr.bf16.mxu0 0
      %434 = vmatpush1.bf16.msra.mxu0 %v389
      %435 = vmatprep.subr.bf16.mxu0 0
      %436 = vmatpush1.bf16.msra.mxu0 %v390
      %437 = vmatprep.subr.bf16.mxu0 0
      %438 = vmatpush1.bf16.msra.mxu0 %v391
      %439 = vmatprep.subr.bf16.mxu0 0
      %440 = vmatpush1.bf16.msra.mxu0 %v392
      %441 = vmatprep.mubr.bf16.mxu0 %v282
      %442 = vmatmul.mubr.bf16.gmra.mrb[0].mxu0 %v281
      %v443 = vpop.f32.mrb[0].mxu0
      %v444 = vadd.f32 %v231, %v443
      %v445 = vpop.f32.mrb[0].mxu0
      %v446 = vpop.f32.mrb[0].mxu0
      %v447 = vadd.f32 %v231, %v446
      %v448 = vpop.f32.mrb[0].mxu0
      %449 = vmatprep.mubr.bf16.mxu0 %v284
      %450 = vmatmul.mubr.bf16.gmra.mrb[0].mxu0 %v283
      %v451 = vpop.f32.mrb[0].mxu0
      %v452 = vadd.f32 %v231, %v451
      %v453 = vpop.f32.mrb[0].mxu0
      %v454 = vpop.f32.mrb[0].mxu0
      %v455 = vadd.f32 %v231, %v454
      %v456 = vpop.f32.mrb[0].mxu0
      %457 = vmatprep.mubr.bf16.mxu0 %v286
      %458 = vmatmul.mubr.bf16.gmra.mrb[0].mxu0 %v285
      %v459 = vpop.f32.mrb[0].mxu0
      %v460 = vadd.f32 %v231, %v459
      %v461 = vpop.f32.mrb[0].mxu0
      %v462 = vpop.f32.mrb[0].mxu0
      %v463 = vadd.f32 %v231, %v462
      %v464 = vpop.f32.mrb[0].mxu0
      %465 = vmatprep.mubr.bf16.mxu0 %v288
      %466 = vmatmul.mubr.bf16.gmra.mrb[0].mxu0 %v287
      %v467 = vpop.f32.mrb[0].mxu0
      %v468 = vadd.f32 %v231, %v467
      %v469 = vpop.f32.mrb[0].mxu0
      %v470 = vpop.f32.mrb[0].mxu0
      %v471 = vadd.f32 %v231, %v470
      %v472 = vpop.f32.mrb[0].mxu0
      %473 = vmatprep.mubr.bf16.mxu0 %v290
      %474 = vmatmul.mubr.bf16.gmra.mrb[0].mxu0 %v289
      %v475 = vpop.f32.mrb[0].mxu0
      %v476 = vadd.f32 %v231, %v475
      %v477 = vpop.f32.mrb[0].mxu0
      %v478 = vpop.f32.mrb[0].mxu0
      %v479 = vadd.f32 %v231, %v478
      %v480 = vpop.f32.mrb[0].mxu0
      %481 = vmatprep.mubr.bf16.mxu0 %v292
      %482 = vmatmul.mubr.bf16.gmra.mrb[0].mxu0 %v291
      %v483 = vpop.f32.mrb[0].mxu0
      %v484 = vadd.f32 %v231, %v483
      %v485 = vpop.f32.mrb[0].mxu0
      %v486 = vpop.f32.mrb[0].mxu0
      %v487 = vadd.f32 %v231, %v486
      %v488 = vpop.f32.mrb[0].mxu0
      %489 = vmatprep.mubr.bf16.mxu0 %v294
      %490 = vmatmul.mubr.bf16.gmra.mrb[0].mxu0 %v293
      %v491 = vpop.f32.mrb[0].mxu0
      %v492 = vadd.f32 %v231, %v491
      %v493 = vpop.f32.mrb[0].mxu0
      %v494 = vpop.f32.mrb[0].mxu0
      %v495 = vadd.f32 %v231, %v494
      %v496 = vpop.f32.mrb[0].mxu0
      %497 = vmatprep.mubr.bf16.mxu0 %v296
      %498 = vmatmul.mubr.bf16.gmra.mrb[0].mxu0 %v295
      %v499 = vpop.f32.mrb[0].mxu0
      %v500 = vadd.f32 %v231, %v499
      %v501 = vpop.f32.mrb[0].mxu0
      %v502 = vpop.f32.mrb[0].mxu0
      %v503 = vadd.f32 %v231, %v502
      %v504 = vpop.f32.mrb[0].mxu0
      %505 = vdwg.mxu0
      %v506 = vmax.f32 %v444, 0.0
      %v507 = vmax.f32 %v447, 0.0
      %v508 = vmax.f32 %v452, 0.0
      %v509 = vmax.f32 %v455, 0.0
      %v510 = vmax.f32 %v460, 0.0
      %v511 = vmax.f32 %v463, 0.0
      %v512 = vmax.f32 %v468, 0.0
      %v513 = vmax.f32 %v471, 0.0
      %v514 = vmax.f32 %v476, 0.0
      %v515 = vmax.f32 %v479, 0.0
      %v516 = vmax.f32 %v484, 0.0
      %v517 = vmax.f32 %v487, 0.0
      %v518 = vmax.f32 %v492, 0.0
      %v519 = vmax.f32 %v495, 0.0
      %v520 = vmax.f32 %v500, 0.0
      %v521 = vmax.f32 %v503, 0.0
      %522 = vst [vmem:[%s175] sm:$0xff] %v506
      %523 = vst [vmem:[%s175 + $0x8] sm:$0xff] %v507
      %524 = vst [vmem:[%s175 + $0x10] sm:$0xff] %v508
      %525 = vst [vmem:[%s175 + $0x18] sm:$0xff] %v509
      %526 = vst [vmem:[%s175 + $0x20] sm:$0xff] %v510
      %527 = vst [vmem:[%s175 + $0x28] sm:$0xff] %v511
      %528 = vst [vmem:[%s175 + $0x30] sm:$0xff] %v512
      %529 = vst [vmem:[%s175 + $0x38] sm:$0xff] %v513
      %530 = vst [vmem:[%s175 + $0x40] sm:$0xff] %v514
      %531 = vst [vmem:[%s175 + $0x48] sm:$0xff] %v515
      %532 = vst [vmem:[%s175 + $0x50] sm:$0xff] %v516
      %533 = vst [vmem:[%s175 + $0x58] sm:$0xff] %v517
      %534 = vst [vmem:[%s175 + $0x60] sm:$0xff] %v518
      %535 = vst [vmem:[%s175 + $0x68] sm:$0xff] %v519
      %536 = vst [vmem:[%s175 + $0x70] sm:$0xff] %v520
      %537 = vst [vmem:[%s175 + $0x78] sm:$0xff] %v521
      %s538 = smul.u32 16, %s14
      %p539 = scmp.lt.s32.totalorder %s538, 255
      %s540 = scalar_select %p539, %s538, 255
      %s541 = smul.addr %s540, 8
      %s542 = scalar_lea.vmem %s3, %s541
      // Predicated region
      $region33: #{dct_stream_forward.44} parent=31 // pred_check
        %p543 = pneg %p100
      $region34: #{dct_stream_forward.44} parent=31 // pred_check_branch
        %545 = sbr.rel (%p543) target = $region36
      $region35: #{dct_stream_forward.44} parent=31 // pred_region
        %s546 = smul.u32 16, %s14
      $region36: #{dct_stream_forward.44} parent=31 // pred_fallthru
        _
    $region32: #{dct_stream_forward.44} parent=5 // pred_fallthru
      _
    %p547 = scmp.le.s32.totalorder 2, %s9
    // Predicated region
    $region37: #{dct_stream_forward.44} parent=5 // pred_check
      %p548 = pneg %p547
    $region38: #{dct_stream_forward.44} parent=5 // pred_check_branch
      %550 = sbr.rel (%p548) target = $region40
    $region39: #{dct_stream_forward.44} parent=5 // pred_region
      %s551 = ssub.s32 %s9, 2
      // Predicated region
      $region41: #{dct_stream_forward.44} parent=39 // pred_check
        %p552 = pneg %p106
      $region42: #{dct_stream_forward.44} parent=39 // pred_check_branch
        %554 = sbr.rel (%p552) target = $region44
      $region43: #{dct_stream_forward.44} parent=39 // pred_region
        %s555 = smul.u32 16, %s15
        %p556 = scmp.lt.s32.totalorder %s555, 255
        %s557 = scalar_select %p556, %s555, 255
        %s558 = smul.addr %s557, 8
        %s559 = scalar_lea.vmem %s3, %s558
      $region44: #{dct_stream_forward.44} parent=39 // pred_fallthru
        _
    $region40: #{dct_stream_forward.44} parent=5 // pred_fallthru
      _
  $region6: #{dct_stream_forward.44} parent=0 // loop_footer
    %s13 = sadd.s32 1, %s9
  $region7: #{dct_stream_forward.44} parent=0 // loop_footer_branch
    %8 = sbr.rel target = $region3
  $region8: #{dct_stream_forward.44} parent=0 // loop_exit
    _

// kernel: dct_stream_forward.45
$region0: #{dct_stream_forward.45}
  #allocation0 [shape = 'u32[]', space=smem, size = 0x4, offset = 0x4, fixed_abs, tag = 'smem constant byte address 0x4 - core index']
  #allocation1 [shape = 'u32[144,128]{1,0:T(1,128)}', space=vmem, size = 0x12000, scoped, tag = 'internal scratch']
  %s0 = inlined_call_operand.vmem [shape: bf16[2048,128], index: 0, kind: input, shape index: {}]
  %s1 = inlined_call_operand.vmem [shape: bf16[128,128], index: 1, kind: input, shape index: {}]
  %s2 = inlined_call_operand.vmem [shape: f32[1,128], index: 2, kind: input, shape index: {}]
  %s3 = inlined_call_operand.vmem [shape: f32[2048,128], index: 3, kind: output, shape index: {}]
  %s4 = sld [smem:[#allocation0]]
  $region45: #{dct_stream_forward.45} parent=0
    _
  %s6 = ssub.s32 1, %s4
  %s7 = scalar_select 0, %s6, %s4
  loop: start=0, step=1, limit=18
  $region2: #{dct_stream_forward.45} parent=0 // loop_pre_header
    _
  $region3: #{dct_stream_forward.45} parent=0 // loop_header
    %s9 = sphi 0, %s13
    %p10 = scmp.ge.s32.totalorder %s9, 18
    %s19 = sphi 0, %s21
    %s22 = sphi 0, %s19
    %s23 = sphi 0, %s22
    %s39 = sphi 0, %s23
    %s43 = sphi 0, %s43
    %s45 = sphi 0, %s43
    %s46 = sphi 0, %s45
    %s60 = sphi 0, %s46
    %s64 = sphi 0, %s64
    %s66 = sphi 0, %s64
    %s67 = sphi 0, %s66
    %s81 = sphi 0, %s67
    %s87 = sphi 0, %s89
    %s90 = sphi 0, %s87
    %s91 = sphi 0, %s90
    %s107 = sphi 0, %s91
  $region4: #{dct_stream_forward.45} parent=0 // loop_header_branch
    %12 = sbr.rel (%p10) target = $region8
  $region5: #{dct_stream_forward.45} parent=0 // loop_body
    %s14 = ssub.s32 %s9, 1
    %s15 = ssub.s32 %s9, 2
    %s16 = sadd.s32 %s9, 1
    %s17 = ssub.s32 %s9, %s16
    %p18 = scmp.eq.s32.totalorder %s17, 0
    %s20 = sadd.s32 %s19, 1
    %s21 = scalar_select %p18, %s19, %s20
    %p24 = pneg %p18
    %p25 = scmp.eq.s32.totalorder %s9, 15
    %p26 = por %p24, %p25
    %p27 = scmp.ne.s32.totalorder %s19, %s22
    %p28 = scmp.eq.s32.totalorder %s9, 0
    %p29 = por %p27, %p28
    %p30 = scmp.ne.s32.totalorder %s19, %s22
    %p31 = scmp.eq.s32.totalorder %s14, 15
    %p32 = por %p30, %p31
    %p33 = scmp.ne.s32.totalorder %s22, %s23
    %p34 = scmp.eq.s32.totalorder %s14, 0
    %p35 = por %p33, %p34
    %p36 = scmp.ne.s32.totalorder %s22, %s23
    %p37 = scmp.eq.s32.totalorder %s15, 15
    %p38 = por %p36, %p37
    %p40 = scmp.ne.s32.totalorder %s23, %s39
    %p41 = scmp.eq.s32.totalorder %s15, 0
    %p42 = por %p40, %p41
    %s44 = sadd.s32 %s43, 1
    %p47 = scmp.eq.s32.totalorder %s9, 15
    %p48 = scmp.ne.s32.totalorder %s43, %s45
    %p49 = scmp.eq.s32.totalorder %s9, 0
    %p50 = por %p48, %p49
    %p51 = scmp.ne.s32.totalorder %s43, %s45
    %p52 = scmp.eq.s32.totalorder %s14, 15
    %p53 = por %p51, %p52
    %p54 = scmp.ne.s32.totalorder %s45, %s46
    %p55 = scmp.eq.s32.totalorder %s14, 0
    %p56 = por %p54, %p55
    %p57 = scmp.ne.s32.totalorder %s45, %s46
    %p58 = scmp.eq.s32.totalorder %s15, 15
    %p59 = por %p57, %p58
    %p61 = scmp.ne.s32.totalorder %s46, %s60
    %p62 = scmp.eq.s32.totalorder %s15, 0
    %p63 = por %p61, %p62
    %s65 = sadd.s32 %s64, 1
    %p68 = scmp.eq.s32.totalorder %s9, 15
    %p69 = scmp.ne.s32.totalorder %s64, %s66
    %p70 = scmp.eq.s32.totalorder %s9, 0
    %p71 = por %p69, %p70
    %p72 = scmp.ne.s32.totalorder %s64, %s66
    %p73 = scmp.eq.s32.totalorder %s14, 15
    %p74 = por %p72, %p73
    %p75 = scmp.ne.s32.totalorder %s66, %s67
    %p76 = scmp.eq.s32.totalorder %s14, 0
    %p77 = por %p75, %p76
    %p78 = scmp.ne.s32.totalorder %s66, %s67
    %p79 = scmp.eq.s32.totalorder %s15, 15
    %p80 = por %p78, %p79
    %p82 = scmp.ne.s32.totalorder %s67, %s81
    %p83 = scmp.eq.s32.totalorder %s15, 0
    %p84 = por %p82, %p83
    %s85 = ssub.s32 %s9, %s16
    %p86 = scmp.eq.s32.totalorder %s85, 0
    %s88 = sadd.s32 %s87, 1
    %s89 = scalar_select %p86, %s87, %s88
    %p92 = pneg %p86
    %p93 = scmp.eq.s32.totalorder %s9, 15
    %p94 = por %p92, %p93
    %p95 = scmp.ne.s32.totalorder %s87, %s90
    %p96 = scmp.eq.s32.totalorder %s9, 0
    %p97 = por %p95, %p96
    %p98 = scmp.ne.s32.totalorder %s87, %s90
    %p99 = scmp.eq.s32.totalorder %s14, 15
    %p100 = por %p98, %p99
    %p101 = scmp.ne.s32.totalorder %s90, %s91
    %p102 = scmp.eq.s32.totalorder %s14, 0
    %p103 = por %p101, %p102
    %p104 = scmp.ne.s32.totalorder %s90, %s91
    %p105 = scmp.eq.s32.totalorder %s15, 15
    %p106 = por %p104, %p105
    %p108 = scmp.ne.s32.totalorder %s91, %s107
    %p109 = scmp.eq.s32.totalorder %s15, 0
    %p110 = por %p108, %p109
    %p111 = scmp.le.s32.totalorder 1, %s9
    %p112 = scmp.lt.s32.totalorder %s9, 17
    %p113 = pnand %p111, %p112
    %p114 = pneg %p113
    // Predicated region
    $region9: #{dct_stream_forward.45} parent=5 // pred_check
      _
    $region10: #{dct_stream_forward.45} parent=5 // pred_check_branch
      %116 = sbr.rel (%p113) target = $region12
    $region11: #{dct_stream_forward.45} parent=5 // pred_region
      %s117 = ssub.s32 %s9, 1
      // Predicated region
      $region13: #{dct_stream_forward.45} parent=11 // pred_check
        %p118 = pneg %p56
      $region14: #{dct_stream_forward.45} parent=11 // pred_check_branch
        %120 = sbr.rel (%p118) target = $region16
      $region15: #{dct_stream_forward.45} parent=11 // pred_region
        _
      $region16: #{dct_stream_forward.45} parent=11 // pred_fallthru
        _
      // Predicated region
      $region17: #{dct_stream_forward.45} parent=11 // pred_check
        %p121 = pneg %p77
      $region18: #{dct_stream_forward.45} parent=11 // pred_check_branch
        %123 = sbr.rel (%p121) target = $region20
      $region19: #{dct_stream_forward.45} parent=11 // pred_region
        _
      $region20: #{dct_stream_forward.45} parent=11 // pred_fallthru
        _
    $region12: #{dct_stream_forward.45} parent=5 // pred_fallthru
      _
    %p124 = scmp.lt.s32.totalorder %s9, 16
    // Predicated region
    $region21: #{dct_stream_forward.45} parent=5 // pred_check
      %p125 = pneg %p124
    $region22: #{dct_stream_forward.45} parent=5 // pred_check_branch
      %127 = sbr.rel (%p125) target = $region24
    $region23: #{dct_stream_forward.45} parent=5 // pred_region
      // Predicated region
      $region25: #{dct_stream_forward.45} parent=23 // pred_check
        %p128 = pneg %p29
      $region26: #{dct_stream_forward.45} parent=23 // pred_check_branch
        %130 = sbr.rel (%p128) target = $region28
      $region27: #{dct_stream_forward.45} parent=23 // pred_region
        %s131 = smul.u32 16, %s9
        %p132 = scmp.lt.s32.totalorder %s131, 255
        %s133 = scalar_select %p132, %s131, 255
        %s134 = smul.addr %s133, 4
        %s135 = scalar_lea.vmem %s0, %s134
        %s136 = smul.u32 16, %s9
      $region28: #{dct_stream_forward.45} parent=23 // pred_fallthru
        _
    $region24: #{dct_stream_forward.45} parent=5 // pred_fallthru
      _
    %p137 = scmp.le.s32.totalorder 1, %s9
    %p138 = scmp.lt.s32.totalorder %s9, 17
    %p139 = pnand %p137, %p138
    %p140 = pneg %p139
    // Predicated region
    $region29: #{dct_stream_forward.45} parent=5 // pred_check
      _
    $region30: #{dct_stream_forward.45} parent=5 // pred_check_branch
      %142 = sbr.rel (%p139) target = $region32
    $region31: #{dct_stream_forward.45} parent=5 // pred_region
      %s143 = ssub.s32 %s9, 1
      %s144 = smul.u32 16, %s14
      %p145 = scmp.lt.s32.totalorder %s144, 255
      %s146 = scalar_select %p145, %s144, 255
      %s147 = smul.addr %s146, 4
      %s148 = scalar_lea.vmem %s0, %s147
      %p149 = pneg %p35
      %p150 = pneg %p32
      %p151 = pneg %p56
      %p152 = pneg %p53
      %p153 = pneg %p77
      %p154 = pneg %p74
      %p155 = pneg %p103
      %p156 = pneg %p100
      %s157 = smul.u32 16, %s14
      %p158 = scmp.lt.s32.totalorder %s157, 255
      %s159 = scalar_select %p158, %s157, 255
      %s160 = smul.addr %s159, 8
      %s161 = scalar_lea.vmem %s3, %s160
      %s162 = smul.u32 16, %s14
      %p163 = scmp.lt.s32.totalorder %s162, 255
      %s164 = scalar_select %p163, %s162, 255
      %s165 = smul.addr %s164, 4
      %s166 = scalar_lea.vmem %s0, %s165
      %s167 = smul.u32 16, %s14
      %s168 = smul.u32 16, %s14
      %p169 = scmp.lt.s32.totalorder %s168, 255
      %s170 = scalar_select %p169, %s168, 255
      %s171 = smul.addr %s170, 8
      %s172 = scalar_lea.vmem %s3, %s171
      %s173 = smul.u32 16, %s14
      %v175 = vld [vmem:[%s166] sm:$0xf]
      %v176 = vld [vmem:[%s166 + $0x4] sm:$0xf]
      %v177 = vld [vmem:[%s166 + $0x8] sm:$0xf]
      %v178 = vld [vmem:[%s166 + $0xc] sm:$0xf]
      %v179 = vld [vmem:[%s166 + $0x10] sm:$0xf]
      %v180 = vld [vmem:[%s166 + $0x14] sm:$0xf]
      %v181 = vld [vmem:[%s166 + $0x18] sm:$0xf]
      %v182 = vld [vmem:[%s166 + $0x1c] sm:$0xf]
      %v183 = vld [vmem:[%s166 + $0x20] sm:$0xf]
      %v184 = vld [vmem:[%s166 + $0x24] sm:$0xf]
      %v185 = vld [vmem:[%s166 + $0x28] sm:$0xf]
      %v186 = vld [vmem:[%s166 + $0x2c] sm:$0xf]
      %v187 = vld [vmem:[%s166 + $0x30] sm:$0xf]
      %v188 = vld [vmem:[%s166 + $0x34] sm:$0xf]
      %v189 = vld [vmem:[%s166 + $0x38] sm:$0xf]
      %v190 = vld [vmem:[%s166 + $0x3c] sm:$0xf]
      %v191 = vld [vmem:[%s1] sm:$0xf]
      %v192 = vld [vmem:[%s1 + $0x4] sm:$0xf]
      %v193 = vld [vmem:[%s1 + $0x8] sm:$0xf]
      %v194 = vld [vmem:[%s1 + $0xc] sm:$0xf]
      %v195 = vld [vmem:[%s1 + $0x10] sm:$0xf]
      %v196 = vld [vmem:[%s1 + $0x14] sm:$0xf]
      %v197 = vld [vmem:[%s1 + $0x18] sm:$0xf]
      %v198 = vld [vmem:[%s1 + $0x1c] sm:$0xf]
      %v199 = vld [vmem:[%s1 + $0x20] sm:$0xf]
      %v200 = vld [vmem:[%s1 + $0x24] sm:$0xf]
      %v201 = vld [vmem:[%s1 + $0x28] sm:$0xf]
      %v202 = vld [vmem:[%s1 + $0x2c] sm:$0xf]
      %v203 = vld [vmem:[%s1 + $0x30] sm:$0xf]
      %v204 = vld [vmem:[%s1 + $0x34] sm:$0xf]
      %v205 = vld [vmem:[%s1 + $0x38] sm:$0xf]
      %v206 = vld [vmem:[%s1 + $0x3c] sm:$0xf]
      %v207 = vld [vmem:[%s2] sm:$0x1]
      %v209 = vlaneseq
      %v210 = vshrl.u32 %v209, 7
      %v211 = vsub.s32 0, %v210
      %v212 = vrot.slane %v207, %v211
      %v230 = vunpack.c.l.b16 %v175
      %v231 = vunpack.c.l.b16 %v176
      %v232 = vunpack.c.l.b16 %v177
      %v233 = vunpack.c.l.b16 %v178
      %v234 = vunpack.c.l.b16 %v179
      %v235 = vunpack.c.l.b16 %v180
      %v236 = vunpack.c.l.b16 %v181
      %v237 = vunpack.c.l.b16 %v182
      %v238 = vunpack.c.l.b16 %v183
      %v239 = vunpack.c.l.b16 %v184
      %v240 = vunpack.c.l.b16 %v185
      %v241 = vunpack.c.l.b16 %v186
      %v242 = vunpack.c.l.b16 %v187
      %v243 = vunpack.c.l.b16 %v188
      %v244 = vunpack.c.l.b16 %v189
      %v245 = vunpack.c.l.b16 %v190
      %v246 = vpack.c.b16 %v231, %v230
      %v247 = vpack.c.b16 %v233, %v232
      %v248 = vpack.c.b16 %v235, %v234
      %v249 = vpack.c.b16 %v237, %v236
      %v250 = vpack.c.b16 %v239, %v238
      %v251 = vpack.c.b16 %v241, %v240
      %v252 = vpack.c.b16 %v243, %v242
      %v253 = vpack.c.b16 %v245, %v244
      %v278 = vunpack.c.l.b16 %v191
      %v279 = vunpack.c.l.b16 %v192
      %v280 = vunpack.c.l.b16 %v193
      %v281 = vunpack.c.l.b16 %v194
      %v282 = vunpack.c.l.b16 %v195
      %v283 = vunpack.c.l.b16 %v196
      %v284 = vunpack.c.l.b16 %v197
      %v285 = vunpack.c.l.b16 %v198
      %v286 = vunpack.c.l.b16 %v199
      %v287 = vunpack.c.l.b16 %v200
      %v288 = vunpack.c.l.b16 %v201
      %v289 = vunpack.c.l.b16 %v202
      %v290 = vunpack.c.l.b16 %v203
      %v291 = vunpack.c.l.b16 %v204
      %v292 = vunpack.c.l.b16 %v205
      %v293 = vunpack.c.l.b16 %v206
      %v294 = vpack.c.b16 %v279, %v278
      %v295 = vpack.c.b16 %v281, %v280
      %v296 = vpack.c.b16 %v283, %v282
      %v297 = vpack.c.b16 %v285, %v284
      %v298 = vpack.c.b16 %v287, %v286
      %v299 = vpack.c.b16 %v289, %v288
      %v300 = vpack.c.b16 %v291, %v290
      %v301 = vpack.c.b16 %v293, %v292
      %310 = vmatprep.subr.bf16.mxu0 0
      %311 = vmatpush1.bf16.msra.mxu0 %v294
      %312 = vmatprep.subr.bf16.mxu0 0
      %313 = vmatpush1.bf16.msra.mxu0 %v295
      %314 = vmatprep.subr.bf16.mxu0 0
      %315 = vmatpush1.bf16.msra.mxu0 %v296
      %316 = vmatprep.subr.bf16.mxu0 0
      %317 = vmatpush1.bf16.msra.mxu0 %v297
      %318 = vmatprep.subr.bf16.mxu0 0
      %319 = vmatpush1.bf16.msra.mxu0 %v298
      %320 = vmatprep.subr.bf16.mxu0 0
      %321 = vmatpush1.bf16.msra.mxu0 %v299
      %322 = vmatprep.subr.bf16.mxu0 0
      %323 = vmatpush1.bf16.msra.mxu0 %v300
      %324 = vmatprep.subr.bf16.mxu0 0
      %325 = vmatpush1.bf16.msra.mxu0 %v301
      %326 = vmatprep.subr.bf16.mxu0 0
      %327 = vmatpush1.bf16.msra.mxu0 0
      %328 = vmatprep.subr.bf16.mxu0 0
      %329 = vmatpush1.bf16.msra.mxu0 0
      %330 = vmatprep.subr.bf16.mxu0 0
      %331 = vmatpush1.bf16.msra.mxu0 0
      %332 = vmatprep.subr.bf16.mxu0 0
      %333 = vmatpush1.bf16.msra.mxu0 0
      %334 = vmatprep.subr.bf16.mxu0 0
      %335 = vmatpush1.bf16.msra.mxu0 0
      %336 = vmatprep.subr.bf16.mxu0 0
      %337 = vmatpush1.bf16.msra.mxu0 0
      %338 = vmatprep.subr.bf16.mxu0 0
      %339 = vmatpush1.bf16.msra.mxu0 0
      %340 = vmatprep.subr.bf16.mxu0 0
      %341 = vmatpush1.bf16.msra.mxu0 0
      %342 = vmatprep.mubr.bf16.mxu0 0
      %343 = vmatmul.mubr.bf16.gmra.mrb[0].mxu0 %v246
      %v344 = vpop.f32.mrb[0].mxu0
      %v345 = vadd.f32 %v212, %v344
      %v346 = vpop.f32.mrb[0].mxu0
      %v347 = vpop.f32.mrb[0].mxu0
      %v348 = vadd.f32 %v212, %v347
      %v349 = vpop.f32.mrb[0].mxu0
      %350 = vmatprep.mubr.bf16.mxu0 0
      %351 = vmatmul.mubr.bf16.gmra.mrb[0].mxu0 %v247
      %v352 = vpop.f32.mrb[0].mxu0
      %v353 = vadd.f32 %v212, %v352
      %v354 = vpop.f32.mrb[0].mxu0
      %v355 = vpop.f32.mrb[0].mxu0
      %v356 = vadd.f32 %v212, %v355
      %v357 = vpop.f32.mrb[0].mxu0
      %358 = vmatprep.mubr.bf16.mxu0 0
      %359 = vmatmul.mubr.bf16.gmra.mrb[0].mxu0 %v248
      %v360 = vpop.f32.mrb[0].mxu0
      %v361 = vadd.f32 %v212, %v360
      %v362 = vpop.f32.mrb[0].mxu0
      %v363 = vpop.f32.mrb[0].mxu0
      %v364 = vadd.f32 %v212, %v363
      %v365 = vpop.f32.mrb[0].mxu0
      %366 = vmatprep.mubr.bf16.mxu0 0
      %367 = vmatmul.mubr.bf16.gmra.mrb[0].mxu0 %v249
      %v368 = vpop.f32.mrb[0].mxu0
      %v369 = vadd.f32 %v212, %v368
      %v370 = vpop.f32.mrb[0].mxu0
      %v371 = vpop.f32.mrb[0].mxu0
      %v372 = vadd.f32 %v212, %v371
      %v373 = vpop.f32.mrb[0].mxu0
      %374 = vmatprep.mubr.bf16.mxu0 0
      %375 = vmatmul.mubr.bf16.gmra.mrb[0].mxu0 %v250
      %v376 = vpop.f32.mrb[0].mxu0
      %v377 = vadd.f32 %v212, %v376
      %v378 = vpop.f32.mrb[0].mxu0
      %v379 = vpop.f32.mrb[0].mxu0
      %v380 = vadd.f32 %v212, %v379
      %v381 = vpop.f32.mrb[0].mxu0
      %382 = vmatprep.mubr.bf16.mxu0 0
      %383 = vmatmul.mubr.bf16.gmra.mrb[0].mxu0 %v251
      %v384 = vpop.f32.mrb[0].mxu0
      %v385 = vadd.f32 %v212, %v384
      %v386 = vpop.f32.mrb[0].mxu0
      %v387 = vpop.f32.mrb[0].mxu0
      %v388 = vadd.f32 %v212, %v387
      %v389 = vpop.f32.mrb[0].mxu0
      %390 = vmatprep.mubr.bf16.mxu0 0
      %391 = vmatmul.mubr.bf16.gmra.mrb[0].mxu0 %v252
      %v392 = vpop.f32.mrb[0].mxu0
      %v393 = vadd.f32 %v212, %v392
      %v394 = vpop.f32.mrb[0].mxu0
      %v395 = vpop.f32.mrb[0].mxu0
      %v396 = vadd.f32 %v212, %v395
      %v397 = vpop.f32.mrb[0].mxu0
      %398 = vmatprep.mubr.bf16.mxu0 0
      %399 = vmatmul.mubr.bf16.gmra.mrb[0].mxu0 %v253
      %v400 = vpop.f32.mrb[0].mxu0
      %v401 = vadd.f32 %v212, %v400
      %v402 = vpop.f32.mrb[0].mxu0
      %v403 = vpop.f32.mrb[0].mxu0
      %v404 = vadd.f32 %v212, %v403
      %v405 = vpop.f32.mrb[0].mxu0
      %406 = vdwg.mxu0
      %v407 = vmax.f32 %v345, 0.0
      %v408 = vmax.f32 %v348, 0.0
      %v409 = vmax.f32 %v353, 0.0
      %v410 = vmax.f32 %v356, 0.0
      %v411 = vmax.f32 %v361, 0.0
      %v412 = vmax.f32 %v364, 0.0
      %v413 = vmax.f32 %v369, 0.0
      %v414 = vmax.f32 %v372, 0.0
      %v415 = vmax.f32 %v377, 0.0
      %v416 = vmax.f32 %v380, 0.0
      %v417 = vmax.f32 %v385, 0.0
      %v418 = vmax.f32 %v388, 0.0
      %v419 = vmax.f32 %v393, 0.0
      %v420 = vmax.f32 %v396, 0.0
      %v421 = vmax.f32 %v401, 0.0
      %v422 = vmax.f32 %v404, 0.0
      %423 = vst [vmem:[%s172] sm:$0xff] %v407
      %424 = vst [vmem:[%s172 + $0x8] sm:$0xff] %v408
      %425 = vst [vmem:[%s172 + $0x10] sm:$0xff] %v409
      %426 = vst [vmem:[%s172 + $0x18] sm:$0xff] %v410
      %427 = vst [vmem:[%s172 + $0x20] sm:$0xff] %v411
      %428 = vst [vmem:[%s172 + $0x28] sm:$0xff] %v412
      %429 = vst [vmem:[%s172 + $0x30] sm:$0xff] %v413
      %430 = vst [vmem:[%s172 + $0x38] sm:$0xff] %v414
      %431 = vst [vmem:[%s172 + $0x40] sm:$0xff] %v415
      %432 = vst [vmem:[%s172 + $0x48] sm:$0xff] %v416
      %433 = vst [vmem:[%s172 + $0x50] sm:$0xff] %v417
      %434 = vst [vmem:[%s172 + $0x58] sm:$0xff] %v418
      %435 = vst [vmem:[%s172 + $0x60] sm:$0xff] %v419
      %436 = vst [vmem:[%s172 + $0x68] sm:$0xff] %v420
      %437 = vst [vmem:[%s172 + $0x70] sm:$0xff] %v421
      %438 = vst [vmem:[%s172 + $0x78] sm:$0xff] %v422
      %s439 = smul.u32 16, %s14
      %p440 = scmp.lt.s32.totalorder %s439, 255
      %s441 = scalar_select %p440, %s439, 255
      %s442 = smul.addr %s441, 8
      %s443 = scalar_lea.vmem %s3, %s442
      // Predicated region
      $region33: #{dct_stream_forward.45} parent=31 // pred_check
        %p444 = pneg %p100
      $region34: #{dct_stream_forward.45} parent=31 // pred_check_branch
        %446 = sbr.rel (%p444) target = $region36
      $region35: #{dct_stream_forward.45} parent=31 // pred_region
        %s447 = smul.u32 16, %s14
      $region36: #{dct_stream_forward.45} parent=31 // pred_fallthru
        _
    $region32: #{dct_stream_forward.45} parent=5 // pred_fallthru
      _
    %p448 = scmp.le.s32.totalorder 2, %s9
    // Predicated region
    $region37: #{dct_stream_forward.45} parent=5 // pred_check
      %p449 = pneg %p448
    $region38: #{dct_stream_forward.45} parent=5 // pred_check_branch
      %451 = sbr.rel (%p449) target = $region40
    $region39: #{dct_stream_forward.45} parent=5 // pred_region
      %s452 = ssub.s32 %s9, 2
      // Predicated region
      $region41: #{dct_stream_forward.45} parent=39 // pred_check
        %p453 = pneg %p106
      $region42: #{dct_stream_forward.45} parent=39 // pred_check_branch
        %455 = sbr.rel (%p453) target = $region44
      $region43: #{dct_stream_forward.45} parent=39 // pred_region
        %s456 = smul.u32 16, %s15
        %p457 = scmp.lt.s32.totalorder %s456, 255
        %s458 = scalar_select %p457, %s456, 255
        %s459 = smul.addr %s458, 8
        %s460 = scalar_lea.vmem %s3, %s459
      $region44: #{dct_stream_forward.45} parent=39 // pred_fallthru
        _
    $region40: #{dct_stream_forward.45} parent=5 // pred_fallthru
      _
  $region6: #{dct_stream_forward.45} parent=0 // loop_footer
    %s13 = sadd.s32 1, %s9
  $region7: #{dct_stream_forward.45} parent=0 // loop_footer_branch
    %8 = sbr.rel target = $region3
  $region8: #{dct_stream_forward.45} parent=0 // loop_exit
    _

// kernel: dct_stream_forward.46
$region0: #{dct_stream_forward.46}
  #allocation0 [shape = 'u32[]', space=smem, size = 0x4, offset = 0x4, fixed_abs, tag = 'smem constant byte address 0x4 - core index']
  #allocation1 [shape = 'u32[144,128]{1,0:T(1,128)}', space=vmem, size = 0x12000, scoped, tag = 'internal scratch']
  %s0 = inlined_call_operand.vmem [shape: f32[32,256], index: 0, kind: input, shape index: {}]
  %s1 = inlined_call_operand.vmem [shape: f32[32,256], index: 1, kind: input, shape index: {}]
  %s2 = inlined_call_operand.vmem [shape: f32[32,512], index: 2, kind: output, shape index: {}]
  %s3 = sld [smem:[#allocation0]]
  $region18: #{dct_stream_forward.46} parent=0
    _
  %s5 = ssub.s32 1, %s3
  %s6 = scalar_select 0, %s5, %s3
  // Predicated region
  $region2: #{dct_stream_forward.46} parent=0 // pred_check
    _
  $region3: #{dct_stream_forward.46} parent=0 // pred_check_branch
    %8 = sbr.rel (0) target = $region5
  $region4: #{dct_stream_forward.46} parent=0 // pred_region
    _
  $region5: #{dct_stream_forward.46} parent=0 // pred_fallthru
    _
  // Predicated region
  $region6: #{dct_stream_forward.46} parent=0 // pred_check
    _
  $region7: #{dct_stream_forward.46} parent=0 // pred_check_branch
    %10 = sbr.rel (0) target = $region9
  $region8: #{dct_stream_forward.46} parent=0 // pred_region
    _
  $region9: #{dct_stream_forward.46} parent=0 // pred_fallthru
    _
  %v11 = vld [vmem:[%s0] sm:$0xff]
  %v12 = vld [vmem:[%s0 + $0x8] sm:$0xff]
  %v13 = vld [vmem:[%s0 + $0x10] sm:$0xff]
  %v14 = vld [vmem:[%s0 + $0x18] sm:$0xff]
  %v15 = vld [vmem:[%s0 + $0x20] sm:$0xff]
  %v16 = vld [vmem:[%s0 + $0x28] sm:$0xff]
  %v17 = vld [vmem:[%s0 + $0x30] sm:$0xff]
  %v18 = vld [vmem:[%s0 + $0x38] sm:$0xff]
  %19 = vst [vmem:[%s2] sm:$0xff] %v11
  %20 = vst [vmem:[%s2 + $0x8] sm:$0xff] %v12
  %21 = vst [vmem:[%s2 + $0x20] sm:$0xff] %v13
  %22 = vst [vmem:[%s2 + $0x28] sm:$0xff] %v14
  %23 = vst [vmem:[%s2 + $0x40] sm:$0xff] %v15
  %24 = vst [vmem:[%s2 + $0x48] sm:$0xff] %v16
  %25 = vst [vmem:[%s2 + $0x60] sm:$0xff] %v17
  %26 = vst [vmem:[%s2 + $0x68] sm:$0xff] %v18
  %v27 = vld [vmem:[%s1] sm:$0xff]
  %v28 = vld [vmem:[%s1 + $0x8] sm:$0xff]
  %v29 = vld [vmem:[%s1 + $0x10] sm:$0xff]
  %v30 = vld [vmem:[%s1 + $0x18] sm:$0xff]
  %v31 = vld [vmem:[%s1 + $0x20] sm:$0xff]
  %v32 = vld [vmem:[%s1 + $0x28] sm:$0xff]
  %v33 = vld [vmem:[%s1 + $0x30] sm:$0xff]
  %v34 = vld [vmem:[%s1 + $0x38] sm:$0xff]
  %v35 = vmul.f32 %v11, %v27
  %v36 = vmul.f32 %v12, %v28
  %v37 = vmul.f32 %v13, %v29
  %v38 = vmul.f32 %v14, %v30
  %v39 = vmul.f32 %v15, %v31
  %v40 = vmul.f32 %v16, %v32
  %v41 = vmul.f32 %v17, %v33
  %v42 = vmul.f32 %v18, %v34
  %43 = vst [vmem:[%s2 + $0x10] sm:$0xff] %v35
  %44 = vst [vmem:[%s2 + $0x18] sm:$0xff] %v36
  %45 = vst [vmem:[%s2 + $0x30] sm:$0xff] %v37
  %46 = vst [vmem:[%s2 + $0x38] sm:$0xff] %v38
  %47 = vst [vmem:[%s2 + $0x50] sm:$0xff] %v39
  %48 = vst [vmem:[%s2 + $0x58] sm:$0xff] %v40
  %49 = vst [vmem:[%s2 + $0x70] sm:$0xff] %v41
  %50 = vst [vmem:[%s2 + $0x78] sm:$0xff] %v42
  // Predicated region
  $region10: #{dct_stream_forward.46} parent=0 // pred_check
    _
  $region11: #{dct_stream_forward.46} parent=0 // pred_check_branch
    %52 = sbr.rel (0) target = $region13
  $region12: #{dct_stream_forward.46} parent=0 // pred_region
    _
  $region13: #{dct_stream_forward.46} parent=0 // pred_fallthru
    _
  // Predicated region
  $region14: #{dct_stream_forward.46} parent=0 // pred_check
    _
  $region15: #{dct_stream_forward.46} parent=0 // pred_check_branch
    %54 = sbr.rel (0) target = $region17
  $region16: #{dct_stream_forward.46} parent=0 // pred_region
    _
  $region17: #{dct_stream_forward.46} parent=0 // pred_fallthru
    _

// kernel: dct_stream_forward.48
$region0: #{dct_stream_forward.48}
  #allocation0 [shape = 'u32[]', space=smem, size = 0x4, offset = 0x4, fixed_abs, tag = 'smem constant byte address 0x4 - core index']
  #allocation1 [shape = 'u32[144,128]{1,0:T(1,128)}', space=vmem, size = 0x12000, scoped, tag = 'internal scratch']
  #allocation2 [shape = 'f32[16,128]{1,0:T(8,128)}', space=vmem, size = 0x2000, scoped, tag = 'scratch operand']
  %s0 = inlined_call_operand.vmem [shape: bf16[32,4608], index: 0, kind: input, shape index: {}]
  %s1 = inlined_call_operand.vmem [shape: bf16[4608,128], index: 1, kind: input, shape index: {}]
  %s2 = inlined_call_operand.vmem [shape: f32[1,128], index: 2, kind: input, shape index: {}]
  %s3 = inlined_call_operand.vmem [shape: f32[32,128], index: 3, kind: output, shape index: {}]
  %s4 = sld [smem:[#allocation0]]
  $region76: #{dct_stream_forward.48} parent=0
    _
  %s6 = ssub.s32 1, %s4
  %s7 = scalar_select 0, %s6, %s4
  $region1: #{dct_stream_forward.48} parent=0
    #allocation3 [shape = 'u8[32768]{0}', space=vmem, size = 0x8000, scoped, tag = 'input window, operand 0']
    loop: start=0, step=1, limit=20
    $region2: #{dct_stream_forward.48} parent=1 // loop_pre_header
      _
    $region3: #{dct_stream_forward.48} parent=1 // loop_header
      %s9 = sphi 0, %s13
      %p10 = scmp.ge.s32.totalorder %s9, 20
      %s16 = sphi 0, %s28
      %s17 = sphi 0, %s24
      %s18 = sphi 0, %s16
      %s19 = sphi 0, %s17
      %s20 = sphi 0, %s18
      %s21 = sphi 0, %s19
      %s33 = sphi 0, %s35
      %s36 = sphi 0, %s33
      %s37 = sphi 0, %s36
      %s53 = sphi 0, %s37
      %s59 = sphi 0, %s61
      %s62 = sphi 0, %s59
      %s63 = sphi 0, %s62
      %s79 = sphi 0, %s63
      %s83 = sphi 0, %s83
      %s85 = sphi 0, %s83
      %s86 = sphi 0, %s85
      %s100 = sphi 0, %s86
      %s106 = sphi 0, %s108
      %s109 = sphi 0, %s106
      %s110 = sphi 0, %s109
      %s126 = sphi 0, %s110
    $region4: #{dct_stream_forward.48} parent=1 // loop_header_branch
      %12 = sbr.rel (%p10) target = $region8
    $region5: #{dct_stream_forward.48} parent=1 // loop_body
      %s14 = ssub.s32 %s9, 1
      %s15 = ssub.s32 %s9, 2
      %s22 = sadd.s32 1, %s17
      %p23 = scmp.ge.s32.totalorder %s22, 9
      %s24 = scalar_select %p23, 0, %s22
      %s25 = sadd.s32 1, %s16
      %s26 = scalar_select %p23, %s25, %s16
      %p27 = scmp.ge.s32.totalorder %s26, 2
      %s28 = scalar_select %p27, 0, %s26
      %s29 = ssub.s32 %s16, %s28
      %s30 = ssub.s32 %s17, %s24
      %s31 = sor.u32 %s29, %s30
      %p32 = scmp.eq.s32.totalorder %s31, 0
      %s34 = sadd.s32 %s33, 1
      %s35 = scalar_select %p32, %s33, %s34
      %p38 = pneg %p32
      %p39 = scmp.eq.s32.totalorder %s9, 17
      %p40 = por %p38, %p39
      %p41 = scmp.ne.s32.totalorder %s33, %s36
      %p42 = scmp.eq.s32.totalorder %s9, 0
      %p43 = por %p41, %p42
      %p44 = scmp.ne.s32.totalorder %s33, %s36
      %p45 = scmp.eq.s32.totalorder %s14, 17
      %p46 = por %p44, %p45
      %p47 = scmp.ne.s32.totalorder %s36, %s37
      %p48 = scmp.eq.s32.totalorder %s14, 0
      %p49 = por %p47, %p48
      %p50 = scmp.ne.s32.totalorder %s36, %s37
      %p51 = scmp.eq.s32.totalorder %s15, 17
      %p52 = por %p50, %p51
      %p54 = scmp.ne.s32.totalorder %s37, %s53
      %p55 = scmp.eq.s32.totalorder %s15, 0
      %p56 = por %p54, %p55
      %s57 = ssub.s32 %s17, %s24
      %p58 = scmp.eq.s32.totalorder %s57, 0
      %s60 = sadd.s32 %s59, 1
      %s61 = scalar_select %p58, %s59, %s60
      %p64 = pneg %p58
      %p65 = scmp.eq.s32.totalorder %s9, 17
      %p66 = por %p64, %p65
      %p67 = scmp.ne.s32.totalorder %s59, %s62
      %p68 = scmp.eq.s32.totalorder %s9, 0
      %p69 = por %p67, %p68
      %p70 = scmp.ne.s32.totalorder %s59, %s62
      %p71 = scmp.eq.s32.totalorder %s14, 17
      %p72 = por %p70, %p71
      %p73 = scmp.ne.s32.totalorder %s62, %s63
      %p74 = scmp.eq.s32.totalorder %s14, 0
      %p75 = por %p73, %p74
      %p76 = scmp.ne.s32.totalorder %s62, %s63
      %p77 = scmp.eq.s32.totalorder %s15, 17
      %p78 = por %p76, %p77
      %p80 = scmp.ne.s32.totalorder %s63, %s79
      %p81 = scmp.eq.s32.totalorder %s15, 0
      %p82 = por %p80, %p81
      %s84 = sadd.s32 %s83, 1
      %p87 = scmp.eq.s32.totalorder %s9, 17
      %p88 = scmp.ne.s32.totalorder %s83, %s85
      %p89 = scmp.eq.s32.totalorder %s9, 0
      %p90 = por %p88, %p89
      %p91 = scmp.ne.s32.totalorder %s83, %s85
      %p92 = scmp.eq.s32.totalorder %s14, 17
      %p93 = por %p91, %p92
      %p94 = scmp.ne.s32.totalorder %s85, %s86
      %p95 = scmp.eq.s32.totalorder %s14, 0
      %p96 = por %p94, %p95
      %p97 = scmp.ne.s32.totalorder %s85, %s86
      %p98 = scmp.eq.s32.totalorder %s15, 17
      %p99 = por %p97, %p98
      %p101 = scmp.ne.s32.totalorder %s86, %s100
      %p102 = scmp.eq.s32.totalorder %s15, 0
      %p103 = por %p101, %p102
      %s104 = ssub.s32 %s16, %s28
      %p105 = scmp.eq.s32.totalorder %s104, 0
      %s107 = sadd.s32 %s106, 1
      %s108 = scalar_select %p105, %s106, %s107
      %p111 = pneg %p105
      %p112 = scmp.eq.s32.totalorder %s9, 17
      %p113 = por %p111, %p112
      %p114 = scmp.ne.s32.totalorder %s106, %s109
      %p115 = scmp.eq.s32.totalorder %s9, 0
      %p116 = por %p114, %p115
      %p117 = scmp.ne.s32.totalorder %s106, %s109
      %p118 = scmp.eq.s32.totalorder %s14, 17
      %p119 = por %p117, %p118
      %p120 = scmp.ne.s32.totalorder %s109, %s110
      %p121 = scmp.eq.s32.totalorder %s14, 0
      %p122 = por %p120, %p121
      %p123 = scmp.ne.s32.totalorder %s109, %s110
      %p124 = scmp.eq.s32.totalorder %s15, 17
      %p125 = por %p123, %p124
      %p127 = scmp.ne.s32.totalorder %s110, %s126
      %p128 = scmp.eq.s32.totalorder %s15, 0
      %p129 = por %p127, %p128
      %p130 = scmp.le.s32.totalorder 1, %s9
      %p131 = scmp.lt.s32.totalorder %s9, 19
      %p132 = pnand %p130, %p131
      %p133 = pneg %p132
      // Predicated region
      $region9: #{dct_stream_forward.48} parent=5 // pred_check
        _
      $region10: #{dct_stream_forward.48} parent=5 // pred_check_branch
        %135 = sbr.rel (%p132) target = $region12
      $region11: #{dct_stream_forward.48} parent=5 // pred_region
        %s136 = ssub.s32 %s9, 1
        // Predicated region
        $region13: #{dct_stream_forward.48} parent=11 // pred_check
          %p137 = pneg %p96
        $region14: #{dct_stream_forward.48} parent=11 // pred_check_branch
          %139 = sbr.rel (%p137) target = $region16
        $region15: #{dct_stream_forward.48} parent=11 // pred_region
          _
        $region16: #{dct_stream_forward.48} parent=11 // pred_fallthru
          _
      $region12: #{dct_stream_forward.48} parent=5 // pred_fallthru
        _
      %p140 = scmp.lt.s32.totalorder %s9, 18
      // Predicated region
      $region17: #{dct_stream_forward.48} parent=5 // pred_check
        %p141 = pneg %p140
      $region18: #{dct_stream_forward.48} parent=5 // pred_check_branch
        %143 = sbr.rel (%p141) target = $region20
      $region19: #{dct_stream_forward.48} parent=5 // pred_region
        // Predicated region
        $region21: #{dct_stream_forward.48} parent=19 // pred_check
          %p144 = pneg %p43
        $region22: #{dct_stream_forward.48} parent=19 // pred_check_branch
          %146 = sbr.rel (%p144) target = $region24
        $region23: #{dct_stream_forward.48} parent=19 // pred_region
          %s147 = sand.u32 %s33, 1
          %s148 = sand.u32 %s33, 1
          %s149 = smul.addr %s148, 32
          %s150 = scalar_lea.vmem [#allocation3], %s149
          %s151 = smul.u32 2, %s16
          %s152 = smul.u32 4, %s17
          %s153 = smul.addr %s151, 36
          %s154 = sadd.s32 %s152, %s153
          %s155 = smul.addr %s154, 4
          %s156 = scalar_lea.vmem %s0, %s155
          // Predicated region
          $region25: #{dct_stream_forward.48} parent=23 // pred_check
            _
          $region26: #{dct_stream_forward.48} parent=23 // pred_check_branch
            %158 = sbr.rel (0) target = $region28
          $region27: #{dct_stream_forward.48} parent=23 // pred_region
            // Predicated region
            $region29: #{dct_stream_forward.48} parent=27 // pred_check
              _
            $region30: #{dct_stream_forward.48} parent=27 // pred_check_branch
              %160 = sbr.rel (0) target = $region32
            $region31: #{dct_stream_forward.48} parent=27 // pred_region
              loop: start=0, step=1, limit=1
              $region33: #{dct_stream_forward.48} parent=31 // loop_pre_header
                _
              $region34: #{dct_stream_forward.48} parent=31 // loop_header
                %s162 = sphi 0, %s166
                %p163 = scmp.ge.s32.totalorder %s162, 1
                %s167 = sphi %s156, %s156
                %s168 = sphi %s150, %s150
              $region35: #{dct_stream_forward.48} parent=31 // loop_header_branch
                %165 = sbr.rel (%p163) target = $region39
              $region36: #{dct_stream_forward.48} parent=31 // loop_body
                %v169 = vld [vmem:[%s167] sm:$0xff]
                %170 = vst [vmem:[%s168] sm:$0xff] %v169
                %v171 = vld [vmem:[%s167 + $0x8] sm:$0xff]
                %172 = vst [vmem:[%s168 + $0x8] sm:$0xff] %v171
                %v173 = vld [vmem:[%s167 + $0x90] sm:$0xff]
                %174 = vst [vmem:[%s168 + $0x10] sm:$0xff] %v173
                %v175 = vld [vmem:[%s167 + $0x98] sm:$0xff]
                %176 = vst [vmem:[%s168 + $0x18] sm:$0xff] %v175
              $region37: #{dct_stream_forward.48} parent=31 // loop_footer
                %s166 = sadd.s32 1, %s162
              $region38: #{dct_stream_forward.48} parent=31 // loop_footer_branch
                %161 = sbr.rel target = $region34
              $region39: #{dct_stream_forward.48} parent=31 // loop_exit
                _
            $region32: #{dct_stream_forward.48} parent=27 // pred_fallthru
              _
            // Predicated region
            $region40: #{dct_stream_forward.48} parent=27 // pred_check
              _
            $region41: #{dct_stream_forward.48} parent=27 // pred_check_branch
              %178 = sbr.rel target = $region43
            $region42: #{dct_stream_forward.48} parent=27 // pred_region
              _
            $region43: #{dct_stream_forward.48} parent=27 // pred_fallthru
              _
          $region28: #{dct_stream_forward.48} parent=23 // pred_fallthru
            _
          %179 = vnop
        $region24: #{dct_stream_forward.48} parent=19 // pred_fallthru
          _
        // Predicated region
        $region44: #{dct_stream_forward.48} parent=19 // pred_check
          %p180 = pneg %p69
        $region45: #{dct_stream_forward.48} parent=19 // pred_check_branch
          %182 = sbr.rel (%p180) target = $region47
        $region46: #{dct_stream_forward.48} parent=19 // pred_region
          %s183 = smul.u32 64, %s17
          %p184 = scmp.lt.s32.totalorder %s183, 575
          %s185 = scalar_select %p184, %s183, 575
          %s186 = smul.addr %s185, 4
          %s187 = scalar_lea.vmem %s1, %s186
          %s188 = smul.u32 64, %s17
        $region47: #{dct_stream_forward.48} parent=19 // pred_fallthru
          _
      $region20: #{dct_stream_forward.48} parent=5 // pred_fallthru
        _
      %p189 = scmp.le.s32.totalorder 1, %s9
      %p190 = scmp.lt.s32.totalorder %s9, 19
      %p191 = pnand %p189, %p190
      %p192 = pneg %p191
      // Predicated region
      $region48: #{dct_stream_forward.48} parent=5 // pred_check
        _
      $region49: #{dct_stream_forward.48} parent=5 // pred_check_branch
        %194 = sbr.rel (%p191) target = $region51
      $region50: #{dct_stream_forward.48} parent=5 // pred_region
        %s195 = ssub.s32 %s9, 1
        %s196 = sand.u32 %s36, 1
        %s197 = sand.u32 %s36, 1
        %s198 = smul.addr %s197, 32
        %s199 = scalar_lea.vmem [#allocation3], %s198
        // Predicated region
        $region52: #{dct_stream_forward.48} parent=50 // pred_check
          %p200 = pneg %p49
        $region53: #{dct_stream_forward.48} parent=50 // pred_check_branch
          %202 = sbr.rel (%p200) target = $region55
        $region54: #{dct_stream_forward.48} parent=50 // pred_region
          _
        $region55: #{dct_stream_forward.48} parent=50 // pred_fallthru
          _
        %s203 = sand.u32 %s36, 1
        %s204 = sand.u32 %s36, 1
        %s205 = smul.addr %s204, 32
        %s206 = scalar_lea.vmem [#allocation3], %s205
        %p207 = pneg %p49
        %p208 = pneg %p46
        %s209 = smul.u32 64, %s19
        %p210 = scmp.lt.s32.totalorder %s209, 575
        %s211 = scalar_select %p210, %s209, 575
        %s212 = smul.addr %s211, 4
        %s213 = scalar_lea.vmem %s1, %s212
        %p214 = pneg %p75
        %p215 = pneg %p72
        %p216 = pneg %p96
        %p217 = pneg %p93
        %p218 = pneg %p122
        %p219 = pneg %p119
        %s220 = smul.u32 2, %s18
        %p221 = scmp.lt.s32.totalorder %s220, 3
        %s222 = scalar_select %p221, %s220, 3
        %s223 = smul.addr %s222, 8
        %s224 = scalar_lea.vmem %s3, %s223
        %s225 = smul.u32 2, %s18
        %s226 = smul.u32 4, %s19
        %s227 = smul.u32 64, %s19
        %p228 = scmp.lt.s32.totalorder %s227, 575
        %s229 = scalar_select %p228, %s227, 575
        %s230 = smul.addr %s229, 4
        %s231 = scalar_lea.vmem %s1, %s230
        %s232 = smul.u32 64, %s19
        %s233 = smul.u32 2, %s18
        %p234 = scmp.lt.s32.totalorder %s233, 3
        %s235 = scalar_select %p234, %s233, 3
        %s236 = smul.addr %s235, 8
        %s237 = scalar_lea.vmem %s3, %s236
        %s238 = smul.u32 2, %s18
        %p240 = scmp.eq.s32.totalorder %s19, 0
        // Predicated region
        $region56: #{dct_stream_forward.48} parent=50 // pred_check
          %p241 = pneg %p240
        $region57: #{dct_stream_forward.48} parent=50 // pred_check_branch
          %243 = sbr.rel (%p241) target = $region59
        $region58: #{dct_stream_forward.48} parent=50 // pred_region
          %244 = vst [vmem:[#allocation2] sm:$0xff] 0.0
          %245 = vst [vmem:[#allocation2 + $0x8] sm:$0xff] 0.0
        $region59: #{dct_stream_forward.48} parent=50 // pred_fallthru
          _
        %v246 = vld [vmem:[#allocation2] sm:$0xff]
        %v247 = vld [vmem:[#allocation2 + $0x8] sm:$0xff]
        %v248 = vld [vmem:[%s199] sm:$0xff]
        %v249 = vld [vmem:[%s199 + $0x8] sm:$0xff]
        %v250 = vld [vmem:[%s199 + $0x10] sm:$0xff]
        %v251 = vld [vmem:[%s199 + $0x18] sm:$0xff]
        %v252 = vld [vmem:[%s231] sm:$0xf]
        %v253 = vld [vmem:[%s231 + $0x4] sm:$0xf]
        %v254 = vld [vmem:[%s231 + $0x8] sm:$0xf]
        %v255 = vld [vmem:[%s231 + $0xc] sm:$0xf]
        %v256 = vld [vmem:[%s231 + $0x10] sm:$0xf]
        %v257 = vld [vmem:[%s231 + $0x14] sm:$0xf]
        %v258 = vld [vmem:[%s231 + $0x18] sm:$0xf]
        %v259 = vld [vmem:[%s231 + $0x1c] sm:$0xf]
        %v260 = vld [vmem:[%s231 + $0x20] sm:$0xf]
        %v261 = vld [vmem:[%s231 + $0x24] sm:$0xf]
        %v262 = vld [vmem:[%s231 + $0x28] sm:$0xf]
        %v263 = vld [vmem:[%s231 + $0x2c] sm:$0xf]
        %v264 = vld [vmem:[%s231 + $0x30] sm:$0xf]
        %v265 = vld [vmem:[%s231 + $0x34] sm:$0xf]
        %v266 = vld [vmem:[%s231 + $0x38] sm:$0xf]
        %v267 = vld [vmem:[%s231 + $0x3c] sm:$0xf]
        %v268 = vld [vmem:[%s231 + $0x40] sm:$0xf]
        %v269 = vld [vmem:[%s231 + $0x44] sm:$0xf]
        %v270 = vld [vmem:[%s231 + $0x48] sm:$0xf]
        %v271 = vld [vmem:[%s231 + $0x4c] sm:$0xf]
        %v272 = vld [vmem:[%s231 + $0x50] sm:$0xf]
        %v273 = vld [vmem:[%s231 + $0x54] sm:$0xf]
        %v274 = vld [vmem:[%s231 + $0x58] sm:$0xf]
        %v275 = vld [vmem:[%s231 + $0x5c] sm:$0xf]
        %v276 = vld [vmem:[%s231 + $0x60] sm:$0xf]
        %v277 = vld [vmem:[%s231 + $0x64] sm:$0xf]
        %v278 = vld [vmem:[%s231 + $0x68] sm:$0xf]
        %v279 = vld [vmem:[%s231 + $0x6c] sm:$0xf]
        %v280 = vld [vmem:[%s231 + $0x70] sm:$0xf]
        %v281 = vld [vmem:[%s231 + $0x74] sm:$0xf]
        %v282 = vld [vmem:[%s231 + $0x78] sm:$0xf]
        %v283 = vld [vmem:[%s231 + $0x7c] sm:$0xf]
        %v284 = vld [vmem:[%s231 + $0x80] sm:$0xf]
        %v285 = vld [vmem:[%s231 + $0x84] sm:$0xf]
        %v286 = vld [vmem:[%s231 + $0x88] sm:$0xf]
        %v287 = vld [vmem:[%s231 + $0x8c] sm:$0xf]
        %v288 = vld [vmem:[%s231 + $0x90] sm:$0xf]
        %v289 = vld [vmem:[%s231 + $0x94] sm:$0xf]
        %v290 = vld [vmem:[%s231 + $0x98] sm:$0xf]
        %v291 = vld [vmem:[%s231 + $0x9c] sm:$0xf]
        %v292 = vld [vmem:[%s231 + $0xa0] sm:$0xf]
        %v293 = vld [vmem:[%s231 + $0xa4] sm:$0xf]
        %v294 = vld [vmem:[%s231 + $0xa8] sm:$0xf]
        %v295 = vld [vmem:[%s231 + $0xac] sm:$0xf]
        %v296 = vld [vmem:[%s231 + $0xb0] sm:$0xf]
        %v297 = vld [vmem:[%s231 + $0xb4] sm:$0xf]
        %v298 = vld [vmem:[%s231 + $0xb8] sm:$0xf]
        %v299 = vld [vmem:[%s231 + $0xbc] sm:$0xf]
        %v300 = vld [vmem:[%s231 + $0xc0] sm:$0xf]
        %v301 = vld [vmem:[%s231 + $0xc4] sm:$0xf]
        %v302 = vld [vmem:[%s231 + $0xc8] sm:$0xf]
        %v303 = vld [vmem:[%s231 + $0xcc] sm:$0xf]
        %v304 = vld [vmem:[%s231 + $0xd0] sm:$0xf]
        %v305 = vld [vmem:[%s231 + $0xd4] sm:$0xf]
        %v306 = vld [vmem:[%s231 + $0xd8] sm:$0xf]
        %v307 = vld [vmem:[%s231 + $0xdc] sm:$0xf]
        %v308 = vld [vmem:[%s231 + $0xe0] sm:$0xf]
        %v309 = vld [vmem:[%s231 + $0xe4] sm:$0xf]
        %v310 = vld [vmem:[%s231 + $0xe8] sm:$0xf]
        %v311 = vld [vmem:[%s231 + $0xec] sm:$0xf]
        %v312 = vld [vmem:[%s231 + $0xf0] sm:$0xf]
        %v313 = vld [vmem:[%s231 + $0xf4] sm:$0xf]
        %v314 = vld [vmem:[%s231 + $0xf8] sm:$0xf]
        %v315 = vld [vmem:[%s231 + $0xfc] sm:$0xf]
        %v320 = vunpack.c.l.b16 %v248
        %v321 = vunpack.c.h.b16 %v248
        %v322 = vunpack.c.l.b16 %v249
        %v323 = vunpack.c.h.b16 %v249
        %v324 = vunpack.c.l.b16 %v250
        %v325 = vunpack.c.h.b16 %v250
        %v326 = vunpack.c.l.b16 %v251
        %v327 = vunpack.c.h.b16 %v251
        %v328 = vpack.c.b16 %v324, %v320
        %v329 = vpack.c.b16 %v325, %v321
        %v330 = vpack.c.b16 %v326, %v322
        %v331 = vpack.c.b16 %v327, %v323
        %v400 = vunpack.c.l.b16 %v252
        %v401 = vunpack.c.l.b16 %v253
        %v402 = vunpack.c.l.b16 %v254
        %v403 = vunpack.c.l.b16 %v255
        %v404 = vunpack.c.l.b16 %v256
        %v405 = vunpack.c.l.b16 %v257
        %v406 = vunpack.c.l.b16 %v258
        %v407 = vunpack.c.l.b16 %v259
        %v408 = vunpack.c.l.b16 %v260
        %v409 = vunpack.c.l.b16 %v261
        %v410 = vunpack.c.l.b16 %v262
        %v411 = vunpack.c.l.b16 %v263
        %v412 = vunpack.c.l.b16 %v264
        %v413 = vunpack.c.l.b16 %v265
        %v414 = vunpack.c.l.b16 %v266
        %v415 = vunpack.c.l.b16 %v267
        %v416 = vunpack.c.l.b16 %v268
        %v417 = vunpack.c.l.b16 %v269
        %v418 = vunpack.c.l.b16 %v270
        %v419 = vunpack.c.l.b16 %v271
        %v420 = vunpack.c.l.b16 %v272
        %v421 = vunpack.c.l.b16 %v273
        %v422 = vunpack.c.l.b16 %v274
        %v423 = vunpack.c.l.b16 %v275
        %v424 = vunpack.c.l.b16 %v276
        %v425 = vunpack.c.l.b16 %v277
        %v426 = vunpack.c.l.b16 %v278
        %v427 = vunpack.c.l.b16 %v279
        %v428 = vunpack.c.l.b16 %v280
        %v429 = vunpack.c.l.b16 %v281
        %v430 = vunpack.c.l.b16 %v282
        %v431 = vunpack.c.l.b16 %v283
        %v432 = vunpack.c.l.b16 %v284
        %v433 = vunpack.c.l.b16 %v285
        %v434 = vunpack.c.l.b16 %v286
        %v435 = vunpack.c.l.b16 %v287
        %v436 = vunpack.c.l.b16 %v288
        %v437 = vunpack.c.l.b16 %v289
        %v438 = vunpack.c.l.b16 %v290
        %v439 = vunpack.c.l.b16 %v291
        %v440 = vunpack.c.l.b16 %v292
        %v441 = vunpack.c.l.b16 %v293
        %v442 = vunpack.c.l.b16 %v294
        %v443 = vunpack.c.l.b16 %v295
        %v444 = vunpack.c.l.b16 %v296
        %v445 = vunpack.c.l.b16 %v297
        %v446 = vunpack.c.l.b16 %v298
        %v447 = vunpack.c.l.b16 %v299
        %v448 = vunpack.c.l.b16 %v300
        %v449 = vunpack.c.l.b16 %v301
        %v450 = vunpack.c.l.b16 %v302
        %v451 = vunpack.c.l.b16 %v303
        %v452 = vunpack.c.l.b16 %v304
        %v453 = vunpack.c.l.b16 %v305
        %v454 = vunpack.c.l.b16 %v306
        %v455 = vunpack.c.l.b16 %v307
        %v456 = vunpack.c.l.b16 %v308
        %v457 = vunpack.c.l.b16 %v309
        %v458 = vunpack.c.l.b16 %v310
        %v459 = vunpack.c.l.b16 %v311
        %v460 = vunpack.c.l.b16 %v312
        %v461 = vunpack.c.l.b16 %v313
        %v462 = vunpack.c.l.b16 %v314
        %v463 = vunpack.c.l.b16 %v315
        %v464 = vpack.c.b16 %v401, %v400
        %v465 = vpack.c.b16 %v403, %v402
        %v466 = vpack.c.b16 %v405, %v404
        %v467 = vpack.c.b16 %v407, %v406
        %v468 = vpack.c.b16 %v409, %v408
        %v469 = vpack.c.b16 %v411, %v410
        %v470 = vpack.c.b16 %v413, %v412
        %v471 = vpack.c.b16 %v415, %v414
        %v472 = vpack.c.b16 %v417, %v416
        %v473 = vpack.c.b16 %v419, %v418
        %v474 = vpack.c.b16 %v421, %v420
        %v475 = vpack.c.b16 %v423, %v422
        %v476 = vpack.c.b16 %v425, %v424
        %v477 = vpack.c.b16 %v427, %v426
        %v478 = vpack.c.b16 %v429, %v428
        %v479 = vpack.c.b16 %v431, %v430
        %v480 = vpack.c.b16 %v433, %v432
        %v481 = vpack.c.b16 %v435, %v434
        %v482 = vpack.c.b16 %v437, %v436
        %v483 = vpack.c.b16 %v439, %v438
        %v484 = vpack.c.b16 %v441, %v440
        %v485 = vpack.c.b16 %v443, %v442
        %v486 = vpack.c.b16 %v445, %v444
        %v487 = vpack.c.b16 %v447, %v446
        %v488 = vpack.c.b16 %v449, %v448
        %v489 = vpack.c.b16 %v451, %v450
        %v490 = vpack.c.b16 %v453, %v452
        %v491 = vpack.c.b16 %v455, %v454
        %v492 = vpack.c.b16 %v457, %v456
        %v493 = vpack.c.b16 %v459, %v458
        %v494 = vpack.c.b16 %v461, %v460
        %v495 = vpack.c.b16 %v463, %v462
        %528 = vmatprep.subr.bf16.mxu0 0
        %529 = vmatpush1.bf16.msra.mxu0 %v464
        %530 = vmatprep.subr.bf16.mxu0 0
        %531 = vmatpush1.bf16.msra.mxu0 %v465
        %532 = vmatprep.subr.bf16.mxu0 0
        %533 = vmatpush1.bf16.msra.mxu0 %v466
        %534 = vmatprep.subr.bf16.mxu0 0
        %535 = vmatpush1.bf16.msra.mxu0 %v467
        %536 = vmatprep.subr.bf16.mxu0 0
        %537 = vmatpush1.bf16.msra.mxu0 %v468
        %538 = vmatprep.subr.bf16.mxu0 0
        %539 = vmatpush1.bf16.msra.mxu0 %v469
        %540 = vmatprep.subr.bf16.mxu0 0
        %541 = vmatpush1.bf16.msra.mxu0 %v470
        %542 = vmatprep.subr.bf16.mxu0 0
        %543 = vmatpush1.bf16.msra.mxu0 %v471
        %544 = vmatprep.subr.bf16.mxu0 0
        %545 = vmatpush1.bf16.msra.mxu0 %v472
        %546 = vmatprep.subr.bf16.mxu0 0
        %547 = vmatpush1.bf16.msra.mxu0 %v473
        %548 = vmatprep.subr.bf16.mxu0 0
        %549 = vmatpush1.bf16.msra.mxu0 %v474
        %550 = vmatprep.subr.bf16.mxu0 0
        %551 = vmatpush1.bf16.msra.mxu0 %v475
        %552 = vmatprep.subr.bf16.mxu0 0
        %553 = vmatpush1.bf16.msra.mxu0 %v476
        %554 = vmatprep.subr.bf16.mxu0 0
        %555 = vmatpush1.bf16.msra.mxu0 %v477
        %556 = vmatprep.subr.bf16.mxu0 0
        %557 = vmatpush1.bf16.msra.mxu0 %v478
        %558 = vmatprep.subr.bf16.mxu0 0
        %559 = vmatpush1.bf16.msra.mxu0 %v479
        %560 = vmatprep.mubr.bf16.mxu0 %v329
        %561 = vmatmul.mubr.bf16.gmra.mrb[0].mxu0 %v328
        %v562 = vpop.f32.mrb[0].mxu0
        %v563 = vadd.f32 0.0, %v562
        %v564 = vpop.f32.mrb[0].mxu0
        %v565 = vpop.f32.mrb[0].mxu0
        %v566 = vadd.f32 0.0, %v565
        %v567 = vpop.f32.mrb[0].mxu0
        %568 = vdwg.mxu0
        %569 = vmatprep.subr.bf16.mxu0 0
        %570 = vmatpush1.bf16.msra.mxu0 %v480
        %571 = vmatprep.subr.bf16.mxu0 0
        %572 = vmatpush1.bf16.msra.mxu0 %v481
        %573 = vmatprep.subr.bf16.mxu0 0
        %574 = vmatpush1.bf16.msra.mxu0 %v482
        %575 = vmatprep.subr.bf16.mxu0 0
        %576 = vmatpush1.bf16.msra.mxu0 %v483
        %577 = vmatprep.subr.bf16.mxu0 0
        %578 = vmatpush1.bf16.msra.mxu0 %v484
        %579 = vmatprep.subr.bf16.mxu0 0
        %580 = vmatpush1.bf16.msra.mxu0 %v485
        %581 = vmatprep.subr.bf16.mxu0 0
        %582 = vmatpush1.bf16.msra.mxu0 %v486
        %583 = vmatprep.subr.bf16.mxu0 0
        %584 = vmatpush1.bf16.msra.mxu0 %v487
        %585 = vmatprep.subr.bf16.mxu0 0
        %586 = vmatpush1.bf16.msra.mxu0 %v488
        %587 = vmatprep.subr.bf16.mxu0 0
        %588 = vmatpush1.bf16.msra.mxu0 %v489
        %589 = vmatprep.subr.bf16.mxu0 0
        %590 = vmatpush1.bf16.msra.mxu0 %v490
        %591 = vmatprep.subr.bf16.mxu0 0
        %592 = vmatpush1.bf16.msra.mxu0 %v491
        %593 = vmatprep.subr.bf16.mxu0 0
        %594 = vmatpush1.bf16.msra.mxu0 %v492
        %595 = vmatprep.subr.bf16.mxu0 0
        %596 = vmatpush1.bf16.msra.mxu0 %v493
        %597 = vmatprep.subr.bf16.mxu0 0
        %598 = vmatpush1.bf16.msra.mxu0 %v494
        %599 = vmatprep.subr.bf16.mxu0 0
        %600 = vmatpush1.bf16.msra.mxu0 %v495
        %601 = vmatprep.mubr.bf16.mxu0 %v331
        %602 = vmatmul.mubr.bf16.gmra.mrb[0].mxu0 %v330
        %v603 = vpop.f32.mrb[0].mxu0
        %v604 = vadd.f32 %v563, %v603
        %v605 = vpop.f32.mrb[0].mxu0
        %v606 = vpop.f32.mrb[0].mxu0
        %v607 = vadd.f32 %v566, %v606
        %v608 = vpop.f32.mrb[0].mxu0
        %609 = vdwg.mxu0
        %v610 = vadd.f32 %v246, %v604
        %v611 = vadd.f32 %v247, %v607
        %612 = vst [vmem:[#allocation2] sm:$0xff] %v610
        %613 = vst [vmem:[#allocation2 + $0x8] sm:$0xff] %v611
        %p614 = scmp.eq.s32.totalorder %s19, 8
        // Predicated region
        $region60: #{dct_stream_forward.48} parent=50 // pred_check
          %p615 = pneg %p614
        $region61: #{dct_stream_forward.48} parent=50 // pred_check_branch
          %617 = sbr.rel (%p615) target = $region63
        $region62: #{dct_stream_forward.48} parent=50 // pred_region
          %v618 = vld [vmem:[#allocation2] sm:$0xff]
          %v619 = vld [vmem:[#allocation2 + $0x8] sm:$0xff]
          %v620 = vld [vmem:[%s2] sm:$0x1]
          %v622 = vlaneseq
          %v623 = vshrl.u32 %v622, 7
          %v624 = vsub.s32 0, %v623
          %v625 = vrot.slane %v620, %v624
          %v627 = vadd.f32 %v618, %v625
          %v628 = vadd.f32 %v619, %v625
          %v629 = vmax.f32 %v627, 0.0
          %v630 = vmax.f32 %v628, 0.0
          %631 = vst [vmem:[%s237] sm:$0xff] %v629
          %632 = vst [vmem:[%s237 + $0x8] sm:$0xff] %v630
        $region63: #{dct_stream_forward.48} parent=50 // pred_fallthru
          _
        %s633 = smul.u32 2, %s18
        %p634 = scmp.lt.s32.totalorder %s633, 3
        %s635 = scalar_select %p634, %s633, 3
        %s636 = smul.addr %s635, 8
        %s637 = scalar_lea.vmem %s3, %s636
        // Predicated region
        $region64: #{dct_stream_forward.48} parent=50 // pred_check
          %p638 = pneg %p119
        $region65: #{dct_stream_forward.48} parent=50 // pred_check_branch
          %640 = sbr.rel (%p638) target = $region67
        $region66: #{dct_stream_forward.48} parent=50 // pred_region
          %s641 = smul.u32 2, %s18
        $region67: #{dct_stream_forward.48} parent=50 // pred_fallthru
          _
      $region51: #{dct_stream_forward.48} parent=5 // pred_fallthru
        _
      %p642 = scmp.le.s32.totalorder 2, %s9
      // Predicated region
      $region68: #{dct_stream_forward.48} parent=5 // pred_check
        %p643 = pneg %p642
      $region69: #{dct_stream_forward.48} parent=5 // pred_check_branch
        %645 = sbr.rel (%p643) target = $region71
      $region70: #{dct_stream_forward.48} parent=5 // pred_region
        %s646 = ssub.s32 %s9, 2
        // Predicated region
        $region72: #{dct_stream_forward.48} parent=70 // pred_check
          %p647 = pneg %p125
        $region73: #{dct_stream_forward.48} parent=70 // pred_check_branch
          %649 = sbr.rel (%p647) target = $region75
        $region74: #{dct_stream_forward.48} parent=70 // pred_region
          %s650 = smul.u32 2, %s20
          %p651 = scmp.lt.s32.totalorder %s650, 3
          %s652 = scalar_select %p651, %s650, 3
          %s653 = smul.addr %s652, 8
          %s654 = scalar_lea.vmem %s3, %s653
        $region75: #{dct_stream_forward.48} parent=70 // pred_fallthru
          _
      $region71: #{dct_stream_forward.48} parent=5 // pred_fallthru
        _
    $region6: #{dct_stream_forward.48} parent=1 // loop_footer
      %s13 = sadd.s32 1, %s9
    $region7: #{dct_stream_forward.48} parent=1 // loop_footer_branch
      %8 = sbr.rel target = $region3
    $region8: #{dct_stream_forward.48} parent=1 // loop_exit
      _

// kernel: dct_stream_forward.47
$region0: #{dct_stream_forward.47}
  #allocation0 [shape = 'u32[]', space=smem, size = 0x4, offset = 0x4, fixed_abs, tag = 'smem constant byte address 0x4 - core index']
  #allocation1 [shape = 'u32[144,128]{1,0:T(1,128)}', space=vmem, size = 0x12000, scoped, tag = 'internal scratch']
  %s0 = inlined_call_operand.vmem [shape: bf16[32,512], index: 0, kind: input, shape index: {}]
  %s1 = inlined_call_operand.vmem [shape: bf16[512,128], index: 1, kind: input, shape index: {}]
  %s2 = inlined_call_operand.vmem [shape: f32[1,128], index: 2, kind: input, shape index: {}]
  %s3 = inlined_call_operand.vmem [shape: f32[32,128], index: 3, kind: output, shape index: {}]
  %s4 = sld [smem:[#allocation0]]
  $region45: #{dct_stream_forward.47} parent=0
    _
  %s6 = ssub.s32 1, %s4
  %s7 = scalar_select 0, %s6, %s4
  loop: start=0, step=1, limit=4
  $region2: #{dct_stream_forward.47} parent=0 // loop_pre_header
    _
  $region3: #{dct_stream_forward.47} parent=0 // loop_header
    %s9 = sphi 0, %s13
    %p10 = scmp.ge.s32.totalorder %s9, 4
    %s19 = sphi 0, %s21
    %s22 = sphi 0, %s19
    %s23 = sphi 0, %s22
    %s39 = sphi 0, %s23
    %s43 = sphi 0, %s43
    %s45 = sphi 0, %s43
    %s46 = sphi 0, %s45
    %s60 = sphi 0, %s46
    %s64 = sphi 0, %s64
    %s66 = sphi 0, %s64
    %s67 = sphi 0, %s66
    %s81 = sphi 0, %s67
    %s87 = sphi 0, %s89
    %s90 = sphi 0, %s87
    %s91 = sphi 0, %s90
    %s107 = sphi 0, %s91
  $region4: #{dct_stream_forward.47} parent=0 // loop_header_branch
    %12 = sbr.rel (%p10) target = $region8
  $region5: #{dct_stream_forward.47} parent=0 // loop_body
    %s14 = ssub.s32 %s9, 1
    %s15 = ssub.s32 %s9, 2
    %s16 = sadd.s32 %s9, 1
    %s17 = ssub.s32 %s9, %s16
    %p18 = scmp.eq.s32.totalorder %s17, 0
    %s20 = sadd.s32 %s19, 1
    %s21 = scalar_select %p18, %s19, %s20
    %p24 = pneg %p18
    %p25 = scmp.eq.s32.totalorder %s9, 1
    %p26 = por %p24, %p25
    %p27 = scmp.ne.s32.totalorder %s19, %s22
    %p28 = scmp.eq.s32.totalorder %s9, 0
    %p29 = por %p27, %p28
    %p30 = scmp.ne.s32.totalorder %s19, %s22
    %p31 = scmp.eq.s32.totalorder %s14, 1
    %p32 = por %p30, %p31
    %p33 = scmp.ne.s32.totalorder %s22, %s23
    %p34 = scmp.eq.s32.totalorder %s14, 0
    %p35 = por %p33, %p34
    %p36 = scmp.ne.s32.totalorder %s22, %s23
    %p37 = scmp.eq.s32.totalorder %s15, 1
    %p38 = por %p36, %p37
    %p40 = scmp.ne.s32.totalorder %s23, %s39
    %p41 = scmp.eq.s32.totalorder %s15, 0
    %p42 = por %p40, %p41
    %s44 = sadd.s32 %s43, 1
    %p47 = scmp.eq.s32.totalorder %s9, 1
    %p48 = scmp.ne.s32.totalorder %s43, %s45
    %p49 = scmp.eq.s32.totalorder %s9, 0
    %p50 = por %p48, %p49
    %p51 = scmp.ne.s32.totalorder %s43, %s45
    %p52 = scmp.eq.s32.totalorder %s14, 1
    %p53 = por %p51, %p52
    %p54 = scmp.ne.s32.totalorder %s45, %s46
    %p55 = scmp.eq.s32.totalorder %s14, 0
    %p56 = por %p54, %p55
    %p57 = scmp.ne.s32.totalorder %s45, %s46
    %p58 = scmp.eq.s32.totalorder %s15, 1
    %p59 = por %p57, %p58
    %p61 = scmp.ne.s32.totalorder %s46, %s60
    %p62 = scmp.eq.s32.totalorder %s15, 0
    %p63 = por %p61, %p62
    %s65 = sadd.s32 %s64, 1
    %p68 = scmp.eq.s32.totalorder %s9, 1
    %p69 = scmp.ne.s32.totalorder %s64, %s66
    %p70 = scmp.eq.s32.totalorder %s9, 0
    %p71 = por %p69, %p70
    %p72 = scmp.ne.s32.totalorder %s64, %s66
    %p73 = scmp.eq.s32.totalorder %s14, 1
    %p74 = por %p72, %p73
    %p75 = scmp.ne.s32.totalorder %s66, %s67
    %p76 = scmp.eq.s32.totalorder %s14, 0
    %p77 = por %p75, %p76
    %p78 = scmp.ne.s32.totalorder %s66, %s67
    %p79 = scmp.eq.s32.totalorder %s15, 1
    %p80 = por %p78, %p79
    %p82 = scmp.ne.s32.totalorder %s67, %s81
    %p83 = scmp.eq.s32.totalorder %s15, 0
    %p84 = por %p82, %p83
    %s85 = ssub.s32 %s9, %s16
    %p86 = scmp.eq.s32.totalorder %s85, 0
    %s88 = sadd.s32 %s87, 1
    %s89 = scalar_select %p86, %s87, %s88
    %p92 = pneg %p86
    %p93 = scmp.eq.s32.totalorder %s9, 1
    %p94 = por %p92, %p93
    %p95 = scmp.ne.s32.totalorder %s87, %s90
    %p96 = scmp.eq.s32.totalorder %s9, 0
    %p97 = por %p95, %p96
    %p98 = scmp.ne.s32.totalorder %s87, %s90
    %p99 = scmp.eq.s32.totalorder %s14, 1
    %p100 = por %p98, %p99
    %p101 = scmp.ne.s32.totalorder %s90, %s91
    %p102 = scmp.eq.s32.totalorder %s14, 0
    %p103 = por %p101, %p102
    %p104 = scmp.ne.s32.totalorder %s90, %s91
    %p105 = scmp.eq.s32.totalorder %s15, 1
    %p106 = por %p104, %p105
    %p108 = scmp.ne.s32.totalorder %s91, %s107
    %p109 = scmp.eq.s32.totalorder %s15, 0
    %p110 = por %p108, %p109
    %p111 = scmp.le.s32.totalorder 1, %s9
    %p112 = scmp.lt.s32.totalorder %s9, 3
    %p113 = pnand %p111, %p112
    %p114 = pneg %p113
    // Predicated region
    $region9: #{dct_stream_forward.47} parent=5 // pred_check
      _
    $region10: #{dct_stream_forward.47} parent=5 // pred_check_branch
      %116 = sbr.rel (%p113) target = $region12
    $region11: #{dct_stream_forward.47} parent=5 // pred_region
      %s117 = ssub.s32 %s9, 1
      // Predicated region
      $region13: #{dct_stream_forward.47} parent=11 // pred_check
        %p118 = pneg %p56
      $region14: #{dct_stream_forward.47} parent=11 // pred_check_branch
        %120 = sbr.rel (%p118) target = $region16
      $region15: #{dct_stream_forward.47} parent=11 // pred_region
        _
      $region16: #{dct_stream_forward.47} parent=11 // pred_fallthru
        _
      // Predicated region
      $region17: #{dct_stream_forward.47} parent=11 // pred_check
        %p121 = pneg %p77
      $region18: #{dct_stream_forward.47} parent=11 // pred_check_branch
        %123 = sbr.rel (%p121) target = $region20
      $region19: #{dct_stream_forward.47} parent=11 // pred_region
        _
      $region20: #{dct_stream_forward.47} parent=11 // pred_fallthru
        _
    $region12: #{dct_stream_forward.47} parent=5 // pred_fallthru
      _
    %p124 = scmp.lt.s32.totalorder %s9, 2
    // Predicated region
    $region21: #{dct_stream_forward.47} parent=5 // pred_check
      %p125 = pneg %p124
    $region22: #{dct_stream_forward.47} parent=5 // pred_check_branch
      %127 = sbr.rel (%p125) target = $region24
    $region23: #{dct_stream_forward.47} parent=5 // pred_region
      // Predicated region
      $region25: #{dct_stream_forward.47} parent=23 // pred_check
        %p128 = pneg %p29
      $region26: #{dct_stream_forward.47} parent=23 // pred_check_branch
        %130 = sbr.rel (%p128) target = $region28
      $region27: #{dct_stream_forward.47} parent=23 // pred_region
        %s131 = smul.u32 2, %s9
        %p132 = scmp.lt.s32.totalorder %s131, 3
        %s133 = scalar_select %p132, %s131, 3
        %s134 = smul.addr %s133, 4
        %s135 = smul.addr %s134, 4
        %s136 = scalar_lea.vmem %s0, %s135
        %s137 = smul.u32 2, %s9
      $region28: #{dct_stream_forward.47} parent=23 // pred_fallthru
        _
    $region24: #{dct_stream_forward.47} parent=5 // pred_fallthru
      _
    %p138 = scmp.le.s32.totalorder 1, %s9
    %p139 = scmp.lt.s32.totalorder %s9, 3
    %p140 = pnand %p138, %p139
    %p141 = pneg %p140
    // Predicated region
    $region29: #{dct_stream_forward.47} parent=5 // pred_check
      _
    $region30: #{dct_stream_forward.47} parent=5 // pred_check_branch
      %143 = sbr.rel (%p140) target = $region32
    $region31: #{dct_stream_forward.47} parent=5 // pred_region
      %s144 = ssub.s32 %s9, 1
      %s145 = smul.u32 2, %s14
      %p146 = scmp.lt.s32.totalorder %s145, 3
      %s147 = scalar_select %p146, %s145, 3
      %s148 = smul.addr %s147, 4
      %s149 = smul.addr %s148, 4
      %s150 = scalar_lea.vmem %s0, %s149
      %p151 = pneg %p35
      %p152 = pneg %p32
      %p153 = pneg %p56
      %p154 = pneg %p53
      %p155 = pneg %p77
      %p156 = pneg %p74
      %p157 = pneg %p103
      %p158 = pneg %p100
      %s159 = smul.u32 2, %s14
      %p160 = scmp.lt.s32.totalorder %s159, 3
      %s161 = scalar_select %p160, %s159, 3
      %s162 = smul.addr %s161, 8
      %s163 = scalar_lea.vmem %s3, %s162
      %s164 = smul.u32 2, %s14
      %p165 = scmp.lt.s32.totalorder %s164, 3
      %s166 = scalar_select %p165, %s164, 3
      %s167 = smul.addr %s166, 4
      %s168 = smul.addr %s167, 4
      %s169 = scalar_lea.vmem %s0, %s168
      %s170 = smul.u32 2, %s14
      %s171 = smul.u32 2, %s14
      %p172 = scmp.lt.s32.totalorder %s171, 3
      %s173 = scalar_select %p172, %s171, 3
      %s174 = smul.addr %s173, 8
      %s175 = scalar_lea.vmem %s3, %s174
      %s176 = smul.u32 2, %s14
      %v178 = vld [vmem:[%s169] sm:$0xff]
      %v179 = vld [vmem:[%s169 + $0x8] sm:$0xff]
      %v180 = vld [vmem:[%s169 + $0x10] sm:$0xff]
      %v181 = vld [vmem:[%s169 + $0x18] sm:$0xff]
      %v182 = vld [vmem:[%s1] sm:$0xf]
      %v183 = vld [vmem:[%s1 + $0x4] sm:$0xf]
      %v184 = vld [vmem:[%s1 + $0x8] sm:$0xf]
      %v185 = vld [vmem:[%s1 + $0xc] sm:$0xf]
      %v186 = vld [vmem:[%s1 + $0x10] sm:$0xf]
      %v187 = vld [vmem:[%s1 + $0x14] sm:$0xf]
      %v188 = vld [vmem:[%s1 + $0x18] sm:$0xf]
      %v189 = vld [vmem:[%s1 + $0x1c] sm:$0xf]
      %v190 = vld [vmem:[%s1 + $0x20] sm:$0xf]
      %v191 = vld [vmem:[%s1 + $0x24] sm:$0xf]
      %v192 = vld [vmem:[%s1 + $0x28] sm:$0xf]
      %v193 = vld [vmem:[%s1 + $0x2c] sm:$0xf]
      %v194 = vld [vmem:[%s1 + $0x30] sm:$0xf]
      %v195 = vld [vmem:[%s1 + $0x34] sm:$0xf]
      %v196 = vld [vmem:[%s1 + $0x38] sm:$0xf]
      %v197 = vld [vmem:[%s1 + $0x3c] sm:$0xf]
      %v198 = vld [vmem:[%s1 + $0x40] sm:$0xf]
      %v199 = vld [vmem:[%s1 + $0x44] sm:$0xf]
      %v200 = vld [vmem:[%s1 + $0x48] sm:$0xf]
      %v201 = vld [vmem:[%s1 + $0x4c] sm:$0xf]
      %v202 = vld [vmem:[%s1 + $0x50] sm:$0xf]
      %v203 = vld [vmem:[%s1 + $0x54] sm:$0xf]
      %v204 = vld [vmem:[%s1 + $0x58] sm:$0xf]
      %v205 = vld [vmem:[%s1 + $0x5c] sm:$0xf]
      %v206 = vld [vmem:[%s1 + $0x60] sm:$0xf]
      %v207 = vld [vmem:[%s1 + $0x64] sm:$0xf]
      %v208 = vld [vmem:[%s1 + $0x68] sm:$0xf]
      %v209 = vld [vmem:[%s1 + $0x6c] sm:$0xf]
      %v210 = vld [vmem:[%s1 + $0x70] sm:$0xf]
      %v211 = vld [vmem:[%s1 + $0x74] sm:$0xf]
      %v212 = vld [vmem:[%s1 + $0x78] sm:$0xf]
      %v213 = vld [vmem:[%s1 + $0x7c] sm:$0xf]
      %v214 = vld [vmem:[%s1 + $0x80] sm:$0xf]
      %v215 = vld [vmem:[%s1 + $0x84] sm:$0xf]
      %v216 = vld [vmem:[%s1 + $0x88] sm:$0xf]
      %v217 = vld [vmem:[%s1 + $0x8c] sm:$0xf]
      %v218 = vld [vmem:[%s1 + $0x90] sm:$0xf]
      %v219 = vld [vmem:[%s1 + $0x94] sm:$0xf]
      %v220 = vld [vmem:[%s1 + $0x98] sm:$0xf]
      %v221 = vld [vmem:[%s1 + $0x9c] sm:$0xf]
      %v222 = vld [vmem:[%s1 + $0xa0] sm:$0xf]
      %v223 = vld [vmem:[%s1 + $0xa4] sm:$0xf]
      %v224 = vld [vmem:[%s1 + $0xa8] sm:$0xf]
      %v225 = vld [vmem:[%s1 + $0xac] sm:$0xf]
      %v226 = vld [vmem:[%s1 + $0xb0] sm:$0xf]
      %v227 = vld [vmem:[%s1 + $0xb4] sm:$0xf]
      %v228 = vld [vmem:[%s1 + $0xb8] sm:$0xf]
      %v229 = vld [vmem:[%s1 + $0xbc] sm:$0xf]
      %v230 = vld [vmem:[%s1 + $0xc0] sm:$0xf]
      %v231 = vld [vmem:[%s1 + $0xc4] sm:$0xf]
      %v232 = vld [vmem:[%s1 + $0xc8] sm:$0xf]
      %v233 = vld [vmem:[%s1 + $0xcc] sm:$0xf]
      %v234 = vld [vmem:[%s1 + $0xd0] sm:$0xf]
      %v235 = vld [vmem:[%s1 + $0xd4] sm:$0xf]
      %v236 = vld [vmem:[%s1 + $0xd8] sm:$0xf]
      %v237 = vld [vmem:[%s1 + $0xdc] sm:$0xf]
      %v238 = vld [vmem:[%s1 + $0xe0] sm:$0xf]
      %v239 = vld [vmem:[%s1 + $0xe4] sm:$0xf]
      %v240 = vld [vmem:[%s1 + $0xe8] sm:$0xf]
      %v241 = vld [vmem:[%s1 + $0xec] sm:$0xf]
      %v242 = vld [vmem:[%s1 + $0xf0] sm:$0xf]
      %v243 = vld [vmem:[%s1 + $0xf4] sm:$0xf]
      %v244 = vld [vmem:[%s1 + $0xf8] sm:$0xf]
      %v245 = vld [vmem:[%s1 + $0xfc] sm:$0xf]
      %v246 = vld [vmem:[%s2] sm:$0x1]
      %v248 = vlaneseq
      %v249 = vshrl.u32 %v248, 7
      %v250 = vsub.s32 0, %v249
      %v251 = vrot.slane %v246, %v250
      %v257 = vunpack.c.l.b16 %v178
      %v258 = vunpack.c.h.b16 %v178
      %v259 = vunpack.c.l.b16 %v179
      %v260 = vunpack.c.h.b16 %v179
      %v261 = vunpack.c.l.b16 %v180
      %v262 = vunpack.c.h.b16 %v180
      %v263 = vunpack.c.l.b16 %v181
      %v264 = vunpack.c.h.b16 %v181
      %v265 = vpack.c.b16 %v261, %v257
      %v266 = vpack.c.b16 %v262, %v258
      %v267 = vpack.c.b16 %v263, %v259
      %v268 = vpack.c.b16 %v264, %v260
      %v337 = vunpack.c.l.b16 %v182
      %v338 = vunpack.c.l.b16 %v183
      %v339 = vunpack.c.l.b16 %v184
      %v340 = vunpack.c.l.b16 %v185
      %v341 = vunpack.c.l.b16 %v186
      %v342 = vunpack.c.l.b16 %v187
      %v343 = vunpack.c.l.b16 %v188
      %v344 = vunpack.c.l.b16 %v189
      %v345 = vunpack.c.l.b16 %v190
      %v346 = vunpack.c.l.b16 %v191
      %v347 = vunpack.c.l.b16 %v192
      %v348 = vunpack.c.l.b16 %v193
      %v349 = vunpack.c.l.b16 %v194
      %v350 = vunpack.c.l.b16 %v195
      %v351 = vunpack.c.l.b16 %v196
      %v352 = vunpack.c.l.b16 %v197
      %v353 = vunpack.c.l.b16 %v198
      %v354 = vunpack.c.l.b16 %v199
      %v355 = vunpack.c.l.b16 %v200
      %v356 = vunpack.c.l.b16 %v201
      %v357 = vunpack.c.l.b16 %v202
      %v358 = vunpack.c.l.b16 %v203
      %v359 = vunpack.c.l.b16 %v204
      %v360 = vunpack.c.l.b16 %v205
      %v361 = vunpack.c.l.b16 %v206
      %v362 = vunpack.c.l.b16 %v207
      %v363 = vunpack.c.l.b16 %v208
      %v364 = vunpack.c.l.b16 %v209
      %v365 = vunpack.c.l.b16 %v210
      %v366 = vunpack.c.l.b16 %v211
      %v367 = vunpack.c.l.b16 %v212
      %v368 = vunpack.c.l.b16 %v213
      %v369 = vunpack.c.l.b16 %v214
      %v370 = vunpack.c.l.b16 %v215
      %v371 = vunpack.c.l.b16 %v216
      %v372 = vunpack.c.l.b16 %v217
      %v373 = vunpack.c.l.b16 %v218
      %v374 = vunpack.c.l.b16 %v219
      %v375 = vunpack.c.l.b16 %v220
      %v376 = vunpack.c.l.b16 %v221
      %v377 = vunpack.c.l.b16 %v222
      %v378 = vunpack.c.l.b16 %v223
      %v379 = vunpack.c.l.b16 %v224
      %v380 = vunpack.c.l.b16 %v225
      %v381 = vunpack.c.l.b16 %v226
      %v382 = vunpack.c.l.b16 %v227
      %v383 = vunpack.c.l.b16 %v228
      %v384 = vunpack.c.l.b16 %v229
      %v385 = vunpack.c.l.b16 %v230
      %v386 = vunpack.c.l.b16 %v231
      %v387 = vunpack.c.l.b16 %v232
      %v388 = vunpack.c.l.b16 %v233
      %v389 = vunpack.c.l.b16 %v234
      %v390 = vunpack.c.l.b16 %v235
      %v391 = vunpack.c.l.b16 %v236
      %v392 = vunpack.c.l.b16 %v237
      %v393 = vunpack.c.l.b16 %v238
      %v394 = vunpack.c.l.b16 %v239
      %v395 = vunpack.c.l.b16 %v240
      %v396 = vunpack.c.l.b16 %v241
      %v397 = vunpack.c.l.b16 %v242
      %v398 = vunpack.c.l.b16 %v243
      %v399 = vunpack.c.l.b16 %v244
      %v400 = vunpack.c.l.b16 %v245
      %v401 = vpack.c.b16 %v338, %v337
      %v402 = vpack.c.b16 %v340, %v339
      %v403 = vpack.c.b16 %v342, %v341
      %v404 = vpack.c.b16 %v344, %v343
      %v405 = vpack.c.b16 %v346, %v345
      %v406 = vpack.c.b16 %v348, %v347
      %v407 = vpack.c.b16 %v350, %v349
      %v408 = vpack.c.b16 %v352, %v351
      %v409 = vpack.c.b16 %v354, %v353
      %v410 = vpack.c.b16 %v356, %v355
      %v411 = vpack.c.b16 %v358, %v357
      %v412 = vpack.c.b16 %v360, %v359
      %v413 = vpack.c.b16 %v362, %v361
      %v414 = vpack.c.b16 %v364, %v363
      %v415 = vpack.c.b16 %v366, %v365
      %v416 = vpack.c.b16 %v368, %v367
      %v417 = vpack.c.b16 %v370, %v369
      %v418 = vpack.c.b16 %v372, %v371
      %v419 = vpack.c.b16 %v374, %v373
      %v420 = vpack.c.b16 %v376, %v375
      %v421 = vpack.c.b16 %v378, %v377
      %v422 = vpack.c.b16 %v380, %v379
      %v423 = vpack.c.b16 %v382, %v381
      %v424 = vpack.c.b16 %v384, %v383
      %v425 = vpack.c.b16 %v386, %v385
      %v426 = vpack.c.b16 %v388, %v387
      %v427 = vpack.c.b16 %v390, %v389
      %v428 = vpack.c.b16 %v392, %v391
      %v429 = vpack.c.b16 %v394, %v393
      %v430 = vpack.c.b16 %v396, %v395
      %v431 = vpack.c.b16 %v398, %v397
      %v432 = vpack.c.b16 %v400, %v399
      %465 = vmatprep.subr.bf16.mxu0 0
      %466 = vmatpush1.bf16.msra.mxu0 %v401
      %467 = vmatprep.subr.bf16.mxu0 0
      %468 = vmatpush1.bf16.msra.mxu0 %v402
      %469 = vmatprep.subr.bf16.mxu0 0
      %470 = vmatpush1.bf16.msra.mxu0 %v403
      %471 = vmatprep.subr.bf16.mxu0 0
      %472 = vmatpush1.bf16.msra.mxu0 %v404
      %473 = vmatprep.subr.bf16.mxu0 0
      %474 = vmatpush1.bf16.msra.mxu0 %v405
      %475 = vmatprep.subr.bf16.mxu0 0
      %476 = vmatpush1.bf16.msra.mxu0 %v406
      %477 = vmatprep.subr.bf16.mxu0 0
      %478 = vmatpush1.bf16.msra.mxu0 %v407
      %479 = vmatprep.subr.bf16.mxu0 0
      %480 = vmatpush1.bf16.msra.mxu0 %v408
      %481 = vmatprep.subr.bf16.mxu0 0
      %482 = vmatpush1.bf16.msra.mxu0 %v409
      %483 = vmatprep.subr.bf16.mxu0 0
      %484 = vmatpush1.bf16.msra.mxu0 %v410
      %485 = vmatprep.subr.bf16.mxu0 0
      %486 = vmatpush1.bf16.msra.mxu0 %v411
      %487 = vmatprep.subr.bf16.mxu0 0
      %488 = vmatpush1.bf16.msra.mxu0 %v412
      %489 = vmatprep.subr.bf16.mxu0 0
      %490 = vmatpush1.bf16.msra.mxu0 %v413
      %491 = vmatprep.subr.bf16.mxu0 0
      %492 = vmatpush1.bf16.msra.mxu0 %v414
      %493 = vmatprep.subr.bf16.mxu0 0
      %494 = vmatpush1.bf16.msra.mxu0 %v415
      %495 = vmatprep.subr.bf16.mxu0 0
      %496 = vmatpush1.bf16.msra.mxu0 %v416
      %497 = vmatprep.mubr.bf16.mxu0 %v266
      %498 = vmatmul.mubr.bf16.gmra.mrb[0].mxu0 %v265
      %v499 = vpop.f32.mrb[0].mxu0
      %v500 = vadd.f32 %v251, %v499
      %v501 = vpop.f32.mrb[0].mxu0
      %v502 = vpop.f32.mrb[0].mxu0
      %v503 = vadd.f32 %v251, %v502
      %v504 = vpop.f32.mrb[0].mxu0
      %505 = vdwg.mxu0
      %506 = vmatprep.subr.bf16.mxu0 0
      %507 = vmatpush1.bf16.msra.mxu0 %v417
      %508 = vmatprep.subr.bf16.mxu0 0
      %509 = vmatpush1.bf16.msra.mxu0 %v418
      %510 = vmatprep.subr.bf16.mxu0 0
      %511 = vmatpush1.bf16.msra.mxu0 %v419
      %512 = vmatprep.subr.bf16.mxu0 0
      %513 = vmatpush1.bf16.msra.mxu0 %v420
      %514 = vmatprep.subr.bf16.mxu0 0
      %515 = vmatpush1.bf16.msra.mxu0 %v421
      %516 = vmatprep.subr.bf16.mxu0 0
      %517 = vmatpush1.bf16.msra.mxu0 %v422
      %518 = vmatprep.subr.bf16.mxu0 0
      %519 = vmatpush1.bf16.msra.mxu0 %v423
      %520 = vmatprep.subr.bf16.mxu0 0
      %521 = vmatpush1.bf16.msra.mxu0 %v424
      %522 = vmatprep.subr.bf16.mxu0 0
      %523 = vmatpush1.bf16.msra.mxu0 %v425
      %524 = vmatprep.subr.bf16.mxu0 0
      %525 = vmatpush1.bf16.msra.mxu0 %v426
      %526 = vmatprep.subr.bf16.mxu0 0
      %527 = vmatpush1.bf16.msra.mxu0 %v427
      %528 = vmatprep.subr.bf16.mxu0 0
      %529 = vmatpush1.bf16.msra.mxu0 %v428
      %530 = vmatprep.subr.bf16.mxu0 0
      %531 = vmatpush1.bf16.msra.mxu0 %v429
      %532 = vmatprep.subr.bf16.mxu0 0
      %533 = vmatpush1.bf16.msra.mxu0 %v430
      %534 = vmatprep.subr.bf16.mxu0 0
      %535 = vmatpush1.bf16.msra.mxu0 %v431
      %536 = vmatprep.subr.bf16.mxu0 0
      %537 = vmatpush1.bf16.msra.mxu0 %v432
      %538 = vmatprep.mubr.bf16.mxu0 %v268
      %539 = vmatmul.mubr.bf16.gmra.mrb[0].mxu0 %v267
      %v540 = vpop.f32.mrb[0].mxu0
      %v541 = vadd.f32 %v500, %v540
      %v542 = vpop.f32.mrb[0].mxu0
      %v543 = vpop.f32.mrb[0].mxu0
      %v544 = vadd.f32 %v503, %v543
      %v545 = vpop.f32.mrb[0].mxu0
      %546 = vdwg.mxu0
      %547 = vst [vmem:[%s175] sm:$0xff] %v541
      %548 = vst [vmem:[%s175 + $0x8] sm:$0xff] %v544
      %s549 = smul.u32 2, %s14
      %p550 = scmp.lt.s32.totalorder %s549, 3
      %s551 = scalar_select %p550, %s549, 3
      %s552 = smul.addr %s551, 8
      %s553 = scalar_lea.vmem %s3, %s552
      // Predicated region
      $region33: #{dct_stream_forward.47} parent=31 // pred_check
        %p554 = pneg %p100
      $region34: #{dct_stream_forward.47} parent=31 // pred_check_branch
        %556 = sbr.rel (%p554) target = $region36
      $region35: #{dct_stream_forward.47} parent=31 // pred_region
        %s557 = smul.u32 2, %s14
      $region36: #{dct_stream_forward.47} parent=31 // pred_fallthru
        _
    $region32: #{dct_stream_forward.47} parent=5 // pred_fallthru
      _
    %p558 = scmp.le.s32.totalorder 2, %s9
    // Predicated region
    $region37: #{dct_stream_forward.47} parent=5 // pred_check
      %p559 = pneg %p558
    $region38: #{dct_stream_forward.47} parent=5 // pred_check_branch
      %561 = sbr.rel (%p559) target = $region40
    $region39: #{dct_stream_forward.47} parent=5 // pred_region
      %s562 = ssub.s32 %s9, 2
      // Predicated region
      $region41: #{dct_stream_forward.47} parent=39 // pred_check
        %p563 = pneg %p106
      $region42: #{dct_stream_forward.47} parent=39 // pred_check_branch
        %565 = sbr.rel (%p563) target = $region44
      $region43: #{dct_stream_forward.47} parent=39 // pred_region
        %s566 = smul.u32 2, %s15
        %p567 = scmp.lt.s32.totalorder %s566, 3
        %s568 = scalar_select %p567, %s566, 3
        %s569 = smul.addr %s568, 8
        %s570 = scalar_lea.vmem %s3, %s569
      $region44: #{dct_stream_forward.47} parent=39 // pred_fallthru
        _
    $region40: #{dct_stream_forward.47} parent=5 // pred_fallthru
      _
  $region6: #{dct_stream_forward.47} parent=0 // loop_footer
    %s13 = sadd.s32 1, %s9
  $region7: #{dct_stream_forward.47} parent=0 // loop_footer_branch
    %8 = sbr.rel target = $region3
  $region8: #{dct_stream_forward.47} parent=0 // loop_exit
    _

// kernel: dct_stream_forward.50
$region0: #{dct_stream_forward.50}
  #allocation0 [shape = 'u32[]', space=smem, size = 0x4, offset = 0x4, fixed_abs, tag = 'smem constant byte address 0x4 - core index']
  #allocation1 [shape = 'u32[144,128]{1,0:T(1,128)}', space=vmem, size = 0x12000, scoped, tag = 'internal scratch']
  %s0 = inlined_call_operand.vmem [shape: bf16[32,896], index: 0, kind: input, shape index: {}]
  %s1 = inlined_call_operand.vmem [shape: bf16[896,128], index: 1, kind: input, shape index: {}]
  %s2 = inlined_call_operand.vmem [shape: f32[1,128], index: 2, kind: input, shape index: {}]
  %s3 = inlined_call_operand.vmem [shape: f32[32,128], index: 3, kind: output, shape index: {}]
  %s4 = sld [smem:[#allocation0]]
  $region45: #{dct_stream_forward.50} parent=0
    _
  %s6 = ssub.s32 1, %s4
  %s7 = scalar_select 0, %s6, %s4
  loop: start=0, step=1, limit=4
  $region2: #{dct_stream_forward.50} parent=0 // loop_pre_header
    _
  $region3: #{dct_stream_forward.50} parent=0 // loop_header
    %s9 = sphi 0, %s13
    %p10 = scmp.ge.s32.totalorder %s9, 4
    %s19 = sphi 0, %s21
    %s22 = sphi 0, %s19
    %s23 = sphi 0, %s22
    %s39 = sphi 0, %s23
    %s43 = sphi 0, %s43
    %s45 = sphi 0, %s43
    %s46 = sphi 0, %s45
    %s60 = sphi 0, %s46
    %s64 = sphi 0, %s64
    %s66 = sphi 0, %s64
    %s67 = sphi 0, %s66
    %s81 = sphi 0, %s67
    %s87 = sphi 0, %s89
    %s90 = sphi 0, %s87
    %s91 = sphi 0, %s90
    %s107 = sphi 0, %s91
  $region4: #{dct_stream_forward.50} parent=0 // loop_header_branch
    %12 = sbr.rel (%p10) target = $region8
  $region5: #{dct_stream_forward.50} parent=0 // loop_body
    %s14 = ssub.s32 %s9, 1
    %s15 = ssub.s32 %s9, 2
    %s16 = sadd.s32 %s9, 1
    %s17 = ssub.s32 %s9, %s16
    %p18 = scmp.eq.s32.totalorder %s17, 0
    %s20 = sadd.s32 %s19, 1
    %s21 = scalar_select %p18, %s19, %s20
    %p24 = pneg %p18
    %p25 = scmp.eq.s32.totalorder %s9, 1
    %p26 = por %p24, %p25
    %p27 = scmp.ne.s32.totalorder %s19, %s22
    %p28 = scmp.eq.s32.totalorder %s9, 0
    %p29 = por %p27, %p28
    %p30 = scmp.ne.s32.totalorder %s19, %s22
    %p31 = scmp.eq.s32.totalorder %s14, 1
    %p32 = por %p30, %p31
    %p33 = scmp.ne.s32.totalorder %s22, %s23
    %p34 = scmp.eq.s32.totalorder %s14, 0
    %p35 = por %p33, %p34
    %p36 = scmp.ne.s32.totalorder %s22, %s23
    %p37 = scmp.eq.s32.totalorder %s15, 1
    %p38 = por %p36, %p37
    %p40 = scmp.ne.s32.totalorder %s23, %s39
    %p41 = scmp.eq.s32.totalorder %s15, 0
    %p42 = por %p40, %p41
    %s44 = sadd.s32 %s43, 1
    %p47 = scmp.eq.s32.totalorder %s9, 1
    %p48 = scmp.ne.s32.totalorder %s43, %s45
    %p49 = scmp.eq.s32.totalorder %s9, 0
    %p50 = por %p48, %p49
    %p51 = scmp.ne.s32.totalorder %s43, %s45
    %p52 = scmp.eq.s32.totalorder %s14, 1
    %p53 = por %p51, %p52
    %p54 = scmp.ne.s32.totalorder %s45, %s46
    %p55 = scmp.eq.s32.totalorder %s14, 0
    %p56 = por %p54, %p55
    %p57 = scmp.ne.s32.totalorder %s45, %s46
    %p58 = scmp.eq.s32.totalorder %s15, 1
    %p59 = por %p57, %p58
    %p61 = scmp.ne.s32.totalorder %s46, %s60
    %p62 = scmp.eq.s32.totalorder %s15, 0
    %p63 = por %p61, %p62
    %s65 = sadd.s32 %s64, 1
    %p68 = scmp.eq.s32.totalorder %s9, 1
    %p69 = scmp.ne.s32.totalorder %s64, %s66
    %p70 = scmp.eq.s32.totalorder %s9, 0
    %p71 = por %p69, %p70
    %p72 = scmp.ne.s32.totalorder %s64, %s66
    %p73 = scmp.eq.s32.totalorder %s14, 1
    %p74 = por %p72, %p73
    %p75 = scmp.ne.s32.totalorder %s66, %s67
    %p76 = scmp.eq.s32.totalorder %s14, 0
    %p77 = por %p75, %p76
    %p78 = scmp.ne.s32.totalorder %s66, %s67
    %p79 = scmp.eq.s32.totalorder %s15, 1
    %p80 = por %p78, %p79
    %p82 = scmp.ne.s32.totalorder %s67, %s81
    %p83 = scmp.eq.s32.totalorder %s15, 0
    %p84 = por %p82, %p83
    %s85 = ssub.s32 %s9, %s16
    %p86 = scmp.eq.s32.totalorder %s85, 0
    %s88 = sadd.s32 %s87, 1
    %s89 = scalar_select %p86, %s87, %s88
    %p92 = pneg %p86
    %p93 = scmp.eq.s32.totalorder %s9, 1
    %p94 = por %p92, %p93
    %p95 = scmp.ne.s32.totalorder %s87, %s90
    %p96 = scmp.eq.s32.totalorder %s9, 0
    %p97 = por %p95, %p96
    %p98 = scmp.ne.s32.totalorder %s87, %s90
    %p99 = scmp.eq.s32.totalorder %s14, 1
    %p100 = por %p98, %p99
    %p101 = scmp.ne.s32.totalorder %s90, %s91
    %p102 = scmp.eq.s32.totalorder %s14, 0
    %p103 = por %p101, %p102
    %p104 = scmp.ne.s32.totalorder %s90, %s91
    %p105 = scmp.eq.s32.totalorder %s15, 1
    %p106 = por %p104, %p105
    %p108 = scmp.ne.s32.totalorder %s91, %s107
    %p109 = scmp.eq.s32.totalorder %s15, 0
    %p110 = por %p108, %p109
    %p111 = scmp.le.s32.totalorder 1, %s9
    %p112 = scmp.lt.s32.totalorder %s9, 3
    %p113 = pnand %p111, %p112
    %p114 = pneg %p113
    // Predicated region
    $region9: #{dct_stream_forward.50} parent=5 // pred_check
      _
    $region10: #{dct_stream_forward.50} parent=5 // pred_check_branch
      %116 = sbr.rel (%p113) target = $region12
    $region11: #{dct_stream_forward.50} parent=5 // pred_region
      %s117 = ssub.s32 %s9, 1
      // Predicated region
      $region13: #{dct_stream_forward.50} parent=11 // pred_check
        %p118 = pneg %p56
      $region14: #{dct_stream_forward.50} parent=11 // pred_check_branch
        %120 = sbr.rel (%p118) target = $region16
      $region15: #{dct_stream_forward.50} parent=11 // pred_region
        _
      $region16: #{dct_stream_forward.50} parent=11 // pred_fallthru
        _
      // Predicated region
      $region17: #{dct_stream_forward.50} parent=11 // pred_check
        %p121 = pneg %p77
      $region18: #{dct_stream_forward.50} parent=11 // pred_check_branch
        %123 = sbr.rel (%p121) target = $region20
      $region19: #{dct_stream_forward.50} parent=11 // pred_region
        _
      $region20: #{dct_stream_forward.50} parent=11 // pred_fallthru
        _
    $region12: #{dct_stream_forward.50} parent=5 // pred_fallthru
      _
    %p124 = scmp.lt.s32.totalorder %s9, 2
    // Predicated region
    $region21: #{dct_stream_forward.50} parent=5 // pred_check
      %p125 = pneg %p124
    $region22: #{dct_stream_forward.50} parent=5 // pred_check_branch
      %127 = sbr.rel (%p125) target = $region24
    $region23: #{dct_stream_forward.50} parent=5 // pred_region
      // Predicated region
      $region25: #{dct_stream_forward.50} parent=23 // pred_check
        %p128 = pneg %p29
      $region26: #{dct_stream_forward.50} parent=23 // pred_check_branch
        %130 = sbr.rel (%p128) target = $region28
      $region27: #{dct_stream_forward.50} parent=23 // pred_region
        %s131 = smul.u32 2, %s9
        %p132 = scmp.lt.s32.totalorder %s131, 3
        %s133 = scalar_select %p132, %s131, 3
        %s134 = smul.addr %s133, 7
        %s135 = smul.addr %s134, 4
        %s136 = scalar_lea.vmem %s0, %s135
        %s137 = smul.u32 2, %s9
      $region28: #{dct_stream_forward.50} parent=23 // pred_fallthru
        _
    $region24: #{dct_stream_forward.50} parent=5 // pred_fallthru
      _
    %p138 = scmp.le.s32.totalorder 1, %s9
    %p139 = scmp.lt.s32.totalorder %s9, 3
    %p140 = pnand %p138, %p139
    %p141 = pneg %p140
    // Predicated region
    $region29: #{dct_stream_forward.50} parent=5 // pred_check
      _
    $region30: #{dct_stream_forward.50} parent=5 // pred_check_branch
      %143 = sbr.rel (%p140) target = $region32
    $region31: #{dct_stream_forward.50} parent=5 // pred_region
      %s144 = ssub.s32 %s9, 1
      %s145 = smul.u32 2, %s14
      %p146 = scmp.lt.s32.totalorder %s145, 3
      %s147 = scalar_select %p146, %s145, 3
      %s148 = smul.addr %s147, 7
      %s149 = smul.addr %s148, 4
      %s150 = scalar_lea.vmem %s0, %s149
      %p151 = pneg %p35
      %p152 = pneg %p32
      %p153 = pneg %p56
      %p154 = pneg %p53
      %p155 = pneg %p77
      %p156 = pneg %p74
      %p157 = pneg %p103
      %p158 = pneg %p100
      %s159 = smul.u32 2, %s14
      %p160 = scmp.lt.s32.totalorder %s159, 3
      %s161 = scalar_select %p160, %s159, 3
      %s162 = smul.addr %s161, 8
      %s163 = scalar_lea.vmem %s3, %s162
      %s164 = smul.u32 2, %s14
      %p165 = scmp.lt.s32.totalorder %s164, 3
      %s166 = scalar_select %p165, %s164, 3
      %s167 = smul.addr %s166, 7
      %s168 = smul.addr %s167, 4
      %s169 = scalar_lea.vmem %s0, %s168
      %s170 = smul.u32 2, %s14
      %s171 = smul.u32 2, %s14
      %p172 = scmp.lt.s32.totalorder %s171, 3
      %s173 = scalar_select %p172, %s171, 3
      %s174 = smul.addr %s173, 8
      %s175 = scalar_lea.vmem %s3, %s174
      %s176 = smul.u32 2, %s14
      %v178 = vld [vmem:[%s169] sm:$0xff]
      %v179 = vld [vmem:[%s169 + $0x8] sm:$0xff]
      %v180 = vld [vmem:[%s169 + $0x10] sm:$0xff]
      %v181 = vld [vmem:[%s169 + $0x18] sm:$0xf]
      %v182 = vld [vmem:[%s169 + $0x1c] sm:$0xff]
      %v183 = vld [vmem:[%s169 + $0x24] sm:$0xff]
      %v184 = vld [vmem:[%s169 + $0x2c] sm:$0xff]
      %v185 = vld [vmem:[%s169 + $0x34] sm:$0xf]
      %v186 = vld [vmem:[%s1] sm:$0xf]
      %v187 = vld [vmem:[%s1 + $0x4] sm:$0xf]
      %v188 = vld [vmem:[%s1 + $0x8] sm:$0xf]
      %v189 = vld [vmem:[%s1 + $0xc] sm:$0xf]
      %v190 = vld [vmem:[%s1 + $0x10] sm:$0xf]
      %v191 = vld [vmem:[%s1 + $0x14] sm:$0xf]
      %v192 = vld [vmem:[%s1 + $0x18] sm:$0xf]
      %v193 = vld [vmem:[%s1 + $0x1c] sm:$0xf]
      %v194 = vld [vmem:[%s1 + $0x20] sm:$0xf]
      %v195 = vld [vmem:[%s1 + $0x24] sm:$0xf]
      %v196 = vld [vmem:[%s1 + $0x28] sm:$0xf]
      %v197 = vld [vmem:[%s1 + $0x2c] sm:$0xf]
      %v198 = vld [vmem:[%s1 + $0x30] sm:$0xf]
      %v199 = vld [vmem:[%s1 + $0x34] sm:$0xf]
      %v200 = vld [vmem:[%s1 + $0x38] sm:$0xf]
      %v201 = vld [vmem:[%s1 + $0x3c] sm:$0xf]
      %v202 = vld [vmem:[%s1 + $0x40] sm:$0xf]
      %v203 = vld [vmem:[%s1 + $0x44] sm:$0xf]
      %v204 = vld [vmem:[%s1 + $0x48] sm:$0xf]
      %v205 = vld [vmem:[%s1 + $0x4c] sm:$0xf]
      %v206 = vld [vmem:[%s1 + $0x50] sm:$0xf]
      %v207 = vld [vmem:[%s1 + $0x54] sm:$0xf]
      %v208 = vld [vmem:[%s1 + $0x58] sm:$0xf]
      %v209 = vld [vmem:[%s1 + $0x5c] sm:$0xf]
      %v210 = vld [vmem:[%s1 + $0x60] sm:$0xf]
      %v211 = vld [vmem:[%s1 + $0x64] sm:$0xf]
      %v212 = vld [vmem:[%s1 + $0x68] sm:$0xf]
      %v213 = vld [vmem:[%s1 + $0x6c] sm:$0xf]
      %v214 = vld [vmem:[%s1 + $0x70] sm:$0xf]
      %v215 = vld [vmem:[%s1 + $0x74] sm:$0xf]
      %v216 = vld [vmem:[%s1 + $0x78] sm:$0xf]
      %v217 = vld [vmem:[%s1 + $0x7c] sm:$0xf]
      %v218 = vld [vmem:[%s1 + $0x80] sm:$0xf]
      %v219 = vld [vmem:[%s1 + $0x84] sm:$0xf]
      %v220 = vld [vmem:[%s1 + $0x88] sm:$0xf]
      %v221 = vld [vmem:[%s1 + $0x8c] sm:$0xf]
      %v222 = vld [vmem:[%s1 + $0x90] sm:$0xf]
      %v223 = vld [vmem:[%s1 + $0x94] sm:$0xf]
      %v224 = vld [vmem:[%s1 + $0x98] sm:$0xf]
      %v225 = vld [vmem:[%s1 + $0x9c] sm:$0xf]
      %v226 = vld [vmem:[%s1 + $0xa0] sm:$0xf]
      %v227 = vld [vmem:[%s1 + $0xa4] sm:$0xf]
      %v228 = vld [vmem:[%s1 + $0xa8] sm:$0xf]
      %v229 = vld [vmem:[%s1 + $0xac] sm:$0xf]
      %v230 = vld [vmem:[%s1 + $0xb0] sm:$0xf]
      %v231 = vld [vmem:[%s1 + $0xb4] sm:$0xf]
      %v232 = vld [vmem:[%s1 + $0xb8] sm:$0xf]
      %v233 = vld [vmem:[%s1 + $0xbc] sm:$0xf]
      %v234 = vld [vmem:[%s1 + $0xc0] sm:$0xf]
      %v235 = vld [vmem:[%s1 + $0xc4] sm:$0xf]
      %v236 = vld [vmem:[%s1 + $0xc8] sm:$0xf]
      %v237 = vld [vmem:[%s1 + $0xcc] sm:$0xf]
      %v238 = vld [vmem:[%s1 + $0xd0] sm:$0xf]
      %v239 = vld [vmem:[%s1 + $0xd4] sm:$0xf]
      %v240 = vld [vmem:[%s1 + $0xd8] sm:$0xf]
      %v241 = vld [vmem:[%s1 + $0xdc] sm:$0xf]
      %v242 = vld [vmem:[%s1 + $0xe0] sm:$0xf]
      %v243 = vld [vmem:[%s1 + $0xe4] sm:$0xf]
      %v244 = vld [vmem:[%s1 + $0xe8] sm:$0xf]
      %v245 = vld [vmem:[%s1 + $0xec] sm:$0xf]
      %v246 = vld [vmem:[%s1 + $0xf0] sm:$0xf]
      %v247 = vld [vmem:[%s1 + $0xf4] sm:$0xf]
      %v248 = vld [vmem:[%s1 + $0xf8] sm:$0xf]
      %v249 = vld [vmem:[%s1 + $0xfc] sm:$0xf]
      %v250 = vld [vmem:[%s1 + $0x100] sm:$0xf]
      %v251 = vld [vmem:[%s1 + $0x104] sm:$0xf]
      %v252 = vld [vmem:[%s1 + $0x108] sm:$0xf]
      %v253 = vld [vmem:[%s1 + $0x10c] sm:$0xf]
      %v254 = vld [vmem:[%s1 + $0x110] sm:$0xf]
      %v255 = vld [vmem:[%s1 + $0x114] sm:$0xf]
      %v256 = vld [vmem:[%s1 + $0x118] sm:$0xf]
      %v257 = vld [vmem:[%s1 + $0x11c] sm:$0xf]
      %v258 = vld [vmem:[%s1 + $0x120] sm:$0xf]
      %v259 = vld [vmem:[%s1 + $0x124] sm:$0xf]
      %v260 = vld [vmem:[%s1 + $0x128] sm:$0xf]
      %v261 = vld [vmem:[%s1 + $0x12c] sm:$0xf]
      %v262 = vld [vmem:[%s1 + $0x130] sm:$0xf]
      %v263 = vld [vmem:[%s1 + $0x134] sm:$0xf]
      %v264 = vld [vmem:[%s1 + $0x138] sm:$0xf]
      %v265 = vld [vmem:[%s1 + $0x13c] sm:$0xf]
      %v266 = vld [vmem:[%s1 + $0x140] sm:$0xf]
      %v267 = vld [vmem:[%s1 + $0x144] sm:$0xf]
      %v268 = vld [vmem:[%s1 + $0x148] sm:$0xf]
      %v269 = vld [vmem:[%s1 + $0x14c] sm:$0xf]
      %v270 = vld [vmem:[%s1 + $0x150] sm:$0xf]
      %v271 = vld [vmem:[%s1 + $0x154] sm:$0xf]
      %v272 = vld [vmem:[%s1 + $0x158] sm:$0xf]
      %v273 = vld [vmem:[%s1 + $0x15c] sm:$0xf]
      %v274 = vld [vmem:[%s1 + $0x160] sm:$0xf]
      %v275 = vld [vmem:[%s1 + $0x164] sm:$0xf]
      %v276 = vld [vmem:[%s1 + $0x168] sm:$0xf]
      %v277 = vld [vmem:[%s1 + $0x16c] sm:$0xf]
      %v278 = vld [vmem:[%s1 + $0x170] sm:$0xf]
      %v279 = vld [vmem:[%s1 + $0x174] sm:$0xf]
      %v280 = vld [vmem:[%s1 + $0x178] sm:$0xf]
      %v281 = vld [vmem:[%s1 + $0x17c] sm:$0xf]
      %v282 = vld [vmem:[%s1 + $0x180] sm:$0xf]
      %v283 = vld [vmem:[%s1 + $0x184] sm:$0xf]
      %v284 = vld [vmem:[%s1 + $0x188] sm:$0xf]
      %v285 = vld [vmem:[%s1 + $0x18c] sm:$0xf]
      %v286 = vld [vmem:[%s1 + $0x190] sm:$0xf]
      %v287 = vld [vmem:[%s1 + $0x194] sm:$0xf]
      %v288 = vld [vmem:[%s1 + $0x198] sm:$0xf]
      %v289 = vld [vmem:[%s1 + $0x19c] sm:$0xf]
      %v290 = vld [vmem:[%s1 + $0x1a0] sm:$0xf]
      %v291 = vld [vmem:[%s1 + $0x1a4] sm:$0xf]
      %v292 = vld [vmem:[%s1 + $0x1a8] sm:$0xf]
      %v293 = vld [vmem:[%s1 + $0x1ac] sm:$0xf]
      %v294 = vld [vmem:[%s1 + $0x1b0] sm:$0xf]
      %v295 = vld [vmem:[%s1 + $0x1b4] sm:$0xf]
      %v296 = vld [vmem:[%s1 + $0x1b8] sm:$0xf]
      %v297 = vld [vmem:[%s1 + $0x1bc] sm:$0xf]
      %v298 = vld [vmem:[%s2] sm:$0x1]
      %v300 = vlaneseq
      %v301 = vshrl.u32 %v300, 7
      %v302 = vsub.s32 0, %v301
      %v303 = vrot.slane %v298, %v302
      %v313 = vunpack.c.l.b16 %v178
      %v314 = vunpack.c.h.b16 %v178
      %v315 = vunpack.c.l.b16 %v179
      %v316 = vunpack.c.h.b16 %v179
      %v317 = vunpack.c.l.b16 %v180
      %v318 = vunpack.c.h.b16 %v180
      %v319 = vunpack.c.l.b16 %v181
      %v320 = vunpack.c.l.b16 %v182
      %v321 = vunpack.c.h.b16 %v182
      %v322 = vunpack.c.l.b16 %v183
      %v323 = vunpack.c.h.b16 %v183
      %v324 = vunpack.c.l.b16 %v184
      %v325 = vunpack.c.h.b16 %v184
      %v326 = vunpack.c.l.b16 %v185
      %v327 = vpack.c.b16 %v320, %v313
      %v328 = vpack.c.b16 %v321, %v314
      %v329 = vpack.c.b16 %v322, %v315
      %v330 = vpack.c.b16 %v323, %v316
      %v331 = vpack.c.b16 %v324, %v317
      %v332 = vpack.c.b16 %v325, %v318
      %v333 = vpack.c.b16 %v326, %v319
      %v453 = vunpack.c.l.b16 %v186
      %v454 = vunpack.c.l.b16 %v187
      %v455 = vunpack.c.l.b16 %v188
      %v456 = vunpack.c.l.b16 %v189
      %v457 = vunpack.c.l.b16 %v190
      %v458 = vunpack.c.l.b16 %v191
      %v459 = vunpack.c.l.b16 %v192
      %v460 = vunpack.c.l.b16 %v193
      %v461 = vunpack.c.l.b16 %v194
      %v462 = vunpack.c.l.b16 %v195
      %v463 = vunpack.c.l.b16 %v196
      %v464 = vunpack.c.l.b16 %v197
      %v465 = vunpack.c.l.b16 %v198
      %v466 = vunpack.c.l.b16 %v199
      %v467 = vunpack.c.l.b16 %v200
      %v468 = vunpack.c.l.b16 %v201
      %v469 = vunpack.c.l.b16 %v202
      %v470 = vunpack.c.l.b16 %v203
      %v471 = vunpack.c.l.b16 %v204
      %v472 = vunpack.c.l.b16 %v205
      %v473 = vunpack.c.l.b16 %v206
      %v474 = vunpack.c.l.b16 %v207
      %v475 = vunpack.c.l.b16 %v208
      %v476 = vunpack.c.l.b16 %v209
      %v477 = vunpack.c.l.b16 %v210
      %v478 = vunpack.c.l.b16 %v211
      %v479 = vunpack.c.l.b16 %v212
      %v480 = vunpack.c.l.b16 %v213
      %v481 = vunpack.c.l.b16 %v214
      %v482 = vunpack.c.l.b16 %v215
      %v483 = vunpack.c.l.b16 %v216
      %v484 = vunpack.c.l.b16 %v217
      %v485 = vunpack.c.l.b16 %v218
      %v486 = vunpack.c.l.b16 %v219
      %v487 = vunpack.c.l.b16 %v220
      %v488 = vunpack.c.l.b16 %v221
      %v489 = vunpack.c.l.b16 %v222
      %v490 = vunpack.c.l.b16 %v223
      %v491 = vunpack.c.l.b16 %v224
      %v492 = vunpack.c.l.b16 %v225
      %v493 = vunpack.c.l.b16 %v226
      %v494 = vunpack.c.l.b16 %v227
      %v495 = vunpack.c.l.b16 %v228
      %v496 = vunpack.c.l.b16 %v229
      %v497 = vunpack.c.l.b16 %v230
      %v498 = vunpack.c.l.b16 %v231
      %v499 = vunpack.c.l.b16 %v232
      %v500 = vunpack.c.l.b16 %v233
      %v501 = vunpack.c.l.b16 %v234
      %v502 = vunpack.c.l.b16 %v235
      %v503 = vunpack.c.l.b16 %v236
      %v504 = vunpack.c.l.b16 %v237
      %v505 = vunpack.c.l.b16 %v238
      %v506 = vunpack.c.l.b16 %v239
      %v507 = vunpack.c.l.b16 %v240
      %v508 = vunpack.c.l.b16 %v241
      %v509 = vunpack.c.l.b16 %v242
      %v510 = vunpack.c.l.b16 %v243
      %v511 = vunpack.c.l.b16 %v244
      %v512 = vunpack.c.l.b16 %v245
      %v513 = vunpack.c.l.b16 %v246
      %v514 = vunpack.c.l.b16 %v247
      %v515 = vunpack.c.l.b16 %v248
      %v516 = vunpack.c.l.b16 %v249
      %v517 = vunpack.c.l.b16 %v250
      %v518 = vunpack.c.l.b16 %v251
      %v519 = vunpack.c.l.b16 %v252
      %v520 = vunpack.c.l.b16 %v253
      %v521 = vunpack.c.l.b16 %v254
      %v522 = vunpack.c.l.b16 %v255
      %v523 = vunpack.c.l.b16 %v256
      %v524 = vunpack.c.l.b16 %v257
      %v525 = vunpack.c.l.b16 %v258
      %v526 = vunpack.c.l.b16 %v259
      %v527 = vunpack.c.l.b16 %v260
      %v528 = vunpack.c.l.b16 %v261
      %v529 = vunpack.c.l.b16 %v262
      %v530 = vunpack.c.l.b16 %v263
      %v531 = vunpack.c.l.b16 %v264
      %v532 = vunpack.c.l.b16 %v265
      %v533 = vunpack.c.l.b16 %v266
      %v534 = vunpack.c.l.b16 %v267
      %v535 = vunpack.c.l.b16 %v268
      %v536 = vunpack.c.l.b16 %v269
      %v537 = vunpack.c.l.b16 %v270
      %v538 = vunpack.c.l.b16 %v271
      %v539 = vunpack.c.l.b16 %v272
      %v540 = vunpack.c.l.b16 %v273
      %v541 = vunpack.c.l.b16 %v274
      %v542 = vunpack.c.l.b16 %v275
      %v543 = vunpack.c.l.b16 %v276
      %v544 = vunpack.c.l.b16 %v277
      %v545 = vunpack.c.l.b16 %v278
      %v546 = vunpack.c.l.b16 %v279
      %v547 = vunpack.c.l.b16 %v280
      %v548 = vunpack.c.l.b16 %v281
      %v549 = vunpack.c.l.b16 %v282
      %v550 = vunpack.c.l.b16 %v283
      %v551 = vunpack.c.l.b16 %v284
      %v552 = vunpack.c.l.b16 %v285
      %v553 = vunpack.c.l.b16 %v286
      %v554 = vunpack.c.l.b16 %v287
      %v555 = vunpack.c.l.b16 %v288
      %v556 = vunpack.c.l.b16 %v289
      %v557 = vunpack.c.l.b16 %v290
      %v558 = vunpack.c.l.b16 %v291
      %v559 = vunpack.c.l.b16 %v292
      %v560 = vunpack.c.l.b16 %v293
      %v561 = vunpack.c.l.b16 %v294
      %v562 = vunpack.c.l.b16 %v295
      %v563 = vunpack.c.l.b16 %v296
      %v564 = vunpack.c.l.b16 %v297
      %v565 = vpack.c.b16 %v454, %v453
      %v566 = vpack.c.b16 %v456, %v455
      %v567 = vpack.c.b16 %v458, %v457
      %v568 = vpack.c.b16 %v460, %v459
      %v569 = vpack.c.b16 %v462, %v461
      %v570 = vpack.c.b16 %v464, %v463
      %v571 = vpack.c.b16 %v466, %v465
      %v572 = vpack.c.b16 %v468, %v467
      %v573 = vpack.c.b16 %v470, %v469
      %v574 = vpack.c.b16 %v472, %v471
      %v575 = vpack.c.b16 %v474, %v473
      %v576 = vpack.c.b16 %v476, %v475
      %v577 = vpack.c.b16 %v478, %v477
      %v578 = vpack.c.b16 %v480, %v479
      %v579 = vpack.c.b16 %v482, %v481
      %v580 = vpack.c.b16 %v484, %v483
      %v581 = vpack.c.b16 %v486, %v485
      %v582 = vpack.c.b16 %v488, %v487
      %v583 = vpack.c.b16 %v490, %v489
      %v584 = vpack.c.b16 %v492, %v491
      %v585 = vpack.c.b16 %v494, %v493
      %v586 = vpack.c.b16 %v496, %v495
      %v587 = vpack.c.b16 %v498, %v497
      %v588 = vpack.c.b16 %v500, %v499
      %v589 = vpack.c.b16 %v502, %v501
      %v590 = vpack.c.b16 %v504, %v503
      %v591 = vpack.c.b16 %v506, %v505
      %v592 = vpack.c.b16 %v508, %v507
      %v593 = vpack.c.b16 %v510, %v509
      %v594 = vpack.c.b16 %v512, %v511
      %v595 = vpack.c.b16 %v514, %v513
      %v596 = vpack.c.b16 %v516, %v515
      %v597 = vpack.c.b16 %v518, %v517
      %v598 = vpack.c.b16 %v520, %v519
      %v599 = vpack.c.b16 %v522, %v521
      %v600 = vpack.c.b16 %v524, %v523
      %v601 = vpack.c.b16 %v526, %v525
      %v602 = vpack.c.b16 %v528, %v527
      %v603 = vpack.c.b16 %v530, %v529
      %v604 = vpack.c.b16 %v532, %v531
      %v605 = vpack.c.b16 %v534, %v533
      %v606 = vpack.c.b16 %v536, %v535
      %v607 = vpack.c.b16 %v538, %v537
      %v608 = vpack.c.b16 %v540, %v539
      %v609 = vpack.c.b16 %v542, %v541
      %v610 = vpack.c.b16 %v544, %v543
      %v611 = vpack.c.b16 %v546, %v545
      %v612 = vpack.c.b16 %v548, %v547
      %v613 = vpack.c.b16 %v550, %v549
      %v614 = vpack.c.b16 %v552, %v551
      %v615 = vpack.c.b16 %v554, %v553
      %v616 = vpack.c.b16 %v556, %v555
      %v617 = vpack.c.b16 %v558, %v557
      %v618 = vpack.c.b16 %v560, %v559
      %v619 = vpack.c.b16 %v562, %v561
      %v620 = vpack.c.b16 %v564, %v563
      %677 = vmatprep.subr.bf16.mxu0 0
      %678 = vmatpush1.bf16.msra.mxu0 %v565
      %679 = vmatprep.subr.bf16.mxu0 0
      %680 = vmatpush1.bf16.msra.mxu0 %v566
      %681 = vmatprep.subr.bf16.mxu0 0
      %682 = vmatpush1.bf16.msra.mxu0 %v567
      %683 = vmatprep.subr.bf16.mxu0 0
      %684 = vmatpush1.bf16.msra.mxu0 %v568
      %685 = vmatprep.subr.bf16.mxu0 0
      %686 = vmatpush1.bf16.msra.mxu0 %v569
      %687 = vmatprep.subr.bf16.mxu0 0
      %688 = vmatpush1.bf16.msra.mxu0 %v570
      %689 = vmatprep.subr.bf16.mxu0 0
      %690 = vmatpush1.bf16.msra.mxu0 %v571
      %691 = vmatprep.subr.bf16.mxu0 0
      %692 = vmatpush1.bf16.msra.mxu0 %v572
      %693 = vmatprep.subr.bf16.mxu0 0
      %694 = vmatpush1.bf16.msra.mxu0 %v573
      %695 = vmatprep.subr.bf16.mxu0 0
      %696 = vmatpush1.bf16.msra.mxu0 %v574
      %697 = vmatprep.subr.bf16.mxu0 0
      %698 = vmatpush1.bf16.msra.mxu0 %v575
      %699 = vmatprep.subr.bf16.mxu0 0
      %700 = vmatpush1.bf16.msra.mxu0 %v576
      %701 = vmatprep.subr.bf16.mxu0 0
      %702 = vmatpush1.bf16.msra.mxu0 %v577
      %703 = vmatprep.subr.bf16.mxu0 0
      %704 = vmatpush1.bf16.msra.mxu0 %v578
      %705 = vmatprep.subr.bf16.mxu0 0
      %706 = vmatpush1.bf16.msra.mxu0 %v579
      %707 = vmatprep.subr.bf16.mxu0 0
      %708 = vmatpush1.bf16.msra.mxu0 %v580
      %709 = vmatprep.mubr.bf16.mxu0 %v328
      %710 = vmatmul.mubr.bf16.gmra.mrb[0].mxu0 %v327
      %v711 = vpop.f32.mrb[0].mxu0
      %v712 = vadd.f32 %v303, %v711
      %v713 = vpop.f32.mrb[0].mxu0
      %v714 = vpop.f32.mrb[0].mxu0
      %v715 = vadd.f32 %v303, %v714
      %v716 = vpop.f32.mrb[0].mxu0
      %717 = vdwg.mxu0
      %718 = vmatprep.subr.bf16.mxu0 0
      %719 = vmatpush1.bf16.msra.mxu0 %v581
      %720 = vmatprep.subr.bf16.mxu0 0
      %721 = vmatpush1.bf16.msra.mxu0 %v582
      %722 = vmatprep.subr.bf16.mxu0 0
      %723 = vmatpush1.bf16.msra.mxu0 %v583
      %724 = vmatprep.subr.bf16.mxu0 0
      %725 = vmatpush1.bf16.msra.mxu0 %v584
      %726 = vmatprep.subr.bf16.mxu0 0
      %727 = vmatpush1.bf16.msra.mxu0 %v585
      %728 = vmatprep.subr.bf16.mxu0 0
      %729 = vmatpush1.bf16.msra.mxu0 %v586
      %730 = vmatprep.subr.bf16.mxu0 0
      %731 = vmatpush1.bf16.msra.mxu0 %v587
      %732 = vmatprep.subr.bf16.mxu0 0
      %733 = vmatpush1.bf16.msra.mxu0 %v588
      %734 = vmatprep.subr.bf16.mxu0 0
      %735 = vmatpush1.bf16.msra.mxu0 %v589
      %736 = vmatprep.subr.bf16.mxu0 0
      %737 = vmatpush1.bf16.msra.mxu0 %v590
      %738 = vmatprep.subr.bf16.mxu0 0
      %739 = vmatpush1.bf16.msra.mxu0 %v591
      %740 = vmatprep.subr.bf16.mxu0 0
      %741 = vmatpush1.bf16.msra.mxu0 %v592
      %742 = vmatprep.subr.bf16.mxu0 0
      %743 = vmatpush1.bf16.msra.mxu0 %v593
      %744 = vmatprep.subr.bf16.mxu0 0
      %745 = vmatpush1.bf16.msra.mxu0 %v594
      %746 = vmatprep.subr.bf16.mxu0 0
      %747 = vmatpush1.bf16.msra.mxu0 %v595
      %748 = vmatprep.subr.bf16.mxu0 0
      %749 = vmatpush1.bf16.msra.mxu0 %v596
      %750 = vmatprep.mubr.bf16.mxu0 %v330
      %751 = vmatmul.mubr.bf16.gmra.mrb[0].mxu0 %v329
      %v752 = vpop.f32.mrb[0].mxu0
      %v753 = vadd.f32 %v712, %v752
      %v754 = vpop.f32.mrb[0].mxu0
      %v755 = vpop.f32.mrb[0].mxu0
      %v756 = vadd.f32 %v715, %v755
      %v757 = vpop.f32.mrb[0].mxu0
      %758 = vdwg.mxu0
      %759 = vmatprep.subr.bf16.mxu0 0
      %760 = vmatpush1.bf16.msra.mxu0 %v597
      %761 = vmatprep.subr.bf16.mxu0 0
      %762 = vmatpush1.bf16.msra.mxu0 %v598
      %763 = vmatprep.subr.bf16.mxu0 0
      %764 = vmatpush1.bf16.msra.mxu0 %v599
      %765 = vmatprep.subr.bf16.mxu0 0
      %766 = vmatpush1.bf16.msra.mxu0 %v600
      %767 = vmatprep.subr.bf16.mxu0 0
      %768 = vmatpush1.bf16.msra.mxu0 %v601
      %769 = vmatprep.subr.bf16.mxu0 0
      %770 = vmatpush1.bf16.msra.mxu0 %v602
      %771 = vmatprep.subr.bf16.mxu0 0
      %772 = vmatpush1.bf16.msra.mxu0 %v603
      %773 = vmatprep.subr.bf16.mxu0 0
      %774 = vmatpush1.bf16.msra.mxu0 %v604
      %775 = vmatprep.subr.bf16.mxu0 0
      %776 = vmatpush1.bf16.msra.mxu0 %v605
      %777 = vmatprep.subr.bf16.mxu0 0
      %778 = vmatpush1.bf16.msra.mxu0 %v606
      %779 = vmatprep.subr.bf16.mxu0 0
      %780 = vmatpush1.bf16.msra.mxu0 %v607
      %781 = vmatprep.subr.bf16.mxu0 0
      %782 = vmatpush1.bf16.msra.mxu0 %v608
      %783 = vmatprep.subr.bf16.mxu0 0
      %784 = vmatpush1.bf16.msra.mxu0 %v609
      %785 = vmatprep.subr.bf16.mxu0 0
      %786 = vmatpush1.bf16.msra.mxu0 %v610
      %787 = vmatprep.subr.bf16.mxu0 0
      %788 = vmatpush1.bf16.msra.mxu0 %v611
      %789 = vmatprep.subr.bf16.mxu0 0
      %790 = vmatpush1.bf16.msra.mxu0 %v612
      %791 = vmatprep.mubr.bf16.mxu0 %v332
      %792 = vmatmul.mubr.bf16.gmra.mrb[0].mxu0 %v331
      %v793 = vpop.f32.mrb[0].mxu0
      %v794 = vadd.f32 %v753, %v793
      %v795 = vpop.f32.mrb[0].mxu0
      %v796 = vpop.f32.mrb[0].mxu0
      %v797 = vadd.f32 %v756, %v796
      %v798 = vpop.f32.mrb[0].mxu0
      %799 = vdwg.mxu0
      %800 = vmatprep.subr.bf16.mxu0 0
      %801 = vmatpush1.bf16.msra.mxu0 %v613
      %802 = vmatprep.subr.bf16.mxu0 0
      %803 = vmatpush1.bf16.msra.mxu0 %v614
      %804 = vmatprep.subr.bf16.mxu0 0
      %805 = vmatpush1.bf16.msra.mxu0 %v615
      %806 = vmatprep.subr.bf16.mxu0 0
      %807 = vmatpush1.bf16.msra.mxu0 %v616
      %808 = vmatprep.subr.bf16.mxu0 0
      %809 = vmatpush1.bf16.msra.mxu0 %v617
      %810 = vmatprep.subr.bf16.mxu0 0
      %811 = vmatpush1.bf16.msra.mxu0 %v618
      %812 = vmatprep.subr.bf16.mxu0 0
      %813 = vmatpush1.bf16.msra.mxu0 %v619
      %814 = vmatprep.subr.bf16.mxu0 0
      %815 = vmatpush1.bf16.msra.mxu0 %v620
      %816 = vmatprep.subr.bf16.mxu0 0
      %817 = vmatpush1.bf16.msra.mxu0 0
      %818 = vmatprep.subr.bf16.mxu0 0
      %819 = vmatpush1.bf16.msra.mxu0 0
      %820 = vmatprep.subr.bf16.mxu0 0
      %821 = vmatpush1.bf16.msra.mxu0 0
      %822 = vmatprep.subr.bf16.mxu0 0
      %823 = vmatpush1.bf16.msra.mxu0 0
      %824 = vmatprep.subr.bf16.mxu0 0
      %825 = vmatpush1.bf16.msra.mxu0 0
      %826 = vmatprep.subr.bf16.mxu0 0
      %827 = vmatpush1.bf16.msra.mxu0 0
      %828 = vmatprep.subr.bf16.mxu0 0
      %829 = vmatpush1.bf16.msra.mxu0 0
      %830 = vmatprep.subr.bf16.mxu0 0
      %831 = vmatpush1.bf16.msra.mxu0 0
      %832 = vmatprep.mubr.bf16.mxu0 0
      %833 = vmatmul.mubr.bf16.gmra.mrb[0].mxu0 %v333
      %v834 = vpop.f32.mrb[0].mxu0
      %v835 = vadd.f32 %v794, %v834
      %v836 = vpop.f32.mrb[0].mxu0
      %v837 = vpop.f32.mrb[0].mxu0
      %v838 = vadd.f32 %v797, %v837
      %v839 = vpop.f32.mrb[0].mxu0
      %840 = vdwg.mxu0
      %v841 = vmax.f32 %v835, 0.0
      %v842 = vmax.f32 %v838, 0.0
      %843 = vst [vmem:[%s175] sm:$0xff] %v841
      %844 = vst [vmem:[%s175 + $0x8] sm:$0xff] %v842
      %s845 = smul.u32 2, %s14
      %p846 = scmp.lt.s32.totalorder %s845, 3
      %s847 = scalar_select %p846, %s845, 3
      %s848 = smul.addr %s847, 8
      %s849 = scalar_lea.vmem %s3, %s848
      // Predicated region
      $region33: #{dct_stream_forward.50} parent=31 // pred_check
        %p850 = pneg %p100
      $region34: #{dct_stream_forward.50} parent=31 // pred_check_branch
        %852 = sbr.rel (%p850) target = $region36
      $region35: #{dct_stream_forward.50} parent=31 // pred_region
        %s853 = smul.u32 2, %s14
      $region36: #{dct_stream_forward.50} parent=31 // pred_fallthru
        _
    $region32: #{dct_stream_forward.50} parent=5 // pred_fallthru
      _
    %p854 = scmp.le.s32.totalorder 2, %s9
    // Predicated region
    $region37: #{dct_stream_forward.50} parent=5 // pred_check
      %p855 = pneg %p854
    $region38: #{dct_stream_forward.50} parent=5 // pred_check_branch
      %857 = sbr.rel (%p855) target = $region40
    $region39: #{dct_stream_forward.50} parent=5 // pred_region
      %s858 = ssub.s32 %s9, 2
      // Predicated region
      $region41: #{dct_stream_forward.50} parent=39 // pred_check
        %p859 = pneg %p106
      $region42: #{dct_stream_forward.50} parent=39 // pred_check_branch
        %861 = sbr.rel (%p859) target = $region44
      $region43: #{dct_stream_forward.50} parent=39 // pred_region
        %s862 = smul.u32 2, %s15
        %p863 = scmp.lt.s32.totalorder %s862, 3
        %s864 = scalar_select %p863, %s862, 3
        %s865 = smul.addr %s864, 8
        %s866 = scalar_lea.vmem %s3, %s865
      $region44: #{dct_stream_forward.50} parent=39 // pred_fallthru
        _
    $region40: #{dct_stream_forward.50} parent=5 // pred_fallthru
      _
  $region6: #{dct_stream_forward.50} parent=0 // loop_footer
    %s13 = sadd.s32 1, %s9
  $region7: #{dct_stream_forward.50} parent=0 // loop_footer_branch
    %8 = sbr.rel target = $region3
  $region8: #{dct_stream_forward.50} parent=0 // loop_exit
    _

// kernel: dct_stream_forward.49
$region0: #{dct_stream_forward.49}
  #allocation0 [shape = 'u32[]', space=smem, size = 0x4, offset = 0x4, fixed_abs, tag = 'smem constant byte address 0x4 - core index']
  #allocation1 [shape = 'u32[144,128]{1,0:T(1,128)}', space=vmem, size = 0x12000, scoped, tag = 'internal scratch']
  %s0 = inlined_call_operand.vmem [shape: bf16[32,896], index: 0, kind: input, shape index: {}]
  %s1 = inlined_call_operand.vmem [shape: bf16[896,128], index: 1, kind: input, shape index: {}]
  %s2 = inlined_call_operand.vmem [shape: f32[1,128], index: 2, kind: input, shape index: {}]
  %s3 = inlined_call_operand.vmem [shape: f32[32,128], index: 3, kind: input, shape index: {}]
  %s4 = inlined_call_operand.vmem [shape: f32[32,128], index: 4, kind: output, shape index: {}]
  %s5 = sld [smem:[#allocation0]]
  $region49: #{dct_stream_forward.49} parent=0
    _
  %s7 = ssub.s32 1, %s5
  %s8 = scalar_select 0, %s7, %s5
  loop: start=0, step=1, limit=4
  $region2: #{dct_stream_forward.49} parent=0 // loop_pre_header
    _
  $region3: #{dct_stream_forward.49} parent=0 // loop_header
    %s10 = sphi 0, %s14
    %p11 = scmp.ge.s32.totalorder %s10, 4
    %s20 = sphi 0, %s22
    %s23 = sphi 0, %s20
    %s24 = sphi 0, %s23
    %s40 = sphi 0, %s24
    %s44 = sphi 0, %s44
    %s46 = sphi 0, %s44
    %s47 = sphi 0, %s46
    %s61 = sphi 0, %s47
    %s65 = sphi 0, %s65
    %s67 = sphi 0, %s65
    %s68 = sphi 0, %s67
    %s82 = sphi 0, %s68
    %s88 = sphi 0, %s90
    %s91 = sphi 0, %s88
    %s92 = sphi 0, %s91
    %s108 = sphi 0, %s92
    %s114 = sphi 0, %s116
    %s117 = sphi 0, %s114
    %s118 = sphi 0, %s117
    %s134 = sphi 0, %s118
  $region4: #{dct_stream_forward.49} parent=0 // loop_header_branch
    %13 = sbr.rel (%p11) target = $region8
  $region5: #{dct_stream_forward.49} parent=0 // loop_body
    %s15 = ssub.s32 %s10, 1
    %s16 = ssub.s32 %s10, 2
    %s17 = sadd.s32 %s10, 1
    %s18 = ssub.s32 %s10, %s17
    %p19 = scmp.eq.s32.totalorder %s18, 0
    %s21 = sadd.s32 %s20, 1
    %s22 = scalar_select %p19, %s20, %s21
    %p25 = pneg %p19
    %p26 = scmp.eq.s32.totalorder %s10, 1
    %p27 = por %p25, %p26
    %p28 = scmp.ne.s32.totalorder %s20, %s23
    %p29 = scmp.eq.s32.totalorder %s10, 0
    %p30 = por %p28, %p29
    %p31 = scmp.ne.s32.totalorder %s20, %s23
    %p32 = scmp.eq.s32.totalorder %s15, 1
    %p33 = por %p31, %p32
    %p34 = scmp.ne.s32.totalorder %s23, %s24
    %p35 = scmp.eq.s32.totalorder %s15, 0
    %p36 = por %p34, %p35
    %p37 = scmp.ne.s32.totalorder %s23, %s24
    %p38 = scmp.eq.s32.totalorder %s16, 1
    %p39 = por %p37, %p38
    %p41 = scmp.ne.s32.totalorder %s24, %s40
    %p42 = scmp.eq.s32.totalorder %s16, 0
    %p43 = por %p41, %p42
    %s45 = sadd.s32 %s44, 1
    %p48 = scmp.eq.s32.totalorder %s10, 1
    %p49 = scmp.ne.s32.totalorder %s44, %s46
    %p50 = scmp.eq.s32.totalorder %s10, 0
    %p51 = por %p49, %p50
    %p52 = scmp.ne.s32.totalorder %s44, %s46
    %p53 = scmp.eq.s32.totalorder %s15, 1
    %p54 = por %p52, %p53
    %p55 = scmp.ne.s32.totalorder %s46, %s47
    %p56 = scmp.eq.s32.totalorder %s15, 0
    %p57 = por %p55, %p56
    %p58 = scmp.ne.s32.totalorder %s46, %s47
    %p59 = scmp.eq.s32.totalorder %s16, 1
    %p60 = por %p58, %p59
    %p62 = scmp.ne.s32.totalorder %s47, %s61
    %p63 = scmp.eq.s32.totalorder %s16, 0
    %p64 = por %p62, %p63
    %s66 = sadd.s32 %s65, 1
    %p69 = scmp.eq.s32.totalorder %s10, 1
    %p70 = scmp.ne.s32.totalorder %s65, %s67
    %p71 = scmp.eq.s32.totalorder %s10, 0
    %p72 = por %p70, %p71
    %p73 = scmp.ne.s32.totalorder %s65, %s67
    %p74 = scmp.eq.s32.totalorder %s15, 1
    %p75 = por %p73, %p74
    %p76 = scmp.ne.s32.totalorder %s67, %s68
    %p77 = scmp.eq.s32.totalorder %s15, 0
    %p78 = por %p76, %p77
    %p79 = scmp.ne.s32.totalorder %s67, %s68
    %p80 = scmp.eq.s32.totalorder %s16, 1
    %p81 = por %p79, %p80
    %p83 = scmp.ne.s32.totalorder %s68, %s82
    %p84 = scmp.eq.s32.totalorder %s16, 0
    %p85 = por %p83, %p84
    %s86 = ssub.s32 %s10, %s17
    %p87 = scmp.eq.s32.totalorder %s86, 0
    %s89 = sadd.s32 %s88, 1
    %s90 = scalar_select %p87, %s88, %s89
    %p93 = pneg %p87
    %p94 = scmp.eq.s32.totalorder %s10, 1
    %p95 = por %p93, %p94
    %p96 = scmp.ne.s32.totalorder %s88, %s91
    %p97 = scmp.eq.s32.totalorder %s10, 0
    %p98 = por %p96, %p97
    %p99 = scmp.ne.s32.totalorder %s88, %s91
    %p100 = scmp.eq.s32.totalorder %s15, 1
    %p101 = por %p99, %p100
    %p102 = scmp.ne.s32.totalorder %s91, %s92
    %p103 = scmp.eq.s32.totalorder %s15, 0
    %p104 = por %p102, %p103
    %p105 = scmp.ne.s32.totalorder %s91, %s92
    %p106 = scmp.eq.s32.totalorder %s16, 1
    %p107 = por %p105, %p106
    %p109 = scmp.ne.s32.totalorder %s92, %s108
    %p110 = scmp.eq.s32.totalorder %s16, 0
    %p111 = por %p109, %p110
    %s112 = ssub.s32 %s10, %s17
    %p113 = scmp.eq.s32.totalorder %s112, 0
    %s115 = sadd.s32 %s114, 1
    %s116 = scalar_select %p113, %s114, %s115
    %p119 = pneg %p113
    %p120 = scmp.eq.s32.totalorder %s10, 1
    %p121 = por %p119, %p120
    %p122 = scmp.ne.s32.totalorder %s114, %s117
    %p123 = scmp.eq.s32.totalorder %s10, 0
    %p124 = por %p122, %p123
    %p125 = scmp.ne.s32.totalorder %s114, %s117
    %p126 = scmp.eq.s32.totalorder %s15, 1
    %p127 = por %p125, %p126
    %p128 = scmp.ne.s32.totalorder %s117, %s118
    %p129 = scmp.eq.s32.totalorder %s15, 0
    %p130 = por %p128, %p129
    %p131 = scmp.ne.s32.totalorder %s117, %s118
    %p132 = scmp.eq.s32.totalorder %s16, 1
    %p133 = por %p131, %p132
    %p135 = scmp.ne.s32.totalorder %s118, %s134
    %p136 = scmp.eq.s32.totalorder %s16, 0
    %p137 = por %p135, %p136
    %p138 = scmp.le.s32.totalorder 1, %s10
    %p139 = scmp.lt.s32.totalorder %s10, 3
    %p140 = pnand %p138, %p139
    %p141 = pneg %p140
    // Predicated region
    $region9: #{dct_stream_forward.49} parent=5 // pred_check
      _
    $region10: #{dct_stream_forward.49} parent=5 // pred_check_branch
      %143 = sbr.rel (%p140) target = $region12
    $region11: #{dct_stream_forward.49} parent=5 // pred_region
      %s144 = ssub.s32 %s10, 1
      // Predicated region
      $region13: #{dct_stream_forward.49} parent=11 // pred_check
        %p145 = pneg %p57
      $region14: #{dct_stream_forward.49} parent=11 // pred_check_branch
        %147 = sbr.rel (%p145) target = $region16
      $region15: #{dct_stream_forward.49} parent=11 // pred_region
        _
      $region16: #{dct_stream_forward.49} parent=11 // pred_fallthru
        _
      // Predicated region
      $region17: #{dct_stream_forward.49} parent=11 // pred_check
        %p148 = pneg %p78
      $region18: #{dct_stream_forward.49} parent=11 // pred_check_branch
        %150 = sbr.rel (%p148) target = $region20
      $region19: #{dct_stream_forward.49} parent=11 // pred_region
        _
      $region20: #{dct_stream_forward.49} parent=11 // pred_fallthru
        _
    $region12: #{dct_stream_forward.49} parent=5 // pred_fallthru
      _
    %p151 = scmp.lt.s32.totalorder %s10, 2
    // Predicated region
    $region21: #{dct_stream_forward.49} parent=5 // pred_check
      %p152 = pneg %p151
    $region22: #{dct_stream_forward.49} parent=5 // pred_check_branch
      %154 = sbr.rel (%p152) target = $region24
    $region23: #{dct_stream_forward.49} parent=5 // pred_region
      // Predicated region
      $region25: #{dct_stream_forward.49} parent=23 // pred_check
        %p155 = pneg %p30
      $region26: #{dct_stream_forward.49} parent=23 // pred_check_branch
        %157 = sbr.rel (%p155) target = $region28
      $region27: #{dct_stream_forward.49} parent=23 // pred_region
        %s158 = smul.u32 2, %s10
        %p159 = scmp.lt.s32.totalorder %s158, 3
        %s160 = scalar_select %p159, %s158, 3
        %s161 = smul.addr %s160, 7
        %s162 = smul.addr %s161, 4
        %s163 = scalar_lea.vmem %s0, %s162
        %s164 = smul.u32 2, %s10
      $region28: #{dct_stream_forward.49} parent=23 // pred_fallthru
        _
      // Predicated region
      $region29: #{dct_stream_forward.49} parent=23 // pred_check
        %p165 = pneg %p98
      $region30: #{dct_stream_forward.49} parent=23 // pred_check_branch
        %167 = sbr.rel (%p165) target = $region32
      $region31: #{dct_stream_forward.49} parent=23 // pred_region
        %s168 = smul.u32 2, %s10
        %p169 = scmp.lt.s32.totalorder %s168, 3
        %s170 = scalar_select %p169, %s168, 3
        %s171 = smul.addr %s170, 8
        %s172 = scalar_lea.vmem %s3, %s171
        %s173 = smul.u32 2, %s10
      $region32: #{dct_stream_forward.49} parent=23 // pred_fallthru
        _
    $region24: #{dct_stream_forward.49} parent=5 // pred_fallthru
      _
    %p174 = scmp.le.s32.totalorder 1, %s10
    %p175 = scmp.lt.s32.totalorder %s10, 3
    %p176 = pnand %p174, %p175
    %p177 = pneg %p176
    // Predicated region
    $region33: #{dct_stream_forward.49} parent=5 // pred_check
      _
    $region34: #{dct_stream_forward.49} parent=5 // pred_check_branch
      %179 = sbr.rel (%p176) target = $region36
    $region35: #{dct_stream_forward.49} parent=5 // pred_region
      %s180 = ssub.s32 %s10, 1
      %s181 = smul.u32 2, %s15
      %p182 = scmp.lt.s32.totalorder %s181, 3
      %s183 = scalar_select %p182, %s181, 3
      %s184 = smul.addr %s183, 7
      %s185 = smul.addr %s184, 4
      %s186 = scalar_lea.vmem %s0, %s185
      %p187 = pneg %p36
      %p188 = pneg %p33
      %p189 = pneg %p57
      %p190 = pneg %p54
      %p191 = pneg %p78
      %p192 = pneg %p75
      %s193 = smul.u32 2, %s15
      %p194 = scmp.lt.s32.totalorder %s193, 3
      %s195 = scalar_select %p194, %s193, 3
      %s196 = smul.addr %s195, 8
      %s197 = scalar_lea.vmem %s3, %s196
      %p198 = pneg %p104
      %p199 = pneg %p101
      %p200 = pneg %p130
      %p201 = pneg %p127
      %s202 = smul.u32 2, %s15
      %p203 = scmp.lt.s32.totalorder %s202, 3
      %s204 = scalar_select %p203, %s202, 3
      %s205 = smul.addr %s204, 8
      %s206 = scalar_lea.vmem %s4, %s205
      %s207 = smul.u32 2, %s15
      %p208 = scmp.lt.s32.totalorder %s207, 3
      %s209 = scalar_select %p208, %s207, 3
      %s210 = smul.addr %s209, 7
      %s211 = smul.addr %s210, 4
      %s212 = scalar_lea.vmem %s0, %s211
      %s213 = smul.u32 2, %s15
      %s214 = smul.u32 2, %s15
      %p215 = scmp.lt.s32.totalorder %s214, 3
      %s216 = scalar_select %p215, %s214, 3
      %s217 = smul.addr %s216, 8
      %s218 = scalar_lea.vmem %s3, %s217
      %s219 = smul.u32 2, %s15
      %s220 = smul.u32 2, %s15
      %p221 = scmp.lt.s32.totalorder %s220, 3
      %s222 = scalar_select %p221, %s220, 3
      %s223 = smul.addr %s222, 8
      %s224 = scalar_lea.vmem %s4, %s223
      %s225 = smul.u32 2, %s15
      %v227 = vld [vmem:[%s212] sm:$0xff]
      %v228 = vld [vmem:[%s212 + $0x8] sm:$0xff]
      %v229 = vld [vmem:[%s212 + $0x10] sm:$0xff]
      %v230 = vld [vmem:[%s212 + $0x18] sm:$0xf]
      %v231 = vld [vmem:[%s212 + $0x1c] sm:$0xff]
      %v232 = vld [vmem:[%s212 + $0x24] sm:$0xff]
      %v233 = vld [vmem:[%s212 + $0x2c] sm:$0xff]
      %v234 = vld [vmem:[%s212 + $0x34] sm:$0xf]
      %v235 = vld [vmem:[%s1] sm:$0xf]
      %v236 = vld [vmem:[%s1 + $0x4] sm:$0xf]
      %v237 = vld [vmem:[%s1 + $0x8] sm:$0xf]
      %v238 = vld [vmem:[%s1 + $0xc] sm:$0xf]
      %v239 = vld [vmem:[%s1 + $0x10] sm:$0xf]
      %v240 = vld [vmem:[%s1 + $0x14] sm:$0xf]
      %v241 = vld [vmem:[%s1 + $0x18] sm:$0xf]
      %v242 = vld [vmem:[%s1 + $0x1c] sm:$0xf]
      %v243 = vld [vmem:[%s1 + $0x20] sm:$0xf]
      %v244 = vld [vmem:[%s1 + $0x24] sm:$0xf]
      %v245 = vld [vmem:[%s1 + $0x28] sm:$0xf]
      %v246 = vld [vmem:[%s1 + $0x2c] sm:$0xf]
      %v247 = vld [vmem:[%s1 + $0x30] sm:$0xf]
      %v248 = vld [vmem:[%s1 + $0x34] sm:$0xf]
      %v249 = vld [vmem:[%s1 + $0x38] sm:$0xf]
      %v250 = vld [vmem:[%s1 + $0x3c] sm:$0xf]
      %v251 = vld [vmem:[%s1 + $0x40] sm:$0xf]
      %v252 = vld [vmem:[%s1 + $0x44] sm:$0xf]
      %v253 = vld [vmem:[%s1 + $0x48] sm:$0xf]
      %v254 = vld [vmem:[%s1 + $0x4c] sm:$0xf]
      %v255 = vld [vmem:[%s1 + $0x50] sm:$0xf]
      %v256 = vld [vmem:[%s1 + $0x54] sm:$0xf]
      %v257 = vld [vmem:[%s1 + $0x58] sm:$0xf]
      %v258 = vld [vmem:[%s1 + $0x5c] sm:$0xf]
      %v259 = vld [vmem:[%s1 + $0x60] sm:$0xf]
      %v260 = vld [vmem:[%s1 + $0x64] sm:$0xf]
      %v261 = vld [vmem:[%s1 + $0x68] sm:$0xf]
      %v262 = vld [vmem:[%s1 + $0x6c] sm:$0xf]
      %v263 = vld [vmem:[%s1 + $0x70] sm:$0xf]
      %v264 = vld [vmem:[%s1 + $0x74] sm:$0xf]
      %v265 = vld [vmem:[%s1 + $0x78] sm:$0xf]
      %v266 = vld [vmem:[%s1 + $0x7c] sm:$0xf]
      %v267 = vld [vmem:[%s1 + $0x80] sm:$0xf]
      %v268 = vld [vmem:[%s1 + $0x84] sm:$0xf]
      %v269 = vld [vmem:[%s1 + $0x88] sm:$0xf]
      %v270 = vld [vmem:[%s1 + $0x8c] sm:$0xf]
      %v271 = vld [vmem:[%s1 + $0x90] sm:$0xf]
      %v272 = vld [vmem:[%s1 + $0x94] sm:$0xf]
      %v273 = vld [vmem:[%s1 + $0x98] sm:$0xf]
      %v274 = vld [vmem:[%s1 + $0x9c] sm:$0xf]
      %v275 = vld [vmem:[%s1 + $0xa0] sm:$0xf]
      %v276 = vld [vmem:[%s1 + $0xa4] sm:$0xf]
      %v277 = vld [vmem:[%s1 + $0xa8] sm:$0xf]
      %v278 = vld [vmem:[%s1 + $0xac] sm:$0xf]
      %v279 = vld [vmem:[%s1 + $0xb0] sm:$0xf]
      %v280 = vld [vmem:[%s1 + $0xb4] sm:$0xf]
      %v281 = vld [vmem:[%s1 + $0xb8] sm:$0xf]
      %v282 = vld [vmem:[%s1 + $0xbc] sm:$0xf]
      %v283 = vld [vmem:[%s1 + $0xc0] sm:$0xf]
      %v284 = vld [vmem:[%s1 + $0xc4] sm:$0xf]
      %v285 = vld [vmem:[%s1 + $0xc8] sm:$0xf]
      %v286 = vld [vmem:[%s1 + $0xcc] sm:$0xf]
      %v287 = vld [vmem:[%s1 + $0xd0] sm:$0xf]
      %v288 = vld [vmem:[%s1 + $0xd4] sm:$0xf]
      %v289 = vld [vmem:[%s1 + $0xd8] sm:$0xf]
      %v290 = vld [vmem:[%s1 + $0xdc] sm:$0xf]
      %v291 = vld [vmem:[%s1 + $0xe0] sm:$0xf]
      %v292 = vld [vmem:[%s1 + $0xe4] sm:$0xf]
      %v293 = vld [vmem:[%s1 + $0xe8] sm:$0xf]
      %v294 = vld [vmem:[%s1 + $0xec] sm:$0xf]
      %v295 = vld [vmem:[%s1 + $0xf0] sm:$0xf]
      %v296 = vld [vmem:[%s1 + $0xf4] sm:$0xf]
      %v297 = vld [vmem:[%s1 + $0xf8] sm:$0xf]
      %v298 = vld [vmem:[%s1 + $0xfc] sm:$0xf]
      %v299 = vld [vmem:[%s1 + $0x100] sm:$0xf]
      %v300 = vld [vmem:[%s1 + $0x104] sm:$0xf]
      %v301 = vld [vmem:[%s1 + $0x108] sm:$0xf]
      %v302 = vld [vmem:[%s1 + $0x10c] sm:$0xf]
      %v303 = vld [vmem:[%s1 + $0x110] sm:$0xf]
      %v304 = vld [vmem:[%s1 + $0x114] sm:$0xf]
      %v305 = vld [vmem:[%s1 + $0x118] sm:$0xf]
      %v306 = vld [vmem:[%s1 + $0x11c] sm:$0xf]
      %v307 = vld [vmem:[%s1 + $0x120] sm:$0xf]
      %v308 = vld [vmem:[%s1 + $0x124] sm:$0xf]
      %v309 = vld [vmem:[%s1 + $0x128] sm:$0xf]
      %v310 = vld [vmem:[%s1 + $0x12c] sm:$0xf]
      %v311 = vld [vmem:[%s1 + $0x130] sm:$0xf]
      %v312 = vld [vmem:[%s1 + $0x134] sm:$0xf]
      %v313 = vld [vmem:[%s1 + $0x138] sm:$0xf]
      %v314 = vld [vmem:[%s1 + $0x13c] sm:$0xf]
      %v315 = vld [vmem:[%s1 + $0x140] sm:$0xf]
      %v316 = vld [vmem:[%s1 + $0x144] sm:$0xf]
      %v317 = vld [vmem:[%s1 + $0x148] sm:$0xf]
      %v318 = vld [vmem:[%s1 + $0x14c] sm:$0xf]
      %v319 = vld [vmem:[%s1 + $0x150] sm:$0xf]
      %v320 = vld [vmem:[%s1 + $0x154] sm:$0xf]
      %v321 = vld [vmem:[%s1 + $0x158] sm:$0xf]
      %v322 = vld [vmem:[%s1 + $0x15c] sm:$0xf]
      %v323 = vld [vmem:[%s1 + $0x160] sm:$0xf]
      %v324 = vld [vmem:[%s1 + $0x164] sm:$0xf]
      %v325 = vld [vmem:[%s1 + $0x168] sm:$0xf]
      %v326 = vld [vmem:[%s1 + $0x16c] sm:$0xf]
      %v327 = vld [vmem:[%s1 + $0x170] sm:$0xf]
      %v328 = vld [vmem:[%s1 + $0x174] sm:$0xf]
      %v329 = vld [vmem:[%s1 + $0x178] sm:$0xf]
      %v330 = vld [vmem:[%s1 + $0x17c] sm:$0xf]
      %v331 = vld [vmem:[%s1 + $0x180] sm:$0xf]
      %v332 = vld [vmem:[%s1 + $0x184] sm:$0xf]
      %v333 = vld [vmem:[%s1 + $0x188] sm:$0xf]
      %v334 = vld [vmem:[%s1 + $0x18c] sm:$0xf]
      %v335 = vld [vmem:[%s1 + $0x190] sm:$0xf]
      %v336 = vld [vmem:[%s1 + $0x194] sm:$0xf]
      %v337 = vld [vmem:[%s1 + $0x198] sm:$0xf]
      %v338 = vld [vmem:[%s1 + $0x19c] sm:$0xf]
      %v339 = vld [vmem:[%s1 + $0x1a0] sm:$0xf]
      %v340 = vld [vmem:[%s1 + $0x1a4] sm:$0xf]
      %v341 = vld [vmem:[%s1 + $0x1a8] sm:$0xf]
      %v342 = vld [vmem:[%s1 + $0x1ac] sm:$0xf]
      %v343 = vld [vmem:[%s1 + $0x1b0] sm:$0xf]
      %v344 = vld [vmem:[%s1 + $0x1b4] sm:$0xf]
      %v345 = vld [vmem:[%s1 + $0x1b8] sm:$0xf]
      %v346 = vld [vmem:[%s1 + $0x1bc] sm:$0xf]
      %v347 = vld [vmem:[%s2] sm:$0x1]
      %v349 = vlaneseq
      %v350 = vshrl.u32 %v349, 7
      %v351 = vsub.s32 0, %v350
      %v352 = vrot.slane %v347, %v351
      %v362 = vunpack.c.l.b16 %v227
      %v363 = vunpack.c.h.b16 %v227
      %v364 = vunpack.c.l.b16 %v228
      %v365 = vunpack.c.h.b16 %v228
      %v366 = vunpack.c.l.b16 %v229
      %v367 = vunpack.c.h.b16 %v229
      %v368 = vunpack.c.l.b16 %v230
      %v369 = vunpack.c.l.b16 %v231
      %v370 = vunpack.c.h.b16 %v231
      %v371 = vunpack.c.l.b16 %v232
      %v372 = vunpack.c.h.b16 %v232
      %v373 = vunpack.c.l.b16 %v233
      %v374 = vunpack.c.h.b16 %v233
      %v375 = vunpack.c.l.b16 %v234
      %v376 = vpack.c.b16 %v369, %v362
      %v377 = vpack.c.b16 %v370, %v363
      %v378 = vpack.c.b16 %v371, %v364
      %v379 = vpack.c.b16 %v372, %v365
      %v380 = vpack.c.b16 %v373, %v366
      %v381 = vpack.c.b16 %v374, %v367
      %v382 = vpack.c.b16 %v375, %v368
      %v502 = vunpack.c.l.b16 %v235
      %v503 = vunpack.c.l.b16 %v236
      %v504 = vunpack.c.l.b16 %v237
      %v505 = vunpack.c.l.b16 %v238
      %v506 = vunpack.c.l.b16 %v239
      %v507 = vunpack.c.l.b16 %v240
      %v508 = vunpack.c.l.b16 %v241
      %v509 = vunpack.c.l.b16 %v242
      %v510 = vunpack.c.l.b16 %v243
      %v511 = vunpack.c.l.b16 %v244
      %v512 = vunpack.c.l.b16 %v245
      %v513 = vunpack.c.l.b16 %v246
      %v514 = vunpack.c.l.b16 %v247
      %v515 = vunpack.c.l.b16 %v248
      %v516 = vunpack.c.l.b16 %v249
      %v517 = vunpack.c.l.b16 %v250
      %v518 = vunpack.c.l.b16 %v251
      %v519 = vunpack.c.l.b16 %v252
      %v520 = vunpack.c.l.b16 %v253
      %v521 = vunpack.c.l.b16 %v254
      %v522 = vunpack.c.l.b16 %v255
      %v523 = vunpack.c.l.b16 %v256
      %v524 = vunpack.c.l.b16 %v257
      %v525 = vunpack.c.l.b16 %v258
      %v526 = vunpack.c.l.b16 %v259
      %v527 = vunpack.c.l.b16 %v260
      %v528 = vunpack.c.l.b16 %v261
      %v529 = vunpack.c.l.b16 %v262
      %v530 = vunpack.c.l.b16 %v263
      %v531 = vunpack.c.l.b16 %v264
      %v532 = vunpack.c.l.b16 %v265
      %v533 = vunpack.c.l.b16 %v266
      %v534 = vunpack.c.l.b16 %v267
      %v535 = vunpack.c.l.b16 %v268
      %v536 = vunpack.c.l.b16 %v269
      %v537 = vunpack.c.l.b16 %v270
      %v538 = vunpack.c.l.b16 %v271
      %v539 = vunpack.c.l.b16 %v272
      %v540 = vunpack.c.l.b16 %v273
      %v541 = vunpack.c.l.b16 %v274
      %v542 = vunpack.c.l.b16 %v275
      %v543 = vunpack.c.l.b16 %v276
      %v544 = vunpack.c.l.b16 %v277
      %v545 = vunpack.c.l.b16 %v278
      %v546 = vunpack.c.l.b16 %v279
      %v547 = vunpack.c.l.b16 %v280
      %v548 = vunpack.c.l.b16 %v281
      %v549 = vunpack.c.l.b16 %v282
      %v550 = vunpack.c.l.b16 %v283
      %v551 = vunpack.c.l.b16 %v284
      %v552 = vunpack.c.l.b16 %v285
      %v553 = vunpack.c.l.b16 %v286
      %v554 = vunpack.c.l.b16 %v287
      %v555 = vunpack.c.l.b16 %v288
      %v556 = vunpack.c.l.b16 %v289
      %v557 = vunpack.c.l.b16 %v290
      %v558 = vunpack.c.l.b16 %v291
      %v559 = vunpack.c.l.b16 %v292
      %v560 = vunpack.c.l.b16 %v293
      %v561 = vunpack.c.l.b16 %v294
      %v562 = vunpack.c.l.b16 %v295
      %v563 = vunpack.c.l.b16 %v296
      %v564 = vunpack.c.l.b16 %v297
      %v565 = vunpack.c.l.b16 %v298
      %v566 = vunpack.c.l.b16 %v299
      %v567 = vunpack.c.l.b16 %v300
      %v568 = vunpack.c.l.b16 %v301
      %v569 = vunpack.c.l.b16 %v302
      %v570 = vunpack.c.l.b16 %v303
      %v571 = vunpack.c.l.b16 %v304
      %v572 = vunpack.c.l.b16 %v305
      %v573 = vunpack.c.l.b16 %v306
      %v574 = vunpack.c.l.b16 %v307
      %v575 = vunpack.c.l.b16 %v308
      %v576 = vunpack.c.l.b16 %v309
      %v577 = vunpack.c.l.b16 %v310
      %v578 = vunpack.c.l.b16 %v311
      %v579 = vunpack.c.l.b16 %v312
      %v580 = vunpack.c.l.b16 %v313
      %v581 = vunpack.c.l.b16 %v314
      %v582 = vunpack.c.l.b16 %v315
      %v583 = vunpack.c.l.b16 %v316
      %v584 = vunpack.c.l.b16 %v317
      %v585 = vunpack.c.l.b16 %v318
      %v586 = vunpack.c.l.b16 %v319
      %v587 = vunpack.c.l.b16 %v320
      %v588 = vunpack.c.l.b16 %v321
      %v589 = vunpack.c.l.b16 %v322
      %v590 = vunpack.c.l.b16 %v323
      %v591 = vunpack.c.l.b16 %v324
      %v592 = vunpack.c.l.b16 %v325
      %v593 = vunpack.c.l.b16 %v326
      %v594 = vunpack.c.l.b16 %v327
      %v595 = vunpack.c.l.b16 %v328
      %v596 = vunpack.c.l.b16 %v329
      %v597 = vunpack.c.l.b16 %v330
      %v598 = vunpack.c.l.b16 %v331
      %v599 = vunpack.c.l.b16 %v332
      %v600 = vunpack.c.l.b16 %v333
      %v601 = vunpack.c.l.b16 %v334
      %v602 = vunpack.c.l.b16 %v335
      %v603 = vunpack.c.l.b16 %v336
      %v604 = vunpack.c.l.b16 %v337
      %v605 = vunpack.c.l.b16 %v338
      %v606 = vunpack.c.l.b16 %v339
      %v607 = vunpack.c.l.b16 %v340
      %v608 = vunpack.c.l.b16 %v341
      %v609 = vunpack.c.l.b16 %v342
      %v610 = vunpack.c.l.b16 %v343
      %v611 = vunpack.c.l.b16 %v344
      %v612 = vunpack.c.l.b16 %v345
      %v613 = vunpack.c.l.b16 %v346
      %v614 = vpack.c.b16 %v503, %v502
      %v615 = vpack.c.b16 %v505, %v504
      %v616 = vpack.c.b16 %v507, %v506
      %v617 = vpack.c.b16 %v509, %v508
      %v618 = vpack.c.b16 %v511, %v510
      %v619 = vpack.c.b16 %v513, %v512
      %v620 = vpack.c.b16 %v515, %v514
      %v621 = vpack.c.b16 %v517, %v516
      %v622 = vpack.c.b16 %v519, %v518
      %v623 = vpack.c.b16 %v521, %v520
      %v624 = vpack.c.b16 %v523, %v522
      %v625 = vpack.c.b16 %v525, %v524
      %v626 = vpack.c.b16 %v527, %v526
      %v627 = vpack.c.b16 %v529, %v528
      %v628 = vpack.c.b16 %v531, %v530
      %v629 = vpack.c.b16 %v533, %v532
      %v630 = vpack.c.b16 %v535, %v534
      %v631 = vpack.c.b16 %v537, %v536
      %v632 = vpack.c.b16 %v539, %v538
      %v633 = vpack.c.b16 %v541, %v540
      %v634 = vpack.c.b16 %v543, %v542
      %v635 = vpack.c.b16 %v545, %v544
      %v636 = vpack.c.b16 %v547, %v546
      %v637 = vpack.c.b16 %v549, %v548
      %v638 = vpack.c.b16 %v551, %v550
      %v639 = vpack.c.b16 %v553, %v552
      %v640 = vpack.c.b16 %v555, %v554
      %v641 = vpack.c.b16 %v557, %v556
      %v642 = vpack.c.b16 %v559, %v558
      %v643 = vpack.c.b16 %v561, %v560
      %v644 = vpack.c.b16 %v563, %v562
      %v645 = vpack.c.b16 %v565, %v564
      %v646 = vpack.c.b16 %v567, %v566
      %v647 = vpack.c.b16 %v569, %v568
      %v648 = vpack.c.b16 %v571, %v570
      %v649 = vpack.c.b16 %v573, %v572
      %v650 = vpack.c.b16 %v575, %v574
      %v651 = vpack.c.b16 %v577, %v576
      %v652 = vpack.c.b16 %v579, %v578
      %v653 = vpack.c.b16 %v581, %v580
      %v654 = vpack.c.b16 %v583, %v582
      %v655 = vpack.c.b16 %v585, %v584
      %v656 = vpack.c.b16 %v587, %v586
      %v657 = vpack.c.b16 %v589, %v588
      %v658 = vpack.c.b16 %v591, %v590
      %v659 = vpack.c.b16 %v593, %v592
      %v660 = vpack.c.b16 %v595, %v594
      %v661 = vpack.c.b16 %v597, %v596
      %v662 = vpack.c.b16 %v599, %v598
      %v663 = vpack.c.b16 %v601, %v600
      %v664 = vpack.c.b16 %v603, %v602
      %v665 = vpack.c.b16 %v605, %v604
      %v666 = vpack.c.b16 %v607, %v606
      %v667 = vpack.c.b16 %v609, %v608
      %v668 = vpack.c.b16 %v611, %v610
      %v669 = vpack.c.b16 %v613, %v612
      %726 = vmatprep.subr.bf16.mxu0 0
      %727 = vmatpush1.bf16.msra.mxu0 %v614
      %728 = vmatprep.subr.bf16.mxu0 0
      %729 = vmatpush1.bf16.msra.mxu0 %v615
      %730 = vmatprep.subr.bf16.mxu0 0
      %731 = vmatpush1.bf16.msra.mxu0 %v616
      %732 = vmatprep.subr.bf16.mxu0 0
      %733 = vmatpush1.bf16.msra.mxu0 %v617
      %734 = vmatprep.subr.bf16.mxu0 0
      %735 = vmatpush1.bf16.msra.mxu0 %v618
      %736 = vmatprep.subr.bf16.mxu0 0
      %737 = vmatpush1.bf16.msra.mxu0 %v619
      %738 = vmatprep.subr.bf16.mxu0 0
      %739 = vmatpush1.bf16.msra.mxu0 %v620
      %740 = vmatprep.subr.bf16.mxu0 0
      %741 = vmatpush1.bf16.msra.mxu0 %v621
      %742 = vmatprep.subr.bf16.mxu0 0
      %743 = vmatpush1.bf16.msra.mxu0 %v622
      %744 = vmatprep.subr.bf16.mxu0 0
      %745 = vmatpush1.bf16.msra.mxu0 %v623
      %746 = vmatprep.subr.bf16.mxu0 0
      %747 = vmatpush1.bf16.msra.mxu0 %v624
      %748 = vmatprep.subr.bf16.mxu0 0
      %749 = vmatpush1.bf16.msra.mxu0 %v625
      %750 = vmatprep.subr.bf16.mxu0 0
      %751 = vmatpush1.bf16.msra.mxu0 %v626
      %752 = vmatprep.subr.bf16.mxu0 0
      %753 = vmatpush1.bf16.msra.mxu0 %v627
      %754 = vmatprep.subr.bf16.mxu0 0
      %755 = vmatpush1.bf16.msra.mxu0 %v628
      %756 = vmatprep.subr.bf16.mxu0 0
      %757 = vmatpush1.bf16.msra.mxu0 %v629
      %758 = vmatprep.mubr.bf16.mxu0 %v377
      %759 = vmatmul.mubr.bf16.gmra.mrb[0].mxu0 %v376
      %v760 = vpop.f32.mrb[0].mxu0
      %v761 = vadd.f32 %v352, %v760
      %v762 = vpop.f32.mrb[0].mxu0
      %v763 = vpop.f32.mrb[0].mxu0
      %v764 = vadd.f32 %v352, %v763
      %v765 = vpop.f32.mrb[0].mxu0
      %766 = vdwg.mxu0
      %767 = vmatprep.subr.bf16.mxu0 0
      %768 = vmatpush1.bf16.msra.mxu0 %v630
      %769 = vmatprep.subr.bf16.mxu0 0
      %770 = vmatpush1.bf16.msra.mxu0 %v631
      %771 = vmatprep.subr.bf16.mxu0 0
      %772 = vmatpush1.bf16.msra.mxu0 %v632
      %773 = vmatprep.subr.bf16.mxu0 0
      %774 = vmatpush1.bf16.msra.mxu0 %v633
      %775 = vmatprep.subr.bf16.mxu0 0
      %776 = vmatpush1.bf16.msra.mxu0 %v634
      %777 = vmatprep.subr.bf16.mxu0 0
      %778 = vmatpush1.bf16.msra.mxu0 %v635
      %779 = vmatprep.subr.bf16.mxu0 0
      %780 = vmatpush1.bf16.msra.mxu0 %v636
      %781 = vmatprep.subr.bf16.mxu0 0
      %782 = vmatpush1.bf16.msra.mxu0 %v637
      %783 = vmatprep.subr.bf16.mxu0 0
      %784 = vmatpush1.bf16.msra.mxu0 %v638
      %785 = vmatprep.subr.bf16.mxu0 0
      %786 = vmatpush1.bf16.msra.mxu0 %v639
      %787 = vmatprep.subr.bf16.mxu0 0
      %788 = vmatpush1.bf16.msra.mxu0 %v640
      %789 = vmatprep.subr.bf16.mxu0 0
      %790 = vmatpush1.bf16.msra.mxu0 %v641
      %791 = vmatprep.subr.bf16.mxu0 0
      %792 = vmatpush1.bf16.msra.mxu0 %v642
      %793 = vmatprep.subr.bf16.mxu0 0
      %794 = vmatpush1.bf16.msra.mxu0 %v643
      %795 = vmatprep.subr.bf16.mxu0 0
      %796 = vmatpush1.bf16.msra.mxu0 %v644
      %797 = vmatprep.subr.bf16.mxu0 0
      %798 = vmatpush1.bf16.msra.mxu0 %v645
      %799 = vmatprep.mubr.bf16.mxu0 %v379
      %800 = vmatmul.mubr.bf16.gmra.mrb[0].mxu0 %v378
      %v801 = vpop.f32.mrb[0].mxu0
      %v802 = vadd.f32 %v761, %v801
      %v803 = vpop.f32.mrb[0].mxu0
      %v804 = vpop.f32.mrb[0].mxu0
      %v805 = vadd.f32 %v764, %v804
      %v806 = vpop.f32.mrb[0].mxu0
      %807 = vdwg.mxu0
      %808 = vmatprep.subr.bf16.mxu0 0
      %809 = vmatpush1.bf16.msra.mxu0 %v646
      %810 = vmatprep.subr.bf16.mxu0 0
      %811 = vmatpush1.bf16.msra.mxu0 %v647
      %812 = vmatprep.subr.bf16.mxu0 0
      %813 = vmatpush1.bf16.msra.mxu0 %v648
      %814 = vmatprep.subr.bf16.mxu0 0
      %815 = vmatpush1.bf16.msra.mxu0 %v649
      %816 = vmatprep.subr.bf16.mxu0 0
      %817 = vmatpush1.bf16.msra.mxu0 %v650
      %818 = vmatprep.subr.bf16.mxu0 0
      %819 = vmatpush1.bf16.msra.mxu0 %v651
      %820 = vmatprep.subr.bf16.mxu0 0
      %821 = vmatpush1.bf16.msra.mxu0 %v652
      %822 = vmatprep.subr.bf16.mxu0 0
      %823 = vmatpush1.bf16.msra.mxu0 %v653
      %824 = vmatprep.subr.bf16.mxu0 0
      %825 = vmatpush1.bf16.msra.mxu0 %v654
      %826 = vmatprep.subr.bf16.mxu0 0
      %827 = vmatpush1.bf16.msra.mxu0 %v655
      %828 = vmatprep.subr.bf16.mxu0 0
      %829 = vmatpush1.bf16.msra.mxu0 %v656
      %830 = vmatprep.subr.bf16.mxu0 0
      %831 = vmatpush1.bf16.msra.mxu0 %v657
      %832 = vmatprep.subr.bf16.mxu0 0
      %833 = vmatpush1.bf16.msra.mxu0 %v658
      %834 = vmatprep.subr.bf16.mxu0 0
      %835 = vmatpush1.bf16.msra.mxu0 %v659
      %836 = vmatprep.subr.bf16.mxu0 0
      %837 = vmatpush1.bf16.msra.mxu0 %v660
      %838 = vmatprep.subr.bf16.mxu0 0
      %839 = vmatpush1.bf16.msra.mxu0 %v661
      %840 = vmatprep.mubr.bf16.mxu0 %v381
      %841 = vmatmul.mubr.bf16.gmra.mrb[0].mxu0 %v380
      %v842 = vpop.f32.mrb[0].mxu0
      %v843 = vadd.f32 %v802, %v842
      %v844 = vpop.f32.mrb[0].mxu0
      %v845 = vpop.f32.mrb[0].mxu0
      %v846 = vadd.f32 %v805, %v845
      %v847 = vpop.f32.mrb[0].mxu0
      %848 = vdwg.mxu0
      %849 = vmatprep.subr.bf16.mxu0 0
      %850 = vmatpush1.bf16.msra.mxu0 %v662
      %851 = vmatprep.subr.bf16.mxu0 0
      %852 = vmatpush1.bf16.msra.mxu0 %v663
      %853 = vmatprep.subr.bf16.mxu0 0
      %854 = vmatpush1.bf16.msra.mxu0 %v664
      %855 = vmatprep.subr.bf16.mxu0 0
      %856 = vmatpush1.bf16.msra.mxu0 %v665
      %857 = vmatprep.subr.bf16.mxu0 0
      %858 = vmatpush1.bf16.msra.mxu0 %v666
      %859 = vmatprep.subr.bf16.mxu0 0
      %860 = vmatpush1.bf16.msra.mxu0 %v667
      %861 = vmatprep.subr.bf16.mxu0 0
      %862 = vmatpush1.bf16.msra.mxu0 %v668
      %863 = vmatprep.subr.bf16.mxu0 0
      %864 = vmatpush1.bf16.msra.mxu0 %v669
      %865 = vmatprep.subr.bf16.mxu0 0
      %866 = vmatpush1.bf16.msra.mxu0 0
      %867 = vmatprep.subr.bf16.mxu0 0
      %868 = vmatpush1.bf16.msra.mxu0 0
      %869 = vmatprep.subr.bf16.mxu0 0
      %870 = vmatpush1.bf16.msra.mxu0 0
      %871 = vmatprep.subr.bf16.mxu0 0
      %872 = vmatpush1.bf16.msra.mxu0 0
      %873 = vmatprep.subr.bf16.mxu0 0
      %874 = vmatpush1.bf16.msra.mxu0 0
      %875 = vmatprep.subr.bf16.mxu0 0
      %876 = vmatpush1.bf16.msra.mxu0 0
      %877 = vmatprep.subr.bf16.mxu0 0
      %878 = vmatpush1.bf16.msra.mxu0 0
      %879 = vmatprep.subr.bf16.mxu0 0
      %880 = vmatpush1.bf16.msra.mxu0 0
      %881 = vmatprep.mubr.bf16.mxu0 0
      %882 = vmatmul.mubr.bf16.gmra.mrb[0].mxu0 %v382
      %v883 = vpop.f32.mrb[0].mxu0
      %v884 = vadd.f32 %v843, %v883
      %v885 = vpop.f32.mrb[0].mxu0
      %v886 = vpop.f32.mrb[0].mxu0
      %v887 = vadd.f32 %v846, %v886
      %v888 = vpop.f32.mrb[0].mxu0
      %889 = vdwg.mxu0
      %v890 = vld [vmem:[%s218] sm:$0xff]
      %v891 = vld [vmem:[%s218 + $0x8] sm:$0xff]
      %v892 = vadd.f32 %v884, %v890
      %v893 = vadd.f32 %v887, %v891
      %v894 = vmax.f32 %v892, 0.0
      %v895 = vmax.f32 %v893, 0.0
      %896 = vst [vmem:[%s224] sm:$0xff] %v894
      %897 = vst [vmem:[%s224 + $0x8] sm:$0xff] %v895
      %s898 = smul.u32 2, %s15
      %p899 = scmp.lt.s32.totalorder %s898, 3
      %s900 = scalar_select %p899, %s898, 3
      %s901 = smul.addr %s900, 8
      %s902 = scalar_lea.vmem %s4, %s901
      // Predicated region
      $region37: #{dct_stream_forward.49} parent=35 // pred_check
        %p903 = pneg %p127
      $region38: #{dct_stream_forward.49} parent=35 // pred_check_branch
        %905 = sbr.rel (%p903) target = $region40
      $region39: #{dct_stream_forward.49} parent=35 // pred_region
        %s906 = smul.u32 2, %s15
      $region40: #{dct_stream_forward.49} parent=35 // pred_fallthru
        _
    $region36: #{dct_stream_forward.49} parent=5 // pred_fallthru
      _
    %p907 = scmp.le.s32.totalorder 2, %s10
    // Predicated region
    $region41: #{dct_stream_forward.49} parent=5 // pred_check
      %p908 = pneg %p907
    $region42: #{dct_stream_forward.49} parent=5 // pred_check_branch
      %910 = sbr.rel (%p908) target = $region44
    $region43: #{dct_stream_forward.49} parent=5 // pred_region
      %s911 = ssub.s32 %s10, 2
      // Predicated region
      $region45: #{dct_stream_forward.49} parent=43 // pred_check
        %p912 = pneg %p133
      $region46: #{dct_stream_forward.49} parent=43 // pred_check_branch
        %914 = sbr.rel (%p912) target = $region48
      $region47: #{dct_stream_forward.49} parent=43 // pred_region
        %s915 = smul.u32 2, %s16
        %p916 = scmp.lt.s32.totalorder %s915, 3
        %s917 = scalar_select %p916, %s915, 3
        %s918 = smul.addr %s917, 8
        %s919 = scalar_lea.vmem %s4, %s918
      $region48: #{dct_stream_forward.49} parent=43 // pred_fallthru
        _
    $region44: #{dct_stream_forward.49} parent=5 // pred_fallthru
      _
  $region6: #{dct_stream_forward.49} parent=0 // loop_footer
    %s14 = sadd.s32 1, %s10
  $region7: #{dct_stream_forward.49} parent=0 // loop_footer_branch
    %9 = sbr.rel target = $region3
  $region8: #{dct_stream_forward.49} parent=0 // loop_exit
    _

// kernel: dct_stream_forward.59
$region0: #{dct_stream_forward.59}
  #allocation0 [shape = 'u32[]', space=smem, size = 0x4, offset = 0x4, fixed_abs, tag = 'smem constant byte address 0x4 - core index']
  #allocation1 [shape = 'u32[144,128]{1,0:T(1,128)}', space=vmem, size = 0x12000, scoped, tag = 'internal scratch']
  %s0 = inlined_call_operand.vmem [shape: bf16[32,384], index: 0, kind: input, shape index: {}]
  %s1 = inlined_call_operand.vmem [shape: bf16[384,128], index: 1, kind: input, shape index: {}]
  %s2 = inlined_call_operand.vmem [shape: f32[1,128], index: 2, kind: input, shape index: {}]
  %s3 = inlined_call_operand.vmem [shape: f32[32,128], index: 3, kind: input, shape index: {}]
  %s4 = inlined_call_operand.vmem [shape: f32[32,128], index: 4, kind: output, shape index: {}]
  %s5 = sld [smem:[#allocation0]]
  $region49: #{dct_stream_forward.59} parent=0
    _
  %s7 = ssub.s32 1, %s5
  %s8 = scalar_select 0, %s7, %s5
  loop: start=0, step=1, limit=4
  $region2: #{dct_stream_forward.59} parent=0 // loop_pre_header
    _
  $region3: #{dct_stream_forward.59} parent=0 // loop_header
    %s10 = sphi 0, %s14
    %p11 = scmp.ge.s32.totalorder %s10, 4
    %s20 = sphi 0, %s22
    %s23 = sphi 0, %s20
    %s24 = sphi 0, %s23
    %s40 = sphi 0, %s24
    %s44 = sphi 0, %s44
    %s46 = sphi 0, %s44
    %s47 = sphi 0, %s46
    %s61 = sphi 0, %s47
    %s65 = sphi 0, %s65
    %s67 = sphi 0, %s65
    %s68 = sphi 0, %s67
    %s82 = sphi 0, %s68
    %s88 = sphi 0, %s90
    %s91 = sphi 0, %s88
    %s92 = sphi 0, %s91
    %s108 = sphi 0, %s92
    %s114 = sphi 0, %s116
    %s117 = sphi 0, %s114
    %s118 = sphi 0, %s117
    %s134 = sphi 0, %s118
  $region4: #{dct_stream_forward.59} parent=0 // loop_header_branch
    %13 = sbr.rel (%p11) target = $region8
  $region5: #{dct_stream_forward.59} parent=0 // loop_body
    %s15 = ssub.s32 %s10, 1
    %s16 = ssub.s32 %s10, 2
    %s17 = sadd.s32 %s10, 1
    %s18 = ssub.s32 %s10, %s17
    %p19 = scmp.eq.s32.totalorder %s18, 0
    %s21 = sadd.s32 %s20, 1
    %s22 = scalar_select %p19, %s20, %s21
    %p25 = pneg %p19
    %p26 = scmp.eq.s32.totalorder %s10, 1
    %p27 = por %p25, %p26
    %p28 = scmp.ne.s32.totalorder %s20, %s23
    %p29 = scmp.eq.s32.totalorder %s10, 0
    %p30 = por %p28, %p29
    %p31 = scmp.ne.s32.totalorder %s20, %s23
    %p32 = scmp.eq.s32.totalorder %s15, 1
    %p33 = por %p31, %p32
    %p34 = scmp.ne.s32.totalorder %s23, %s24
    %p35 = scmp.eq.s32.totalorder %s15, 0
    %p36 = por %p34, %p35
    %p37 = scmp.ne.s32.totalorder %s23, %s24
    %p38 = scmp.eq.s32.totalorder %s16, 1
    %p39 = por %p37, %p38
    %p41 = scmp.ne.s32.totalorder %s24, %s40
    %p42 = scmp.eq.s32.totalorder %s16, 0
    %p43 = por %p41, %p42
    %s45 = sadd.s32 %s44, 1
    %p48 = scmp.eq.s32.totalorder %s10, 1
    %p49 = scmp.ne.s32.totalorder %s44, %s46
    %p50 = scmp.eq.s32.totalorder %s10, 0
    %p51 = por %p49, %p50
    %p52 = scmp.ne.s32.totalorder %s44, %s46
    %p53 = scmp.eq.s32.totalorder %s15, 1
    %p54 = por %p52, %p53
    %p55 = scmp.ne.s32.totalorder %s46, %s47
    %p56 = scmp.eq.s32.totalorder %s15, 0
    %p57 = por %p55, %p56
    %p58 = scmp.ne.s32.totalorder %s46, %s47
    %p59 = scmp.eq.s32.totalorder %s16, 1
    %p60 = por %p58, %p59
    %p62 = scmp.ne.s32.totalorder %s47, %s61
    %p63 = scmp.eq.s32.totalorder %s16, 0
    %p64 = por %p62, %p63
    %s66 = sadd.s32 %s65, 1
    %p69 = scmp.eq.s32.totalorder %s10, 1
    %p70 = scmp.ne.s32.totalorder %s65, %s67
    %p71 = scmp.eq.s32.totalorder %s10, 0
    %p72 = por %p70, %p71
    %p73 = scmp.ne.s32.totalorder %s65, %s67
    %p74 = scmp.eq.s32.totalorder %s15, 1
    %p75 = por %p73, %p74
    %p76 = scmp.ne.s32.totalorder %s67, %s68
    %p77 = scmp.eq.s32.totalorder %s15, 0
    %p78 = por %p76, %p77
    %p79 = scmp.ne.s32.totalorder %s67, %s68
    %p80 = scmp.eq.s32.totalorder %s16, 1
    %p81 = por %p79, %p80
    %p83 = scmp.ne.s32.totalorder %s68, %s82
    %p84 = scmp.eq.s32.totalorder %s16, 0
    %p85 = por %p83, %p84
    %s86 = ssub.s32 %s10, %s17
    %p87 = scmp.eq.s32.totalorder %s86, 0
    %s89 = sadd.s32 %s88, 1
    %s90 = scalar_select %p87, %s88, %s89
    %p93 = pneg %p87
    %p94 = scmp.eq.s32.totalorder %s10, 1
    %p95 = por %p93, %p94
    %p96 = scmp.ne.s32.totalorder %s88, %s91
    %p97 = scmp.eq.s32.totalorder %s10, 0
    %p98 = por %p96, %p97
    %p99 = scmp.ne.s32.totalorder %s88, %s91
    %p100 = scmp.eq.s32.totalorder %s15, 1
    %p101 = por %p99, %p100
    %p102 = scmp.ne.s32.totalorder %s91, %s92
    %p103 = scmp.eq.s32.totalorder %s15, 0
    %p104 = por %p102, %p103
    %p105 = scmp.ne.s32.totalorder %s91, %s92
    %p106 = scmp.eq.s32.totalorder %s16, 1
    %p107 = por %p105, %p106
    %p109 = scmp.ne.s32.totalorder %s92, %s108
    %p110 = scmp.eq.s32.totalorder %s16, 0
    %p111 = por %p109, %p110
    %s112 = ssub.s32 %s10, %s17
    %p113 = scmp.eq.s32.totalorder %s112, 0
    %s115 = sadd.s32 %s114, 1
    %s116 = scalar_select %p113, %s114, %s115
    %p119 = pneg %p113
    %p120 = scmp.eq.s32.totalorder %s10, 1
    %p121 = por %p119, %p120
    %p122 = scmp.ne.s32.totalorder %s114, %s117
    %p123 = scmp.eq.s32.totalorder %s10, 0
    %p124 = por %p122, %p123
    %p125 = scmp.ne.s32.totalorder %s114, %s117
    %p126 = scmp.eq.s32.totalorder %s15, 1
    %p127 = por %p125, %p126
    %p128 = scmp.ne.s32.totalorder %s117, %s118
    %p129 = scmp.eq.s32.totalorder %s15, 0
    %p130 = por %p128, %p129
    %p131 = scmp.ne.s32.totalorder %s117, %s118
    %p132 = scmp.eq.s32.totalorder %s16, 1
    %p133 = por %p131, %p132
    %p135 = scmp.ne.s32.totalorder %s118, %s134
    %p136 = scmp.eq.s32.totalorder %s16, 0
    %p137 = por %p135, %p136
    %p138 = scmp.le.s32.totalorder 1, %s10
    %p139 = scmp.lt.s32.totalorder %s10, 3
    %p140 = pnand %p138, %p139
    %p141 = pneg %p140
    // Predicated region
    $region9: #{dct_stream_forward.59} parent=5 // pred_check
      _
    $region10: #{dct_stream_forward.59} parent=5 // pred_check_branch
      %143 = sbr.rel (%p140) target = $region12
    $region11: #{dct_stream_forward.59} parent=5 // pred_region
      %s144 = ssub.s32 %s10, 1
      // Predicated region
      $region13: #{dct_stream_forward.59} parent=11 // pred_check
        %p145 = pneg %p57
      $region14: #{dct_stream_forward.59} parent=11 // pred_check_branch
        %147 = sbr.rel (%p145) target = $region16
      $region15: #{dct_stream_forward.59} parent=11 // pred_region
        _
      $region16: #{dct_stream_forward.59} parent=11 // pred_fallthru
        _
      // Predicated region
      $region17: #{dct_stream_forward.59} parent=11 // pred_check
        %p148 = pneg %p78
      $region18: #{dct_stream_forward.59} parent=11 // pred_check_branch
        %150 = sbr.rel (%p148) target = $region20
      $region19: #{dct_stream_forward.59} parent=11 // pred_region
        _
      $region20: #{dct_stream_forward.59} parent=11 // pred_fallthru
        _
    $region12: #{dct_stream_forward.59} parent=5 // pred_fallthru
      _
    %p151 = scmp.lt.s32.totalorder %s10, 2
    // Predicated region
    $region21: #{dct_stream_forward.59} parent=5 // pred_check
      %p152 = pneg %p151
    $region22: #{dct_stream_forward.59} parent=5 // pred_check_branch
      %154 = sbr.rel (%p152) target = $region24
    $region23: #{dct_stream_forward.59} parent=5 // pred_region
      // Predicated region
      $region25: #{dct_stream_forward.59} parent=23 // pred_check
        %p155 = pneg %p30
      $region26: #{dct_stream_forward.59} parent=23 // pred_check_branch
        %157 = sbr.rel (%p155) target = $region28
      $region27: #{dct_stream_forward.59} parent=23 // pred_region
        %s158 = smul.u32 2, %s10
        %p159 = scmp.lt.s32.totalorder %s158, 3
        %s160 = scalar_select %p159, %s158, 3
        %s161 = smul.addr %s160, 3
        %s162 = smul.addr %s161, 4
        %s163 = scalar_lea.vmem %s0, %s162
        %s164 = smul.u32 2, %s10
      $region28: #{dct_stream_forward.59} parent=23 // pred_fallthru
        _
      // Predicated region
      $region29: #{dct_stream_forward.59} parent=23 // pred_check
        %p165 = pneg %p98
      $region30: #{dct_stream_forward.59} parent=23 // pred_check_branch
        %167 = sbr.rel (%p165) target = $region32
      $region31: #{dct_stream_forward.59} parent=23 // pred_region
        %s168 = smul.u32 2, %s10
        %p169 = scmp.lt.s32.totalorder %s168, 3
        %s170 = scalar_select %p169, %s168, 3
        %s171 = smul.addr %s170, 8
        %s172 = scalar_lea.vmem %s3, %s171
        %s173 = smul.u32 2, %s10
      $region32: #{dct_stream_forward.59} parent=23 // pred_fallthru
        _
    $region24: #{dct_stream_forward.59} parent=5 // pred_fallthru
      _
    %p174 = scmp.le.s32.totalorder 1, %s10
    %p175 = scmp.lt.s32.totalorder %s10, 3
    %p176 = pnand %p174, %p175
    %p177 = pneg %p176
    // Predicated region
    $region33: #{dct_stream_forward.59} parent=5 // pred_check
      _
    $region34: #{dct_stream_forward.59} parent=5 // pred_check_branch
      %179 = sbr.rel (%p176) target = $region36
    $region35: #{dct_stream_forward.59} parent=5 // pred_region
      %s180 = ssub.s32 %s10, 1
      %s181 = smul.u32 2, %s15
      %p182 = scmp.lt.s32.totalorder %s181, 3
      %s183 = scalar_select %p182, %s181, 3
      %s184 = smul.addr %s183, 3
      %s185 = smul.addr %s184, 4
      %s186 = scalar_lea.vmem %s0, %s185
      %p187 = pneg %p36
      %p188 = pneg %p33
      %p189 = pneg %p57
      %p190 = pneg %p54
      %p191 = pneg %p78
      %p192 = pneg %p75
      %s193 = smul.u32 2, %s15
      %p194 = scmp.lt.s32.totalorder %s193, 3
      %s195 = scalar_select %p194, %s193, 3
      %s196 = smul.addr %s195, 8
      %s197 = scalar_lea.vmem %s3, %s196
      %p198 = pneg %p104
      %p199 = pneg %p101
      %p200 = pneg %p130
      %p201 = pneg %p127
      %s202 = smul.u32 2, %s15
      %p203 = scmp.lt.s32.totalorder %s202, 3
      %s204 = scalar_select %p203, %s202, 3
      %s205 = smul.addr %s204, 8
      %s206 = scalar_lea.vmem %s4, %s205
      %s207 = smul.u32 2, %s15
      %p208 = scmp.lt.s32.totalorder %s207, 3
      %s209 = scalar_select %p208, %s207, 3
      %s210 = smul.addr %s209, 3
      %s211 = smul.addr %s210, 4
      %s212 = scalar_lea.vmem %s0, %s211
      %s213 = smul.u32 2, %s15
      %s214 = smul.u32 2, %s15
      %p215 = scmp.lt.s32.totalorder %s214, 3
      %s216 = scalar_select %p215, %s214, 3
      %s217 = smul.addr %s216, 8
      %s218 = scalar_lea.vmem %s3, %s217
      %s219 = smul.u32 2, %s15
      %s220 = smul.u32 2, %s15
      %p221 = scmp.lt.s32.totalorder %s220, 3
      %s222 = scalar_select %p221, %s220, 3
      %s223 = smul.addr %s222, 8
      %s224 = scalar_lea.vmem %s4, %s223
      %s225 = smul.u32 2, %s15
      %v227 = vld [vmem:[%s212] sm:$0xff]
      %v228 = vld [vmem:[%s212 + $0x8] sm:$0xf]
      %v229 = vld [vmem:[%s212 + $0xc] sm:$0xff]
      %v230 = vld [vmem:[%s212 + $0x14] sm:$0xf]
      %v231 = vld [vmem:[%s1] sm:$0xf]
      %v232 = vld [vmem:[%s1 + $0x4] sm:$0xf]
      %v233 = vld [vmem:[%s1 + $0x8] sm:$0xf]
      %v234 = vld [vmem:[%s1 + $0xc] sm:$0xf]
      %v235 = vld [vmem:[%s1 + $0x10] sm:$0xf]
      %v236 = vld [vmem:[%s1 + $0x14] sm:$0xf]
      %v237 = vld [vmem:[%s1 + $0x18] sm:$0xf]
      %v238 = vld [vmem:[%s1 + $0x1c] sm:$0xf]
      %v239 = vld [vmem:[%s1 + $0x20] sm:$0xf]
      %v240 = vld [vmem:[%s1 + $0x24] sm:$0xf]
      %v241 = vld [vmem:[%s1 + $0x28] sm:$0xf]
      %v242 = vld [vmem:[%s1 + $0x2c] sm:$0xf]
      %v243 = vld [vmem:[%s1 + $0x30] sm:$0xf]
      %v244 = vld [vmem:[%s1 + $0x34] sm:$0xf]
      %v245 = vld [vmem:[%s1 + $0x38] sm:$0xf]
      %v246 = vld [vmem:[%s1 + $0x3c] sm:$0xf]
      %v247 = vld [vmem:[%s1 + $0x40] sm:$0xf]
      %v248 = vld [vmem:[%s1 + $0x44] sm:$0xf]
      %v249 = vld [vmem:[%s1 + $0x48] sm:$0xf]
      %v250 = vld [vmem:[%s1 + $0x4c] sm:$0xf]
      %v251 = vld [vmem:[%s1 + $0x50] sm:$0xf]
      %v252 = vld [vmem:[%s1 + $0x54] sm:$0xf]
      %v253 = vld [vmem:[%s1 + $0x58] sm:$0xf]
      %v254 = vld [vmem:[%s1 + $0x5c] sm:$0xf]
      %v255 = vld [vmem:[%s1 + $0x60] sm:$0xf]
      %v256 = vld [vmem:[%s1 + $0x64] sm:$0xf]
      %v257 = vld [vmem:[%s1 + $0x68] sm:$0xf]
      %v258 = vld [vmem:[%s1 + $0x6c] sm:$0xf]
      %v259 = vld [vmem:[%s1 + $0x70] sm:$0xf]
      %v260 = vld [vmem:[%s1 + $0x74] sm:$0xf]
      %v261 = vld [vmem:[%s1 + $0x78] sm:$0xf]
      %v262 = vld [vmem:[%s1 + $0x7c] sm:$0xf]
      %v263 = vld [vmem:[%s1 + $0x80] sm:$0xf]
      %v264 = vld [vmem:[%s1 + $0x84] sm:$0xf]
      %v265 = vld [vmem:[%s1 + $0x88] sm:$0xf]
      %v266 = vld [vmem:[%s1 + $0x8c] sm:$0xf]
      %v267 = vld [vmem:[%s1 + $0x90] sm:$0xf]
      %v268 = vld [vmem:[%s1 + $0x94] sm:$0xf]
      %v269 = vld [vmem:[%s1 + $0x98] sm:$0xf]
      %v270 = vld [vmem:[%s1 + $0x9c] sm:$0xf]
      %v271 = vld [vmem:[%s1 + $0xa0] sm:$0xf]
      %v272 = vld [vmem:[%s1 + $0xa4] sm:$0xf]
      %v273 = vld [vmem:[%s1 + $0xa8] sm:$0xf]
      %v274 = vld [vmem:[%s1 + $0xac] sm:$0xf]
      %v275 = vld [vmem:[%s1 + $0xb0] sm:$0xf]
      %v276 = vld [vmem:[%s1 + $0xb4] sm:$0xf]
      %v277 = vld [vmem:[%s1 + $0xb8] sm:$0xf]
      %v278 = vld [vmem:[%s1 + $0xbc] sm:$0xf]
      %v279 = vld [vmem:[%s2] sm:$0x1]
      %v281 = vlaneseq
      %v282 = vshrl.u32 %v281, 7
      %v283 = vsub.s32 0, %v282
      %v284 = vrot.slane %v279, %v283
      %v290 = vunpack.c.l.b16 %v227
      %v291 = vunpack.c.h.b16 %v227
      %v292 = vunpack.c.l.b16 %v228
      %v293 = vunpack.c.l.b16 %v229
      %v294 = vunpack.c.h.b16 %v229
      %v295 = vunpack.c.l.b16 %v230
      %v296 = vpack.c.b16 %v293, %v290
      %v297 = vpack.c.b16 %v294, %v291
      %v298 = vpack.c.b16 %v295, %v292
      %v350 = vunpack.c.l.b16 %v231
      %v351 = vunpack.c.l.b16 %v232
      %v352 = vunpack.c.l.b16 %v233
      %v353 = vunpack.c.l.b16 %v234
      %v354 = vunpack.c.l.b16 %v235
      %v355 = vunpack.c.l.b16 %v236
      %v356 = vunpack.c.l.b16 %v237
      %v357 = vunpack.c.l.b16 %v238
      %v358 = vunpack.c.l.b16 %v239
      %v359 = vunpack.c.l.b16 %v240
      %v360 = vunpack.c.l.b16 %v241
      %v361 = vunpack.c.l.b16 %v242
      %v362 = vunpack.c.l.b16 %v243
      %v363 = vunpack.c.l.b16 %v244
      %v364 = vunpack.c.l.b16 %v245
      %v365 = vunpack.c.l.b16 %v246
      %v366 = vunpack.c.l.b16 %v247
      %v367 = vunpack.c.l.b16 %v248
      %v368 = vunpack.c.l.b16 %v249
      %v369 = vunpack.c.l.b16 %v250
      %v370 = vunpack.c.l.b16 %v251
      %v371 = vunpack.c.l.b16 %v252
      %v372 = vunpack.c.l.b16 %v253
      %v373 = vunpack.c.l.b16 %v254
      %v374 = vunpack.c.l.b16 %v255
      %v375 = vunpack.c.l.b16 %v256
      %v376 = vunpack.c.l.b16 %v257
      %v377 = vunpack.c.l.b16 %v258
      %v378 = vunpack.c.l.b16 %v259
      %v379 = vunpack.c.l.b16 %v260
      %v380 = vunpack.c.l.b16 %v261
      %v381 = vunpack.c.l.b16 %v262
      %v382 = vunpack.c.l.b16 %v263
      %v383 = vunpack.c.l.b16 %v264
      %v384 = vunpack.c.l.b16 %v265
      %v385 = vunpack.c.l.b16 %v266
      %v386 = vunpack.c.l.b16 %v267
      %v387 = vunpack.c.l.b16 %v268
      %v388 = vunpack.c.l.b16 %v269
      %v389 = vunpack.c.l.b16 %v270
      %v390 = vunpack.c.l.b16 %v271
      %v391 = vunpack.c.l.b16 %v272
      %v392 = vunpack.c.l.b16 %v273
      %v393 = vunpack.c.l.b16 %v274
      %v394 = vunpack.c.l.b16 %v275
      %v395 = vunpack.c.l.b16 %v276
      %v396 = vunpack.c.l.b16 %v277
      %v397 = vunpack.c.l.b16 %v278
      %v398 = vpack.c.b16 %v351, %v350
      %v399 = vpack.c.b16 %v353, %v352
      %v400 = vpack.c.b16 %v355, %v354
      %v401 = vpack.c.b16 %v357, %v356
      %v402 = vpack.c.b16 %v359, %v358
      %v403 = vpack.c.b16 %v361, %v360
      %v404 = vpack.c.b16 %v363, %v362
      %v405 = vpack.c.b16 %v365, %v364
      %v406 = vpack.c.b16 %v367, %v366
      %v407 = vpack.c.b16 %v369, %v368
      %v408 = vpack.c.b16 %v371, %v370
      %v409 = vpack.c.b16 %v373, %v372
      %v410 = vpack.c.b16 %v375, %v374
      %v411 = vpack.c.b16 %v377, %v376
      %v412 = vpack.c.b16 %v379, %v378
      %v413 = vpack.c.b16 %v381, %v380
      %v414 = vpack.c.b16 %v383, %v382
      %v415 = vpack.c.b16 %v385, %v384
      %v416 = vpack.c.b16 %v387, %v386
      %v417 = vpack.c.b16 %v389, %v388
      %v418 = vpack.c.b16 %v391, %v390
      %v419 = vpack.c.b16 %v393, %v392
      %v420 = vpack.c.b16 %v395, %v394
      %v421 = vpack.c.b16 %v397, %v396
      %446 = vmatprep.subr.bf16.mxu0 0
      %447 = vmatpush1.bf16.msra.mxu0 %v398
      %448 = vmatprep.subr.bf16.mxu0 0
      %449 = vmatpush1.bf16.msra.mxu0 %v399
      %450 = vmatprep.subr.bf16.mxu0 0
      %451 = vmatpush1.bf16.msra.mxu0 %v400
      %452 = vmatprep.subr.bf16.mxu0 0
      %453 = vmatpush1.bf16.msra.mxu0 %v401
      %454 = vmatprep.subr.bf16.mxu0 0
      %455 = vmatpush1.bf16.msra.mxu0 %v402
      %456 = vmatprep.subr.bf16.mxu0 0
      %457 = vmatpush1.bf16.msra.mxu0 %v403
      %458 = vmatprep.subr.bf16.mxu0 0
      %459 = vmatpush1.bf16.msra.mxu0 %v404
      %460 = vmatprep.subr.bf16.mxu0 0
      %461 = vmatpush1.bf16.msra.mxu0 %v405
      %462 = vmatprep.subr.bf16.mxu0 0
      %463 = vmatpush1.bf16.msra.mxu0 %v406
      %464 = vmatprep.subr.bf16.mxu0 0
      %465 = vmatpush1.bf16.msra.mxu0 %v407
      %466 = vmatprep.subr.bf16.mxu0 0
      %467 = vmatpush1.bf16.msra.mxu0 %v408
      %468 = vmatprep.subr.bf16.mxu0 0
      %469 = vmatpush1.bf16.msra.mxu0 %v409
      %470 = vmatprep.subr.bf16.mxu0 0
      %471 = vmatpush1.bf16.msra.mxu0 %v410
      %472 = vmatprep.subr.bf16.mxu0 0
      %473 = vmatpush1.bf16.msra.mxu0 %v411
      %474 = vmatprep.subr.bf16.mxu0 0
      %475 = vmatpush1.bf16.msra.mxu0 %v412
      %476 = vmatprep.subr.bf16.mxu0 0
      %477 = vmatpush1.bf16.msra.mxu0 %v413
      %478 = vmatprep.mubr.bf16.mxu0 %v297
      %479 = vmatmul.mubr.bf16.gmra.mrb[0].mxu0 %v296
      %v480 = vpop.f32.mrb[0].mxu0
      %v481 = vadd.f32 %v284, %v480
      %v482 = vpop.f32.mrb[0].mxu0
      %v483 = vpop.f32.mrb[0].mxu0
      %v484 = vadd.f32 %v284, %v483
      %v485 = vpop.f32.mrb[0].mxu0
      %486 = vdwg.mxu0
      %487 = vmatprep.subr.bf16.mxu0 0
      %488 = vmatpush1.bf16.msra.mxu0 %v414
      %489 = vmatprep.subr.bf16.mxu0 0
      %490 = vmatpush1.bf16.msra.mxu0 %v415
      %491 = vmatprep.subr.bf16.mxu0 0
      %492 = vmatpush1.bf16.msra.mxu0 %v416
      %493 = vmatprep.subr.bf16.mxu0 0
      %494 = vmatpush1.bf16.msra.mxu0 %v417
      %495 = vmatprep.subr.bf16.mxu0 0
      %496 = vmatpush1.bf16.msra.mxu0 %v418
      %497 = vmatprep.subr.bf16.mxu0 0
      %498 = vmatpush1.bf16.msra.mxu0 %v419
      %499 = vmatprep.subr.bf16.mxu0 0
      %500 = vmatpush1.bf16.msra.mxu0 %v420
      %501 = vmatprep.subr.bf16.mxu0 0
      %502 = vmatpush1.bf16.msra.mxu0 %v421
      %503 = vmatprep.subr.bf16.mxu0 0
      %504 = vmatpush1.bf16.msra.mxu0 0
      %505 = vmatprep.subr.bf16.mxu0 0
      %506 = vmatpush1.bf16.msra.mxu0 0
      %507 = vmatprep.subr.bf16.mxu0 0
      %508 = vmatpush1.bf16.msra.mxu0 0
      %509 = vmatprep.subr.bf16.mxu0 0
      %510 = vmatpush1.bf16.msra.mxu0 0
      %511 = vmatprep.subr.bf16.mxu0 0
      %512 = vmatpush1.bf16.msra.mxu0 0
      %513 = vmatprep.subr.bf16.mxu0 0
      %514 = vmatpush1.bf16.msra.mxu0 0
      %515 = vmatprep.subr.bf16.mxu0 0
      %516 = vmatpush1.bf16.msra.mxu0 0
      %517 = vmatprep.subr.bf16.mxu0 0
      %518 = vmatpush1.bf16.msra.mxu0 0
      %519 = vmatprep.mubr.bf16.mxu0 0
      %520 = vmatmul.mubr.bf16.gmra.mrb[0].mxu0 %v298
      %v521 = vpop.f32.mrb[0].mxu0
      %v522 = vadd.f32 %v481, %v521
      %v523 = vpop.f32.mrb[0].mxu0
      %v524 = vpop.f32.mrb[0].mxu0
      %v525 = vadd.f32 %v484, %v524
      %v526 = vpop.f32.mrb[0].mxu0
      %527 = vdwg.mxu0
      %v528 = vld [vmem:[%s218] sm:$0xff]
      %v529 = vld [vmem:[%s218 + $0x8] sm:$0xff]
      %v530 = vadd.f32 %v522, %v528
      %v531 = vadd.f32 %v525, %v529
      %v532 = vmax.f32 %v530, 0.0
      %v533 = vmax.f32 %v531, 0.0
      %534 = vst [vmem:[%s224] sm:$0xff] %v532
      %535 = vst [vmem:[%s224 + $0x8] sm:$0xff] %v533
      %s536 = smul.u32 2, %s15
      %p537 = scmp.lt.s32.totalorder %s536, 3
      %s538 = scalar_select %p537, %s536, 3
      %s539 = smul.addr %s538, 8
      %s540 = scalar_lea.vmem %s4, %s539
      // Predicated region
      $region37: #{dct_stream_forward.59} parent=35 // pred_check
        %p541 = pneg %p127
      $region38: #{dct_stream_forward.59} parent=35 // pred_check_branch
        %543 = sbr.rel (%p541) target = $region40
      $region39: #{dct_stream_forward.59} parent=35 // pred_region
        %s544 = smul.u32 2, %s15
      $region40: #{dct_stream_forward.59} parent=35 // pred_fallthru
        _
    $region36: #{dct_stream_forward.59} parent=5 // pred_fallthru
      _
    %p545 = scmp.le.s32.totalorder 2, %s10
    // Predicated region
    $region41: #{dct_stream_forward.59} parent=5 // pred_check
      %p546 = pneg %p545
    $region42: #{dct_stream_forward.59} parent=5 // pred_check_branch
      %548 = sbr.rel (%p546) target = $region44
    $region43: #{dct_stream_forward.59} parent=5 // pred_region
      %s549 = ssub.s32 %s10, 2
      // Predicated region
      $region45: #{dct_stream_forward.59} parent=43 // pred_check
        %p550 = pneg %p133
      $region46: #{dct_stream_forward.59} parent=43 // pred_check_branch
        %552 = sbr.rel (%p550) target = $region48
      $region47: #{dct_stream_forward.59} parent=43 // pred_region
        %s553 = smul.u32 2, %s16
        %p554 = scmp.lt.s32.totalorder %s553, 3
        %s555 = scalar_select %p554, %s553, 3
        %s556 = smul.addr %s555, 8
        %s557 = scalar_lea.vmem %s4, %s556
      $region48: #{dct_stream_forward.59} parent=43 // pred_fallthru
        _
    $region44: #{dct_stream_forward.59} parent=5 // pred_fallthru
      _
  $region6: #{dct_stream_forward.59} parent=0 // loop_footer
    %s14 = sadd.s32 1, %s10
  $region7: #{dct_stream_forward.59} parent=0 // loop_footer_branch
    %9 = sbr.rel target = $region3
  $region8: #{dct_stream_forward.59} parent=0 // loop_exit
    _

// kernel: dct_stream_forward.58
$region0: #{dct_stream_forward.58}
  #allocation0 [shape = 'u32[]', space=smem, size = 0x4, offset = 0x4, fixed_abs, tag = 'smem constant byte address 0x4 - core index']
  #allocation1 [shape = 'u32[144,128]{1,0:T(1,128)}', space=vmem, size = 0x12000, scoped, tag = 'internal scratch']
  %s0 = inlined_call_operand.vmem [shape: bf16[32,384], index: 0, kind: input, shape index: {}]
  %s1 = inlined_call_operand.vmem [shape: bf16[384,128], index: 1, kind: input, shape index: {}]
  %s2 = inlined_call_operand.vmem [shape: f32[1,128], index: 2, kind: input, shape index: {}]
  %s3 = inlined_call_operand.vmem [shape: f32[32,128], index: 3, kind: output, shape index: {}]
  %s4 = sld [smem:[#allocation0]]
  $region45: #{dct_stream_forward.58} parent=0
    _
  %s6 = ssub.s32 1, %s4
  %s7 = scalar_select 0, %s6, %s4
  loop: start=0, step=1, limit=4
  $region2: #{dct_stream_forward.58} parent=0 // loop_pre_header
    _
  $region3: #{dct_stream_forward.58} parent=0 // loop_header
    %s9 = sphi 0, %s13
    %p10 = scmp.ge.s32.totalorder %s9, 4
    %s19 = sphi 0, %s21
    %s22 = sphi 0, %s19
    %s23 = sphi 0, %s22
    %s39 = sphi 0, %s23
    %s43 = sphi 0, %s43
    %s45 = sphi 0, %s43
    %s46 = sphi 0, %s45
    %s60 = sphi 0, %s46
    %s64 = sphi 0, %s64
    %s66 = sphi 0, %s64
    %s67 = sphi 0, %s66
    %s81 = sphi 0, %s67
    %s87 = sphi 0, %s89
    %s90 = sphi 0, %s87
    %s91 = sphi 0, %s90
    %s107 = sphi 0, %s91
  $region4: #{dct_stream_forward.58} parent=0 // loop_header_branch
    %12 = sbr.rel (%p10) target = $region8
  $region5: #{dct_stream_forward.58} parent=0 // loop_body
    %s14 = ssub.s32 %s9, 1
    %s15 = ssub.s32 %s9, 2
    %s16 = sadd.s32 %s9, 1
    %s17 = ssub.s32 %s9, %s16
    %p18 = scmp.eq.s32.totalorder %s17, 0
    %s20 = sadd.s32 %s19, 1
    %s21 = scalar_select %p18, %s19, %s20
    %p24 = pneg %p18
    %p25 = scmp.eq.s32.totalorder %s9, 1
    %p26 = por %p24, %p25
    %p27 = scmp.ne.s32.totalorder %s19, %s22
    %p28 = scmp.eq.s32.totalorder %s9, 0
    %p29 = por %p27, %p28
    %p30 = scmp.ne.s32.totalorder %s19, %s22
    %p31 = scmp.eq.s32.totalorder %s14, 1
    %p32 = por %p30, %p31
    %p33 = scmp.ne.s32.totalorder %s22, %s23
    %p34 = scmp.eq.s32.totalorder %s14, 0
    %p35 = por %p33, %p34
    %p36 = scmp.ne.s32.totalorder %s22, %s23
    %p37 = scmp.eq.s32.totalorder %s15, 1
    %p38 = por %p36, %p37
    %p40 = scmp.ne.s32.totalorder %s23, %s39
    %p41 = scmp.eq.s32.totalorder %s15, 0
    %p42 = por %p40, %p41
    %s44 = sadd.s32 %s43, 1
    %p47 = scmp.eq.s32.totalorder %s9, 1
    %p48 = scmp.ne.s32.totalorder %s43, %s45
    %p49 = scmp.eq.s32.totalorder %s9, 0
    %p50 = por %p48, %p49
    %p51 = scmp.ne.s32.totalorder %s43, %s45
    %p52 = scmp.eq.s32.totalorder %s14, 1
    %p53 = por %p51, %p52
    %p54 = scmp.ne.s32.totalorder %s45, %s46
    %p55 = scmp.eq.s32.totalorder %s14, 0
    %p56 = por %p54, %p55
    %p57 = scmp.ne.s32.totalorder %s45, %s46
    %p58 = scmp.eq.s32.totalorder %s15, 1
    %p59 = por %p57, %p58
    %p61 = scmp.ne.s32.totalorder %s46, %s60
    %p62 = scmp.eq.s32.totalorder %s15, 0
    %p63 = por %p61, %p62
    %s65 = sadd.s32 %s64, 1
    %p68 = scmp.eq.s32.totalorder %s9, 1
    %p69 = scmp.ne.s32.totalorder %s64, %s66
    %p70 = scmp.eq.s32.totalorder %s9, 0
    %p71 = por %p69, %p70
    %p72 = scmp.ne.s32.totalorder %s64, %s66
    %p73 = scmp.eq.s32.totalorder %s14, 1
    %p74 = por %p72, %p73
    %p75 = scmp.ne.s32.totalorder %s66, %s67
    %p76 = scmp.eq.s32.totalorder %s14, 0
    %p77 = por %p75, %p76
    %p78 = scmp.ne.s32.totalorder %s66, %s67
    %p79 = scmp.eq.s32.totalorder %s15, 1
    %p80 = por %p78, %p79
    %p82 = scmp.ne.s32.totalorder %s67, %s81
    %p83 = scmp.eq.s32.totalorder %s15, 0
    %p84 = por %p82, %p83
    %s85 = ssub.s32 %s9, %s16
    %p86 = scmp.eq.s32.totalorder %s85, 0
    %s88 = sadd.s32 %s87, 1
    %s89 = scalar_select %p86, %s87, %s88
    %p92 = pneg %p86
    %p93 = scmp.eq.s32.totalorder %s9, 1
    %p94 = por %p92, %p93
    %p95 = scmp.ne.s32.totalorder %s87, %s90
    %p96 = scmp.eq.s32.totalorder %s9, 0
    %p97 = por %p95, %p96
    %p98 = scmp.ne.s32.totalorder %s87, %s90
    %p99 = scmp.eq.s32.totalorder %s14, 1
    %p100 = por %p98, %p99
    %p101 = scmp.ne.s32.totalorder %s90, %s91
    %p102 = scmp.eq.s32.totalorder %s14, 0
    %p103 = por %p101, %p102
    %p104 = scmp.ne.s32.totalorder %s90, %s91
    %p105 = scmp.eq.s32.totalorder %s15, 1
    %p106 = por %p104, %p105
    %p108 = scmp.ne.s32.totalorder %s91, %s107
    %p109 = scmp.eq.s32.totalorder %s15, 0
    %p110 = por %p108, %p109
    %p111 = scmp.le.s32.totalorder 1, %s9
    %p112 = scmp.lt.s32.totalorder %s9, 3
    %p113 = pnand %p111, %p112
    %p114 = pneg %p113
    // Predicated region
    $region9: #{dct_stream_forward.58} parent=5 // pred_check
      _
    $region10: #{dct_stream_forward.58} parent=5 // pred_check_branch
      %116 = sbr.rel (%p113) target = $region12
    $region11: #{dct_stream_forward.58} parent=5 // pred_region
      %s117 = ssub.s32 %s9, 1
      // Predicated region
      $region13: #{dct_stream_forward.58} parent=11 // pred_check
        %p118 = pneg %p56
      $region14: #{dct_stream_forward.58} parent=11 // pred_check_branch
        %120 = sbr.rel (%p118) target = $region16
      $region15: #{dct_stream_forward.58} parent=11 // pred_region
        _
      $region16: #{dct_stream_forward.58} parent=11 // pred_fallthru
        _
      // Predicated region
      $region17: #{dct_stream_forward.58} parent=11 // pred_check
        %p121 = pneg %p77
      $region18: #{dct_stream_forward.58} parent=11 // pred_check_branch
        %123 = sbr.rel (%p121) target = $region20
      $region19: #{dct_stream_forward.58} parent=11 // pred_region
        _
      $region20: #{dct_stream_forward.58} parent=11 // pred_fallthru
        _
    $region12: #{dct_stream_forward.58} parent=5 // pred_fallthru
      _
    %p124 = scmp.lt.s32.totalorder %s9, 2
    // Predicated region
    $region21: #{dct_stream_forward.58} parent=5 // pred_check
      %p125 = pneg %p124
    $region22: #{dct_stream_forward.58} parent=5 // pred_check_branch
      %127 = sbr.rel (%p125) target = $region24
    $region23: #{dct_stream_forward.58} parent=5 // pred_region
      // Predicated region
      $region25: #{dct_stream_forward.58} parent=23 // pred_check
        %p128 = pneg %p29
      $region26: #{dct_stream_forward.58} parent=23 // pred_check_branch
        %130 = sbr.rel (%p128) target = $region28
      $region27: #{dct_stream_forward.58} parent=23 // pred_region
        %s131 = smul.u32 2, %s9
        %p132 = scmp.lt.s32.totalorder %s131, 3
        %s133 = scalar_select %p132, %s131, 3
        %s134 = smul.addr %s133, 3
        %s135 = smul.addr %s134, 4
        %s136 = scalar_lea.vmem %s0, %s135
        %s137 = smul.u32 2, %s9
      $region28: #{dct_stream_forward.58} parent=23 // pred_fallthru
        _
    $region24: #{dct_stream_forward.58} parent=5 // pred_fallthru
      _
    %p138 = scmp.le.s32.totalorder 1, %s9
    %p139 = scmp.lt.s32.totalorder %s9, 3
    %p140 = pnand %p138, %p139
    %p141 = pneg %p140
    // Predicated region
    $region29: #{dct_stream_forward.58} parent=5 // pred_check
      _
    $region30: #{dct_stream_forward.58} parent=5 // pred_check_branch
      %143 = sbr.rel (%p140) target = $region32
    $region31: #{dct_stream_forward.58} parent=5 // pred_region
      %s144 = ssub.s32 %s9, 1
      %s145 = smul.u32 2, %s14
      %p146 = scmp.lt.s32.totalorder %s145, 3
      %s147 = scalar_select %p146, %s145, 3
      %s148 = smul.addr %s147, 3
      %s149 = smul.addr %s148, 4
      %s150 = scalar_lea.vmem %s0, %s149
      %p151 = pneg %p35
      %p152 = pneg %p32
      %p153 = pneg %p56
      %p154 = pneg %p53
      %p155 = pneg %p77
      %p156 = pneg %p74
      %p157 = pneg %p103
      %p158 = pneg %p100
      %s159 = smul.u32 2, %s14
      %p160 = scmp.lt.s32.totalorder %s159, 3
      %s161 = scalar_select %p160, %s159, 3
      %s162 = smul.addr %s161, 8
      %s163 = scalar_lea.vmem %s3, %s162
      %s164 = smul.u32 2, %s14
      %p165 = scmp.lt.s32.totalorder %s164, 3
      %s166 = scalar_select %p165, %s164, 3
      %s167 = smul.addr %s166, 3
      %s168 = smul.addr %s167, 4
      %s169 = scalar_lea.vmem %s0, %s168
      %s170 = smul.u32 2, %s14
      %s171 = smul.u32 2, %s14
      %p172 = scmp.lt.s32.totalorder %s171, 3
      %s173 = scalar_select %p172, %s171, 3
      %s174 = smul.addr %s173, 8
      %s175 = scalar_lea.vmem %s3, %s174
      %s176 = smul.u32 2, %s14
      %v178 = vld [vmem:[%s169] sm:$0xff]
      %v179 = vld [vmem:[%s169 + $0x8] sm:$0xf]
      %v180 = vld [vmem:[%s169 + $0xc] sm:$0xff]
      %v181 = vld [vmem:[%s169 + $0x14] sm:$0xf]
      %v182 = vld [vmem:[%s1] sm:$0xf]
      %v183 = vld [vmem:[%s1 + $0x4] sm:$0xf]
      %v184 = vld [vmem:[%s1 + $0x8] sm:$0xf]
      %v185 = vld [vmem:[%s1 + $0xc] sm:$0xf]
      %v186 = vld [vmem:[%s1 + $0x10] sm:$0xf]
      %v187 = vld [vmem:[%s1 + $0x14] sm:$0xf]
      %v188 = vld [vmem:[%s1 + $0x18] sm:$0xf]
      %v189 = vld [vmem:[%s1 + $0x1c] sm:$0xf]
      %v190 = vld [vmem:[%s1 + $0x20] sm:$0xf]
      %v191 = vld [vmem:[%s1 + $0x24] sm:$0xf]
      %v192 = vld [vmem:[%s1 + $0x28] sm:$0xf]
      %v193 = vld [vmem:[%s1 + $0x2c] sm:$0xf]
      %v194 = vld [vmem:[%s1 + $0x30] sm:$0xf]
      %v195 = vld [vmem:[%s1 + $0x34] sm:$0xf]
      %v196 = vld [vmem:[%s1 + $0x38] sm:$0xf]
      %v197 = vld [vmem:[%s1 + $0x3c] sm:$0xf]
      %v198 = vld [vmem:[%s1 + $0x40] sm:$0xf]
      %v199 = vld [vmem:[%s1 + $0x44] sm:$0xf]
      %v200 = vld [vmem:[%s1 + $0x48] sm:$0xf]
      %v201 = vld [vmem:[%s1 + $0x4c] sm:$0xf]
      %v202 = vld [vmem:[%s1 + $0x50] sm:$0xf]
      %v203 = vld [vmem:[%s1 + $0x54] sm:$0xf]
      %v204 = vld [vmem:[%s1 + $0x58] sm:$0xf]
      %v205 = vld [vmem:[%s1 + $0x5c] sm:$0xf]
      %v206 = vld [vmem:[%s1 + $0x60] sm:$0xf]
      %v207 = vld [vmem:[%s1 + $0x64] sm:$0xf]
      %v208 = vld [vmem:[%s1 + $0x68] sm:$0xf]
      %v209 = vld [vmem:[%s1 + $0x6c] sm:$0xf]
      %v210 = vld [vmem:[%s1 + $0x70] sm:$0xf]
      %v211 = vld [vmem:[%s1 + $0x74] sm:$0xf]
      %v212 = vld [vmem:[%s1 + $0x78] sm:$0xf]
      %v213 = vld [vmem:[%s1 + $0x7c] sm:$0xf]
      %v214 = vld [vmem:[%s1 + $0x80] sm:$0xf]
      %v215 = vld [vmem:[%s1 + $0x84] sm:$0xf]
      %v216 = vld [vmem:[%s1 + $0x88] sm:$0xf]
      %v217 = vld [vmem:[%s1 + $0x8c] sm:$0xf]
      %v218 = vld [vmem:[%s1 + $0x90] sm:$0xf]
      %v219 = vld [vmem:[%s1 + $0x94] sm:$0xf]
      %v220 = vld [vmem:[%s1 + $0x98] sm:$0xf]
      %v221 = vld [vmem:[%s1 + $0x9c] sm:$0xf]
      %v222 = vld [vmem:[%s1 + $0xa0] sm:$0xf]
      %v223 = vld [vmem:[%s1 + $0xa4] sm:$0xf]
      %v224 = vld [vmem:[%s1 + $0xa8] sm:$0xf]
      %v225 = vld [vmem:[%s1 + $0xac] sm:$0xf]
      %v226 = vld [vmem:[%s1 + $0xb0] sm:$0xf]
      %v227 = vld [vmem:[%s1 + $0xb4] sm:$0xf]
      %v228 = vld [vmem:[%s1 + $0xb8] sm:$0xf]
      %v229 = vld [vmem:[%s1 + $0xbc] sm:$0xf]
      %v230 = vld [vmem:[%s2] sm:$0x1]
      %v232 = vlaneseq
      %v233 = vshrl.u32 %v232, 7
      %v234 = vsub.s32 0, %v233
      %v235 = vrot.slane %v230, %v234
      %v241 = vunpack.c.l.b16 %v178
      %v242 = vunpack.c.h.b16 %v178
      %v243 = vunpack.c.l.b16 %v179
      %v244 = vunpack.c.l.b16 %v180
      %v245 = vunpack.c.h.b16 %v180
      %v246 = vunpack.c.l.b16 %v181
      %v247 = vpack.c.b16 %v244, %v241
      %v248 = vpack.c.b16 %v245, %v242
      %v249 = vpack.c.b16 %v246, %v243
      %v301 = vunpack.c.l.b16 %v182
      %v302 = vunpack.c.l.b16 %v183
      %v303 = vunpack.c.l.b16 %v184
      %v304 = vunpack.c.l.b16 %v185
      %v305 = vunpack.c.l.b16 %v186
      %v306 = vunpack.c.l.b16 %v187
      %v307 = vunpack.c.l.b16 %v188
      %v308 = vunpack.c.l.b16 %v189
      %v309 = vunpack.c.l.b16 %v190
      %v310 = vunpack.c.l.b16 %v191
      %v311 = vunpack.c.l.b16 %v192
      %v312 = vunpack.c.l.b16 %v193
      %v313 = vunpack.c.l.b16 %v194
      %v314 = vunpack.c.l.b16 %v195
      %v315 = vunpack.c.l.b16 %v196
      %v316 = vunpack.c.l.b16 %v197
      %v317 = vunpack.c.l.b16 %v198
      %v318 = vunpack.c.l.b16 %v199
      %v319 = vunpack.c.l.b16 %v200
      %v320 = vunpack.c.l.b16 %v201
      %v321 = vunpack.c.l.b16 %v202
      %v322 = vunpack.c.l.b16 %v203
      %v323 = vunpack.c.l.b16 %v204
      %v324 = vunpack.c.l.b16 %v205
      %v325 = vunpack.c.l.b16 %v206
      %v326 = vunpack.c.l.b16 %v207
      %v327 = vunpack.c.l.b16 %v208
      %v328 = vunpack.c.l.b16 %v209
      %v329 = vunpack.c.l.b16 %v210
      %v330 = vunpack.c.l.b16 %v211
      %v331 = vunpack.c.l.b16 %v212
      %v332 = vunpack.c.l.b16 %v213
      %v333 = vunpack.c.l.b16 %v214
      %v334 = vunpack.c.l.b16 %v215
      %v335 = vunpack.c.l.b16 %v216
      %v336 = vunpack.c.l.b16 %v217
      %v337 = vunpack.c.l.b16 %v218
      %v338 = vunpack.c.l.b16 %v219
      %v339 = vunpack.c.l.b16 %v220
      %v340 = vunpack.c.l.b16 %v221
      %v341 = vunpack.c.l.b16 %v222
      %v342 = vunpack.c.l.b16 %v223
      %v343 = vunpack.c.l.b16 %v224
      %v344 = vunpack.c.l.b16 %v225
      %v345 = vunpack.c.l.b16 %v226
      %v346 = vunpack.c.l.b16 %v227
      %v347 = vunpack.c.l.b16 %v228
      %v348 = vunpack.c.l.b16 %v229
      %v349 = vpack.c.b16 %v302, %v301
      %v350 = vpack.c.b16 %v304, %v303
      %v351 = vpack.c.b16 %v306, %v305
      %v352 = vpack.c.b16 %v308, %v307
      %v353 = vpack.c.b16 %v310, %v309
      %v354 = vpack.c.b16 %v312, %v311
      %v355 = vpack.c.b16 %v314, %v313
      %v356 = vpack.c.b16 %v316, %v315
      %v357 = vpack.c.b16 %v318, %v317
      %v358 = vpack.c.b16 %v320, %v319
      %v359 = vpack.c.b16 %v322, %v321
      %v360 = vpack.c.b16 %v324, %v323
      %v361 = vpack.c.b16 %v326, %v325
      %v362 = vpack.c.b16 %v328, %v327
      %v363 = vpack.c.b16 %v330, %v329
      %v364 = vpack.c.b16 %v332, %v331
      %v365 = vpack.c.b16 %v334, %v333
      %v366 = vpack.c.b16 %v336, %v335
      %v367 = vpack.c.b16 %v338, %v337
      %v368 = vpack.c.b16 %v340, %v339
      %v369 = vpack.c.b16 %v342, %v341
      %v370 = vpack.c.b16 %v344, %v343
      %v371 = vpack.c.b16 %v346, %v345
      %v372 = vpack.c.b16 %v348, %v347
      %397 = vmatprep.subr.bf16.mxu0 0
      %398 = vmatpush1.bf16.msra.mxu0 %v349
      %399 = vmatprep.subr.bf16.mxu0 0
      %400 = vmatpush1.bf16.msra.mxu0 %v350
      %401 = vmatprep.subr.bf16.mxu0 0
      %402 = vmatpush1.bf16.msra.mxu0 %v351
      %403 = vmatprep.subr.bf16.mxu0 0
      %404 = vmatpush1.bf16.msra.mxu0 %v352
      %405 = vmatprep.subr.bf16.mxu0 0
      %406 = vmatpush1.bf16.msra.mxu0 %v353
      %407 = vmatprep.subr.bf16.mxu0 0
      %408 = vmatpush1.bf16.msra.mxu0 %v354
      %409 = vmatprep.subr.bf16.mxu0 0
      %410 = vmatpush1.bf16.msra.mxu0 %v355
      %411 = vmatprep.subr.bf16.mxu0 0
      %412 = vmatpush1.bf16.msra.mxu0 %v356
      %413 = vmatprep.subr.bf16.mxu0 0
      %414 = vmatpush1.bf16.msra.mxu0 %v357
      %415 = vmatprep.subr.bf16.mxu0 0
      %416 = vmatpush1.bf16.msra.mxu0 %v358
      %417 = vmatprep.subr.bf16.mxu0 0
      %418 = vmatpush1.bf16.msra.mxu0 %v359
      %419 = vmatprep.subr.bf16.mxu0 0
      %420 = vmatpush1.bf16.msra.mxu0 %v360
      %421 = vmatprep.subr.bf16.mxu0 0
      %422 = vmatpush1.bf16.msra.mxu0 %v361
      %423 = vmatprep.subr.bf16.mxu0 0
      %424 = vmatpush1.bf16.msra.mxu0 %v362
      %425 = vmatprep.subr.bf16.mxu0 0
      %426 = vmatpush1.bf16.msra.mxu0 %v363
      %427 = vmatprep.subr.bf16.mxu0 0
      %428 = vmatpush1.bf16.msra.mxu0 %v364
      %429 = vmatprep.mubr.bf16.mxu0 %v248
      %430 = vmatmul.mubr.bf16.gmra.mrb[0].mxu0 %v247
      %v431 = vpop.f32.mrb[0].mxu0
      %v432 = vadd.f32 %v235, %v431
      %v433 = vpop.f32.mrb[0].mxu0
      %v434 = vpop.f32.mrb[0].mxu0
      %v435 = vadd.f32 %v235, %v434
      %v436 = vpop.f32.mrb[0].mxu0
      %437 = vdwg.mxu0
      %438 = vmatprep.subr.bf16.mxu0 0
      %439 = vmatpush1.bf16.msra.mxu0 %v365
      %440 = vmatprep.subr.bf16.mxu0 0
      %441 = vmatpush1.bf16.msra.mxu0 %v366
      %442 = vmatprep.subr.bf16.mxu0 0
      %443 = vmatpush1.bf16.msra.mxu0 %v367
      %444 = vmatprep.subr.bf16.mxu0 0
      %445 = vmatpush1.bf16.msra.mxu0 %v368
      %446 = vmatprep.subr.bf16.mxu0 0
      %447 = vmatpush1.bf16.msra.mxu0 %v369
      %448 = vmatprep.subr.bf16.mxu0 0
      %449 = vmatpush1.bf16.msra.mxu0 %v370
      %450 = vmatprep.subr.bf16.mxu0 0
      %451 = vmatpush1.bf16.msra.mxu0 %v371
      %452 = vmatprep.subr.bf16.mxu0 0
      %453 = vmatpush1.bf16.msra.mxu0 %v372
      %454 = vmatprep.subr.bf16.mxu0 0
      %455 = vmatpush1.bf16.msra.mxu0 0
      %456 = vmatprep.subr.bf16.mxu0 0
      %457 = vmatpush1.bf16.msra.mxu0 0
      %458 = vmatprep.subr.bf16.mxu0 0
      %459 = vmatpush1.bf16.msra.mxu0 0
      %460 = vmatprep.subr.bf16.mxu0 0
      %461 = vmatpush1.bf16.msra.mxu0 0
      %462 = vmatprep.subr.bf16.mxu0 0
      %463 = vmatpush1.bf16.msra.mxu0 0
      %464 = vmatprep.subr.bf16.mxu0 0
      %465 = vmatpush1.bf16.msra.mxu0 0
      %466 = vmatprep.subr.bf16.mxu0 0
      %467 = vmatpush1.bf16.msra.mxu0 0
      %468 = vmatprep.subr.bf16.mxu0 0
      %469 = vmatpush1.bf16.msra.mxu0 0
      %470 = vmatprep.mubr.bf16.mxu0 0
      %471 = vmatmul.mubr.bf16.gmra.mrb[0].mxu0 %v249
      %v472 = vpop.f32.mrb[0].mxu0
      %v473 = vadd.f32 %v432, %v472
      %v474 = vpop.f32.mrb[0].mxu0
      %v475 = vpop.f32.mrb[0].mxu0
      %v476 = vadd.f32 %v435, %v475
      %v477 = vpop.f32.mrb[0].mxu0
      %478 = vdwg.mxu0
      %v479 = vmax.f32 %v473, 0.0
      %v480 = vmax.f32 %v476, 0.0
      %481 = vst [vmem:[%s175] sm:$0xff] %v479
      %482 = vst [vmem:[%s175 + $0x8] sm:$0xff] %v480
      %s483 = smul.u32 2, %s14
      %p484 = scmp.lt.s32.totalorder %s483, 3
      %s485 = scalar_select %p484, %s483, 3
      %s486 = smul.addr %s485, 8
      %s487 = scalar_lea.vmem %s3, %s486
      // Predicated region
      $region33: #{dct_stream_forward.58} parent=31 // pred_check
        %p488 = pneg %p100
      $region34: #{dct_stream_forward.58} parent=31 // pred_check_branch
        %490 = sbr.rel (%p488) target = $region36
      $region35: #{dct_stream_forward.58} parent=31 // pred_region
        %s491 = smul.u32 2, %s14
      $region36: #{dct_stream_forward.58} parent=31 // pred_fallthru
        _
    $region32: #{dct_stream_forward.58} parent=5 // pred_fallthru
      _
    %p492 = scmp.le.s32.totalorder 2, %s9
    // Predicated region
    $region37: #{dct_stream_forward.58} parent=5 // pred_check
      %p493 = pneg %p492
    $region38: #{dct_stream_forward.58} parent=5 // pred_check_branch
      %495 = sbr.rel (%p493) target = $region40
    $region39: #{dct_stream_forward.58} parent=5 // pred_region
      %s496 = ssub.s32 %s9, 2
      // Predicated region
      $region41: #{dct_stream_forward.58} parent=39 // pred_check
        %p497 = pneg %p106
      $region42: #{dct_stream_forward.58} parent=39 // pred_check_branch
        %499 = sbr.rel (%p497) target = $region44
      $region43: #{dct_stream_forward.58} parent=39 // pred_region
        %s500 = smul.u32 2, %s15
        %p501 = scmp.lt.s32.totalorder %s500, 3
        %s502 = scalar_select %p501, %s500, 3
        %s503 = smul.addr %s502, 8
        %s504 = scalar_lea.vmem %s3, %s503
      $region44: #{dct_stream_forward.58} parent=39 // pred_fallthru
        _
    $region40: #{dct_stream_forward.58} parent=5 // pred_fallthru
      _
  $region6: #{dct_stream_forward.58} parent=0 // loop_footer
    %s13 = sadd.s32 1, %s9
  $region7: #{dct_stream_forward.58} parent=0 // loop_footer_branch
    %8 = sbr.rel target = $region3
  $region8: #{dct_stream_forward.58} parent=0 // loop_exit
    _

// kernel: dct_stream_forward.62
$region0: #{dct_stream_forward.62}
  #allocation0 [shape = 'u32[]', space=smem, size = 0x4, offset = 0x4, fixed_abs, tag = 'smem constant byte address 0x4 - core index']
  #allocation1 [shape = 'u32[144,128]{1,0:T(1,128)}', space=vmem, size = 0x12000, scoped, tag = 'internal scratch']
  %s0 = inlined_call_operand.vmem [shape: bf16[16,640], index: 0, kind: input, shape index: {}]
  %s1 = inlined_call_operand.vmem [shape: bf16[640,128], index: 1, kind: input, shape index: {}]
  %s2 = inlined_call_operand.vmem [shape: f32[1,128], index: 2, kind: input, shape index: {}]
  %s3 = inlined_call_operand.vmem [shape: f32[16,128], index: 3, kind: output, shape index: {}]
  %s4 = sld [smem:[#allocation0]]
  $region22: #{dct_stream_forward.62} parent=0
    _
  %s6 = ssub.s32 1, %s4
  %s7 = scalar_select 0, %s6, %s4
  // Predicated region
  $region2: #{dct_stream_forward.62} parent=0 // pred_check
    _
  $region3: #{dct_stream_forward.62} parent=0 // pred_check_branch
    %9 = sbr.rel (0) target = $region5
  $region4: #{dct_stream_forward.62} parent=0 // pred_region
    _
  $region5: #{dct_stream_forward.62} parent=0 // pred_fallthru
    _
  // Predicated region
  $region6: #{dct_stream_forward.62} parent=0 // pred_check
    _
  $region7: #{dct_stream_forward.62} parent=0 // pred_check_branch
    %11 = sbr.rel (0) target = $region9
  $region8: #{dct_stream_forward.62} parent=0 // pred_region
    _
  $region9: #{dct_stream_forward.62} parent=0 // pred_fallthru
    _
  // Predicated region
  $region10: #{dct_stream_forward.62} parent=0 // pred_check
    _
  $region11: #{dct_stream_forward.62} parent=0 // pred_check_branch
    %13 = sbr.rel (0) target = $region13
  $region12: #{dct_stream_forward.62} parent=0 // pred_region
    _
  $region13: #{dct_stream_forward.62} parent=0 // pred_fallthru
    _
  %v15 = vld [vmem:[%s0] sm:$0xff]
  %v16 = vld [vmem:[%s0 + $0x8] sm:$0xff]
  %v17 = vld [vmem:[%s0 + $0x10] sm:$0xf]
  %v18 = vld [vmem:[%s0 + $0x14] sm:$0xff]
  %v19 = vld [vmem:[%s0 + $0x1c] sm:$0xff]
  %v20 = vld [vmem:[%s0 + $0x24] sm:$0xf]
  %v21 = vld [vmem:[%s1] sm:$0xf]
  %v22 = vld [vmem:[%s1 + $0x4] sm:$0xf]
  %v23 = vld [vmem:[%s1 + $0x8] sm:$0xf]
  %v24 = vld [vmem:[%s1 + $0xc] sm:$0xf]
  %v25 = vld [vmem:[%s1 + $0x10] sm:$0xf]
  %v26 = vld [vmem:[%s1 + $0x14] sm:$0xf]
  %v27 = vld [vmem:[%s1 + $0x18] sm:$0xf]
  %v28 = vld [vmem:[%s1 + $0x1c] sm:$0xf]
  %v29 = vld [vmem:[%s1 + $0x20] sm:$0xf]
  %v30 = vld [vmem:[%s1 + $0x24] sm:$0xf]
  %v31 = vld [vmem:[%s1 + $0x28] sm:$0xf]
  %v32 = vld [vmem:[%s1 + $0x2c] sm:$0xf]
  %v33 = vld [vmem:[%s1 + $0x30] sm:$0xf]
  %v34 = vld [vmem:[%s1 + $0x34] sm:$0xf]
  %v35 = vld [vmem:[%s1 + $0x38] sm:$0xf]
  %v36 = vld [vmem:[%s1 + $0x3c] sm:$0xf]
  %v37 = vld [vmem:[%s1 + $0x40] sm:$0xf]
  %v38 = vld [vmem:[%s1 + $0x44] sm:$0xf]
  %v39 = vld [vmem:[%s1 + $0x48] sm:$0xf]
  %v40 = vld [vmem:[%s1 + $0x4c] sm:$0xf]
  %v41 = vld [vmem:[%s1 + $0x50] sm:$0xf]
  %v42 = vld [vmem:[%s1 + $0x54] sm:$0xf]
  %v43 = vld [vmem:[%s1 + $0x58] sm:$0xf]
  %v44 = vld [vmem:[%s1 + $0x5c] sm:$0xf]
  %v45 = vld [vmem:[%s1 + $0x60] sm:$0xf]
  %v46 = vld [vmem:[%s1 + $0x64] sm:$0xf]
  %v47 = vld [vmem:[%s1 + $0x68] sm:$0xf]
  %v48 = vld [vmem:[%s1 + $0x6c] sm:$0xf]
  %v49 = vld [vmem:[%s1 + $0x70] sm:$0xf]
  %v50 = vld [vmem:[%s1 + $0x74] sm:$0xf]
  %v51 = vld [vmem:[%s1 + $0x78] sm:$0xf]
  %v52 = vld [vmem:[%s1 + $0x7c] sm:$0xf]
  %v53 = vld [vmem:[%s1 + $0x80] sm:$0xf]
  %v54 = vld [vmem:[%s1 + $0x84] sm:$0xf]
  %v55 = vld [vmem:[%s1 + $0x88] sm:$0xf]
  %v56 = vld [vmem:[%s1 + $0x8c] sm:$0xf]
  %v57 = vld [vmem:[%s1 + $0x90] sm:$0xf]
  %v58 = vld [vmem:[%s1 + $0x94] sm:$0xf]
  %v59 = vld [vmem:[%s1 + $0x98] sm:$0xf]
  %v60 = vld [vmem:[%s1 + $0x9c] sm:$0xf]
  %v61 = vld [vmem:[%s1 + $0xa0] sm:$0xf]
  %v62 = vld [vmem:[%s1 + $0xa4] sm:$0xf]
  %v63 = vld [vmem:[%s1 + $0xa8] sm:$0xf]
  %v64 = vld [vmem:[%s1 + $0xac] sm:$0xf]
  %v65 = vld [vmem:[%s1 + $0xb0] sm:$0xf]
  %v66 = vld [vmem:[%s1 + $0xb4] sm:$0xf]
  %v67 = vld [vmem:[%s1 + $0xb8] sm:$0xf]
  %v68 = vld [vmem:[%s1 + $0xbc] sm:$0xf]
  %v69 = vld [vmem:[%s1 + $0xc0] sm:$0xf]
  %v70 = vld [vmem:[%s1 + $0xc4] sm:$0xf]
  %v71 = vld [vmem:[%s1 + $0xc8] sm:$0xf]
  %v72 = vld [vmem:[%s1 + $0xcc] sm:$0xf]
  %v73 = vld [vmem:[%s1 + $0xd0] sm:$0xf]
  %v74 = vld [vmem:[%s1 + $0xd4] sm:$0xf]
  %v75 = vld [vmem:[%s1 + $0xd8] sm:$0xf]
  %v76 = vld [vmem:[%s1 + $0xdc] sm:$0xf]
  %v77 = vld [vmem:[%s1 + $0xe0] sm:$0xf]
  %v78 = vld [vmem:[%s1 + $0xe4] sm:$0xf]
  %v79 = vld [vmem:[%s1 + $0xe8] sm:$0xf]
  %v80 = vld [vmem:[%s1 + $0xec] sm:$0xf]
  %v81 = vld [vmem:[%s1 + $0xf0] sm:$0xf]
  %v82 = vld [vmem:[%s1 + $0xf4] sm:$0xf]
  %v83 = vld [vmem:[%s1 + $0xf8] sm:$0xf]
  %v84 = vld [vmem:[%s1 + $0xfc] sm:$0xf]
  %v85 = vld [vmem:[%s1 + $0x100] sm:$0xf]
  %v86 = vld [vmem:[%s1 + $0x104] sm:$0xf]
  %v87 = vld [vmem:[%s1 + $0x108] sm:$0xf]
  %v88 = vld [vmem:[%s1 + $0x10c] sm:$0xf]
  %v89 = vld [vmem:[%s1 + $0x110] sm:$0xf]
  %v90 = vld [vmem:[%s1 + $0x114] sm:$0xf]
  %v91 = vld [vmem:[%s1 + $0x118] sm:$0xf]
  %v92 = vld [vmem:[%s1 + $0x11c] sm:$0xf]
  %v93 = vld [vmem:[%s1 + $0x120] sm:$0xf]
  %v94 = vld [vmem:[%s1 + $0x124] sm:$0xf]
  %v95 = vld [vmem:[%s1 + $0x128] sm:$0xf]
  %v96 = vld [vmem:[%s1 + $0x12c] sm:$0xf]
  %v97 = vld [vmem:[%s1 + $0x130] sm:$0xf]
  %v98 = vld [vmem:[%s1 + $0x134] sm:$0xf]
  %v99 = vld [vmem:[%s1 + $0x138] sm:$0xf]
  %v100 = vld [vmem:[%s1 + $0x13c] sm:$0xf]
  %v101 = vld [vmem:[%s2] sm:$0x1]
  %v103 = vlaneseq
  %v104 = vshrl.u32 %v103, 7
  %v105 = vsub.s32 0, %v104
  %v106 = vrot.slane %v101, %v105
  %v114 = vunpack.c.l.b16 %v15
  %v115 = vunpack.c.h.b16 %v15
  %v116 = vunpack.c.l.b16 %v16
  %v117 = vunpack.c.h.b16 %v16
  %v118 = vunpack.c.l.b16 %v17
  %v119 = vunpack.c.l.b16 %v18
  %v120 = vunpack.c.h.b16 %v18
  %v121 = vunpack.c.l.b16 %v19
  %v122 = vunpack.c.h.b16 %v19
  %v123 = vunpack.c.l.b16 %v20
  %v124 = vpack.c.b16 %v119, %v114
  %v125 = vpack.c.b16 %v120, %v115
  %v126 = vpack.c.b16 %v121, %v116
  %v127 = vpack.c.b16 %v122, %v117
  %v128 = vpack.c.b16 %v123, %v118
  %v214 = vunpack.c.l.b16 %v21
  %v215 = vunpack.c.l.b16 %v22
  %v216 = vunpack.c.l.b16 %v23
  %v217 = vunpack.c.l.b16 %v24
  %v218 = vunpack.c.l.b16 %v25
  %v219 = vunpack.c.l.b16 %v26
  %v220 = vunpack.c.l.b16 %v27
  %v221 = vunpack.c.l.b16 %v28
  %v222 = vunpack.c.l.b16 %v29
  %v223 = vunpack.c.l.b16 %v30
  %v224 = vunpack.c.l.b16 %v31
  %v225 = vunpack.c.l.b16 %v32
  %v226 = vunpack.c.l.b16 %v33
  %v227 = vunpack.c.l.b16 %v34
  %v228 = vunpack.c.l.b16 %v35
  %v229 = vunpack.c.l.b16 %v36
  %v230 = vunpack.c.l.b16 %v37
  %v231 = vunpack.c.l.b16 %v38
  %v232 = vunpack.c.l.b16 %v39
  %v233 = vunpack.c.l.b16 %v40
  %v234 = vunpack.c.l.b16 %v41
  %v235 = vunpack.c.l.b16 %v42
  %v236 = vunpack.c.l.b16 %v43
  %v237 = vunpack.c.l.b16 %v44
  %v238 = vunpack.c.l.b16 %v45
  %v239 = vunpack.c.l.b16 %v46
  %v240 = vunpack.c.l.b16 %v47
  %v241 = vunpack.c.l.b16 %v48
  %v242 = vunpack.c.l.b16 %v49
  %v243 = vunpack.c.l.b16 %v50
  %v244 = vunpack.c.l.b16 %v51
  %v245 = vunpack.c.l.b16 %v52
  %v246 = vunpack.c.l.b16 %v53
  %v247 = vunpack.c.l.b16 %v54
  %v248 = vunpack.c.l.b16 %v55
  %v249 = vunpack.c.l.b16 %v56
  %v250 = vunpack.c.l.b16 %v57
  %v251 = vunpack.c.l.b16 %v58
  %v252 = vunpack.c.l.b16 %v59
  %v253 = vunpack.c.l.b16 %v60
  %v254 = vunpack.c.l.b16 %v61
  %v255 = vunpack.c.l.b16 %v62
  %v256 = vunpack.c.l.b16 %v63
  %v257 = vunpack.c.l.b16 %v64
  %v258 = vunpack.c.l.b16 %v65
  %v259 = vunpack.c.l.b16 %v66
  %v260 = vunpack.c.l.b16 %v67
  %v261 = vunpack.c.l.b16 %v68
  %v262 = vunpack.c.l.b16 %v69
  %v263 = vunpack.c.l.b16 %v70
  %v264 = vunpack.c.l.b16 %v71
  %v265 = vunpack.c.l.b16 %v72
  %v266 = vunpack.c.l.b16 %v73
  %v267 = vunpack.c.l.b16 %v74
  %v268 = vunpack.c.l.b16 %v75
  %v269 = vunpack.c.l.b16 %v76
  %v270 = vunpack.c.l.b16 %v77
  %v271 = vunpack.c.l.b16 %v78
  %v272 = vunpack.c.l.b16 %v79
  %v273 = vunpack.c.l.b16 %v80
  %v274 = vunpack.c.l.b16 %v81
  %v275 = vunpack.c.l.b16 %v82
  %v276 = vunpack.c.l.b16 %v83
  %v277 = vunpack.c.l.b16 %v84
  %v278 = vunpack.c.l.b16 %v85
  %v279 = vunpack.c.l.b16 %v86
  %v280 = vunpack.c.l.b16 %v87
  %v281 = vunpack.c.l.b16 %v88
  %v282 = vunpack.c.l.b16 %v89
  %v283 = vunpack.c.l.b16 %v90
  %v284 = vunpack.c.l.b16 %v91
  %v285 = vunpack.c.l.b16 %v92
  %v286 = vunpack.c.l.b16 %v93
  %v287 = vunpack.c.l.b16 %v94
  %v288 = vunpack.c.l.b16 %v95
  %v289 = vunpack.c.l.b16 %v96
  %v290 = vunpack.c.l.b16 %v97
  %v291 = vunpack.c.l.b16 %v98
  %v292 = vunpack.c.l.b16 %v99
  %v293 = vunpack.c.l.b16 %v100
  %v294 = vpack.c.b16 %v215, %v214
  %v295 = vpack.c.b16 %v217, %v216
  %v296 = vpack.c.b16 %v219, %v218
  %v297 = vpack.c.b16 %v221, %v220
  %v298 = vpack.c.b16 %v223, %v222
  %v299 = vpack.c.b16 %v225, %v224
  %v300 = vpack.c.b16 %v227, %v226
  %v301 = vpack.c.b16 %v229, %v228
  %v302 = vpack.c.b16 %v231, %v230
  %v303 = vpack.c.b16 %v233, %v232
  %v304 = vpack.c.b16 %v235, %v234
  %v305 = vpack.c.b16 %v237, %v236
  %v306 = vpack.c.b16 %v239, %v238
  %v307 = vpack.c.b16 %v241, %v240
  %v308 = vpack.c.b16 %v243, %v242
  %v309 = vpack.c.b16 %v245, %v244
  %v310 = vpack.c.b16 %v247, %v246
  %v311 = vpack.c.b16 %v249, %v248
  %v312 = vpack.c.b16 %v251, %v250
  %v313 = vpack.c.b16 %v253, %v252
  %v314 = vpack.c.b16 %v255, %v254
  %v315 = vpack.c.b16 %v257, %v256
  %v316 = vpack.c.b16 %v259, %v258
  %v317 = vpack.c.b16 %v261, %v260
  %v318 = vpack.c.b16 %v263, %v262
  %v319 = vpack.c.b16 %v265, %v264
  %v320 = vpack.c.b16 %v267, %v266
  %v321 = vpack.c.b16 %v269, %v268
  %v322 = vpack.c.b16 %v271, %v270
  %v323 = vpack.c.b16 %v273, %v272
  %v324 = vpack.c.b16 %v275, %v274
  %v325 = vpack.c.b16 %v277, %v276
  %v326 = vpack.c.b16 %v279, %v278
  %v327 = vpack.c.b16 %v281, %v280
  %v328 = vpack.c.b16 %v283, %v282
  %v329 = vpack.c.b16 %v285, %v284
  %v330 = vpack.c.b16 %v287, %v286
  %v331 = vpack.c.b16 %v289, %v288
  %v332 = vpack.c.b16 %v291, %v290
  %v333 = vpack.c.b16 %v293, %v292
  %374 = vmatprep.subr.bf16.mxu0 0
  %375 = vmatpush1.bf16.msra.mxu0 %v294
  %376 = vmatprep.subr.bf16.mxu0 0
  %377 = vmatpush1.bf16.msra.mxu0 %v295
  %378 = vmatprep.subr.bf16.mxu0 0
  %379 = vmatpush1.bf16.msra.mxu0 %v296
  %380 = vmatprep.subr.bf16.mxu0 0
  %381 = vmatpush1.bf16.msra.mxu0 %v297
  %382 = vmatprep.subr.bf16.mxu0 0
  %383 = vmatpush1.bf16.msra.mxu0 %v298
  %384 = vmatprep.subr.bf16.mxu0 0
  %385 = vmatpush1.bf16.msra.mxu0 %v299
  %386 = vmatprep.subr.bf16.mxu0 0
  %387 = vmatpush1.bf16.msra.mxu0 %v300
  %388 = vmatprep.subr.bf16.mxu0 0
  %389 = vmatpush1.bf16.msra.mxu0 %v301
  %390 = vmatprep.subr.bf16.mxu0 0
  %391 = vmatpush1.bf16.msra.mxu0 %v302
  %392 = vmatprep.subr.bf16.mxu0 0
  %393 = vmatpush1.bf16.msra.mxu0 %v303
  %394 = vmatprep.subr.bf16.mxu0 0
  %395 = vmatpush1.bf16.msra.mxu0 %v304
  %396 = vmatprep.subr.bf16.mxu0 0
  %397 = vmatpush1.bf16.msra.mxu0 %v305
  %398 = vmatprep.subr.bf16.mxu0 0
  %399 = vmatpush1.bf16.msra.mxu0 %v306
  %400 = vmatprep.subr.bf16.mxu0 0
  %401 = vmatpush1.bf16.msra.mxu0 %v307
  %402 = vmatprep.subr.bf16.mxu0 0
  %403 = vmatpush1.bf16.msra.mxu0 %v308
  %404 = vmatprep.subr.bf16.mxu0 0
  %405 = vmatpush1.bf16.msra.mxu0 %v309
  %406 = vmatprep.mubr.bf16.mxu0 %v125
  %407 = vmatmul.mubr.bf16.gmra.mrb[0].mxu0 %v124
  %v408 = vpop.f32.mrb[0].mxu0
  %v409 = vadd.f32 %v106, %v408
  %v410 = vpop.f32.mrb[0].mxu0
  %v411 = vpop.f32.mrb[0].mxu0
  %v412 = vadd.f32 %v106, %v411
  %v413 = vpop.f32.mrb[0].mxu0
  %414 = vdwg.mxu0
  %415 = vmatprep.subr.bf16.mxu0 0
  %416 = vmatpush1.bf16.msra.mxu0 %v310
  %417 = vmatprep.subr.bf16.mxu0 0
  %418 = vmatpush1.bf16.msra.mxu0 %v311
  %419 = vmatprep.subr.bf16.mxu0 0
  %420 = vmatpush1.bf16.msra.mxu0 %v312
  %421 = vmatprep.subr.bf16.mxu0 0
  %422 = vmatpush1.bf16.msra.mxu0 %v313
  %423 = vmatprep.subr.bf16.mxu0 0
  %424 = vmatpush1.bf16.msra.mxu0 %v314
  %425 = vmatprep.subr.bf16.mxu0 0
  %426 = vmatpush1.bf16.msra.mxu0 %v315
  %427 = vmatprep.subr.bf16.mxu0 0
  %428 = vmatpush1.bf16.msra.mxu0 %v316
  %429 = vmatprep.subr.bf16.mxu0 0
  %430 = vmatpush1.bf16.msra.mxu0 %v317
  %431 = vmatprep.subr.bf16.mxu0 0
  %432 = vmatpush1.bf16.msra.mxu0 %v318
  %433 = vmatprep.subr.bf16.mxu0 0
  %434 = vmatpush1.bf16.msra.mxu0 %v319
  %435 = vmatprep.subr.bf16.mxu0 0
  %436 = vmatpush1.bf16.msra.mxu0 %v320
  %437 = vmatprep.subr.bf16.mxu0 0
  %438 = vmatpush1.bf16.msra.mxu0 %v321
  %439 = vmatprep.subr.bf16.mxu0 0
  %440 = vmatpush1.bf16.msra.mxu0 %v322
  %441 = vmatprep.subr.bf16.mxu0 0
  %442 = vmatpush1.bf16.msra.mxu0 %v323
  %443 = vmatprep.subr.bf16.mxu0 0
  %444 = vmatpush1.bf16.msra.mxu0 %v324
  %445 = vmatprep.subr.bf16.mxu0 0
  %446 = vmatpush1.bf16.msra.mxu0 %v325
  %447 = vmatprep.mubr.bf16.mxu0 %v127
  %448 = vmatmul.mubr.bf16.gmra.mrb[0].mxu0 %v126
  %v449 = vpop.f32.mrb[0].mxu0
  %v450 = vadd.f32 %v409, %v449
  %v451 = vpop.f32.mrb[0].mxu0
  %v452 = vpop.f32.mrb[0].mxu0
  %v453 = vadd.f32 %v412, %v452
  %v454 = vpop.f32.mrb[0].mxu0
  %455 = vdwg.mxu0
  %456 = vmatprep.subr.bf16.mxu0 0
  %457 = vmatpush1.bf16.msra.mxu0 %v326
  %458 = vmatprep.subr.bf16.mxu0 0
  %459 = vmatpush1.bf16.msra.mxu0 %v327
  %460 = vmatprep.subr.bf16.mxu0 0
  %461 = vmatpush1.bf16.msra.mxu0 %v328
  %462 = vmatprep.subr.bf16.mxu0 0
  %463 = vmatpush1.bf16.msra.mxu0 %v329
  %464 = vmatprep.subr.bf16.mxu0 0
  %465 = vmatpush1.bf16.msra.mxu0 %v330
  %466 = vmatprep.subr.bf16.mxu0 0
  %467 = vmatpush1.bf16.msra.mxu0 %v331
  %468 = vmatprep.subr.bf16.mxu0 0
  %469 = vmatpush1.bf16.msra.mxu0 %v332
  %470 = vmatprep.subr.bf16.mxu0 0
  %471 = vmatpush1.bf16.msra.mxu0 %v333
  %472 = vmatprep.subr.bf16.mxu0 0
  %473 = vmatpush1.bf16.msra.mxu0 0
  %474 = vmatprep.subr.bf16.mxu0 0
  %475 = vmatpush1.bf16.msra.mxu0 0
  %476 = vmatprep.subr.bf16.mxu0 0
  %477 = vmatpush1.bf16.msra.mxu0 0
  %478 = vmatprep.subr.bf16.mxu0 0
  %479 = vmatpush1.bf16.msra.mxu0 0
  %480 = vmatprep.subr.bf16.mxu0 0
  %481 = vmatpush1.bf16.msra.mxu0 0
  %482 = vmatprep.subr.bf16.mxu0 0
  %483 = vmatpush1.bf16.msra.mxu0 0
  %484 = vmatprep.subr.bf16.mxu0 0
  %485 = vmatpush1.bf16.msra.mxu0 0
  %486 = vmatprep.subr.bf16.mxu0 0
  %487 = vmatpush1.bf16.msra.mxu0 0
  %488 = vmatprep.mubr.bf16.mxu0 0
  %489 = vmatmul.mubr.bf16.gmra.mrb[0].mxu0 %v128
  %v490 = vpop.f32.mrb[0].mxu0
  %v491 = vadd.f32 %v450, %v490
  %v492 = vpop.f32.mrb[0].mxu0
  %v493 = vpop.f32.mrb[0].mxu0
  %v494 = vadd.f32 %v453, %v493
  %v495 = vpop.f32.mrb[0].mxu0
  %496 = vdwg.mxu0
  %v497 = vmax.f32 %v491, 0.0
  %v498 = vmax.f32 %v494, 0.0
  %499 = vst [vmem:[%s3] sm:$0xff] %v497
  %500 = vst [vmem:[%s3 + $0x8] sm:$0xff] %v498
  // Predicated region
  $region14: #{dct_stream_forward.62} parent=0 // pred_check
    _
  $region15: #{dct_stream_forward.62} parent=0 // pred_check_branch
    %502 = sbr.rel (0) target = $region17
  $region16: #{dct_stream_forward.62} parent=0 // pred_region
    _
  $region17: #{dct_stream_forward.62} parent=0 // pred_fallthru
    _
  // Predicated region
  $region18: #{dct_stream_forward.62} parent=0 // pred_check
    _
  $region19: #{dct_stream_forward.62} parent=0 // pred_check_branch
    %504 = sbr.rel (0) target = $region21
  $region20: #{dct_stream_forward.62} parent=0 // pred_region
    _
  $region21: #{dct_stream_forward.62} parent=0 // pred_fallthru
    _

// kernel: dct_stream_forward.66
$region0: #{dct_stream_forward.66}
  #allocation0 [shape = 'u32[]', space=smem, size = 0x4, offset = 0x4, fixed_abs, tag = 'smem constant byte address 0x4 - core index']
  #allocation1 [shape = 'u32[144,128]{1,0:T(1,128)}', space=vmem, size = 0x12000, scoped, tag = 'internal scratch']
  %s0 = inlined_call_operand.vmem [shape: bf16[16,128], index: 0, kind: input, shape index: {}]
  %s1 = inlined_call_operand.vmem [shape: bf16[128,128], index: 1, kind: input, shape index: {}]
  %s2 = inlined_call_operand.vmem [shape: f32[1,128], index: 2, kind: input, shape index: {}]
  %s3 = inlined_call_operand.vmem [shape: f32[16,128], index: 3, kind: output, shape index: {}]
  %s4 = sld [smem:[#allocation0]]
  $region22: #{dct_stream_forward.66} parent=0
    _
  %s6 = ssub.s32 1, %s4
  %s7 = scalar_select 0, %s6, %s4
  // Predicated region
  $region2: #{dct_stream_forward.66} parent=0 // pred_check
    _
  $region3: #{dct_stream_forward.66} parent=0 // pred_check_branch
    %9 = sbr.rel (0) target = $region5
  $region4: #{dct_stream_forward.66} parent=0 // pred_region
    _
  $region5: #{dct_stream_forward.66} parent=0 // pred_fallthru
    _
  // Predicated region
  $region6: #{dct_stream_forward.66} parent=0 // pred_check
    _
  $region7: #{dct_stream_forward.66} parent=0 // pred_check_branch
    %11 = sbr.rel (0) target = $region9
  $region8: #{dct_stream_forward.66} parent=0 // pred_region
    _
  $region9: #{dct_stream_forward.66} parent=0 // pred_fallthru
    _
  // Predicated region
  $region10: #{dct_stream_forward.66} parent=0 // pred_check
    _
  $region11: #{dct_stream_forward.66} parent=0 // pred_check_branch
    %13 = sbr.rel (0) target = $region13
  $region12: #{dct_stream_forward.66} parent=0 // pred_region
    _
  $region13: #{dct_stream_forward.66} parent=0 // pred_fallthru
    _
  %v15 = vld [vmem:[%s0] sm:$0xf]
  %v16 = vld [vmem:[%s0 + $0x4] sm:$0xf]
  %v17 = vld [vmem:[%s1] sm:$0xf]
  %v18 = vld [vmem:[%s1 + $0x4] sm:$0xf]
  %v19 = vld [vmem:[%s1 + $0x8] sm:$0xf]
  %v20 = vld [vmem:[%s1 + $0xc] sm:$0xf]
  %v21 = vld [vmem:[%s1 + $0x10] sm:$0xf]
  %v22 = vld [vmem:[%s1 + $0x14] sm:$0xf]
  %v23 = vld [vmem:[%s1 + $0x18] sm:$0xf]
  %v24 = vld [vmem:[%s1 + $0x1c] sm:$0xf]
  %v25 = vld [vmem:[%s1 + $0x20] sm:$0xf]
  %v26 = vld [vmem:[%s1 + $0x24] sm:$0xf]
  %v27 = vld [vmem:[%s1 + $0x28] sm:$0xf]
  %v28 = vld [vmem:[%s1 + $0x2c] sm:$0xf]
  %v29 = vld [vmem:[%s1 + $0x30] sm:$0xf]
  %v30 = vld [vmem:[%s1 + $0x34] sm:$0xf]
  %v31 = vld [vmem:[%s1 + $0x38] sm:$0xf]
  %v32 = vld [vmem:[%s1 + $0x3c] sm:$0xf]
  %v33 = vld [vmem:[%s2] sm:$0x1]
  %v35 = vlaneseq
  %v36 = vshrl.u32 %v35, 7
  %v37 = vsub.s32 0, %v36
  %v38 = vrot.slane %v33, %v37
  %v42 = vunpack.c.l.b16 %v15
  %v43 = vunpack.c.l.b16 %v16
  %v44 = vpack.c.b16 %v43, %v42
  %v62 = vunpack.c.l.b16 %v17
  %v63 = vunpack.c.l.b16 %v18
  %v64 = vunpack.c.l.b16 %v19
  %v65 = vunpack.c.l.b16 %v20
  %v66 = vunpack.c.l.b16 %v21
  %v67 = vunpack.c.l.b16 %v22
  %v68 = vunpack.c.l.b16 %v23
  %v69 = vunpack.c.l.b16 %v24
  %v70 = vunpack.c.l.b16 %v25
  %v71 = vunpack.c.l.b16 %v26
  %v72 = vunpack.c.l.b16 %v27
  %v73 = vunpack.c.l.b16 %v28
  %v74 = vunpack.c.l.b16 %v29
  %v75 = vunpack.c.l.b16 %v30
  %v76 = vunpack.c.l.b16 %v31
  %v77 = vunpack.c.l.b16 %v32
  %v78 = vpack.c.b16 %v63, %v62
  %v79 = vpack.c.b16 %v65, %v64
  %v80 = vpack.c.b16 %v67, %v66
  %v81 = vpack.c.b16 %v69, %v68
  %v82 = vpack.c.b16 %v71, %v70
  %v83 = vpack.c.b16 %v73, %v72
  %v84 = vpack.c.b16 %v75, %v74
  %v85 = vpack.c.b16 %v77, %v76
  %94 = vmatprep.subr.bf16.mxu0 0
  %95 = vmatpush1.bf16.msra.mxu0 %v78
  %96 = vmatprep.subr.bf16.mxu0 0
  %97 = vmatpush1.bf16.msra.mxu0 %v79
  %98 = vmatprep.subr.bf16.mxu0 0
  %99 = vmatpush1.bf16.msra.mxu0 %v80
  %100 = vmatprep.subr.bf16.mxu0 0
  %101 = vmatpush1.bf16.msra.mxu0 %v81
  %102 = vmatprep.subr.bf16.mxu0 0
  %103 = vmatpush1.bf16.msra.mxu0 %v82
  %104 = vmatprep.subr.bf16.mxu0 0
  %105 = vmatpush1.bf16.msra.mxu0 %v83
  %106 = vmatprep.subr.bf16.mxu0 0
  %107 = vmatpush1.bf16.msra.mxu0 %v84
  %108 = vmatprep.subr.bf16.mxu0 0
  %109 = vmatpush1.bf16.msra.mxu0 %v85
  %110 = vmatprep.subr.bf16.mxu0 0
  %111 = vmatpush1.bf16.msra.mxu0 0
  %112 = vmatprep.subr.bf16.mxu0 0
  %113 = vmatpush1.bf16.msra.mxu0 0
  %114 = vmatprep.subr.bf16.mxu0 0
  %115 = vmatpush1.bf16.msra.mxu0 0
  %116 = vmatprep.subr.bf16.mxu0 0
  %117 = vmatpush1.bf16.msra.mxu0 0
  %118 = vmatprep.subr.bf16.mxu0 0
  %119 = vmatpush1.bf16.msra.mxu0 0
  %120 = vmatprep.subr.bf16.mxu0 0
  %121 = vmatpush1.bf16.msra.mxu0 0
  %122 = vmatprep.subr.bf16.mxu0 0
  %123 = vmatpush1.bf16.msra.mxu0 0
  %124 = vmatprep.subr.bf16.mxu0 0
  %125 = vmatpush1.bf16.msra.mxu0 0
  %126 = vmatprep.mubr.bf16.mxu0 0
  %127 = vmatmul.mubr.bf16.gmra.mrb[0].mxu0 %v44
  %v128 = vpop.f32.mrb[0].mxu0
  %v129 = vadd.f32 %v38, %v128
  %v130 = vpop.f32.mrb[0].mxu0
  %v131 = vpop.f32.mrb[0].mxu0
  %v132 = vadd.f32 %v38, %v131
  %v133 = vpop.f32.mrb[0].mxu0
  %134 = vdwg.mxu0
  %135 = vst [vmem:[%s3] sm:$0xff] %v129
  %136 = vst [vmem:[%s3 + $0x8] sm:$0xff] %v132
  // Predicated region
  $region14: #{dct_stream_forward.66} parent=0 // pred_check
    _
  $region15: #{dct_stream_forward.66} parent=0 // pred_check_branch
    %138 = sbr.rel (0) target = $region17
  $region16: #{dct_stream_forward.66} parent=0 // pred_region
    _
  $region17: #{dct_stream_forward.66} parent=0 // pred_fallthru
    _
  // Predicated region
  $region18: #{dct_stream_forward.66} parent=0 // pred_check
    _
  $region19: #{dct_stream_forward.66} parent=0 // pred_check_branch
    %140 = sbr.rel (0) target = $region21
  $region20: #{dct_stream_forward.66} parent=0 // pred_region
    _
  $region21: #{dct_stream_forward.66} parent=0 // pred_fallthru
    _

// kernel: dct_stream_forward.57
$region0: #{dct_stream_forward.57}
  #allocation0 [shape = 'u32[]', space=smem, size = 0x4, offset = 0x4, fixed_abs, tag = 'smem constant byte address 0x4 - core index']
  #allocation1 [shape = 'u32[144,128]{1,0:T(1,128)}', space=vmem, size = 0x12000, scoped, tag = 'internal scratch']
  %s0 = inlined_call_operand.vmem [shape: bf16[16,896], index: 0, kind: input, shape index: {}]
  %s1 = inlined_call_operand.vmem [shape: bf16[896,128], index: 1, kind: input, shape index: {}]
  %s2 = inlined_call_operand.vmem [shape: f32[1,128], index: 2, kind: input, shape index: {}]
  %s3 = inlined_call_operand.vmem [shape: f32[16,128], index: 3, kind: output, shape index: {}]
  %s4 = sld [smem:[#allocation0]]
  $region22: #{dct_stream_forward.57} parent=0
    _
  %s6 = ssub.s32 1, %s4
  %s7 = scalar_select 0, %s6, %s4
  // Predicated region
  $region2: #{dct_stream_forward.57} parent=0 // pred_check
    _
  $region3: #{dct_stream_forward.57} parent=0 // pred_check_branch
    %9 = sbr.rel (0) target = $region5
  $region4: #{dct_stream_forward.57} parent=0 // pred_region
    _
  $region5: #{dct_stream_forward.57} parent=0 // pred_fallthru
    _
  // Predicated region
  $region6: #{dct_stream_forward.57} parent=0 // pred_check
    _
  $region7: #{dct_stream_forward.57} parent=0 // pred_check_branch
    %11 = sbr.rel (0) target = $region9
  $region8: #{dct_stream_forward.57} parent=0 // pred_region
    _
  $region9: #{dct_stream_forward.57} parent=0 // pred_fallthru
    _
  // Predicated region
  $region10: #{dct_stream_forward.57} parent=0 // pred_check
    _
  $region11: #{dct_stream_forward.57} parent=0 // pred_check_branch
    %13 = sbr.rel (0) target = $region13
  $region12: #{dct_stream_forward.57} parent=0 // pred_region
    _
  $region13: #{dct_stream_forward.57} parent=0 // pred_fallthru
    _
  %v15 = vld [vmem:[%s0] sm:$0xff]
  %v16 = vld [vmem:[%s0 + $0x8] sm:$0xff]
  %v17 = vld [vmem:[%s0 + $0x10] sm:$0xff]
  %v18 = vld [vmem:[%s0 + $0x18] sm:$0xf]
  %v19 = vld [vmem:[%s0 + $0x1c] sm:$0xff]
  %v20 = vld [vmem:[%s0 + $0x24] sm:$0xff]
  %v21 = vld [vmem:[%s0 + $0x2c] sm:$0xff]
  %v22 = vld [vmem:[%s0 + $0x34] sm:$0xf]
  %v23 = vld [vmem:[%s1] sm:$0xf]
  %v24 = vld [vmem:[%s1 + $0x4] sm:$0xf]
  %v25 = vld [vmem:[%s1 + $0x8] sm:$0xf]
  %v26 = vld [vmem:[%s1 + $0xc] sm:$0xf]
  %v27 = vld [vmem:[%s1 + $0x10] sm:$0xf]
  %v28 = vld [vmem:[%s1 + $0x14] sm:$0xf]
  %v29 = vld [vmem:[%s1 + $0x18] sm:$0xf]
  %v30 = vld [vmem:[%s1 + $0x1c] sm:$0xf]
  %v31 = vld [vmem:[%s1 + $0x20] sm:$0xf]
  %v32 = vld [vmem:[%s1 + $0x24] sm:$0xf]
  %v33 = vld [vmem:[%s1 + $0x28] sm:$0xf]
  %v34 = vld [vmem:[%s1 + $0x2c] sm:$0xf]
  %v35 = vld [vmem:[%s1 + $0x30] sm:$0xf]
  %v36 = vld [vmem:[%s1 + $0x34] sm:$0xf]
  %v37 = vld [vmem:[%s1 + $0x38] sm:$0xf]
  %v38 = vld [vmem:[%s1 + $0x3c] sm:$0xf]
  %v39 = vld [vmem:[%s1 + $0x40] sm:$0xf]
  %v40 = vld [vmem:[%s1 + $0x44] sm:$0xf]
  %v41 = vld [vmem:[%s1 + $0x48] sm:$0xf]
  %v42 = vld [vmem:[%s1 + $0x4c] sm:$0xf]
  %v43 = vld [vmem:[%s1 + $0x50] sm:$0xf]
  %v44 = vld [vmem:[%s1 + $0x54] sm:$0xf]
  %v45 = vld [vmem:[%s1 + $0x58] sm:$0xf]
  %v46 = vld [vmem:[%s1 + $0x5c] sm:$0xf]
  %v47 = vld [vmem:[%s1 + $0x60] sm:$0xf]
  %v48 = vld [vmem:[%s1 + $0x64] sm:$0xf]
  %v49 = vld [vmem:[%s1 + $0x68] sm:$0xf]
  %v50 = vld [vmem:[%s1 + $0x6c] sm:$0xf]
  %v51 = vld [vmem:[%s1 + $0x70] sm:$0xf]
  %v52 = vld [vmem:[%s1 + $0x74] sm:$0xf]
  %v53 = vld [vmem:[%s1 + $0x78] sm:$0xf]
  %v54 = vld [vmem:[%s1 + $0x7c] sm:$0xf]
  %v55 = vld [vmem:[%s1 + $0x80] sm:$0xf]
  %v56 = vld [vmem:[%s1 + $0x84] sm:$0xf]
  %v57 = vld [vmem:[%s1 + $0x88] sm:$0xf]
  %v58 = vld [vmem:[%s1 + $0x8c] sm:$0xf]
  %v59 = vld [vmem:[%s1 + $0x90] sm:$0xf]
  %v60 = vld [vmem:[%s1 + $0x94] sm:$0xf]
  %v61 = vld [vmem:[%s1 + $0x98] sm:$0xf]
  %v62 = vld [vmem:[%s1 + $0x9c] sm:$0xf]
  %v63 = vld [vmem:[%s1 + $0xa0] sm:$0xf]
  %v64 = vld [vmem:[%s1 + $0xa4] sm:$0xf]
  %v65 = vld [vmem:[%s1 + $0xa8] sm:$0xf]
  %v66 = vld [vmem:[%s1 + $0xac] sm:$0xf]
  %v67 = vld [vmem:[%s1 + $0xb0] sm:$0xf]
  %v68 = vld [vmem:[%s1 + $0xb4] sm:$0xf]
  %v69 = vld [vmem:[%s1 + $0xb8] sm:$0xf]
  %v70 = vld [vmem:[%s1 + $0xbc] sm:$0xf]
  %v71 = vld [vmem:[%s1 + $0xc0] sm:$0xf]
  %v72 = vld [vmem:[%s1 + $0xc4] sm:$0xf]
  %v73 = vld [vmem:[%s1 + $0xc8] sm:$0xf]
  %v74 = vld [vmem:[%s1 + $0xcc] sm:$0xf]
  %v75 = vld [vmem:[%s1 + $0xd0] sm:$0xf]
  %v76 = vld [vmem:[%s1 + $0xd4] sm:$0xf]
  %v77 = vld [vmem:[%s1 + $0xd8] sm:$0xf]
  %v78 = vld [vmem:[%s1 + $0xdc] sm:$0xf]
  %v79 = vld [vmem:[%s1 + $0xe0] sm:$0xf]
  %v80 = vld [vmem:[%s1 + $0xe4] sm:$0xf]
  %v81 = vld [vmem:[%s1 + $0xe8] sm:$0xf]
  %v82 = vld [vmem:[%s1 + $0xec] sm:$0xf]
  %v83 = vld [vmem:[%s1 + $0xf0] sm:$0xf]
  %v84 = vld [vmem:[%s1 + $0xf4] sm:$0xf]
  %v85 = vld [vmem:[%s1 + $0xf8] sm:$0xf]
  %v86 = vld [vmem:[%s1 + $0xfc] sm:$0xf]
  %v87 = vld [vmem:[%s1 + $0x100] sm:$0xf]
  %v88 = vld [vmem:[%s1 + $0x104] sm:$0xf]
  %v89 = vld [vmem:[%s1 + $0x108] sm:$0xf]
  %v90 = vld [vmem:[%s1 + $0x10c] sm:$0xf]
  %v91 = vld [vmem:[%s1 + $0x110] sm:$0xf]
  %v92 = vld [vmem:[%s1 + $0x114] sm:$0xf]
  %v93 = vld [vmem:[%s1 + $0x118] sm:$0xf]
  %v94 = vld [vmem:[%s1 + $0x11c] sm:$0xf]
  %v95 = vld [vmem:[%s1 + $0x120] sm:$0xf]
  %v96 = vld [vmem:[%s1 + $0x124] sm:$0xf]
  %v97 = vld [vmem:[%s1 + $0x128] sm:$0xf]
  %v98 = vld [vmem:[%s1 + $0x12c] sm:$0xf]
  %v99 = vld [vmem:[%s1 + $0x130] sm:$0xf]
  %v100 = vld [vmem:[%s1 + $0x134] sm:$0xf]
  %v101 = vld [vmem:[%s1 + $0x138] sm:$0xf]
  %v102 = vld [vmem:[%s1 + $0x13c] sm:$0xf]
  %v103 = vld [vmem:[%s1 + $0x140] sm:$0xf]
  %v104 = vld [vmem:[%s1 + $0x144] sm:$0xf]
  %v105 = vld [vmem:[%s1 + $0x148] sm:$0xf]
  %v106 = vld [vmem:[%s1 + $0x14c] sm:$0xf]
  %v107 = vld [vmem:[%s1 + $0x150] sm:$0xf]
  %v108 = vld [vmem:[%s1 + $0x154] sm:$0xf]
  %v109 = vld [vmem:[%s1 + $0x158] sm:$0xf]
  %v110 = vld [vmem:[%s1 + $0x15c] sm:$0xf]
  %v111 = vld [vmem:[%s1 + $0x160] sm:$0xf]
  %v112 = vld [vmem:[%s1 + $0x164] sm:$0xf]
  %v113 = vld [vmem:[%s1 + $0x168] sm:$0xf]
  %v114 = vld [vmem:[%s1 + $0x16c] sm:$0xf]
  %v115 = vld [vmem:[%s1 + $0x170] sm:$0xf]
  %v116 = vld [vmem:[%s1 + $0x174] sm:$0xf]
  %v117 = vld [vmem:[%s1 + $0x178] sm:$0xf]
  %v118 = vld [vmem:[%s1 + $0x17c] sm:$0xf]
  %v119 = vld [vmem:[%s1 + $0x180] sm:$0xf]
  %v120 = vld [vmem:[%s1 + $0x184] sm:$0xf]
  %v121 = vld [vmem:[%s1 + $0x188] sm:$0xf]
  %v122 = vld [vmem:[%s1 + $0x18c] sm:$0xf]
  %v123 = vld [vmem:[%s1 + $0x190] sm:$0xf]
  %v124 = vld [vmem:[%s1 + $0x194] sm:$0xf]
  %v125 = vld [vmem:[%s1 + $0x198] sm:$0xf]
  %v126 = vld [vmem:[%s1 + $0x19c] sm:$0xf]
  %v127 = vld [vmem:[%s1 + $0x1a0] sm:$0xf]
  %v128 = vld [vmem:[%s1 + $0x1a4] sm:$0xf]
  %v129 = vld [vmem:[%s1 + $0x1a8] sm:$0xf]
  %v130 = vld [vmem:[%s1 + $0x1ac] sm:$0xf]
  %v131 = vld [vmem:[%s1 + $0x1b0] sm:$0xf]
  %v132 = vld [vmem:[%s1 + $0x1b4] sm:$0xf]
  %v133 = vld [vmem:[%s1 + $0x1b8] sm:$0xf]
  %v134 = vld [vmem:[%s1 + $0x1bc] sm:$0xf]
  %v135 = vld [vmem:[%s2] sm:$0x1]
  %v137 = vlaneseq
  %v138 = vshrl.u32 %v137, 7
  %v139 = vsub.s32 0, %v138
  %v140 = vrot.slane %v135, %v139
  %v150 = vunpack.c.l.b16 %v15
  %v151 = vunpack.c.h.b16 %v15
  %v152 = vunpack.c.l.b16 %v16
  %v153 = vunpack.c.h.b16 %v16
  %v154 = vunpack.c.l.b16 %v17
  %v155 = vunpack.c.h.b16 %v17
  %v156 = vunpack.c.l.b16 %v18
  %v157 = vunpack.c.l.b16 %v19
  %v158 = vunpack.c.h.b16 %v19
  %v159 = vunpack.c.l.b16 %v20
  %v160 = vunpack.c.h.b16 %v20
  %v161 = vunpack.c.l.b16 %v21
  %v162 = vunpack.c.h.b16 %v21
  %v163 = vunpack.c.l.b16 %v22
  %v164 = vpack.c.b16 %v157, %v150
  %v165 = vpack.c.b16 %v158, %v151
  %v166 = vpack.c.b16 %v159, %v152
  %v167 = vpack.c.b16 %v160, %v153
  %v168 = vpack.c.b16 %v161, %v154
  %v169 = vpack.c.b16 %v162, %v155
  %v170 = vpack.c.b16 %v163, %v156
  %v290 = vunpack.c.l.b16 %v23
  %v291 = vunpack.c.l.b16 %v24
  %v292 = vunpack.c.l.b16 %v25
  %v293 = vunpack.c.l.b16 %v26
  %v294 = vunpack.c.l.b16 %v27
  %v295 = vunpack.c.l.b16 %v28
  %v296 = vunpack.c.l.b16 %v29
  %v297 = vunpack.c.l.b16 %v30
  %v298 = vunpack.c.l.b16 %v31
  %v299 = vunpack.c.l.b16 %v32
  %v300 = vunpack.c.l.b16 %v33
  %v301 = vunpack.c.l.b16 %v34
  %v302 = vunpack.c.l.b16 %v35
  %v303 = vunpack.c.l.b16 %v36
  %v304 = vunpack.c.l.b16 %v37
  %v305 = vunpack.c.l.b16 %v38
  %v306 = vunpack.c.l.b16 %v39
  %v307 = vunpack.c.l.b16 %v40
  %v308 = vunpack.c.l.b16 %v41
  %v309 = vunpack.c.l.b16 %v42
  %v310 = vunpack.c.l.b16 %v43
  %v311 = vunpack.c.l.b16 %v44
  %v312 = vunpack.c.l.b16 %v45
  %v313 = vunpack.c.l.b16 %v46
  %v314 = vunpack.c.l.b16 %v47
  %v315 = vunpack.c.l.b16 %v48
  %v316 = vunpack.c.l.b16 %v49
  %v317 = vunpack.c.l.b16 %v50
  %v318 = vunpack.c.l.b16 %v51
  %v319 = vunpack.c.l.b16 %v52
  %v320 = vunpack.c.l.b16 %v53
  %v321 = vunpack.c.l.b16 %v54
  %v322 = vunpack.c.l.b16 %v55
  %v323 = vunpack.c.l.b16 %v56
  %v324 = vunpack.c.l.b16 %v57
  %v325 = vunpack.c.l.b16 %v58
  %v326 = vunpack.c.l.b16 %v59
  %v327 = vunpack.c.l.b16 %v60
  %v328 = vunpack.c.l.b16 %v61
  %v329 = vunpack.c.l.b16 %v62
  %v330 = vunpack.c.l.b16 %v63
  %v331 = vunpack.c.l.b16 %v64
  %v332 = vunpack.c.l.b16 %v65
  %v333 = vunpack.c.l.b16 %v66
  %v334 = vunpack.c.l.b16 %v67
  %v335 = vunpack.c.l.b16 %v68
  %v336 = vunpack.c.l.b16 %v69
  %v337 = vunpack.c.l.b16 %v70
  %v338 = vunpack.c.l.b16 %v71
  %v339 = vunpack.c.l.b16 %v72
  %v340 = vunpack.c.l.b16 %v73
  %v341 = vunpack.c.l.b16 %v74
  %v342 = vunpack.c.l.b16 %v75
  %v343 = vunpack.c.l.b16 %v76
  %v344 = vunpack.c.l.b16 %v77
  %v345 = vunpack.c.l.b16 %v78
  %v346 = vunpack.c.l.b16 %v79
  %v347 = vunpack.c.l.b16 %v80
  %v348 = vunpack.c.l.b16 %v81
  %v349 = vunpack.c.l.b16 %v82
  %v350 = vunpack.c.l.b16 %v83
  %v351 = vunpack.c.l.b16 %v84
  %v352 = vunpack.c.l.b16 %v85
  %v353 = vunpack.c.l.b16 %v86
  %v354 = vunpack.c.l.b16 %v87
  %v355 = vunpack.c.l.b16 %v88
  %v356 = vunpack.c.l.b16 %v89
  %v357 = vunpack.c.l.b16 %v90
  %v358 = vunpack.c.l.b16 %v91
  %v359 = vunpack.c.l.b16 %v92
  %v360 = vunpack.c.l.b16 %v93
  %v361 = vunpack.c.l.b16 %v94
  %v362 = vunpack.c.l.b16 %v95
  %v363 = vunpack.c.l.b16 %v96
  %v364 = vunpack.c.l.b16 %v97
  %v365 = vunpack.c.l.b16 %v98
  %v366 = vunpack.c.l.b16 %v99
  %v367 = vunpack.c.l.b16 %v100
  %v368 = vunpack.c.l.b16 %v101
  %v369 = vunpack.c.l.b16 %v102
  %v370 = vunpack.c.l.b16 %v103
  %v371 = vunpack.c.l.b16 %v104
  %v372 = vunpack.c.l.b16 %v105
  %v373 = vunpack.c.l.b16 %v106
  %v374 = vunpack.c.l.b16 %v107
  %v375 = vunpack.c.l.b16 %v108
  %v376 = vunpack.c.l.b16 %v109
  %v377 = vunpack.c.l.b16 %v110
  %v378 = vunpack.c.l.b16 %v111
  %v379 = vunpack.c.l.b16 %v112
  %v380 = vunpack.c.l.b16 %v113
  %v381 = vunpack.c.l.b16 %v114
  %v382 = vunpack.c.l.b16 %v115
  %v383 = vunpack.c.l.b16 %v116
  %v384 = vunpack.c.l.b16 %v117
  %v385 = vunpack.c.l.b16 %v118
  %v386 = vunpack.c.l.b16 %v119
  %v387 = vunpack.c.l.b16 %v120
  %v388 = vunpack.c.l.b16 %v121
  %v389 = vunpack.c.l.b16 %v122
  %v390 = vunpack.c.l.b16 %v123
  %v391 = vunpack.c.l.b16 %v124
  %v392 = vunpack.c.l.b16 %v125
  %v393 = vunpack.c.l.b16 %v126
  %v394 = vunpack.c.l.b16 %v127
  %v395 = vunpack.c.l.b16 %v128
  %v396 = vunpack.c.l.b16 %v129
  %v397 = vunpack.c.l.b16 %v130
  %v398 = vunpack.c.l.b16 %v131
  %v399 = vunpack.c.l.b16 %v132
  %v400 = vunpack.c.l.b16 %v133
  %v401 = vunpack.c.l.b16 %v134
  %v402 = vpack.c.b16 %v291, %v290
  %v403 = vpack.c.b16 %v293, %v292
  %v404 = vpack.c.b16 %v295, %v294
  %v405 = vpack.c.b16 %v297, %v296
  %v406 = vpack.c.b16 %v299, %v298
  %v407 = vpack.c.b16 %v301, %v300
  %v408 = vpack.c.b16 %v303, %v302
  %v409 = vpack.c.b16 %v305, %v304
  %v410 = vpack.c.b16 %v307, %v306
  %v411 = vpack.c.b16 %v309, %v308
  %v412 = vpack.c.b16 %v311, %v310
  %v413 = vpack.c.b16 %v313, %v312
  %v414 = vpack.c.b16 %v315, %v314
  %v415 = vpack.c.b16 %v317, %v316
  %v416 = vpack.c.b16 %v319, %v318
  %v417 = vpack.c.b16 %v321, %v320
  %v418 = vpack.c.b16 %v323, %v322
  %v419 = vpack.c.b16 %v325, %v324
  %v420 = vpack.c.b16 %v327, %v326
  %v421 = vpack.c.b16 %v329, %v328
  %v422 = vpack.c.b16 %v331, %v330
  %v423 = vpack.c.b16 %v333, %v332
  %v424 = vpack.c.b16 %v335, %v334
  %v425 = vpack.c.b16 %v337, %v336
  %v426 = vpack.c.b16 %v339, %v338
  %v427 = vpack.c.b16 %v341, %v340
  %v428 = vpack.c.b16 %v343, %v342
  %v429 = vpack.c.b16 %v345, %v344
  %v430 = vpack.c.b16 %v347, %v346
  %v431 = vpack.c.b16 %v349, %v348
  %v432 = vpack.c.b16 %v351, %v350
  %v433 = vpack.c.b16 %v353, %v352
  %v434 = vpack.c.b16 %v355, %v354
  %v435 = vpack.c.b16 %v357, %v356
  %v436 = vpack.c.b16 %v359, %v358
  %v437 = vpack.c.b16 %v361, %v360
  %v438 = vpack.c.b16 %v363, %v362
  %v439 = vpack.c.b16 %v365, %v364
  %v440 = vpack.c.b16 %v367, %v366
  %v441 = vpack.c.b16 %v369, %v368
  %v442 = vpack.c.b16 %v371, %v370
  %v443 = vpack.c.b16 %v373, %v372
  %v444 = vpack.c.b16 %v375, %v374
  %v445 = vpack.c.b16 %v377, %v376
  %v446 = vpack.c.b16 %v379, %v378
  %v447 = vpack.c.b16 %v381, %v380
  %v448 = vpack.c.b16 %v383, %v382
  %v449 = vpack.c.b16 %v385, %v384
  %v450 = vpack.c.b16 %v387, %v386
  %v451 = vpack.c.b16 %v389, %v388
  %v452 = vpack.c.b16 %v391, %v390
  %v453 = vpack.c.b16 %v393, %v392
  %v454 = vpack.c.b16 %v395, %v394
  %v455 = vpack.c.b16 %v397, %v396
  %v456 = vpack.c.b16 %v399, %v398
  %v457 = vpack.c.b16 %v401, %v400
  %514 = vmatprep.subr.bf16.mxu0 0
  %515 = vmatpush1.bf16.msra.mxu0 %v402
  %516 = vmatprep.subr.bf16.mxu0 0
  %517 = vmatpush1.bf16.msra.mxu0 %v403
  %518 = vmatprep.subr.bf16.mxu0 0
  %519 = vmatpush1.bf16.msra.mxu0 %v404
  %520 = vmatprep.subr.bf16.mxu0 0
  %521 = vmatpush1.bf16.msra.mxu0 %v405
  %522 = vmatprep.subr.bf16.mxu0 0
  %523 = vmatpush1.bf16.msra.mxu0 %v406
  %524 = vmatprep.subr.bf16.mxu0 0
  %525 = vmatpush1.bf16.msra.mxu0 %v407
  %526 = vmatprep.subr.bf16.mxu0 0
  %527 = vmatpush1.bf16.msra.mxu0 %v408
  %528 = vmatprep.subr.bf16.mxu0 0
  %529 = vmatpush1.bf16.msra.mxu0 %v409
  %530 = vmatprep.subr.bf16.mxu0 0
  %531 = vmatpush1.bf16.msra.mxu0 %v410
  %532 = vmatprep.subr.bf16.mxu0 0
  %533 = vmatpush1.bf16.msra.mxu0 %v411
  %534 = vmatprep.subr.bf16.mxu0 0
  %535 = vmatpush1.bf16.msra.mxu0 %v412
  %536 = vmatprep.subr.bf16.mxu0 0
  %537 = vmatpush1.bf16.msra.mxu0 %v413
  %538 = vmatprep.subr.bf16.mxu0 0
  %539 = vmatpush1.bf16.msra.mxu0 %v414
  %540 = vmatprep.subr.bf16.mxu0 0
  %541 = vmatpush1.bf16.msra.mxu0 %v415
  %542 = vmatprep.subr.bf16.mxu0 0
  %543 = vmatpush1.bf16.msra.mxu0 %v416
  %544 = vmatprep.subr.bf16.mxu0 0
  %545 = vmatpush1.bf16.msra.mxu0 %v417
  %546 = vmatprep.mubr.bf16.mxu0 %v165
  %547 = vmatmul.mubr.bf16.gmra.mrb[0].mxu0 %v164
  %v548 = vpop.f32.mrb[0].mxu0
  %v549 = vadd.f32 %v140, %v548
  %v550 = vpop.f32.mrb[0].mxu0
  %v551 = vpop.f32.mrb[0].mxu0
  %v552 = vadd.f32 %v140, %v551
  %v553 = vpop.f32.mrb[0].mxu0
  %554 = vdwg.mxu0
  %555 = vmatprep.subr.bf16.mxu0 0
  %556 = vmatpush1.bf16.msra.mxu0 %v418
  %557 = vmatprep.subr.bf16.mxu0 0
  %558 = vmatpush1.bf16.msra.mxu0 %v419
  %559 = vmatprep.subr.bf16.mxu0 0
  %560 = vmatpush1.bf16.msra.mxu0 %v420
  %561 = vmatprep.subr.bf16.mxu0 0
  %562 = vmatpush1.bf16.msra.mxu0 %v421
  %563 = vmatprep.subr.bf16.mxu0 0
  %564 = vmatpush1.bf16.msra.mxu0 %v422
  %565 = vmatprep.subr.bf16.mxu0 0
  %566 = vmatpush1.bf16.msra.mxu0 %v423
  %567 = vmatprep.subr.bf16.mxu0 0
  %568 = vmatpush1.bf16.msra.mxu0 %v424
  %569 = vmatprep.subr.bf16.mxu0 0
  %570 = vmatpush1.bf16.msra.mxu0 %v425
  %571 = vmatprep.subr.bf16.mxu0 0
  %572 = vmatpush1.bf16.msra.mxu0 %v426
  %573 = vmatprep.subr.bf16.mxu0 0
  %574 = vmatpush1.bf16.msra.mxu0 %v427
  %575 = vmatprep.subr.bf16.mxu0 0
  %576 = vmatpush1.bf16.msra.mxu0 %v428
  %577 = vmatprep.subr.bf16.mxu0 0
  %578 = vmatpush1.bf16.msra.mxu0 %v429
  %579 = vmatprep.subr.bf16.mxu0 0
  %580 = vmatpush1.bf16.msra.mxu0 %v430
  %581 = vmatprep.subr.bf16.mxu0 0
  %582 = vmatpush1.bf16.msra.mxu0 %v431
  %583 = vmatprep.subr.bf16.mxu0 0
  %584 = vmatpush1.bf16.msra.mxu0 %v432
  %585 = vmatprep.subr.bf16.mxu0 0
  %586 = vmatpush1.bf16.msra.mxu0 %v433
  %587 = vmatprep.mubr.bf16.mxu0 %v167
  %588 = vmatmul.mubr.bf16.gmra.mrb[0].mxu0 %v166
  %v589 = vpop.f32.mrb[0].mxu0
  %v590 = vadd.f32 %v549, %v589
  %v591 = vpop.f32.mrb[0].mxu0
  %v592 = vpop.f32.mrb[0].mxu0
  %v593 = vadd.f32 %v552, %v592
  %v594 = vpop.f32.mrb[0].mxu0
  %595 = vdwg.mxu0
  %596 = vmatprep.subr.bf16.mxu0 0
  %597 = vmatpush1.bf16.msra.mxu0 %v434
  %598 = vmatprep.subr.bf16.mxu0 0
  %599 = vmatpush1.bf16.msra.mxu0 %v435
  %600 = vmatprep.subr.bf16.mxu0 0
  %601 = vmatpush1.bf16.msra.mxu0 %v436
  %602 = vmatprep.subr.bf16.mxu0 0
  %603 = vmatpush1.bf16.msra.mxu0 %v437
  %604 = vmatprep.subr.bf16.mxu0 0
  %605 = vmatpush1.bf16.msra.mxu0 %v438
  %606 = vmatprep.subr.bf16.mxu0 0
  %607 = vmatpush1.bf16.msra.mxu0 %v439
  %608 = vmatprep.subr.bf16.mxu0 0
  %609 = vmatpush1.bf16.msra.mxu0 %v440
  %610 = vmatprep.subr.bf16.mxu0 0
  %611 = vmatpush1.bf16.msra.mxu0 %v441
  %612 = vmatprep.subr.bf16.mxu0 0
  %613 = vmatpush1.bf16.msra.mxu0 %v442
  %614 = vmatprep.subr.bf16.mxu0 0
  %615 = vmatpush1.bf16.msra.mxu0 %v443
  %616 = vmatprep.subr.bf16.mxu0 0
  %617 = vmatpush1.bf16.msra.mxu0 %v444
  %618 = vmatprep.subr.bf16.mxu0 0
  %619 = vmatpush1.bf16.msra.mxu0 %v445
  %620 = vmatprep.subr.bf16.mxu0 0
  %621 = vmatpush1.bf16.msra.mxu0 %v446
  %622 = vmatprep.subr.bf16.mxu0 0
  %623 = vmatpush1.bf16.msra.mxu0 %v447
  %624 = vmatprep.subr.bf16.mxu0 0
  %625 = vmatpush1.bf16.msra.mxu0 %v448
  %626 = vmatprep.subr.bf16.mxu0 0
  %627 = vmatpush1.bf16.msra.mxu0 %v449
  %628 = vmatprep.mubr.bf16.mxu0 %v169
  %629 = vmatmul.mubr.bf16.gmra.mrb[0].mxu0 %v168
  %v630 = vpop.f32.mrb[0].mxu0
  %v631 = vadd.f32 %v590, %v630
  %v632 = vpop.f32.mrb[0].mxu0
  %v633 = vpop.f32.mrb[0].mxu0
  %v634 = vadd.f32 %v593, %v633
  %v635 = vpop.f32.mrb[0].mxu0
  %636 = vdwg.mxu0
  %637 = vmatprep.subr.bf16.mxu0 0
  %638 = vmatpush1.bf16.msra.mxu0 %v450
  %639 = vmatprep.subr.bf16.mxu0 0
  %640 = vmatpush1.bf16.msra.mxu0 %v451
  %641 = vmatprep.subr.bf16.mxu0 0
  %642 = vmatpush1.bf16.msra.mxu0 %v452
  %643 = vmatprep.subr.bf16.mxu0 0
  %644 = vmatpush1.bf16.msra.mxu0 %v453
  %645 = vmatprep.subr.bf16.mxu0 0
  %646 = vmatpush1.bf16.msra.mxu0 %v454
  %647 = vmatprep.subr.bf16.mxu0 0
  %648 = vmatpush1.bf16.msra.mxu0 %v455
  %649 = vmatprep.subr.bf16.mxu0 0
  %650 = vmatpush1.bf16.msra.mxu0 %v456
  %651 = vmatprep.subr.bf16.mxu0 0
  %652 = vmatpush1.bf16.msra.mxu0 %v457
  %653 = vmatprep.subr.bf16.mxu0 0
  %654 = vmatpush1.bf16.msra.mxu0 0
  %655 = vmatprep.subr.bf16.mxu0 0
  %656 = vmatpush1.bf16.msra.mxu0 0
  %657 = vmatprep.subr.bf16.mxu0 0
  %658 = vmatpush1.bf16.msra.mxu0 0
  %659 = vmatprep.subr.bf16.mxu0 0
  %660 = vmatpush1.bf16.msra.mxu0 0
  %661 = vmatprep.subr.bf16.mxu0 0
  %662 = vmatpush1.bf16.msra.mxu0 0
  %663 = vmatprep.subr.bf16.mxu0 0
  %664 = vmatpush1.bf16.msra.mxu0 0
  %665 = vmatprep.subr.bf16.mxu0 0
  %666 = vmatpush1.bf16.msra.mxu0 0
  %667 = vmatprep.subr.bf16.mxu0 0
  %668 = vmatpush1.bf16.msra.mxu0 0
  %669 = vmatprep.mubr.bf16.mxu0 0
  %670 = vmatmul.mubr.bf16.gmra.mrb[0].mxu0 %v170
  %v671 = vpop.f32.mrb[0].mxu0
  %v672 = vadd.f32 %v631, %v671
  %v673 = vpop.f32.mrb[0].mxu0
  %v674 = vpop.f32.mrb[0].mxu0
  %v675 = vadd.f32 %v634, %v674
  %v676 = vpop.f32.mrb[0].mxu0
  %677 = vdwg.mxu0
  %v678 = vmax.f32 %v672, 0.0
  %v679 = vmax.f32 %v675, 0.0
  %680 = vst [vmem:[%s3] sm:$0xff] %v678
  %681 = vst [vmem:[%s3 + $0x8] sm:$0xff] %v679
  // Predicated region
  $region14: #{dct_stream_forward.57} parent=0 // pred_check
    _
  $region15: #{dct_stream_forward.57} parent=0 // pred_check_branch
    %683 = sbr.rel (0) target = $region17
  $region16: #{dct_stream_forward.57} parent=0 // pred_region
    _
  $region17: #{dct_stream_forward.57} parent=0 // pred_fallthru
    _
  // Predicated region
  $region18: #{dct_stream_forward.57} parent=0 // pred_check
    _
  $region19: #{dct_stream_forward.57} parent=0 // pred_check_branch
    %685 = sbr.rel (0) target = $region21
  $region20: #{dct_stream_forward.57} parent=0 // pred_region
    _
  $region21: #{dct_stream_forward.57} parent=0 // pred_fallthru
    _

// kernel: dct_stream_forward.63
$region0: #{dct_stream_forward.63}
  #allocation0 [shape = 'u32[]', space=smem, size = 0x4, offset = 0x4, fixed_abs, tag = 'smem constant byte address 0x4 - core index']
  #allocation1 [shape = 'u32[144,128]{1,0:T(1,128)}', space=vmem, size = 0x12000, scoped, tag = 'internal scratch']
  %s0 = inlined_call_operand.vmem [shape: bf16[16,640], index: 0, kind: input, shape index: {}]
  %s1 = inlined_call_operand.vmem [shape: bf16[640,128], index: 1, kind: input, shape index: {}]
  %s2 = inlined_call_operand.vmem [shape: f32[1,128], index: 2, kind: input, shape index: {}]
  %s3 = inlined_call_operand.vmem [shape: f32[16,128], index: 3, kind: input, shape index: {}]
  %s4 = inlined_call_operand.vmem [shape: f32[16,128], index: 4, kind: output, shape index: {}]
  %s5 = sld [smem:[#allocation0]]
  $region26: #{dct_stream_forward.63} parent=0
    _
  %s7 = ssub.s32 1, %s5
  %s8 = scalar_select 0, %s7, %s5
  // Predicated region
  $region2: #{dct_stream_forward.63} parent=0 // pred_check
    _
  $region3: #{dct_stream_forward.63} parent=0 // pred_check_branch
    %10 = sbr.rel (0) target = $region5
  $region4: #{dct_stream_forward.63} parent=0 // pred_region
    _
  $region5: #{dct_stream_forward.63} parent=0 // pred_fallthru
    _
  // Predicated region
  $region6: #{dct_stream_forward.63} parent=0 // pred_check
    _
  $region7: #{dct_stream_forward.63} parent=0 // pred_check_branch
    %12 = sbr.rel (0) target = $region9
  $region8: #{dct_stream_forward.63} parent=0 // pred_region
    _
  $region9: #{dct_stream_forward.63} parent=0 // pred_fallthru
    _
  // Predicated region
  $region10: #{dct_stream_forward.63} parent=0 // pred_check
    _
  $region11: #{dct_stream_forward.63} parent=0 // pred_check_branch
    %14 = sbr.rel (0) target = $region13
  $region12: #{dct_stream_forward.63} parent=0 // pred_region
    _
  $region13: #{dct_stream_forward.63} parent=0 // pred_fallthru
    _
  // Predicated region
  $region14: #{dct_stream_forward.63} parent=0 // pred_check
    _
  $region15: #{dct_stream_forward.63} parent=0 // pred_check_branch
    %16 = sbr.rel (0) target = $region17
  $region16: #{dct_stream_forward.63} parent=0 // pred_region
    _
  $region17: #{dct_stream_forward.63} parent=0 // pred_fallthru
    _
  %v18 = vld [vmem:[%s0] sm:$0xff]
  %v19 = vld [vmem:[%s0 + $0x8] sm:$0xff]
  %v20 = vld [vmem:[%s0 + $0x10] sm:$0xf]
  %v21 = vld [vmem:[%s0 + $0x14] sm:$0xff]
  %v22 = vld [vmem:[%s0 + $0x1c] sm:$0xff]
  %v23 = vld [vmem:[%s0 + $0x24] sm:$0xf]
  %v24 = vld [vmem:[%s1] sm:$0xf]
  %v25 = vld [vmem:[%s1 + $0x4] sm:$0xf]
  %v26 = vld [vmem:[%s1 + $0x8] sm:$0xf]
  %v27 = vld [vmem:[%s1 + $0xc] sm:$0xf]
  %v28 = vld [vmem:[%s1 + $0x10] sm:$0xf]
  %v29 = vld [vmem:[%s1 + $0x14] sm:$0xf]
  %v30 = vld [vmem:[%s1 + $0x18] sm:$0xf]
  %v31 = vld [vmem:[%s1 + $0x1c] sm:$0xf]
  %v32 = vld [vmem:[%s1 + $0x20] sm:$0xf]
  %v33 = vld [vmem:[%s1 + $0x24] sm:$0xf]
  %v34 = vld [vmem:[%s1 + $0x28] sm:$0xf]
  %v35 = vld [vmem:[%s1 + $0x2c] sm:$0xf]
  %v36 = vld [vmem:[%s1 + $0x30] sm:$0xf]
  %v37 = vld [vmem:[%s1 + $0x34] sm:$0xf]
  %v38 = vld [vmem:[%s1 + $0x38] sm:$0xf]
  %v39 = vld [vmem:[%s1 + $0x3c] sm:$0xf]
  %v40 = vld [vmem:[%s1 + $0x40] sm:$0xf]
  %v41 = vld [vmem:[%s1 + $0x44] sm:$0xf]
  %v42 = vld [vmem:[%s1 + $0x48] sm:$0xf]
  %v43 = vld [vmem:[%s1 + $0x4c] sm:$0xf]
  %v44 = vld [vmem:[%s1 + $0x50] sm:$0xf]
  %v45 = vld [vmem:[%s1 + $0x54] sm:$0xf]
  %v46 = vld [vmem:[%s1 + $0x58] sm:$0xf]
  %v47 = vld [vmem:[%s1 + $0x5c] sm:$0xf]
  %v48 = vld [vmem:[%s1 + $0x60] sm:$0xf]
  %v49 = vld [vmem:[%s1 + $0x64] sm:$0xf]
  %v50 = vld [vmem:[%s1 + $0x68] sm:$0xf]
  %v51 = vld [vmem:[%s1 + $0x6c] sm:$0xf]
  %v52 = vld [vmem:[%s1 + $0x70] sm:$0xf]
  %v53 = vld [vmem:[%s1 + $0x74] sm:$0xf]
  %v54 = vld [vmem:[%s1 + $0x78] sm:$0xf]
  %v55 = vld [vmem:[%s1 + $0x7c] sm:$0xf]
  %v56 = vld [vmem:[%s1 + $0x80] sm:$0xf]
  %v57 = vld [vmem:[%s1 + $0x84] sm:$0xf]
  %v58 = vld [vmem:[%s1 + $0x88] sm:$0xf]
  %v59 = vld [vmem:[%s1 + $0x8c] sm:$0xf]
  %v60 = vld [vmem:[%s1 + $0x90] sm:$0xf]
  %v61 = vld [vmem:[%s1 + $0x94] sm:$0xf]
  %v62 = vld [vmem:[%s1 + $0x98] sm:$0xf]
  %v63 = vld [vmem:[%s1 + $0x9c] sm:$0xf]
  %v64 = vld [vmem:[%s1 + $0xa0] sm:$0xf]
  %v65 = vld [vmem:[%s1 + $0xa4] sm:$0xf]
  %v66 = vld [vmem:[%s1 + $0xa8] sm:$0xf]
  %v67 = vld [vmem:[%s1 + $0xac] sm:$0xf]
  %v68 = vld [vmem:[%s1 + $0xb0] sm:$0xf]
  %v69 = vld [vmem:[%s1 + $0xb4] sm:$0xf]
  %v70 = vld [vmem:[%s1 + $0xb8] sm:$0xf]
  %v71 = vld [vmem:[%s1 + $0xbc] sm:$0xf]
  %v72 = vld [vmem:[%s1 + $0xc0] sm:$0xf]
  %v73 = vld [vmem:[%s1 + $0xc4] sm:$0xf]
  %v74 = vld [vmem:[%s1 + $0xc8] sm:$0xf]
  %v75 = vld [vmem:[%s1 + $0xcc] sm:$0xf]
  %v76 = vld [vmem:[%s1 + $0xd0] sm:$0xf]
  %v77 = vld [vmem:[%s1 + $0xd4] sm:$0xf]
  %v78 = vld [vmem:[%s1 + $0xd8] sm:$0xf]
  %v79 = vld [vmem:[%s1 + $0xdc] sm:$0xf]
  %v80 = vld [vmem:[%s1 + $0xe0] sm:$0xf]
  %v81 = vld [vmem:[%s1 + $0xe4] sm:$0xf]
  %v82 = vld [vmem:[%s1 + $0xe8] sm:$0xf]
  %v83 = vld [vmem:[%s1 + $0xec] sm:$0xf]
  %v84 = vld [vmem:[%s1 + $0xf0] sm:$0xf]
  %v85 = vld [vmem:[%s1 + $0xf4] sm:$0xf]
  %v86 = vld [vmem:[%s1 + $0xf8] sm:$0xf]
  %v87 = vld [vmem:[%s1 + $0xfc] sm:$0xf]
  %v88 = vld [vmem:[%s1 + $0x100] sm:$0xf]
  %v89 = vld [vmem:[%s1 + $0x104] sm:$0xf]
  %v90 = vld [vmem:[%s1 + $0x108] sm:$0xf]
  %v91 = vld [vmem:[%s1 + $0x10c] sm:$0xf]
  %v92 = vld [vmem:[%s1 + $0x110] sm:$0xf]
  %v93 = vld [vmem:[%s1 + $0x114] sm:$0xf]
  %v94 = vld [vmem:[%s1 + $0x118] sm:$0xf]
  %v95 = vld [vmem:[%s1 + $0x11c] sm:$0xf]
  %v96 = vld [vmem:[%s1 + $0x120] sm:$0xf]
  %v97 = vld [vmem:[%s1 + $0x124] sm:$0xf]
  %v98 = vld [vmem:[%s1 + $0x128] sm:$0xf]
  %v99 = vld [vmem:[%s1 + $0x12c] sm:$0xf]
  %v100 = vld [vmem:[%s1 + $0x130] sm:$0xf]
  %v101 = vld [vmem:[%s1 + $0x134] sm:$0xf]
  %v102 = vld [vmem:[%s1 + $0x138] sm:$0xf]
  %v103 = vld [vmem:[%s1 + $0x13c] sm:$0xf]
  %v104 = vld [vmem:[%s2] sm:$0x1]
  %v106 = vlaneseq
  %v107 = vshrl.u32 %v106, 7
  %v108 = vsub.s32 0, %v107
  %v109 = vrot.slane %v104, %v108
  %v117 = vunpack.c.l.b16 %v18
  %v118 = vunpack.c.h.b16 %v18
  %v119 = vunpack.c.l.b16 %v19
  %v120 = vunpack.c.h.b16 %v19
  %v121 = vunpack.c.l.b16 %v20
  %v122 = vunpack.c.l.b16 %v21
  %v123 = vunpack.c.h.b16 %v21
  %v124 = vunpack.c.l.b16 %v22
  %v125 = vunpack.c.h.b16 %v22
  %v126 = vunpack.c.l.b16 %v23
  %v127 = vpack.c.b16 %v122, %v117
  %v128 = vpack.c.b16 %v123, %v118
  %v129 = vpack.c.b16 %v124, %v119
  %v130 = vpack.c.b16 %v125, %v120
  %v131 = vpack.c.b16 %v126, %v121
  %v217 = vunpack.c.l.b16 %v24
  %v218 = vunpack.c.l.b16 %v25
  %v219 = vunpack.c.l.b16 %v26
  %v220 = vunpack.c.l.b16 %v27
  %v221 = vunpack.c.l.b16 %v28
  %v222 = vunpack.c.l.b16 %v29
  %v223 = vunpack.c.l.b16 %v30
  %v224 = vunpack.c.l.b16 %v31
  %v225 = vunpack.c.l.b16 %v32
  %v226 = vunpack.c.l.b16 %v33
  %v227 = vunpack.c.l.b16 %v34
  %v228 = vunpack.c.l.b16 %v35
  %v229 = vunpack.c.l.b16 %v36
  %v230 = vunpack.c.l.b16 %v37
  %v231 = vunpack.c.l.b16 %v38
  %v232 = vunpack.c.l.b16 %v39
  %v233 = vunpack.c.l.b16 %v40
  %v234 = vunpack.c.l.b16 %v41
  %v235 = vunpack.c.l.b16 %v42
  %v236 = vunpack.c.l.b16 %v43
  %v237 = vunpack.c.l.b16 %v44
  %v238 = vunpack.c.l.b16 %v45
  %v239 = vunpack.c.l.b16 %v46
  %v240 = vunpack.c.l.b16 %v47
  %v241 = vunpack.c.l.b16 %v48
  %v242 = vunpack.c.l.b16 %v49
  %v243 = vunpack.c.l.b16 %v50
  %v244 = vunpack.c.l.b16 %v51
  %v245 = vunpack.c.l.b16 %v52
  %v246 = vunpack.c.l.b16 %v53
  %v247 = vunpack.c.l.b16 %v54
  %v248 = vunpack.c.l.b16 %v55
  %v249 = vunpack.c.l.b16 %v56
  %v250 = vunpack.c.l.b16 %v57
  %v251 = vunpack.c.l.b16 %v58
  %v252 = vunpack.c.l.b16 %v59
  %v253 = vunpack.c.l.b16 %v60
  %v254 = vunpack.c.l.b16 %v61
  %v255 = vunpack.c.l.b16 %v62
  %v256 = vunpack.c.l.b16 %v63
  %v257 = vunpack.c.l.b16 %v64
  %v258 = vunpack.c.l.b16 %v65
  %v259 = vunpack.c.l.b16 %v66
  %v260 = vunpack.c.l.b16 %v67
  %v261 = vunpack.c.l.b16 %v68
  %v262 = vunpack.c.l.b16 %v69
  %v263 = vunpack.c.l.b16 %v70
  %v264 = vunpack.c.l.b16 %v71
  %v265 = vunpack.c.l.b16 %v72
  %v266 = vunpack.c.l.b16 %v73
  %v267 = vunpack.c.l.b16 %v74
  %v268 = vunpack.c.l.b16 %v75
  %v269 = vunpack.c.l.b16 %v76
  %v270 = vunpack.c.l.b16 %v77
  %v271 = vunpack.c.l.b16 %v78
  %v272 = vunpack.c.l.b16 %v79
  %v273 = vunpack.c.l.b16 %v80
  %v274 = vunpack.c.l.b16 %v81
  %v275 = vunpack.c.l.b16 %v82
  %v276 = vunpack.c.l.b16 %v83
  %v277 = vunpack.c.l.b16 %v84
  %v278 = vunpack.c.l.b16 %v85
  %v279 = vunpack.c.l.b16 %v86
  %v280 = vunpack.c.l.b16 %v87
  %v281 = vunpack.c.l.b16 %v88
  %v282 = vunpack.c.l.b16 %v89
  %v283 = vunpack.c.l.b16 %v90
  %v284 = vunpack.c.l.b16 %v91
  %v285 = vunpack.c.l.b16 %v92
  %v286 = vunpack.c.l.b16 %v93
  %v287 = vunpack.c.l.b16 %v94
  %v288 = vunpack.c.l.b16 %v95
  %v289 = vunpack.c.l.b16 %v96
  %v290 = vunpack.c.l.b16 %v97
  %v291 = vunpack.c.l.b16 %v98
  %v292 = vunpack.c.l.b16 %v99
  %v293 = vunpack.c.l.b16 %v100
  %v294 = vunpack.c.l.b16 %v101
  %v295 = vunpack.c.l.b16 %v102
  %v296 = vunpack.c.l.b16 %v103
  %v297 = vpack.c.b16 %v218, %v217
  %v298 = vpack.c.b16 %v220, %v219
  %v299 = vpack.c.b16 %v222, %v221
  %v300 = vpack.c.b16 %v224, %v223
  %v301 = vpack.c.b16 %v226, %v225
  %v302 = vpack.c.b16 %v228, %v227
  %v303 = vpack.c.b16 %v230, %v229
  %v304 = vpack.c.b16 %v232, %v231
  %v305 = vpack.c.b16 %v234, %v233
  %v306 = vpack.c.b16 %v236, %v235
  %v307 = vpack.c.b16 %v238, %v237
  %v308 = vpack.c.b16 %v240, %v239
  %v309 = vpack.c.b16 %v242, %v241
  %v310 = vpack.c.b16 %v244, %v243
  %v311 = vpack.c.b16 %v246, %v245
  %v312 = vpack.c.b16 %v248, %v247
  %v313 = vpack.c.b16 %v250, %v249
  %v314 = vpack.c.b16 %v252, %v251
  %v315 = vpack.c.b16 %v254, %v253
  %v316 = vpack.c.b16 %v256, %v255
  %v317 = vpack.c.b16 %v258, %v257
  %v318 = vpack.c.b16 %v260, %v259
  %v319 = vpack.c.b16 %v262, %v261
  %v320 = vpack.c.b16 %v264, %v263
  %v321 = vpack.c.b16 %v266, %v265
  %v322 = vpack.c.b16 %v268, %v267
  %v323 = vpack.c.b16 %v270, %v269
  %v324 = vpack.c.b16 %v272, %v271
  %v325 = vpack.c.b16 %v274, %v273
  %v326 = vpack.c.b16 %v276, %v275
  %v327 = vpack.c.b16 %v278, %v277
  %v328 = vpack.c.b16 %v280, %v279
  %v329 = vpack.c.b16 %v282, %v281
  %v330 = vpack.c.b16 %v284, %v283
  %v331 = vpack.c.b16 %v286, %v285
  %v332 = vpack.c.b16 %v288, %v287
  %v333 = vpack.c.b16 %v290, %v289
  %v334 = vpack.c.b16 %v292, %v291
  %v335 = vpack.c.b16 %v294, %v293
  %v336 = vpack.c.b16 %v296, %v295
  %377 = vmatprep.subr.bf16.mxu0 0
  %378 = vmatpush1.bf16.msra.mxu0 %v297
  %379 = vmatprep.subr.bf16.mxu0 0
  %380 = vmatpush1.bf16.msra.mxu0 %v298
  %381 = vmatprep.subr.bf16.mxu0 0
  %382 = vmatpush1.bf16.msra.mxu0 %v299
  %383 = vmatprep.subr.bf16.mxu0 0
  %384 = vmatpush1.bf16.msra.mxu0 %v300
  %385 = vmatprep.subr.bf16.mxu0 0
  %386 = vmatpush1.bf16.msra.mxu0 %v301
  %387 = vmatprep.subr.bf16.mxu0 0
  %388 = vmatpush1.bf16.msra.mxu0 %v302
  %389 = vmatprep.subr.bf16.mxu0 0
  %390 = vmatpush1.bf16.msra.mxu0 %v303
  %391 = vmatprep.subr.bf16.mxu0 0
  %392 = vmatpush1.bf16.msra.mxu0 %v304
  %393 = vmatprep.subr.bf16.mxu0 0
  %394 = vmatpush1.bf16.msra.mxu0 %v305
  %395 = vmatprep.subr.bf16.mxu0 0
  %396 = vmatpush1.bf16.msra.mxu0 %v306
  %397 = vmatprep.subr.bf16.mxu0 0
  %398 = vmatpush1.bf16.msra.mxu0 %v307
  %399 = vmatprep.subr.bf16.mxu0 0
  %400 = vmatpush1.bf16.msra.mxu0 %v308
  %401 = vmatprep.subr.bf16.mxu0 0
  %402 = vmatpush1.bf16.msra.mxu0 %v309
  %403 = vmatprep.subr.bf16.mxu0 0
  %404 = vmatpush1.bf16.msra.mxu0 %v310
  %405 = vmatprep.subr.bf16.mxu0 0
  %406 = vmatpush1.bf16.msra.mxu0 %v311
  %407 = vmatprep.subr.bf16.mxu0 0
  %408 = vmatpush1.bf16.msra.mxu0 %v312
  %409 = vmatprep.mubr.bf16.mxu0 %v128
  %410 = vmatmul.mubr.bf16.gmra.mrb[0].mxu0 %v127
  %v411 = vpop.f32.mrb[0].mxu0
  %v412 = vadd.f32 %v109, %v411
  %v413 = vpop.f32.mrb[0].mxu0
  %v414 = vpop.f32.mrb[0].mxu0
  %v415 = vadd.f32 %v109, %v414
  %v416 = vpop.f32.mrb[0].mxu0
  %417 = vdwg.mxu0
  %418 = vmatprep.subr.bf16.mxu0 0
  %419 = vmatpush1.bf16.msra.mxu0 %v313
  %420 = vmatprep.subr.bf16.mxu0 0
  %421 = vmatpush1.bf16.msra.mxu0 %v314
  %422 = vmatprep.subr.bf16.mxu0 0
  %423 = vmatpush1.bf16.msra.mxu0 %v315
  %424 = vmatprep.subr.bf16.mxu0 0
  %425 = vmatpush1.bf16.msra.mxu0 %v316
  %426 = vmatprep.subr.bf16.mxu0 0
  %427 = vmatpush1.bf16.msra.mxu0 %v317
  %428 = vmatprep.subr.bf16.mxu0 0
  %429 = vmatpush1.bf16.msra.mxu0 %v318
  %430 = vmatprep.subr.bf16.mxu0 0
  %431 = vmatpush1.bf16.msra.mxu0 %v319
  %432 = vmatprep.subr.bf16.mxu0 0
  %433 = vmatpush1.bf16.msra.mxu0 %v320
  %434 = vmatprep.subr.bf16.mxu0 0
  %435 = vmatpush1.bf16.msra.mxu0 %v321
  %436 = vmatprep.subr.bf16.mxu0 0
  %437 = vmatpush1.bf16.msra.mxu0 %v322
  %438 = vmatprep.subr.bf16.mxu0 0
  %439 = vmatpush1.bf16.msra.mxu0 %v323
  %440 = vmatprep.subr.bf16.mxu0 0
  %441 = vmatpush1.bf16.msra.mxu0 %v324
  %442 = vmatprep.subr.bf16.mxu0 0
  %443 = vmatpush1.bf16.msra.mxu0 %v325
  %444 = vmatprep.subr.bf16.mxu0 0
  %445 = vmatpush1.bf16.msra.mxu0 %v326
  %446 = vmatprep.subr.bf16.mxu0 0
  %447 = vmatpush1.bf16.msra.mxu0 %v327
  %448 = vmatprep.subr.bf16.mxu0 0
  %449 = vmatpush1.bf16.msra.mxu0 %v328
  %450 = vmatprep.mubr.bf16.mxu0 %v130
  %451 = vmatmul.mubr.bf16.gmra.mrb[0].mxu0 %v129
  %v452 = vpop.f32.mrb[0].mxu0
  %v453 = vadd.f32 %v412, %v452
  %v454 = vpop.f32.mrb[0].mxu0
  %v455 = vpop.f32.mrb[0].mxu0
  %v456 = vadd.f32 %v415, %v455
  %v457 = vpop.f32.mrb[0].mxu0
  %458 = vdwg.mxu0
  %459 = vmatprep.subr.bf16.mxu0 0
  %460 = vmatpush1.bf16.msra.mxu0 %v329
  %461 = vmatprep.subr.bf16.mxu0 0
  %462 = vmatpush1.bf16.msra.mxu0 %v330
  %463 = vmatprep.subr.bf16.mxu0 0
  %464 = vmatpush1.bf16.msra.mxu0 %v331
  %465 = vmatprep.subr.bf16.mxu0 0
  %466 = vmatpush1.bf16.msra.mxu0 %v332
  %467 = vmatprep.subr.bf16.mxu0 0
  %468 = vmatpush1.bf16.msra.mxu0 %v333
  %469 = vmatprep.subr.bf16.mxu0 0
  %470 = vmatpush1.bf16.msra.mxu0 %v334
  %471 = vmatprep.subr.bf16.mxu0 0
  %472 = vmatpush1.bf16.msra.mxu0 %v335
  %473 = vmatprep.subr.bf16.mxu0 0
  %474 = vmatpush1.bf16.msra.mxu0 %v336
  %475 = vmatprep.subr.bf16.mxu0 0
  %476 = vmatpush1.bf16.msra.mxu0 0
  %477 = vmatprep.subr.bf16.mxu0 0
  %478 = vmatpush1.bf16.msra.mxu0 0
  %479 = vmatprep.subr.bf16.mxu0 0
  %480 = vmatpush1.bf16.msra.mxu0 0
  %481 = vmatprep.subr.bf16.mxu0 0
  %482 = vmatpush1.bf16.msra.mxu0 0
  %483 = vmatprep.subr.bf16.mxu0 0
  %484 = vmatpush1.bf16.msra.mxu0 0
  %485 = vmatprep.subr.bf16.mxu0 0
  %486 = vmatpush1.bf16.msra.mxu0 0
  %487 = vmatprep.subr.bf16.mxu0 0
  %488 = vmatpush1.bf16.msra.mxu0 0
  %489 = vmatprep.subr.bf16.mxu0 0
  %490 = vmatpush1.bf16.msra.mxu0 0
  %491 = vmatprep.mubr.bf16.mxu0 0
  %492 = vmatmul.mubr.bf16.gmra.mrb[0].mxu0 %v131
  %v493 = vpop.f32.mrb[0].mxu0
  %v494 = vadd.f32 %v453, %v493
  %v495 = vpop.f32.mrb[0].mxu0
  %v496 = vpop.f32.mrb[0].mxu0
  %v497 = vadd.f32 %v456, %v496
  %v498 = vpop.f32.mrb[0].mxu0
  %499 = vdwg.mxu0
  %v500 = vld [vmem:[%s3] sm:$0xff]
  %v501 = vld [vmem:[%s3 + $0x8] sm:$0xff]
  %v502 = vadd.f32 %v494, %v500
  %v503 = vadd.f32 %v497, %v501
  %v504 = vmax.f32 %v502, 0.0
  %v505 = vmax.f32 %v503, 0.0
  %506 = vst [vmem:[%s4] sm:$0xff] %v504
  %507 = vst [vmem:[%s4 + $0x8] sm:$0xff] %v505
  // Predicated region
  $region18: #{dct_stream_forward.63} parent=0 // pred_check
    _
  $region19: #{dct_stream_forward.63} parent=0 // pred_check_branch
    %509 = sbr.rel (0) target = $region21
  $region20: #{dct_stream_forward.63} parent=0 // pred_region
    _
  $region21: #{dct_stream_forward.63} parent=0 // pred_fallthru
    _
  // Predicated region
  $region22: #{dct_stream_forward.63} parent=0 // pred_check
    _
  $region23: #{dct_stream_forward.63} parent=0 // pred_check_branch
    %511 = sbr.rel (0) target = $region25
  $region24: #{dct_stream_forward.63} parent=0 // pred_region
    _
  $region25: #{dct_stream_forward.63} parent=0 // pred_fallthru
    _

// kernel: dct_stream_forward.85
$region0: #{dct_stream_forward.85}
  #allocation0 [shape = 'u32[]', space=smem, size = 0x4, offset = 0x4, fixed_abs, tag = 'smem constant byte address 0x4 - core index']
  #allocation1 [shape = 'u32[144,128]{1,0:T(1,128)}', space=vmem, size = 0x12000, scoped, tag = 'internal scratch']
  %s0 = inlined_call_operand.vmem [shape: bf16[16,384], index: 0, kind: input, shape index: {}]
  %s1 = inlined_call_operand.vmem [shape: bf16[384,128], index: 1, kind: input, shape index: {}]
  %s2 = inlined_call_operand.vmem [shape: f32[1,128], index: 2, kind: input, shape index: {}]
  %s3 = inlined_call_operand.vmem [shape: f32[16,128], index: 3, kind: output, shape index: {}]
  %s4 = sld [smem:[#allocation0]]
  $region22: #{dct_stream_forward.85} parent=0
    _
  %s6 = ssub.s32 1, %s4
  %s7 = scalar_select 0, %s6, %s4
  // Predicated region
  $region2: #{dct_stream_forward.85} parent=0 // pred_check
    _
  $region3: #{dct_stream_forward.85} parent=0 // pred_check_branch
    %9 = sbr.rel (0) target = $region5
  $region4: #{dct_stream_forward.85} parent=0 // pred_region
    _
  $region5: #{dct_stream_forward.85} parent=0 // pred_fallthru
    _
  // Predicated region
  $region6: #{dct_stream_forward.85} parent=0 // pred_check
    _
  $region7: #{dct_stream_forward.85} parent=0 // pred_check_branch
    %11 = sbr.rel (0) target = $region9
  $region8: #{dct_stream_forward.85} parent=0 // pred_region
    _
  $region9: #{dct_stream_forward.85} parent=0 // pred_fallthru
    _
  // Predicated region
  $region10: #{dct_stream_forward.85} parent=0 // pred_check
    _
  $region11: #{dct_stream_forward.85} parent=0 // pred_check_branch
    %13 = sbr.rel (0) target = $region13
  $region12: #{dct_stream_forward.85} parent=0 // pred_region
    _
  $region13: #{dct_stream_forward.85} parent=0 // pred_fallthru
    _
  %v15 = vld [vmem:[%s0] sm:$0xff]
  %v16 = vld [vmem:[%s0 + $0x8] sm:$0xf]
  %v17 = vld [vmem:[%s0 + $0xc] sm:$0xff]
  %v18 = vld [vmem:[%s0 + $0x14] sm:$0xf]
  %v19 = vld [vmem:[%s1] sm:$0xf]
  %v20 = vld [vmem:[%s1 + $0x4] sm:$0xf]
  %v21 = vld [vmem:[%s1 + $0x8] sm:$0xf]
  %v22 = vld [vmem:[%s1 + $0xc] sm:$0xf]
  %v23 = vld [vmem:[%s1 + $0x10] sm:$0xf]
  %v24 = vld [vmem:[%s1 + $0x14] sm:$0xf]
  %v25 = vld [vmem:[%s1 + $0x18] sm:$0xf]
  %v26 = vld [vmem:[%s1 + $0x1c] sm:$0xf]
  %v27 = vld [vmem:[%s1 + $0x20] sm:$0xf]
  %v28 = vld [vmem:[%s1 + $0x24] sm:$0xf]
  %v29 = vld [vmem:[%s1 + $0x28] sm:$0xf]
  %v30 = vld [vmem:[%s1 + $0x2c] sm:$0xf]
  %v31 = vld [vmem:[%s1 + $0x30] sm:$0xf]
  %v32 = vld [vmem:[%s1 + $0x34] sm:$0xf]
  %v33 = vld [vmem:[%s1 + $0x38] sm:$0xf]
  %v34 = vld [vmem:[%s1 + $0x3c] sm:$0xf]
  %v35 = vld [vmem:[%s1 + $0x40] sm:$0xf]
  %v36 = vld [vmem:[%s1 + $0x44] sm:$0xf]
  %v37 = vld [vmem:[%s1 + $0x48] sm:$0xf]
  %v38 = vld [vmem:[%s1 + $0x4c] sm:$0xf]
  %v39 = vld [vmem:[%s1 + $0x50] sm:$0xf]
  %v40 = vld [vmem:[%s1 + $0x54] sm:$0xf]
  %v41 = vld [vmem:[%s1 + $0x58] sm:$0xf]
  %v42 = vld [vmem:[%s1 + $0x5c] sm:$0xf]
  %v43 = vld [vmem:[%s1 + $0x60] sm:$0xf]
  %v44 = vld [vmem:[%s1 + $0x64] sm:$0xf]
  %v45 = vld [vmem:[%s1 + $0x68] sm:$0xf]
  %v46 = vld [vmem:[%s1 + $0x6c] sm:$0xf]
  %v47 = vld [vmem:[%s1 + $0x70] sm:$0xf]
  %v48 = vld [vmem:[%s1 + $0x74] sm:$0xf]
  %v49 = vld [vmem:[%s1 + $0x78] sm:$0xf]
  %v50 = vld [vmem:[%s1 + $0x7c] sm:$0xf]
  %v51 = vld [vmem:[%s1 + $0x80] sm:$0xf]
  %v52 = vld [vmem:[%s1 + $0x84] sm:$0xf]
  %v53 = vld [vmem:[%s1 + $0x88] sm:$0xf]
  %v54 = vld [vmem:[%s1 + $0x8c] sm:$0xf]
  %v55 = vld [vmem:[%s1 + $0x90] sm:$0xf]
  %v56 = vld [vmem:[%s1 + $0x94] sm:$0xf]
  %v57 = vld [vmem:[%s1 + $0x98] sm:$0xf]
  %v58 = vld [vmem:[%s1 + $0x9c] sm:$0xf]
  %v59 = vld [vmem:[%s1 + $0xa0] sm:$0xf]
  %v60 = vld [vmem:[%s1 + $0xa4] sm:$0xf]
  %v61 = vld [vmem:[%s1 + $0xa8] sm:$0xf]
  %v62 = vld [vmem:[%s1 + $0xac] sm:$0xf]
  %v63 = vld [vmem:[%s1 + $0xb0] sm:$0xf]
  %v64 = vld [vmem:[%s1 + $0xb4] sm:$0xf]
  %v65 = vld [vmem:[%s1 + $0xb8] sm:$0xf]
  %v66 = vld [vmem:[%s1 + $0xbc] sm:$0xf]
  %v67 = vld [vmem:[%s2] sm:$0x1]
  %v69 = vlaneseq
  %v70 = vshrl.u32 %v69, 7
  %v71 = vsub.s32 0, %v70
  %v72 = vrot.slane %v67, %v71
  %v78 = vunpack.c.l.b16 %v15
  %v79 = vunpack.c.h.b16 %v15
  %v80 = vunpack.c.l.b16 %v16
  %v81 = vunpack.c.l.b16 %v17
  %v82 = vunpack.c.h.b16 %v17
  %v83 = vunpack.c.l.b16 %v18
  %v84 = vpack.c.b16 %v81, %v78
  %v85 = vpack.c.b16 %v82, %v79
  %v86 = vpack.c.b16 %v83, %v80
  %v138 = vunpack.c.l.b16 %v19
  %v139 = vunpack.c.l.b16 %v20
  %v140 = vunpack.c.l.b16 %v21
  %v141 = vunpack.c.l.b16 %v22
  %v142 = vunpack.c.l.b16 %v23
  %v143 = vunpack.c.l.b16 %v24
  %v144 = vunpack.c.l.b16 %v25
  %v145 = vunpack.c.l.b16 %v26
  %v146 = vunpack.c.l.b16 %v27
  %v147 = vunpack.c.l.b16 %v28
  %v148 = vunpack.c.l.b16 %v29
  %v149 = vunpack.c.l.b16 %v30
  %v150 = vunpack.c.l.b16 %v31
  %v151 = vunpack.c.l.b16 %v32
  %v152 = vunpack.c.l.b16 %v33
  %v153 = vunpack.c.l.b16 %v34
  %v154 = vunpack.c.l.b16 %v35
  %v155 = vunpack.c.l.b16 %v36
  %v156 = vunpack.c.l.b16 %v37
  %v157 = vunpack.c.l.b16 %v38
  %v158 = vunpack.c.l.b16 %v39
  %v159 = vunpack.c.l.b16 %v40
  %v160 = vunpack.c.l.b16 %v41
  %v161 = vunpack.c.l.b16 %v42
  %v162 = vunpack.c.l.b16 %v43
  %v163 = vunpack.c.l.b16 %v44
  %v164 = vunpack.c.l.b16 %v45
  %v165 = vunpack.c.l.b16 %v46
  %v166 = vunpack.c.l.b16 %v47
  %v167 = vunpack.c.l.b16 %v48
  %v168 = vunpack.c.l.b16 %v49
  %v169 = vunpack.c.l.b16 %v50
  %v170 = vunpack.c.l.b16 %v51
  %v171 = vunpack.c.l.b16 %v52
  %v172 = vunpack.c.l.b16 %v53
  %v173 = vunpack.c.l.b16 %v54
  %v174 = vunpack.c.l.b16 %v55
  %v175 = vunpack.c.l.b16 %v56
  %v176 = vunpack.c.l.b16 %v57
  %v177 = vunpack.c.l.b16 %v58
  %v178 = vunpack.c.l.b16 %v59
  %v179 = vunpack.c.l.b16 %v60
  %v180 = vunpack.c.l.b16 %v61
  %v181 = vunpack.c.l.b16 %v62
  %v182 = vunpack.c.l.b16 %v63
  %v183 = vunpack.c.l.b16 %v64
  %v184 = vunpack.c.l.b16 %v65
  %v185 = vunpack.c.l.b16 %v66
  %v186 = vpack.c.b16 %v139, %v138
  %v187 = vpack.c.b16 %v141, %v140
  %v188 = vpack.c.b16 %v143, %v142
  %v189 = vpack.c.b16 %v145, %v144
  %v190 = vpack.c.b16 %v147, %v146
  %v191 = vpack.c.b16 %v149, %v148
  %v192 = vpack.c.b16 %v151, %v150
  %v193 = vpack.c.b16 %v153, %v152
  %v194 = vpack.c.b16 %v155, %v154
  %v195 = vpack.c.b16 %v157, %v156
  %v196 = vpack.c.b16 %v159, %v158
  %v197 = vpack.c.b16 %v161, %v160
  %v198 = vpack.c.b16 %v163, %v162
  %v199 = vpack.c.b16 %v165, %v164
  %v200 = vpack.c.b16 %v167, %v166
  %v201 = vpack.c.b16 %v169, %v168
  %v202 = vpack.c.b16 %v171, %v170
  %v203 = vpack.c.b16 %v173, %v172
  %v204 = vpack.c.b16 %v175, %v174
  %v205 = vpack.c.b16 %v177, %v176
  %v206 = vpack.c.b16 %v179, %v178
  %v207 = vpack.c.b16 %v181, %v180
  %v208 = vpack.c.b16 %v183, %v182
  %v209 = vpack.c.b16 %v185, %v184
  %234 = vmatprep.subr.bf16.mxu0 0
  %235 = vmatpush1.bf16.msra.mxu0 %v186
  %236 = vmatprep.subr.bf16.mxu0 0
  %237 = vmatpush1.bf16.msra.mxu0 %v187
  %238 = vmatprep.subr.bf16.mxu0 0
  %239 = vmatpush1.bf16.msra.mxu0 %v188
  %240 = vmatprep.subr.bf16.mxu0 0
  %241 = vmatpush1.bf16.msra.mxu0 %v189
  %242 = vmatprep.subr.bf16.mxu0 0
  %243 = vmatpush1.bf16.msra.mxu0 %v190
  %244 = vmatprep.subr.bf16.mxu0 0
  %245 = vmatpush1.bf16.msra.mxu0 %v191
  %246 = vmatprep.subr.bf16.mxu0 0
  %247 = vmatpush1.bf16.msra.mxu0 %v192
  %248 = vmatprep.subr.bf16.mxu0 0
  %249 = vmatpush1.bf16.msra.mxu0 %v193
  %250 = vmatprep.subr.bf16.mxu0 0
  %251 = vmatpush1.bf16.msra.mxu0 %v194
  %252 = vmatprep.subr.bf16.mxu0 0
  %253 = vmatpush1.bf16.msra.mxu0 %v195
  %254 = vmatprep.subr.bf16.mxu0 0
  %255 = vmatpush1.bf16.msra.mxu0 %v196
  %256 = vmatprep.subr.bf16.mxu0 0
  %257 = vmatpush1.bf16.msra.mxu0 %v197
  %258 = vmatprep.subr.bf16.mxu0 0
  %259 = vmatpush1.bf16.msra.mxu0 %v198
  %260 = vmatprep.subr.bf16.mxu0 0
  %261 = vmatpush1.bf16.msra.mxu0 %v199
  %262 = vmatprep.subr.bf16.mxu0 0
  %263 = vmatpush1.bf16.msra.mxu0 %v200
  %264 = vmatprep.subr.bf16.mxu0 0
  %265 = vmatpush1.bf16.msra.mxu0 %v201
  %266 = vmatprep.mubr.bf16.mxu0 %v85
  %267 = vmatmul.mubr.bf16.gmra.mrb[0].mxu0 %v84
  %v268 = vpop.f32.mrb[0].mxu0
  %v269 = vadd.f32 %v72, %v268
  %v270 = vpop.f32.mrb[0].mxu0
  %v271 = vpop.f32.mrb[0].mxu0
  %v272 = vadd.f32 %v72, %v271
  %v273 = vpop.f32.mrb[0].mxu0
  %274 = vdwg.mxu0
  %275 = vmatprep.subr.bf16.mxu0 0
  %276 = vmatpush1.bf16.msra.mxu0 %v202
  %277 = vmatprep.subr.bf16.mxu0 0
  %278 = vmatpush1.bf16.msra.mxu0 %v203
  %279 = vmatprep.subr.bf16.mxu0 0
  %280 = vmatpush1.bf16.msra.mxu0 %v204
  %281 = vmatprep.subr.bf16.mxu0 0
  %282 = vmatpush1.bf16.msra.mxu0 %v205
  %283 = vmatprep.subr.bf16.mxu0 0
  %284 = vmatpush1.bf16.msra.mxu0 %v206
  %285 = vmatprep.subr.bf16.mxu0 0
  %286 = vmatpush1.bf16.msra.mxu0 %v207
  %287 = vmatprep.subr.bf16.mxu0 0
  %288 = vmatpush1.bf16.msra.mxu0 %v208
  %289 = vmatprep.subr.bf16.mxu0 0
  %290 = vmatpush1.bf16.msra.mxu0 %v209
  %291 = vmatprep.subr.bf16.mxu0 0
  %292 = vmatpush1.bf16.msra.mxu0 0
  %293 = vmatprep.subr.bf16.mxu0 0
  %294 = vmatpush1.bf16.msra.mxu0 0
  %295 = vmatprep.subr.bf16.mxu0 0
  %296 = vmatpush1.bf16.msra.mxu0 0
  %297 = vmatprep.subr.bf16.mxu0 0
  %298 = vmatpush1.bf16.msra.mxu0 0
  %299 = vmatprep.subr.bf16.mxu0 0
  %300 = vmatpush1.bf16.msra.mxu0 0
  %301 = vmatprep.subr.bf16.mxu0 0
  %302 = vmatpush1.bf16.msra.mxu0 0
  %303 = vmatprep.subr.bf16.mxu0 0
  %304 = vmatpush1.bf16.msra.mxu0 0
  %305 = vmatprep.subr.bf16.mxu0 0
  %306 = vmatpush1.bf16.msra.mxu0 0
  %307 = vmatprep.mubr.bf16.mxu0 0
  %308 = vmatmul.mubr.bf16.gmra.mrb[0].mxu0 %v86
  %v309 = vpop.f32.mrb[0].mxu0
  %v310 = vadd.f32 %v269, %v309
  %v311 = vpop.f32.mrb[0].mxu0
  %v312 = vpop.f32.mrb[0].mxu0
  %v313 = vadd.f32 %v272, %v312
  %v314 = vpop.f32.mrb[0].mxu0
  %315 = vdwg.mxu0
  %v316 = vmax.f32 %v310, 0.0
  %v317 = vmax.f32 %v313, 0.0
  %318 = vst [vmem:[%s3] sm:$0xff] %v316
  %319 = vst [vmem:[%s3 + $0x8] sm:$0xff] %v317
  // Predicated region
  $region14: #{dct_stream_forward.85} parent=0 // pred_check
    _
  $region15: #{dct_stream_forward.85} parent=0 // pred_check_branch
    %321 = sbr.rel (0) target = $region17
  $region16: #{dct_stream_forward.85} parent=0 // pred_region
    _
  $region17: #{dct_stream_forward.85} parent=0 // pred_fallthru
    _
  // Predicated region
  $region18: #{dct_stream_forward.85} parent=0 // pred_check
    _
  $region19: #{dct_stream_forward.85} parent=0 // pred_check_branch
    %323 = sbr.rel (0) target = $region21
  $region20: #{dct_stream_forward.85} parent=0 // pred_region
    _
  $region21: #{dct_stream_forward.85} parent=0 // pred_fallthru
    _

// kernel: dct_stream_forward.86
$region0: #{dct_stream_forward.86}
  #allocation0 [shape = 'u32[]', space=smem, size = 0x4, offset = 0x4, fixed_abs, tag = 'smem constant byte address 0x4 - core index']
  #allocation1 [shape = 'u32[144,128]{1,0:T(1,128)}', space=vmem, size = 0x12000, scoped, tag = 'internal scratch']
  %s0 = inlined_call_operand.vmem [shape: bf16[16,384], index: 0, kind: input, shape index: {}]
  %s1 = inlined_call_operand.vmem [shape: bf16[384,128], index: 1, kind: input, shape index: {}]
  %s2 = inlined_call_operand.vmem [shape: f32[1,128], index: 2, kind: input, shape index: {}]
  %s3 = inlined_call_operand.vmem [shape: f32[16,128], index: 3, kind: output, shape index: {}]
  %s4 = sld [smem:[#allocation0]]
  $region22: #{dct_stream_forward.86} parent=0
    _
  %s6 = ssub.s32 1, %s4
  %s7 = scalar_select 0, %s6, %s4
  // Predicated region
  $region2: #{dct_stream_forward.86} parent=0 // pred_check
    _
  $region3: #{dct_stream_forward.86} parent=0 // pred_check_branch
    %9 = sbr.rel (0) target = $region5
  $region4: #{dct_stream_forward.86} parent=0 // pred_region
    _
  $region5: #{dct_stream_forward.86} parent=0 // pred_fallthru
    _
  // Predicated region
  $region6: #{dct_stream_forward.86} parent=0 // pred_check
    _
  $region7: #{dct_stream_forward.86} parent=0 // pred_check_branch
    %11 = sbr.rel (0) target = $region9
  $region8: #{dct_stream_forward.86} parent=0 // pred_region
    _
  $region9: #{dct_stream_forward.86} parent=0 // pred_fallthru
    _
  // Predicated region
  $region10: #{dct_stream_forward.86} parent=0 // pred_check
    _
  $region11: #{dct_stream_forward.86} parent=0 // pred_check_branch
    %13 = sbr.rel (0) target = $region13
  $region12: #{dct_stream_forward.86} parent=0 // pred_region
    _
  $region13: #{dct_stream_forward.86} parent=0 // pred_fallthru
    _
  %v15 = vld [vmem:[%s0] sm:$0xff]
  %v16 = vld [vmem:[%s0 + $0x8] sm:$0xf]
  %v17 = vld [vmem:[%s0 + $0xc] sm:$0xff]
  %v18 = vld [vmem:[%s0 + $0x14] sm:$0xf]
  %v19 = vld [vmem:[%s1] sm:$0xf]
  %v20 = vld [vmem:[%s1 + $0x4] sm:$0xf]
  %v21 = vld [vmem:[%s1 + $0x8] sm:$0xf]
  %v22 = vld [vmem:[%s1 + $0xc] sm:$0xf]
  %v23 = vld [vmem:[%s1 + $0x10] sm:$0xf]
  %v24 = vld [vmem:[%s1 + $0x14] sm:$0xf]
  %v25 = vld [vmem:[%s1 + $0x18] sm:$0xf]
  %v26 = vld [vmem:[%s1 + $0x1c] sm:$0xf]
  %v27 = vld [vmem:[%s1 + $0x20] sm:$0xf]
  %v28 = vld [vmem:[%s1 + $0x24] sm:$0xf]
  %v29 = vld [vmem:[%s1 + $0x28] sm:$0xf]
  %v30 = vld [vmem:[%s1 + $0x2c] sm:$0xf]
  %v31 = vld [vmem:[%s1 + $0x30] sm:$0xf]
  %v32 = vld [vmem:[%s1 + $0x34] sm:$0xf]
  %v33 = vld [vmem:[%s1 + $0x38] sm:$0xf]
  %v34 = vld [vmem:[%s1 + $0x3c] sm:$0xf]
  %v35 = vld [vmem:[%s1 + $0x40] sm:$0xf]
  %v36 = vld [vmem:[%s1 + $0x44] sm:$0xf]
  %v37 = vld [vmem:[%s1 + $0x48] sm:$0xf]
  %v38 = vld [vmem:[%s1 + $0x4c] sm:$0xf]
  %v39 = vld [vmem:[%s1 + $0x50] sm:$0xf]
  %v40 = vld [vmem:[%s1 + $0x54] sm:$0xf]
  %v41 = vld [vmem:[%s1 + $0x58] sm:$0xf]
  %v42 = vld [vmem:[%s1 + $0x5c] sm:$0xf]
  %v43 = vld [vmem:[%s1 + $0x60] sm:$0xf]
  %v44 = vld [vmem:[%s1 + $0x64] sm:$0xf]
  %v45 = vld [vmem:[%s1 + $0x68] sm:$0xf]
  %v46 = vld [vmem:[%s1 + $0x6c] sm:$0xf]
  %v47 = vld [vmem:[%s1 + $0x70] sm:$0xf]
  %v48 = vld [vmem:[%s1 + $0x74] sm:$0xf]
  %v49 = vld [vmem:[%s1 + $0x78] sm:$0xf]
  %v50 = vld [vmem:[%s1 + $0x7c] sm:$0xf]
  %v51 = vld [vmem:[%s1 + $0x80] sm:$0xf]
  %v52 = vld [vmem:[%s1 + $0x84] sm:$0xf]
  %v53 = vld [vmem:[%s1 + $0x88] sm:$0xf]
  %v54 = vld [vmem:[%s1 + $0x8c] sm:$0xf]
  %v55 = vld [vmem:[%s1 + $0x90] sm:$0xf]
  %v56 = vld [vmem:[%s1 + $0x94] sm:$0xf]
  %v57 = vld [vmem:[%s1 + $0x98] sm:$0xf]
  %v58 = vld [vmem:[%s1 + $0x9c] sm:$0xf]
  %v59 = vld [vmem:[%s1 + $0xa0] sm:$0xf]
  %v60 = vld [vmem:[%s1 + $0xa4] sm:$0xf]
  %v61 = vld [vmem:[%s1 + $0xa8] sm:$0xf]
  %v62 = vld [vmem:[%s1 + $0xac] sm:$0xf]
  %v63 = vld [vmem:[%s1 + $0xb0] sm:$0xf]
  %v64 = vld [vmem:[%s1 + $0xb4] sm:$0xf]
  %v65 = vld [vmem:[%s1 + $0xb8] sm:$0xf]
  %v66 = vld [vmem:[%s1 + $0xbc] sm:$0xf]
  %v67 = vld [vmem:[%s2] sm:$0x1]
  %v69 = vlaneseq
  %v70 = vshrl.u32 %v69, 7
  %v71 = vsub.s32 0, %v70
  %v72 = vrot.slane %v67, %v71
  %v78 = vunpack.c.l.b16 %v15
  %v79 = vunpack.c.h.b16 %v15
  %v80 = vunpack.c.l.b16 %v16
  %v81 = vunpack.c.l.b16 %v17
  %v82 = vunpack.c.h.b16 %v17
  %v83 = vunpack.c.l.b16 %v18
  %v84 = vpack.c.b16 %v81, %v78
  %v85 = vpack.c.b16 %v82, %v79
  %v86 = vpack.c.b16 %v83, %v80
  %v138 = vunpack.c.l.b16 %v19
  %v139 = vunpack.c.l.b16 %v20
  %v140 = vunpack.c.l.b16 %v21
  %v141 = vunpack.c.l.b16 %v22
  %v142 = vunpack.c.l.b16 %v23
  %v143 = vunpack.c.l.b16 %v24
  %v144 = vunpack.c.l.b16 %v25
  %v145 = vunpack.c.l.b16 %v26
  %v146 = vunpack.c.l.b16 %v27
  %v147 = vunpack.c.l.b16 %v28
  %v148 = vunpack.c.l.b16 %v29
  %v149 = vunpack.c.l.b16 %v30
  %v150 = vunpack.c.l.b16 %v31
  %v151 = vunpack.c.l.b16 %v32
  %v152 = vunpack.c.l.b16 %v33
  %v153 = vunpack.c.l.b16 %v34
  %v154 = vunpack.c.l.b16 %v35
  %v155 = vunpack.c.l.b16 %v36
  %v156 = vunpack.c.l.b16 %v37
  %v157 = vunpack.c.l.b16 %v38
  %v158 = vunpack.c.l.b16 %v39
  %v159 = vunpack.c.l.b16 %v40
  %v160 = vunpack.c.l.b16 %v41
  %v161 = vunpack.c.l.b16 %v42
  %v162 = vunpack.c.l.b16 %v43
  %v163 = vunpack.c.l.b16 %v44
  %v164 = vunpack.c.l.b16 %v45
  %v165 = vunpack.c.l.b16 %v46
  %v166 = vunpack.c.l.b16 %v47
  %v167 = vunpack.c.l.b16 %v48
  %v168 = vunpack.c.l.b16 %v49
  %v169 = vunpack.c.l.b16 %v50
  %v170 = vunpack.c.l.b16 %v51
  %v171 = vunpack.c.l.b16 %v52
  %v172 = vunpack.c.l.b16 %v53
  %v173 = vunpack.c.l.b16 %v54
  %v174 = vunpack.c.l.b16 %v55
  %v175 = vunpack.c.l.b16 %v56
  %v176 = vunpack.c.l.b16 %v57
  %v177 = vunpack.c.l.b16 %v58
  %v178 = vunpack.c.l.b16 %v59
  %v179 = vunpack.c.l.b16 %v60
  %v180 = vunpack.c.l.b16 %v61
  %v181 = vunpack.c.l.b16 %v62
  %v182 = vunpack.c.l.b16 %v63
  %v183 = vunpack.c.l.b16 %v64
  %v184 = vunpack.c.l.b16 %v65
  %v185 = vunpack.c.l.b16 %v66
  %v186 = vpack.c.b16 %v139, %v138
  %v187 = vpack.c.b16 %v141, %v140
  %v188 = vpack.c.b16 %v143, %v142
  %v189 = vpack.c.b16 %v145, %v144
  %v190 = vpack.c.b16 %v147, %v146
  %v191 = vpack.c.b16 %v149, %v148
  %v192 = vpack.c.b16 %v151, %v150
  %v193 = vpack.c.b16 %v153, %v152
  %v194 = vpack.c.b16 %v155, %v154
  %v195 = vpack.c.b16 %v157, %v156
  %v196 = vpack.c.b16 %v159, %v158
  %v197 = vpack.c.b16 %v161, %v160
  %v198 = vpack.c.b16 %v163, %v162
  %v199 = vpack.c.b16 %v165, %v164
  %v200 = vpack.c.b16 %v167, %v166
  %v201 = vpack.c.b16 %v169, %v168
  %v202 = vpack.c.b16 %v171, %v170
  %v203 = vpack.c.b16 %v173, %v172
  %v204 = vpack.c.b16 %v175, %v174
  %v205 = vpack.c.b16 %v177, %v176
  %v206 = vpack.c.b16 %v179, %v178
  %v207 = vpack.c.b16 %v181, %v180
  %v208 = vpack.c.b16 %v183, %v182
  %v209 = vpack.c.b16 %v185, %v184
  %234 = vmatprep.subr.bf16.mxu0 0
  %235 = vmatpush1.bf16.msra.mxu0 %v186
  %236 = vmatprep.subr.bf16.mxu0 0
  %237 = vmatpush1.bf16.msra.mxu0 %v187
  %238 = vmatprep.subr.bf16.mxu0 0
  %239 = vmatpush1.bf16.msra.mxu0 %v188
  %240 = vmatprep.subr.bf16.mxu0 0
  %241 = vmatpush1.bf16.msra.mxu0 %v189
  %242 = vmatprep.subr.bf16.mxu0 0
  %243 = vmatpush1.bf16.msra.mxu0 %v190
  %244 = vmatprep.subr.bf16.mxu0 0
  %245 = vmatpush1.bf16.msra.mxu0 %v191
  %246 = vmatprep.subr.bf16.mxu0 0
  %247 = vmatpush1.bf16.msra.mxu0 %v192
  %248 = vmatprep.subr.bf16.mxu0 0
  %249 = vmatpush1.bf16.msra.mxu0 %v193
  %250 = vmatprep.subr.bf16.mxu0 0
  %251 = vmatpush1.bf16.msra.mxu0 %v194
  %252 = vmatprep.subr.bf16.mxu0 0
  %253 = vmatpush1.bf16.msra.mxu0 %v195
  %254 = vmatprep.subr.bf16.mxu0 0
  %255 = vmatpush1.bf16.msra.mxu0 %v196
  %256 = vmatprep.subr.bf16.mxu0 0
  %257 = vmatpush1.bf16.msra.mxu0 %v197
  %258 = vmatprep.subr.bf16.mxu0 0
  %259 = vmatpush1.bf16.msra.mxu0 %v198
  %260 = vmatprep.subr.bf16.mxu0 0
  %261 = vmatpush1.bf16.msra.mxu0 %v199
  %262 = vmatprep.subr.bf16.mxu0 0
  %263 = vmatpush1.bf16.msra.mxu0 %v200
  %264 = vmatprep.subr.bf16.mxu0 0
  %265 = vmatpush1.bf16.msra.mxu0 %v201
  %266 = vmatprep.mubr.bf16.mxu0 %v85
  %267 = vmatmul.mubr.bf16.gmra.mrb[0].mxu0 %v84
  %v268 = vpop.f32.mrb[0].mxu0
  %v269 = vadd.f32 %v72, %v268
  %v270 = vpop.f32.mrb[0].mxu0
  %v271 = vpop.f32.mrb[0].mxu0
  %v272 = vadd.f32 %v72, %v271
  %v273 = vpop.f32.mrb[0].mxu0
  %274 = vdwg.mxu0
  %275 = vmatprep.subr.bf16.mxu0 0
  %276 = vmatpush1.bf16.msra.mxu0 %v202
  %277 = vmatprep.subr.bf16.mxu0 0
  %278 = vmatpush1.bf16.msra.mxu0 %v203
  %279 = vmatprep.subr.bf16.mxu0 0
  %280 = vmatpush1.bf16.msra.mxu0 %v204
  %281 = vmatprep.subr.bf16.mxu0 0
  %282 = vmatpush1.bf16.msra.mxu0 %v205
  %283 = vmatprep.subr.bf16.mxu0 0
  %284 = vmatpush1.bf16.msra.mxu0 %v206
  %285 = vmatprep.subr.bf16.mxu0 0
  %286 = vmatpush1.bf16.msra.mxu0 %v207
  %287 = vmatprep.subr.bf16.mxu0 0
  %288 = vmatpush1.bf16.msra.mxu0 %v208
  %289 = vmatprep.subr.bf16.mxu0 0
  %290 = vmatpush1.bf16.msra.mxu0 %v209
  %291 = vmatprep.subr.bf16.mxu0 0
  %292 = vmatpush1.bf16.msra.mxu0 0
  %293 = vmatprep.subr.bf16.mxu0 0
  %294 = vmatpush1.bf16.msra.mxu0 0
  %295 = vmatprep.subr.bf16.mxu0 0
  %296 = vmatpush1.bf16.msra.mxu0 0
  %297 = vmatprep.subr.bf16.mxu0 0
  %298 = vmatpush1.bf16.msra.mxu0 0
  %299 = vmatprep.subr.bf16.mxu0 0
  %300 = vmatpush1.bf16.msra.mxu0 0
  %301 = vmatprep.subr.bf16.mxu0 0
  %302 = vmatpush1.bf16.msra.mxu0 0
  %303 = vmatprep.subr.bf16.mxu0 0
  %304 = vmatpush1.bf16.msra.mxu0 0
  %305 = vmatprep.subr.bf16.mxu0 0
  %306 = vmatpush1.bf16.msra.mxu0 0
  %307 = vmatprep.mubr.bf16.mxu0 0
  %308 = vmatmul.mubr.bf16.gmra.mrb[0].mxu0 %v86
  %v309 = vpop.f32.mrb[0].mxu0
  %v310 = vadd.f32 %v269, %v309
  %v311 = vpop.f32.mrb[0].mxu0
  %v312 = vpop.f32.mrb[0].mxu0
  %v313 = vadd.f32 %v272, %v312
  %v314 = vpop.f32.mrb[0].mxu0
  %315 = vdwg.mxu0
  %316 = vst [vmem:[%s3] sm:$0xff] %v310
  %317 = vst [vmem:[%s3 + $0x8] sm:$0xff] %v313
  // Predicated region
  $region14: #{dct_stream_forward.86} parent=0 // pred_check
    _
  $region15: #{dct_stream_forward.86} parent=0 // pred_check_branch
    %319 = sbr.rel (0) target = $region17
  $region16: #{dct_stream_forward.86} parent=0 // pred_region
    _
  $region17: #{dct_stream_forward.86} parent=0 // pred_fallthru
    _
  // Predicated region
  $region18: #{dct_stream_forward.86} parent=0 // pred_check
    _
  $region19: #{dct_stream_forward.86} parent=0 // pred_check_branch
    %321 = sbr.rel (0) target = $region21
  $region20: #{dct_stream_forward.86} parent=0 // pred_region
    _
  $region21: #{dct_stream_forward.86} parent=0 // pred_fallthru
    _

// kernel: dct_stream_forward.87
$region0: #{dct_stream_forward.87}
  #allocation0 [shape = 'u32[]', space=smem, size = 0x4, offset = 0x4, fixed_abs, tag = 'smem constant byte address 0x4 - core index']
  #allocation1 [shape = 'u32[144,128]{1,0:T(1,128)}', space=vmem, size = 0x12000, scoped, tag = 'internal scratch']
  %s0 = inlined_call_operand.vmem [shape: bf16[16,640], index: 0, kind: input, shape index: {}]
  %s1 = inlined_call_operand.vmem [shape: bf16[640,128], index: 1, kind: input, shape index: {}]
  %s2 = inlined_call_operand.vmem [shape: f32[1,128], index: 2, kind: input, shape index: {}]
  %s3 = inlined_call_operand.vmem [shape: f32[16,128], index: 3, kind: output, shape index: {}]
  %s4 = sld [smem:[#allocation0]]
  $region22: #{dct_stream_forward.87} parent=0
    _
  %s6 = ssub.s32 1, %s4
  %s7 = scalar_select 0, %s6, %s4
  // Predicated region
  $region2: #{dct_stream_forward.87} parent=0 // pred_check
    _
  $region3: #{dct_stream_forward.87} parent=0 // pred_check_branch
    %9 = sbr.rel (0) target = $region5
  $region4: #{dct_stream_forward.87} parent=0 // pred_region
    _
  $region5: #{dct_stream_forward.87} parent=0 // pred_fallthru
    _
  // Predicated region
  $region6: #{dct_stream_forward.87} parent=0 // pred_check
    _
  $region7: #{dct_stream_forward.87} parent=0 // pred_check_branch
    %11 = sbr.rel (0) target = $region9
  $region8: #{dct_stream_forward.87} parent=0 // pred_region
    _
  $region9: #{dct_stream_forward.87} parent=0 // pred_fallthru
    _
  // Predicated region
  $region10: #{dct_stream_forward.87} parent=0 // pred_check
    _
  $region11: #{dct_stream_forward.87} parent=0 // pred_check_branch
    %13 = sbr.rel (0) target = $region13
  $region12: #{dct_stream_forward.87} parent=0 // pred_region
    _
  $region13: #{dct_stream_forward.87} parent=0 // pred_fallthru
    _
  %v15 = vld [vmem:[%s0] sm:$0xff]
  %v16 = vld [vmem:[%s0 + $0x8] sm:$0xff]
  %v17 = vld [vmem:[%s0 + $0x10] sm:$0xf]
  %v18 = vld [vmem:[%s0 + $0x14] sm:$0xff]
  %v19 = vld [vmem:[%s0 + $0x1c] sm:$0xff]
  %v20 = vld [vmem:[%s0 + $0x24] sm:$0xf]
  %v21 = vld [vmem:[%s1] sm:$0xf]
  %v22 = vld [vmem:[%s1 + $0x4] sm:$0xf]
  %v23 = vld [vmem:[%s1 + $0x8] sm:$0xf]
  %v24 = vld [vmem:[%s1 + $0xc] sm:$0xf]
  %v25 = vld [vmem:[%s1 + $0x10] sm:$0xf]
  %v26 = vld [vmem:[%s1 + $0x14] sm:$0xf]
  %v27 = vld [vmem:[%s1 + $0x18] sm:$0xf]
  %v28 = vld [vmem:[%s1 + $0x1c] sm:$0xf]
  %v29 = vld [vmem:[%s1 + $0x20] sm:$0xf]
  %v30 = vld [vmem:[%s1 + $0x24] sm:$0xf]
  %v31 = vld [vmem:[%s1 + $0x28] sm:$0xf]
  %v32 = vld [vmem:[%s1 + $0x2c] sm:$0xf]
  %v33 = vld [vmem:[%s1 + $0x30] sm:$0xf]
  %v34 = vld [vmem:[%s1 + $0x34] sm:$0xf]
  %v35 = vld [vmem:[%s1 + $0x38] sm:$0xf]
  %v36 = vld [vmem:[%s1 + $0x3c] sm:$0xf]
  %v37 = vld [vmem:[%s1 + $0x40] sm:$0xf]
  %v38 = vld [vmem:[%s1 + $0x44] sm:$0xf]
  %v39 = vld [vmem:[%s1 + $0x48] sm:$0xf]
  %v40 = vld [vmem:[%s1 + $0x4c] sm:$0xf]
  %v41 = vld [vmem:[%s1 + $0x50] sm:$0xf]
  %v42 = vld [vmem:[%s1 + $0x54] sm:$0xf]
  %v43 = vld [vmem:[%s1 + $0x58] sm:$0xf]
  %v44 = vld [vmem:[%s1 + $0x5c] sm:$0xf]
  %v45 = vld [vmem:[%s1 + $0x60] sm:$0xf]
  %v46 = vld [vmem:[%s1 + $0x64] sm:$0xf]
  %v47 = vld [vmem:[%s1 + $0x68] sm:$0xf]
  %v48 = vld [vmem:[%s1 + $0x6c] sm:$0xf]
  %v49 = vld [vmem:[%s1 + $0x70] sm:$0xf]
  %v50 = vld [vmem:[%s1 + $0x74] sm:$0xf]
  %v51 = vld [vmem:[%s1 + $0x78] sm:$0xf]
  %v52 = vld [vmem:[%s1 + $0x7c] sm:$0xf]
  %v53 = vld [vmem:[%s1 + $0x80] sm:$0xf]
  %v54 = vld [vmem:[%s1 + $0x84] sm:$0xf]
  %v55 = vld [vmem:[%s1 + $0x88] sm:$0xf]
  %v56 = vld [vmem:[%s1 + $0x8c] sm:$0xf]
  %v57 = vld [vmem:[%s1 + $0x90] sm:$0xf]
  %v58 = vld [vmem:[%s1 + $0x94] sm:$0xf]
  %v59 = vld [vmem:[%s1 + $0x98] sm:$0xf]
  %v60 = vld [vmem:[%s1 + $0x9c] sm:$0xf]
  %v61 = vld [vmem:[%s1 + $0xa0] sm:$0xf]
  %v62 = vld [vmem:[%s1 + $0xa4] sm:$0xf]
  %v63 = vld [vmem:[%s1 + $0xa8] sm:$0xf]
  %v64 = vld [vmem:[%s1 + $0xac] sm:$0xf]
  %v65 = vld [vmem:[%s1 + $0xb0] sm:$0xf]
  %v66 = vld [vmem:[%s1 + $0xb4] sm:$0xf]
  %v67 = vld [vmem:[%s1 + $0xb8] sm:$0xf]
  %v68 = vld [vmem:[%s1 + $0xbc] sm:$0xf]
  %v69 = vld [vmem:[%s1 + $0xc0] sm:$0xf]
  %v70 = vld [vmem:[%s1 + $0xc4] sm:$0xf]
  %v71 = vld [vmem:[%s1 + $0xc8] sm:$0xf]
  %v72 = vld [vmem:[%s1 + $0xcc] sm:$0xf]
  %v73 = vld [vmem:[%s1 + $0xd0] sm:$0xf]
  %v74 = vld [vmem:[%s1 + $0xd4] sm:$0xf]
  %v75 = vld [vmem:[%s1 + $0xd8] sm:$0xf]
  %v76 = vld [vmem:[%s1 + $0xdc] sm:$0xf]
  %v77 = vld [vmem:[%s1 + $0xe0] sm:$0xf]
  %v78 = vld [vmem:[%s1 + $0xe4] sm:$0xf]
  %v79 = vld [vmem:[%s1 + $0xe8] sm:$0xf]
  %v80 = vld [vmem:[%s1 + $0xec] sm:$0xf]
  %v81 = vld [vmem:[%s1 + $0xf0] sm:$0xf]
  %v82 = vld [vmem:[%s1 + $0xf4] sm:$0xf]
  %v83 = vld [vmem:[%s1 + $0xf8] sm:$0xf]
  %v84 = vld [vmem:[%s1 + $0xfc] sm:$0xf]
  %v85 = vld [vmem:[%s1 + $0x100] sm:$0xf]
  %v86 = vld [vmem:[%s1 + $0x104] sm:$0xf]
  %v87 = vld [vmem:[%s1 + $0x108] sm:$0xf]
  %v88 = vld [vmem:[%s1 + $0x10c] sm:$0xf]
  %v89 = vld [vmem:[%s1 + $0x110] sm:$0xf]
  %v90 = vld [vmem:[%s1 + $0x114] sm:$0xf]
  %v91 = vld [vmem:[%s1 + $0x118] sm:$0xf]
  %v92 = vld [vmem:[%s1 + $0x11c] sm:$0xf]
  %v93 = vld [vmem:[%s1 + $0x120] sm:$0xf]
  %v94 = vld [vmem:[%s1 + $0x124] sm:$0xf]
  %v95 = vld [vmem:[%s1 + $0x128] sm:$0xf]
  %v96 = vld [vmem:[%s1 + $0x12c] sm:$0xf]
  %v97 = vld [vmem:[%s1 + $0x130] sm:$0xf]
  %v98 = vld [vmem:[%s1 + $0x134] sm:$0xf]
  %v99 = vld [vmem:[%s1 + $0x138] sm:$0xf]
  %v100 = vld [vmem:[%s1 + $0x13c] sm:$0xf]
  %v101 = vld [vmem:[%s2] sm:$0x1]
  %v103 = vlaneseq
  %v104 = vshrl.u32 %v103, 7
  %v105 = vsub.s32 0, %v104
  %v106 = vrot.slane %v101, %v105
  %v114 = vunpack.c.l.b16 %v15
  %v115 = vunpack.c.h.b16 %v15
  %v116 = vunpack.c.l.b16 %v16
  %v117 = vunpack.c.h.b16 %v16
  %v118 = vunpack.c.l.b16 %v17
  %v119 = vunpack.c.l.b16 %v18
  %v120 = vunpack.c.h.b16 %v18
  %v121 = vunpack.c.l.b16 %v19
  %v122 = vunpack.c.h.b16 %v19
  %v123 = vunpack.c.l.b16 %v20
  %v124 = vpack.c.b16 %v119, %v114
  %v125 = vpack.c.b16 %v120, %v115
  %v126 = vpack.c.b16 %v121, %v116
  %v127 = vpack.c.b16 %v122, %v117
  %v128 = vpack.c.b16 %v123, %v118
  %v214 = vunpack.c.l.b16 %v21
  %v215 = vunpack.c.l.b16 %v22
  %v216 = vunpack.c.l.b16 %v23
  %v217 = vunpack.c.l.b16 %v24
  %v218 = vunpack.c.l.b16 %v25
  %v219 = vunpack.c.l.b16 %v26
  %v220 = vunpack.c.l.b16 %v27
  %v221 = vunpack.c.l.b16 %v28
  %v222 = vunpack.c.l.b16 %v29
  %v223 = vunpack.c.l.b16 %v30
  %v224 = vunpack.c.l.b16 %v31
  %v225 = vunpack.c.l.b16 %v32
  %v226 = vunpack.c.l.b16 %v33
  %v227 = vunpack.c.l.b16 %v34
  %v228 = vunpack.c.l.b16 %v35
  %v229 = vunpack.c.l.b16 %v36
  %v230 = vunpack.c.l.b16 %v37
  %v231 = vunpack.c.l.b16 %v38
  %v232 = vunpack.c.l.b16 %v39
  %v233 = vunpack.c.l.b16 %v40
  %v234 = vunpack.c.l.b16 %v41
  %v235 = vunpack.c.l.b16 %v42
  %v236 = vunpack.c.l.b16 %v43
  %v237 = vunpack.c.l.b16 %v44
  %v238 = vunpack.c.l.b16 %v45
  %v239 = vunpack.c.l.b16 %v46
  %v240 = vunpack.c.l.b16 %v47
  %v241 = vunpack.c.l.b16 %v48
  %v242 = vunpack.c.l.b16 %v49
  %v243 = vunpack.c.l.b16 %v50
  %v244 = vunpack.c.l.b16 %v51
  %v245 = vunpack.c.l.b16 %v52
  %v246 = vunpack.c.l.b16 %v53
  %v247 = vunpack.c.l.b16 %v54
  %v248 = vunpack.c.l.b16 %v55
  %v249 = vunpack.c.l.b16 %v56
  %v250 = vunpack.c.l.b16 %v57
  %v251 = vunpack.c.l.b16 %v58
  %v252 = vunpack.c.l.b16 %v59
  %v253 = vunpack.c.l.b16 %v60
  %v254 = vunpack.c.l.b16 %v61
  %v255 = vunpack.c.l.b16 %v62
  %v256 = vunpack.c.l.b16 %v63
  %v257 = vunpack.c.l.b16 %v64
  %v258 = vunpack.c.l.b16 %v65
  %v259 = vunpack.c.l.b16 %v66
  %v260 = vunpack.c.l.b16 %v67
  %v261 = vunpack.c.l.b16 %v68
  %v262 = vunpack.c.l.b16 %v69
  %v263 = vunpack.c.l.b16 %v70
  %v264 = vunpack.c.l.b16 %v71
  %v265 = vunpack.c.l.b16 %v72
  %v266 = vunpack.c.l.b16 %v73
  %v267 = vunpack.c.l.b16 %v74
  %v268 = vunpack.c.l.b16 %v75
  %v269 = vunpack.c.l.b16 %v76
  %v270 = vunpack.c.l.b16 %v77
  %v271 = vunpack.c.l.b16 %v78
  %v272 = vunpack.c.l.b16 %v79
  %v273 = vunpack.c.l.b16 %v80
  %v274 = vunpack.c.l.b16 %v81
  %v275 = vunpack.c.l.b16 %v82
  %v276 = vunpack.c.l.b16 %v83
  %v277 = vunpack.c.l.b16 %v84
  %v278 = vunpack.c.l.b16 %v85
  %v279 = vunpack.c.l.b16 %v86
  %v280 = vunpack.c.l.b16 %v87
  %v281 = vunpack.c.l.b16 %v88
  %v282 = vunpack.c.l.b16 %v89
  %v283 = vunpack.c.l.b16 %v90
  %v284 = vunpack.c.l.b16 %v91
  %v285 = vunpack.c.l.b16 %v92
  %v286 = vunpack.c.l.b16 %v93
  %v287 = vunpack.c.l.b16 %v94
  %v288 = vunpack.c.l.b16 %v95
  %v289 = vunpack.c.l.b16 %v96
  %v290 = vunpack.c.l.b16 %v97
  %v291 = vunpack.c.l.b16 %v98
  %v292 = vunpack.c.l.b16 %v99
  %v293 = vunpack.c.l.b16 %v100
  %v294 = vpack.c.b16 %v215, %v214
  %v295 = vpack.c.b16 %v217, %v216
  %v296 = vpack.c.b16 %v219, %v218
  %v297 = vpack.c.b16 %v221, %v220
  %v298 = vpack.c.b16 %v223, %v222
  %v299 = vpack.c.b16 %v225, %v224
  %v300 = vpack.c.b16 %v227, %v226
  %v301 = vpack.c.b16 %v229, %v228
  %v302 = vpack.c.b16 %v231, %v230
  %v303 = vpack.c.b16 %v233, %v232
  %v304 = vpack.c.b16 %v235, %v234
  %v305 = vpack.c.b16 %v237, %v236
  %v306 = vpack.c.b16 %v239, %v238
  %v307 = vpack.c.b16 %v241, %v240
  %v308 = vpack.c.b16 %v243, %v242
  %v309 = vpack.c.b16 %v245, %v244
  %v310 = vpack.c.b16 %v247, %v246
  %v311 = vpack.c.b16 %v249, %v248
  %v312 = vpack.c.b16 %v251, %v250
  %v313 = vpack.c.b16 %v253, %v252
  %v314 = vpack.c.b16 %v255, %v254
  %v315 = vpack.c.b16 %v257, %v256
  %v316 = vpack.c.b16 %v259, %v258
  %v317 = vpack.c.b16 %v261, %v260
  %v318 = vpack.c.b16 %v263, %v262
  %v319 = vpack.c.b16 %v265, %v264
  %v320 = vpack.c.b16 %v267, %v266
  %v321 = vpack.c.b16 %v269, %v268
  %v322 = vpack.c.b16 %v271, %v270
  %v323 = vpack.c.b16 %v273, %v272
  %v324 = vpack.c.b16 %v275, %v274
  %v325 = vpack.c.b16 %v277, %v276
  %v326 = vpack.c.b16 %v279, %v278
  %v327 = vpack.c.b16 %v281, %v280
  %v328 = vpack.c.b16 %v283, %v282
  %v329 = vpack.c.b16 %v285, %v284
  %v330 = vpack.c.b16 %v287, %v286
  %v331 = vpack.c.b16 %v289, %v288
  %v332 = vpack.c.b16 %v291, %v290
  %v333 = vpack.c.b16 %v293, %v292
  %374 = vmatprep.subr.bf16.mxu0 0
  %375 = vmatpush1.bf16.msra.mxu0 %v294
  %376 = vmatprep.subr.bf16.mxu0 0
  %377 = vmatpush1.bf16.msra.mxu0 %v295
  %378 = vmatprep.subr.bf16.mxu0 0
  %379 = vmatpush1.bf16.msra.mxu0 %v296
  %380 = vmatprep.subr.bf16.mxu0 0
  %381 = vmatpush1.bf16.msra.mxu0 %v297
  %382 = vmatprep.subr.bf16.mxu0 0
  %383 = vmatpush1.bf16.msra.mxu0 %v298
  %384 = vmatprep.subr.bf16.mxu0 0
  %385 = vmatpush1.bf16.msra.mxu0 %v299
  %386 = vmatprep.subr.bf16.mxu0 0
  %387 = vmatpush1.bf16.msra.mxu0 %v300
  %388 = vmatprep.subr.bf16.mxu0 0
  %389 = vmatpush1.bf16.msra.mxu0 %v301
  %390 = vmatprep.subr.bf16.mxu0 0
  %391 = vmatpush1.bf16.msra.mxu0 %v302
  %392 = vmatprep.subr.bf16.mxu0 0
  %393 = vmatpush1.bf16.msra.mxu0 %v303
  %394 = vmatprep.subr.bf16.mxu0 0
  %395 = vmatpush1.bf16.msra.mxu0 %v304
  %396 = vmatprep.subr.bf16.mxu0 0
  %397 = vmatpush1.bf16.msra.mxu0 %v305
  %398 = vmatprep.subr.bf16.mxu0 0
  %399 = vmatpush1.bf16.msra.mxu0 %v306
  %400 = vmatprep.subr.bf16.mxu0 0
  %401 = vmatpush1.bf16.msra.mxu0 %v307
  %402 = vmatprep.subr.bf16.mxu0 0
  %403 = vmatpush1.bf16.msra.mxu0 %v308
  %404 = vmatprep.subr.bf16.mxu0 0
  %405 = vmatpush1.bf16.msra.mxu0 %v309
  %406 = vmatprep.mubr.bf16.mxu0 %v125
  %407 = vmatmul.mubr.bf16.gmra.mrb[0].mxu0 %v124
  %v408 = vpop.f32.mrb[0].mxu0
  %v409 = vadd.f32 %v106, %v408
  %v410 = vpop.f32.mrb[0].mxu0
  %v411 = vpop.f32.mrb[0].mxu0
  %v412 = vadd.f32 %v106, %v411
  %v413 = vpop.f32.mrb[0].mxu0
  %414 = vdwg.mxu0
  %415 = vmatprep.subr.bf16.mxu0 0
  %416 = vmatpush1.bf16.msra.mxu0 %v310
  %417 = vmatprep.subr.bf16.mxu0 0
  %418 = vmatpush1.bf16.msra.mxu0 %v311
  %419 = vmatprep.subr.bf16.mxu0 0
  %420 = vmatpush1.bf16.msra.mxu0 %v312
  %421 = vmatprep.subr.bf16.mxu0 0
  %422 = vmatpush1.bf16.msra.mxu0 %v313
  %423 = vmatprep.subr.bf16.mxu0 0
  %424 = vmatpush1.bf16.msra.mxu0 %v314
  %425 = vmatprep.subr.bf16.mxu0 0
  %426 = vmatpush1.bf16.msra.mxu0 %v315
  %427 = vmatprep.subr.bf16.mxu0 0
  %428 = vmatpush1.bf16.msra.mxu0 %v316
  %429 = vmatprep.subr.bf16.mxu0 0
  %430 = vmatpush1.bf16.msra.mxu0 %v317
  %431 = vmatprep.subr.bf16.mxu0 0
  %432 = vmatpush1.bf16.msra.mxu0 %v318
  %433 = vmatprep.subr.bf16.mxu0 0
  %434 = vmatpush1.bf16.msra.mxu0 %v319
  %435 = vmatprep.subr.bf16.mxu0 0
  %436 = vmatpush1.bf16.msra.mxu0 %v320
  %437 = vmatprep.subr.bf16.mxu0 0
  %438 = vmatpush1.bf16.msra.mxu0 %v321
  %439 = vmatprep.subr.bf16.mxu0 0
  %440 = vmatpush1.bf16.msra.mxu0 %v322
  %441 = vmatprep.subr.bf16.mxu0 0
  %442 = vmatpush1.bf16.msra.mxu0 %v323
  %443 = vmatprep.subr.bf16.mxu0 0
  %444 = vmatpush1.bf16.msra.mxu0 %v324
  %445 = vmatprep.subr.bf16.mxu0 0
  %446 = vmatpush1.bf16.msra.mxu0 %v325
  %447 = vmatprep.mubr.bf16.mxu0 %v127
  %448 = vmatmul.mubr.bf16.gmra.mrb[0].mxu0 %v126
  %v449 = vpop.f32.mrb[0].mxu0
  %v450 = vadd.f32 %v409, %v449
  %v451 = vpop.f32.mrb[0].mxu0
  %v452 = vpop.f32.mrb[0].mxu0
  %v453 = vadd.f32 %v412, %v452
  %v454 = vpop.f32.mrb[0].mxu0
  %455 = vdwg.mxu0
  %456 = vmatprep.subr.bf16.mxu0 0
  %457 = vmatpush1.bf16.msra.mxu0 %v326
  %458 = vmatprep.subr.bf16.mxu0 0
  %459 = vmatpush1.bf16.msra.mxu0 %v327
  %460 = vmatprep.subr.bf16.mxu0 0
  %461 = vmatpush1.bf16.msra.mxu0 %v328
  %462 = vmatprep.subr.bf16.mxu0 0
  %463 = vmatpush1.bf16.msra.mxu0 %v329
  %464 = vmatprep.subr.bf16.mxu0 0
  %465 = vmatpush1.bf16.msra.mxu0 %v330
  %466 = vmatprep.subr.bf16.mxu0 0
  %467 = vmatpush1.bf16.msra.mxu0 %v331
  %468 = vmatprep.subr.bf16.mxu0 0
  %469 = vmatpush1.bf16.msra.mxu0 %v332
  %470 = vmatprep.subr.bf16.mxu0 0
  %471 = vmatpush1.bf16.msra.mxu0 %v333
  %472 = vmatprep.subr.bf16.mxu0 0
  %473 = vmatpush1.bf16.msra.mxu0 0
  %474 = vmatprep.subr.bf16.mxu0 0
  %475 = vmatpush1.bf16.msra.mxu0 0
  %476 = vmatprep.subr.bf16.mxu0 0
  %477 = vmatpush1.bf16.msra.mxu0 0
  %478 = vmatprep.subr.bf16.mxu0 0
  %479 = vmatpush1.bf16.msra.mxu0 0
  %480 = vmatprep.subr.bf16.mxu0 0
  %481 = vmatpush1.bf16.msra.mxu0 0
  %482 = vmatprep.subr.bf16.mxu0 0
  %483 = vmatpush1.bf16.msra.mxu0 0
  %484 = vmatprep.subr.bf16.mxu0 0
  %485 = vmatpush1.bf16.msra.mxu0 0
  %486 = vmatprep.subr.bf16.mxu0 0
  %487 = vmatpush1.bf16.msra.mxu0 0
  %488 = vmatprep.mubr.bf16.mxu0 0
  %489 = vmatmul.mubr.bf16.gmra.mrb[0].mxu0 %v128
  %v490 = vpop.f32.mrb[0].mxu0
  %v491 = vadd.f32 %v450, %v490
  %v492 = vpop.f32.mrb[0].mxu0
  %v493 = vpop.f32.mrb[0].mxu0
  %v494 = vadd.f32 %v453, %v493
  %v495 = vpop.f32.mrb[0].mxu0
  %496 = vdwg.mxu0
  %497 = vst [vmem:[%s3] sm:$0xff] %v491
  %498 = vst [vmem:[%s3 + $0x8] sm:$0xff] %v494
  // Predicated region
  $region14: #{dct_stream_forward.87} parent=0 // pred_check
    _
  $region15: #{dct_stream_forward.87} parent=0 // pred_check_branch
    %500 = sbr.rel (0) target = $region17
  $region16: #{dct_stream_forward.87} parent=0 // pred_region
    _
  $region17: #{dct_stream_forward.87} parent=0 // pred_fallthru
    _
  // Predicated region
  $region18: #{dct_stream_forward.87} parent=0 // pred_check
    _
  $region19: #{dct_stream_forward.87} parent=0 // pred_check_branch
    %502 = sbr.rel (0) target = $region21
  $region20: #{dct_stream_forward.87} parent=0 // pred_region
    _
  $region21: #{dct_stream_forward.87} parent=0 // pred_fallthru
    _

// kernel: dct_stream_forward.77
$region0: #{dct_stream_forward.77}
  #allocation0 [shape = 'u32[]', space=smem, size = 0x4, offset = 0x4, fixed_abs, tag = 'smem constant byte address 0x4 - core index']
  #allocation1 [shape = 'u32[144,128]{1,0:T(1,128)}', space=vmem, size = 0x12000, scoped, tag = 'internal scratch']
  #allocation2 [shape = 'f32[16,128]{1,0:T(8,128)}', space=vmem, size = 0x2000, scoped, tag = 'scratch operand']
  %s0 = inlined_call_operand.vmem [shape: bf16[16,1536], index: 0, kind: input, shape index: {}]
  %s1 = inlined_call_operand.vmem [shape: bf16[1536,128], index: 1, kind: input, shape index: {}]
  %s2 = inlined_call_operand.vmem [shape: f32[1,128], index: 2, kind: input, shape index: {}]
  %s3 = inlined_call_operand.vmem [shape: f32[16,128], index: 3, kind: output, shape index: {}]
  %s4 = sld [smem:[#allocation0]]
  $region76: #{dct_stream_forward.77} parent=0
    _
  %s6 = ssub.s32 1, %s4
  %s7 = scalar_select 0, %s6, %s4
  $region1: #{dct_stream_forward.77} parent=0
    #allocation3 [shape = 'u8[32768]{0}', space=vmem, size = 0x8000, scoped, tag = 'input window, operand 0']
    loop: start=0, step=1, limit=5
    $region2: #{dct_stream_forward.77} parent=1 // loop_pre_header
      _
    $region3: #{dct_stream_forward.77} parent=1 // loop_header
      %s9 = sphi 0, %s13
      %p10 = scmp.ge.s32.totalorder %s9, 5
      %s16 = sphi 0, %s28
      %s17 = sphi 0, %s24
      %s18 = sphi 0, %s16
      %s19 = sphi 0, %s17
      %s20 = sphi 0, %s18
      %s21 = sphi 0, %s19
      %s33 = sphi 0, %s35
      %s36 = sphi 0, %s33
      %s37 = sphi 0, %s36
      %s53 = sphi 0, %s37
      %s59 = sphi 0, %s61
      %s62 = sphi 0, %s59
      %s63 = sphi 0, %s62
      %s79 = sphi 0, %s63
      %s83 = sphi 0, %s83
      %s85 = sphi 0, %s83
      %s86 = sphi 0, %s85
      %s100 = sphi 0, %s86
      %s106 = sphi 0, %s108
      %s109 = sphi 0, %s106
      %s110 = sphi 0, %s109
      %s126 = sphi 0, %s110
    $region4: #{dct_stream_forward.77} parent=1 // loop_header_branch
      %12 = sbr.rel (%p10) target = $region8
    $region5: #{dct_stream_forward.77} parent=1 // loop_body
      %s14 = ssub.s32 %s9, 1
      %s15 = ssub.s32 %s9, 2
      %s22 = sadd.s32 1, %s17
      %p23 = scmp.ge.s32.totalorder %s22, 3
      %s24 = scalar_select %p23, 0, %s22
      %s25 = sadd.s32 1, %s16
      %s26 = scalar_select %p23, %s25, %s16
      %p27 = scmp.ge.s32.totalorder %s26, 1
      %s28 = scalar_select %p27, 0, %s26
      %s29 = ssub.s32 %s16, %s28
      %s30 = ssub.s32 %s17, %s24
      %s31 = sor.u32 %s29, %s30
      %p32 = scmp.eq.s32.totalorder %s31, 0
      %s34 = sadd.s32 %s33, 1
      %s35 = scalar_select %p32, %s33, %s34
      %p38 = pneg %p32
      %p39 = scmp.eq.s32.totalorder %s9, 2
      %p40 = por %p38, %p39
      %p41 = scmp.ne.s32.totalorder %s33, %s36
      %p42 = scmp.eq.s32.totalorder %s9, 0
      %p43 = por %p41, %p42
      %p44 = scmp.ne.s32.totalorder %s33, %s36
      %p45 = scmp.eq.s32.totalorder %s14, 2
      %p46 = por %p44, %p45
      %p47 = scmp.ne.s32.totalorder %s36, %s37
      %p48 = scmp.eq.s32.totalorder %s14, 0
      %p49 = por %p47, %p48
      %p50 = scmp.ne.s32.totalorder %s36, %s37
      %p51 = scmp.eq.s32.totalorder %s15, 2
      %p52 = por %p50, %p51
      %p54 = scmp.ne.s32.totalorder %s37, %s53
      %p55 = scmp.eq.s32.totalorder %s15, 0
      %p56 = por %p54, %p55
      %s57 = ssub.s32 %s17, %s24
      %p58 = scmp.eq.s32.totalorder %s57, 0
      %s60 = sadd.s32 %s59, 1
      %s61 = scalar_select %p58, %s59, %s60
      %p64 = pneg %p58
      %p65 = scmp.eq.s32.totalorder %s9, 2
      %p66 = por %p64, %p65
      %p67 = scmp.ne.s32.totalorder %s59, %s62
      %p68 = scmp.eq.s32.totalorder %s9, 0
      %p69 = por %p67, %p68
      %p70 = scmp.ne.s32.totalorder %s59, %s62
      %p71 = scmp.eq.s32.totalorder %s14, 2
      %p72 = por %p70, %p71
      %p73 = scmp.ne.s32.totalorder %s62, %s63
      %p74 = scmp.eq.s32.totalorder %s14, 0
      %p75 = por %p73, %p74
      %p76 = scmp.ne.s32.totalorder %s62, %s63
      %p77 = scmp.eq.s32.totalorder %s15, 2
      %p78 = por %p76, %p77
      %p80 = scmp.ne.s32.totalorder %s63, %s79
      %p81 = scmp.eq.s32.totalorder %s15, 0
      %p82 = por %p80, %p81
      %s84 = sadd.s32 %s83, 1
      %p87 = scmp.eq.s32.totalorder %s9, 2
      %p88 = scmp.ne.s32.totalorder %s83, %s85
      %p89 = scmp.eq.s32.totalorder %s9, 0
      %p90 = por %p88, %p89
      %p91 = scmp.ne.s32.totalorder %s83, %s85
      %p92 = scmp.eq.s32.totalorder %s14, 2
      %p93 = por %p91, %p92
      %p94 = scmp.ne.s32.totalorder %s85, %s86
      %p95 = scmp.eq.s32.totalorder %s14, 0
      %p96 = por %p94, %p95
      %p97 = scmp.ne.s32.totalorder %s85, %s86
      %p98 = scmp.eq.s32.totalorder %s15, 2
      %p99 = por %p97, %p98
      %p101 = scmp.ne.s32.totalorder %s86, %s100
      %p102 = scmp.eq.s32.totalorder %s15, 0
      %p103 = por %p101, %p102
      %s104 = ssub.s32 %s16, %s28
      %p105 = scmp.eq.s32.totalorder %s104, 0
      %s107 = sadd.s32 %s106, 1
      %s108 = scalar_select %p105, %s106, %s107
      %p111 = pneg %p105
      %p112 = scmp.eq.s32.totalorder %s9, 2
      %p113 = por %p111, %p112
      %p114 = scmp.ne.s32.totalorder %s106, %s109
      %p115 = scmp.eq.s32.totalorder %s9, 0
      %p116 = por %p114, %p115
      %p117 = scmp.ne.s32.totalorder %s106, %s109
      %p118 = scmp.eq.s32.totalorder %s14, 2
      %p119 = por %p117, %p118
      %p120 = scmp.ne.s32.totalorder %s109, %s110
      %p121 = scmp.eq.s32.totalorder %s14, 0
      %p122 = por %p120, %p121
      %p123 = scmp.ne.s32.totalorder %s109, %s110
      %p124 = scmp.eq.s32.totalorder %s15, 2
      %p125 = por %p123, %p124
      %p127 = scmp.ne.s32.totalorder %s110, %s126
      %p128 = scmp.eq.s32.totalorder %s15, 0
      %p129 = por %p127, %p128
      %p130 = scmp.le.s32.totalorder 1, %s9
      %p131 = scmp.lt.s32.totalorder %s9, 4
      %p132 = pnand %p130, %p131
      %p133 = pneg %p132
      // Predicated region
      $region9: #{dct_stream_forward.77} parent=5 // pred_check
        _
      $region10: #{dct_stream_forward.77} parent=5 // pred_check_branch
        %135 = sbr.rel (%p132) target = $region12
      $region11: #{dct_stream_forward.77} parent=5 // pred_region
        %s136 = ssub.s32 %s9, 1
        // Predicated region
        $region13: #{dct_stream_forward.77} parent=11 // pred_check
          %p137 = pneg %p96
        $region14: #{dct_stream_forward.77} parent=11 // pred_check_branch
          %139 = sbr.rel (%p137) target = $region16
        $region15: #{dct_stream_forward.77} parent=11 // pred_region
          _
        $region16: #{dct_stream_forward.77} parent=11 // pred_fallthru
          _
      $region12: #{dct_stream_forward.77} parent=5 // pred_fallthru
        _
      %p140 = scmp.lt.s32.totalorder %s9, 3
      // Predicated region
      $region17: #{dct_stream_forward.77} parent=5 // pred_check
        %p141 = pneg %p140
      $region18: #{dct_stream_forward.77} parent=5 // pred_check_branch
        %143 = sbr.rel (%p141) target = $region20
      $region19: #{dct_stream_forward.77} parent=5 // pred_region
        // Predicated region
        $region21: #{dct_stream_forward.77} parent=19 // pred_check
          %p144 = pneg %p43
        $region22: #{dct_stream_forward.77} parent=19 // pred_check_branch
          %146 = sbr.rel (%p144) target = $region24
        $region23: #{dct_stream_forward.77} parent=19 // pred_region
          %s147 = sand.u32 %s33, 1
          %s148 = sand.u32 %s33, 1
          %s149 = smul.addr %s148, 32
          %s150 = scalar_lea.vmem [#allocation3], %s149
          %s151 = smul.u32 2, %s16
          %s152 = smul.u32 4, %s17
          %s153 = smul.addr %s151, 12
          %s154 = sadd.s32 %s152, %s153
          %s155 = smul.addr %s154, 4
          %s156 = scalar_lea.vmem %s0, %s155
          // Predicated region
          $region25: #{dct_stream_forward.77} parent=23 // pred_check
            _
          $region26: #{dct_stream_forward.77} parent=23 // pred_check_branch
            %158 = sbr.rel (0) target = $region28
          $region27: #{dct_stream_forward.77} parent=23 // pred_region
            // Predicated region
            $region29: #{dct_stream_forward.77} parent=27 // pred_check
              _
            $region30: #{dct_stream_forward.77} parent=27 // pred_check_branch
              %160 = sbr.rel (0) target = $region32
            $region31: #{dct_stream_forward.77} parent=27 // pred_region
              loop: start=0, step=1, limit=1
              $region33: #{dct_stream_forward.77} parent=31 // loop_pre_header
                _
              $region34: #{dct_stream_forward.77} parent=31 // loop_header
                %s162 = sphi 0, %s166
                %p163 = scmp.ge.s32.totalorder %s162, 1
                %s167 = sphi %s156, %s156
                %s168 = sphi %s150, %s150
              $region35: #{dct_stream_forward.77} parent=31 // loop_header_branch
                %165 = sbr.rel (%p163) target = $region39
              $region36: #{dct_stream_forward.77} parent=31 // loop_body
                %v169 = vld [vmem:[%s167] sm:$0xff]
                %170 = vst [vmem:[%s168] sm:$0xff] %v169
                %v171 = vld [vmem:[%s167 + $0x8] sm:$0xff]
                %172 = vst [vmem:[%s168 + $0x8] sm:$0xff] %v171
                %v173 = vld [vmem:[%s167 + $0x30] sm:$0xff]
                %174 = vst [vmem:[%s168 + $0x10] sm:$0xff] %v173
                %v175 = vld [vmem:[%s167 + $0x38] sm:$0xff]
                %176 = vst [vmem:[%s168 + $0x18] sm:$0xff] %v175
              $region37: #{dct_stream_forward.77} parent=31 // loop_footer
                %s166 = sadd.s32 1, %s162
              $region38: #{dct_stream_forward.77} parent=31 // loop_footer_branch
                %161 = sbr.rel target = $region34
              $region39: #{dct_stream_forward.77} parent=31 // loop_exit
                _
            $region32: #{dct_stream_forward.77} parent=27 // pred_fallthru
              _
            // Predicated region
            $region40: #{dct_stream_forward.77} parent=27 // pred_check
              _
            $region41: #{dct_stream_forward.77} parent=27 // pred_check_branch
              %178 = sbr.rel target = $region43
            $region42: #{dct_stream_forward.77} parent=27 // pred_region
              _
            $region43: #{dct_stream_forward.77} parent=27 // pred_fallthru
              _
          $region28: #{dct_stream_forward.77} parent=23 // pred_fallthru
            _
          %179 = vnop
        $region24: #{dct_stream_forward.77} parent=19 // pred_fallthru
          _
        // Predicated region
        $region44: #{dct_stream_forward.77} parent=19 // pred_check
          %p180 = pneg %p69
        $region45: #{dct_stream_forward.77} parent=19 // pred_check_branch
          %182 = sbr.rel (%p180) target = $region47
        $region46: #{dct_stream_forward.77} parent=19 // pred_region
          %s183 = smul.u32 64, %s17
          %p184 = scmp.lt.s32.totalorder %s183, 191
          %s185 = scalar_select %p184, %s183, 191
          %s186 = smul.addr %s185, 4
          %s187 = scalar_lea.vmem %s1, %s186
          %s188 = smul.u32 64, %s17
        $region47: #{dct_stream_forward.77} parent=19 // pred_fallthru
          _
      $region20: #{dct_stream_forward.77} parent=5 // pred_fallthru
        _
      %p189 = scmp.le.s32.totalorder 1, %s9
      %p190 = scmp.lt.s32.totalorder %s9, 4
      %p191 = pnand %p189, %p190
      %p192 = pneg %p191
      // Predicated region
      $region48: #{dct_stream_forward.77} parent=5 // pred_check
        _
      $region49: #{dct_stream_forward.77} parent=5 // pred_check_branch
        %194 = sbr.rel (%p191) target = $region51
      $region50: #{dct_stream_forward.77} parent=5 // pred_region
        %s195 = ssub.s32 %s9, 1
        %s196 = sand.u32 %s36, 1
        %s197 = sand.u32 %s36, 1
        %s198 = smul.addr %s197, 32
        %s199 = scalar_lea.vmem [#allocation3], %s198
        // Predicated region
        $region52: #{dct_stream_forward.77} parent=50 // pred_check
          %p200 = pneg %p49
        $region53: #{dct_stream_forward.77} parent=50 // pred_check_branch
          %202 = sbr.rel (%p200) target = $region55
        $region54: #{dct_stream_forward.77} parent=50 // pred_region
          _
        $region55: #{dct_stream_forward.77} parent=50 // pred_fallthru
          _
        %s203 = sand.u32 %s36, 1
        %s204 = sand.u32 %s36, 1
        %s205 = smul.addr %s204, 32
        %s206 = scalar_lea.vmem [#allocation3], %s205
        %p207 = pneg %p49
        %p208 = pneg %p46
        %s209 = smul.u32 64, %s19
        %p210 = scmp.lt.s32.totalorder %s209, 191
        %s211 = scalar_select %p210, %s209, 191
        %s212 = smul.addr %s211, 4
        %s213 = scalar_lea.vmem %s1, %s212
        %p214 = pneg %p75
        %p215 = pneg %p72
        %p216 = pneg %p96
        %p217 = pneg %p93
        %p218 = pneg %p122
        %p219 = pneg %p119
        %s220 = smul.u32 2, %s18
        %p221 = scmp.lt.s32.totalorder %s220, 1
        %s222 = scalar_select %p221, %s220, 1
        %s223 = smul.addr %s222, 8
        %s224 = scalar_lea.vmem %s3, %s223
        %s225 = smul.u32 2, %s18
        %s226 = smul.u32 4, %s19
        %s227 = smul.u32 64, %s19
        %p228 = scmp.lt.s32.totalorder %s227, 191
        %s229 = scalar_select %p228, %s227, 191
        %s230 = smul.addr %s229, 4
        %s231 = scalar_lea.vmem %s1, %s230
        %s232 = smul.u32 64, %s19
        %s233 = smul.u32 2, %s18
        %p234 = scmp.lt.s32.totalorder %s233, 1
        %s235 = scalar_select %p234, %s233, 1
        %s236 = smul.addr %s235, 8
        %s237 = scalar_lea.vmem %s3, %s236
        %s238 = smul.u32 2, %s18
        %p240 = scmp.eq.s32.totalorder %s19, 0
        // Predicated region
        $region56: #{dct_stream_forward.77} parent=50 // pred_check
          %p241 = pneg %p240
        $region57: #{dct_stream_forward.77} parent=50 // pred_check_branch
          %243 = sbr.rel (%p241) target = $region59
        $region58: #{dct_stream_forward.77} parent=50 // pred_region
          %244 = vst [vmem:[#allocation2] sm:$0xff] 0.0
          %245 = vst [vmem:[#allocation2 + $0x8] sm:$0xff] 0.0
        $region59: #{dct_stream_forward.77} parent=50 // pred_fallthru
          _
        %v246 = vld [vmem:[#allocation2] sm:$0xff]
        %v247 = vld [vmem:[#allocation2 + $0x8] sm:$0xff]
        %v248 = vld [vmem:[%s199] sm:$0xff]
        %v249 = vld [vmem:[%s199 + $0x8] sm:$0xff]
        %v250 = vld [vmem:[%s199 + $0x10] sm:$0xff]
        %v251 = vld [vmem:[%s199 + $0x18] sm:$0xff]
        %v252 = vld [vmem:[%s231] sm:$0xf]
        %v253 = vld [vmem:[%s231 + $0x4] sm:$0xf]
        %v254 = vld [vmem:[%s231 + $0x8] sm:$0xf]
        %v255 = vld [vmem:[%s231 + $0xc] sm:$0xf]
        %v256 = vld [vmem:[%s231 + $0x10] sm:$0xf]
        %v257 = vld [vmem:[%s231 + $0x14] sm:$0xf]
        %v258 = vld [vmem:[%s231 + $0x18] sm:$0xf]
        %v259 = vld [vmem:[%s231 + $0x1c] sm:$0xf]
        %v260 = vld [vmem:[%s231 + $0x20] sm:$0xf]
        %v261 = vld [vmem:[%s231 + $0x24] sm:$0xf]
        %v262 = vld [vmem:[%s231 + $0x28] sm:$0xf]
        %v263 = vld [vmem:[%s231 + $0x2c] sm:$0xf]
        %v264 = vld [vmem:[%s231 + $0x30] sm:$0xf]
        %v265 = vld [vmem:[%s231 + $0x34] sm:$0xf]
        %v266 = vld [vmem:[%s231 + $0x38] sm:$0xf]
        %v267 = vld [vmem:[%s231 + $0x3c] sm:$0xf]
        %v268 = vld [vmem:[%s231 + $0x40] sm:$0xf]
        %v269 = vld [vmem:[%s231 + $0x44] sm:$0xf]
        %v270 = vld [vmem:[%s231 + $0x48] sm:$0xf]
        %v271 = vld [vmem:[%s231 + $0x4c] sm:$0xf]
        %v272 = vld [vmem:[%s231 + $0x50] sm:$0xf]
        %v273 = vld [vmem:[%s231 + $0x54] sm:$0xf]
        %v274 = vld [vmem:[%s231 + $0x58] sm:$0xf]
        %v275 = vld [vmem:[%s231 + $0x5c] sm:$0xf]
        %v276 = vld [vmem:[%s231 + $0x60] sm:$0xf]
        %v277 = vld [vmem:[%s231 + $0x64] sm:$0xf]
        %v278 = vld [vmem:[%s231 + $0x68] sm:$0xf]
        %v279 = vld [vmem:[%s231 + $0x6c] sm:$0xf]
        %v280 = vld [vmem:[%s231 + $0x70] sm:$0xf]
        %v281 = vld [vmem:[%s231 + $0x74] sm:$0xf]
        %v282 = vld [vmem:[%s231 + $0x78] sm:$0xf]
        %v283 = vld [vmem:[%s231 + $0x7c] sm:$0xf]
        %v284 = vld [vmem:[%s231 + $0x80] sm:$0xf]
        %v285 = vld [vmem:[%s231 + $0x84] sm:$0xf]
        %v286 = vld [vmem:[%s231 + $0x88] sm:$0xf]
        %v287 = vld [vmem:[%s231 + $0x8c] sm:$0xf]
        %v288 = vld [vmem:[%s231 + $0x90] sm:$0xf]
        %v289 = vld [vmem:[%s231 + $0x94] sm:$0xf]
        %v290 = vld [vmem:[%s231 + $0x98] sm:$0xf]
        %v291 = vld [vmem:[%s231 + $0x9c] sm:$0xf]
        %v292 = vld [vmem:[%s231 + $0xa0] sm:$0xf]
        %v293 = vld [vmem:[%s231 + $0xa4] sm:$0xf]
        %v294 = vld [vmem:[%s231 + $0xa8] sm:$0xf]
        %v295 = vld [vmem:[%s231 + $0xac] sm:$0xf]
        %v296 = vld [vmem:[%s231 + $0xb0] sm:$0xf]
        %v297 = vld [vmem:[%s231 + $0xb4] sm:$0xf]
        %v298 = vld [vmem:[%s231 + $0xb8] sm:$0xf]
        %v299 = vld [vmem:[%s231 + $0xbc] sm:$0xf]
        %v300 = vld [vmem:[%s231 + $0xc0] sm:$0xf]
        %v301 = vld [vmem:[%s231 + $0xc4] sm:$0xf]
        %v302 = vld [vmem:[%s231 + $0xc8] sm:$0xf]
        %v303 = vld [vmem:[%s231 + $0xcc] sm:$0xf]
        %v304 = vld [vmem:[%s231 + $0xd0] sm:$0xf]
        %v305 = vld [vmem:[%s231 + $0xd4] sm:$0xf]
        %v306 = vld [vmem:[%s231 + $0xd8] sm:$0xf]
        %v307 = vld [vmem:[%s231 + $0xdc] sm:$0xf]
        %v308 = vld [vmem:[%s231 + $0xe0] sm:$0xf]
        %v309 = vld [vmem:[%s231 + $0xe4] sm:$0xf]
        %v310 = vld [vmem:[%s231 + $0xe8] sm:$0xf]
        %v311 = vld [vmem:[%s231 + $0xec] sm:$0xf]
        %v312 = vld [vmem:[%s231 + $0xf0] sm:$0xf]
        %v313 = vld [vmem:[%s231 + $0xf4] sm:$0xf]
        %v314 = vld [vmem:[%s231 + $0xf8] sm:$0xf]
        %v315 = vld [vmem:[%s231 + $0xfc] sm:$0xf]
        %v320 = vunpack.c.l.b16 %v248
        %v321 = vunpack.c.h.b16 %v248
        %v322 = vunpack.c.l.b16 %v249
        %v323 = vunpack.c.h.b16 %v249
        %v324 = vunpack.c.l.b16 %v250
        %v325 = vunpack.c.h.b16 %v250
        %v326 = vunpack.c.l.b16 %v251
        %v327 = vunpack.c.h.b16 %v251
        %v328 = vpack.c.b16 %v324, %v320
        %v329 = vpack.c.b16 %v325, %v321
        %v330 = vpack.c.b16 %v326, %v322
        %v331 = vpack.c.b16 %v327, %v323
        %v400 = vunpack.c.l.b16 %v252
        %v401 = vunpack.c.l.b16 %v253
        %v402 = vunpack.c.l.b16 %v254
        %v403 = vunpack.c.l.b16 %v255
        %v404 = vunpack.c.l.b16 %v256
        %v405 = vunpack.c.l.b16 %v257
        %v406 = vunpack.c.l.b16 %v258
        %v407 = vunpack.c.l.b16 %v259
        %v408 = vunpack.c.l.b16 %v260
        %v409 = vunpack.c.l.b16 %v261
        %v410 = vunpack.c.l.b16 %v262
        %v411 = vunpack.c.l.b16 %v263
        %v412 = vunpack.c.l.b16 %v264
        %v413 = vunpack.c.l.b16 %v265
        %v414 = vunpack.c.l.b16 %v266
        %v415 = vunpack.c.l.b16 %v267
        %v416 = vunpack.c.l.b16 %v268
        %v417 = vunpack.c.l.b16 %v269
        %v418 = vunpack.c.l.b16 %v270
        %v419 = vunpack.c.l.b16 %v271
        %v420 = vunpack.c.l.b16 %v272
        %v421 = vunpack.c.l.b16 %v273
        %v422 = vunpack.c.l.b16 %v274
        %v423 = vunpack.c.l.b16 %v275
        %v424 = vunpack.c.l.b16 %v276
        %v425 = vunpack.c.l.b16 %v277
        %v426 = vunpack.c.l.b16 %v278
        %v427 = vunpack.c.l.b16 %v279
        %v428 = vunpack.c.l.b16 %v280
        %v429 = vunpack.c.l.b16 %v281
        %v430 = vunpack.c.l.b16 %v282
        %v431 = vunpack.c.l.b16 %v283
        %v432 = vunpack.c.l.b16 %v284
        %v433 = vunpack.c.l.b16 %v285
        %v434 = vunpack.c.l.b16 %v286
        %v435 = vunpack.c.l.b16 %v287
        %v436 = vunpack.c.l.b16 %v288
        %v437 = vunpack.c.l.b16 %v289
        %v438 = vunpack.c.l.b16 %v290
        %v439 = vunpack.c.l.b16 %v291
        %v440 = vunpack.c.l.b16 %v292
        %v441 = vunpack.c.l.b16 %v293
        %v442 = vunpack.c.l.b16 %v294
        %v443 = vunpack.c.l.b16 %v295
        %v444 = vunpack.c.l.b16 %v296
        %v445 = vunpack.c.l.b16 %v297
        %v446 = vunpack.c.l.b16 %v298
        %v447 = vunpack.c.l.b16 %v299
        %v448 = vunpack.c.l.b16 %v300
        %v449 = vunpack.c.l.b16 %v301
        %v450 = vunpack.c.l.b16 %v302
        %v451 = vunpack.c.l.b16 %v303
        %v452 = vunpack.c.l.b16 %v304
        %v453 = vunpack.c.l.b16 %v305
        %v454 = vunpack.c.l.b16 %v306
        %v455 = vunpack.c.l.b16 %v307
        %v456 = vunpack.c.l.b16 %v308
        %v457 = vunpack.c.l.b16 %v309
        %v458 = vunpack.c.l.b16 %v310
        %v459 = vunpack.c.l.b16 %v311
        %v460 = vunpack.c.l.b16 %v312
        %v461 = vunpack.c.l.b16 %v313
        %v462 = vunpack.c.l.b16 %v314
        %v463 = vunpack.c.l.b16 %v315
        %v464 = vpack.c.b16 %v401, %v400
        %v465 = vpack.c.b16 %v403, %v402
        %v466 = vpack.c.b16 %v405, %v404
        %v467 = vpack.c.b16 %v407, %v406
        %v468 = vpack.c.b16 %v409, %v408
        %v469 = vpack.c.b16 %v411, %v410
        %v470 = vpack.c.b16 %v413, %v412
        %v471 = vpack.c.b16 %v415, %v414
        %v472 = vpack.c.b16 %v417, %v416
        %v473 = vpack.c.b16 %v419, %v418
        %v474 = vpack.c.b16 %v421, %v420
        %v475 = vpack.c.b16 %v423, %v422
        %v476 = vpack.c.b16 %v425, %v424
        %v477 = vpack.c.b16 %v427, %v426
        %v478 = vpack.c.b16 %v429, %v428
        %v479 = vpack.c.b16 %v431, %v430
        %v480 = vpack.c.b16 %v433, %v432
        %v481 = vpack.c.b16 %v435, %v434
        %v482 = vpack.c.b16 %v437, %v436
        %v483 = vpack.c.b16 %v439, %v438
        %v484 = vpack.c.b16 %v441, %v440
        %v485 = vpack.c.b16 %v443, %v442
        %v486 = vpack.c.b16 %v445, %v444
        %v487 = vpack.c.b16 %v447, %v446
        %v488 = vpack.c.b16 %v449, %v448
        %v489 = vpack.c.b16 %v451, %v450
        %v490 = vpack.c.b16 %v453, %v452
        %v491 = vpack.c.b16 %v455, %v454
        %v492 = vpack.c.b16 %v457, %v456
        %v493 = vpack.c.b16 %v459, %v458
        %v494 = vpack.c.b16 %v461, %v460
        %v495 = vpack.c.b16 %v463, %v462
        %528 = vmatprep.subr.bf16.mxu0 0
        %529 = vmatpush1.bf16.msra.mxu0 %v464
        %530 = vmatprep.subr.bf16.mxu0 0
        %531 = vmatpush1.bf16.msra.mxu0 %v465
        %532 = vmatprep.subr.bf16.mxu0 0
        %533 = vmatpush1.bf16.msra.mxu0 %v466
        %534 = vmatprep.subr.bf16.mxu0 0
        %535 = vmatpush1.bf16.msra.mxu0 %v467
        %536 = vmatprep.subr.bf16.mxu0 0
        %537 = vmatpush1.bf16.msra.mxu0 %v468
        %538 = vmatprep.subr.bf16.mxu0 0
        %539 = vmatpush1.bf16.msra.mxu0 %v469
        %540 = vmatprep.subr.bf16.mxu0 0
        %541 = vmatpush1.bf16.msra.mxu0 %v470
        %542 = vmatprep.subr.bf16.mxu0 0
        %543 = vmatpush1.bf16.msra.mxu0 %v471
        %544 = vmatprep.subr.bf16.mxu0 0
        %545 = vmatpush1.bf16.msra.mxu0 %v472
        %546 = vmatprep.subr.bf16.mxu0 0
        %547 = vmatpush1.bf16.msra.mxu0 %v473
        %548 = vmatprep.subr.bf16.mxu0 0
        %549 = vmatpush1.bf16.msra.mxu0 %v474
        %550 = vmatprep.subr.bf16.mxu0 0
        %551 = vmatpush1.bf16.msra.mxu0 %v475
        %552 = vmatprep.subr.bf16.mxu0 0
        %553 = vmatpush1.bf16.msra.mxu0 %v476
        %554 = vmatprep.subr.bf16.mxu0 0
        %555 = vmatpush1.bf16.msra.mxu0 %v477
        %556 = vmatprep.subr.bf16.mxu0 0
        %557 = vmatpush1.bf16.msra.mxu0 %v478
        %558 = vmatprep.subr.bf16.mxu0 0
        %559 = vmatpush1.bf16.msra.mxu0 %v479
        %560 = vmatprep.mubr.bf16.mxu0 %v329
        %561 = vmatmul.mubr.bf16.gmra.mrb[0].mxu0 %v328
        %v562 = vpop.f32.mrb[0].mxu0
        %v563 = vadd.f32 0.0, %v562
        %v564 = vpop.f32.mrb[0].mxu0
        %v565 = vpop.f32.mrb[0].mxu0
        %v566 = vadd.f32 0.0, %v565
        %v567 = vpop.f32.mrb[0].mxu0
        %568 = vdwg.mxu0
        %569 = vmatprep.subr.bf16.mxu0 0
        %570 = vmatpush1.bf16.msra.mxu0 %v480
        %571 = vmatprep.subr.bf16.mxu0 0
        %572 = vmatpush1.bf16.msra.mxu0 %v481
        %573 = vmatprep.subr.bf16.mxu0 0
        %574 = vmatpush1.bf16.msra.mxu0 %v482
        %575 = vmatprep.subr.bf16.mxu0 0
        %576 = vmatpush1.bf16.msra.mxu0 %v483
        %577 = vmatprep.subr.bf16.mxu0 0
        %578 = vmatpush1.bf16.msra.mxu0 %v484
        %579 = vmatprep.subr.bf16.mxu0 0
        %580 = vmatpush1.bf16.msra.mxu0 %v485
        %581 = vmatprep.subr.bf16.mxu0 0
        %582 = vmatpush1.bf16.msra.mxu0 %v486
        %583 = vmatprep.subr.bf16.mxu0 0
        %584 = vmatpush1.bf16.msra.mxu0 %v487
        %585 = vmatprep.subr.bf16.mxu0 0
        %586 = vmatpush1.bf16.msra.mxu0 %v488
        %587 = vmatprep.subr.bf16.mxu0 0
        %588 = vmatpush1.bf16.msra.mxu0 %v489
        %589 = vmatprep.subr.bf16.mxu0 0
        %590 = vmatpush1.bf16.msra.mxu0 %v490
        %591 = vmatprep.subr.bf16.mxu0 0
        %592 = vmatpush1.bf16.msra.mxu0 %v491
        %593 = vmatprep.subr.bf16.mxu0 0
        %594 = vmatpush1.bf16.msra.mxu0 %v492
        %595 = vmatprep.subr.bf16.mxu0 0
        %596 = vmatpush1.bf16.msra.mxu0 %v493
        %597 = vmatprep.subr.bf16.mxu0 0
        %598 = vmatpush1.bf16.msra.mxu0 %v494
        %599 = vmatprep.subr.bf16.mxu0 0
        %600 = vmatpush1.bf16.msra.mxu0 %v495
        %601 = vmatprep.mubr.bf16.mxu0 %v331
        %602 = vmatmul.mubr.bf16.gmra.mrb[0].mxu0 %v330
        %v603 = vpop.f32.mrb[0].mxu0
        %v604 = vadd.f32 %v563, %v603
        %v605 = vpop.f32.mrb[0].mxu0
        %v606 = vpop.f32.mrb[0].mxu0
        %v607 = vadd.f32 %v566, %v606
        %v608 = vpop.f32.mrb[0].mxu0
        %609 = vdwg.mxu0
        %v610 = vadd.f32 %v246, %v604
        %v611 = vadd.f32 %v247, %v607
        %612 = vst [vmem:[#allocation2] sm:$0xff] %v610
        %613 = vst [vmem:[#allocation2 + $0x8] sm:$0xff] %v611
        %p614 = scmp.eq.s32.totalorder %s19, 2
        // Predicated region
        $region60: #{dct_stream_forward.77} parent=50 // pred_check
          %p615 = pneg %p614
        $region61: #{dct_stream_forward.77} parent=50 // pred_check_branch
          %617 = sbr.rel (%p615) target = $region63
        $region62: #{dct_stream_forward.77} parent=50 // pred_region
          %v618 = vld [vmem:[#allocation2] sm:$0xff]
          %v619 = vld [vmem:[#allocation2 + $0x8] sm:$0xff]
          %v620 = vld [vmem:[%s2] sm:$0x1]
          %v622 = vlaneseq
          %v623 = vshrl.u32 %v622, 7
          %v624 = vsub.s32 0, %v623
          %v625 = vrot.slane %v620, %v624
          %v627 = vadd.f32 %v618, %v625
          %v628 = vadd.f32 %v619, %v625
          %v629 = vmax.f32 %v627, 0.0
          %v630 = vmax.f32 %v628, 0.0
          %631 = vst [vmem:[%s237] sm:$0xff] %v629
          %632 = vst [vmem:[%s237 + $0x8] sm:$0xff] %v630
        $region63: #{dct_stream_forward.77} parent=50 // pred_fallthru
          _
        %s633 = smul.u32 2, %s18
        %p634 = scmp.lt.s32.totalorder %s633, 1
        %s635 = scalar_select %p634, %s633, 1
        %s636 = smul.addr %s635, 8
        %s637 = scalar_lea.vmem %s3, %s636
        // Predicated region
        $region64: #{dct_stream_forward.77} parent=50 // pred_check
          %p638 = pneg %p119
        $region65: #{dct_stream_forward.77} parent=50 // pred_check_branch
          %640 = sbr.rel (%p638) target = $region67
        $region66: #{dct_stream_forward.77} parent=50 // pred_region
          %s641 = smul.u32 2, %s18
        $region67: #{dct_stream_forward.77} parent=50 // pred_fallthru
          _
        // Predicated region
        $region68: #{dct_stream_forward.77} parent=50 // pred_check
          %p642 = pneg %p119
        $region69: #{dct_stream_forward.77} parent=50 // pred_check_branch
          %644 = sbr.rel (%p642) target = $region71
        $region70: #{dct_stream_forward.77} parent=50 // pred_region
          %s645 = smul.u32 2, %s18
          %p646 = scmp.lt.s32.totalorder %s645, 1
          %s647 = scalar_select %p646, %s645, 1
          %s648 = smul.addr %s647, 8
          %s649 = scalar_lea.vmem %s3, %s648
        $region71: #{dct_stream_forward.77} parent=50 // pred_fallthru
          _
      $region51: #{dct_stream_forward.77} parent=5 // pred_fallthru
        _
      %p650 = scmp.le.s32.totalorder 2, %s9
      // Predicated region
      $region72: #{dct_stream_forward.77} parent=5 // pred_check
        %p651 = pneg %p650
      $region73: #{dct_stream_forward.77} parent=5 // pred_check_branch
        %653 = sbr.rel (%p651) target = $region75
      $region74: #{dct_stream_forward.77} parent=5 // pred_region
        %s654 = ssub.s32 %s9, 2
      $region75: #{dct_stream_forward.77} parent=5 // pred_fallthru
        _
    $region6: #{dct_stream_forward.77} parent=1 // loop_footer
      %s13 = sadd.s32 1, %s9
    $region7: #{dct_stream_forward.77} parent=1 // loop_footer_branch
      %8 = sbr.rel target = $region3
    $region8: #{dct_stream_forward.77} parent=1 // loop_exit
      _

// kernel: dct_stream_forward.78
$region0: #{dct_stream_forward.78}
  #allocation0 [shape = 'u32[]', space=smem, size = 0x4, offset = 0x4, fixed_abs, tag = 'smem constant byte address 0x4 - core index']
  #allocation1 [shape = 'u32[144,128]{1,0:T(1,128)}', space=vmem, size = 0x12000, scoped, tag = 'internal scratch']
  #allocation2 [shape = 'f32[16,128]{1,0:T(8,128)}', space=vmem, size = 0x2000, scoped, tag = 'scratch operand']
  %s0 = inlined_call_operand.vmem [shape: bf16[16,1536], index: 0, kind: input, shape index: {}]
  %s1 = inlined_call_operand.vmem [shape: bf16[1536,128], index: 1, kind: input, shape index: {}]
  %s2 = inlined_call_operand.vmem [shape: f32[1,128], index: 2, kind: input, shape index: {}]
  %s3 = inlined_call_operand.vmem [shape: f32[16,128], index: 3, kind: input, shape index: {}]
  %s4 = inlined_call_operand.vmem [shape: f32[16,128], index: 4, kind: output, shape index: {}]
  %s5 = sld [smem:[#allocation0]]
  $region80: #{dct_stream_forward.78} parent=0
    _
  %s7 = ssub.s32 1, %s5
  %s8 = scalar_select 0, %s7, %s5
  $region1: #{dct_stream_forward.78} parent=0
    #allocation3 [shape = 'u8[32768]{0}', space=vmem, size = 0x8000, scoped, tag = 'input window, operand 0']
    loop: start=0, step=1, limit=5
    $region2: #{dct_stream_forward.78} parent=1 // loop_pre_header
      _
    $region3: #{dct_stream_forward.78} parent=1 // loop_header
      %s10 = sphi 0, %s14
      %p11 = scmp.ge.s32.totalorder %s10, 5
      %s17 = sphi 0, %s29
      %s18 = sphi 0, %s25
      %s19 = sphi 0, %s17
      %s20 = sphi 0, %s18
      %s21 = sphi 0, %s19
      %s22 = sphi 0, %s20
      %s34 = sphi 0, %s36
      %s37 = sphi 0, %s34
      %s38 = sphi 0, %s37
      %s54 = sphi 0, %s38
      %s60 = sphi 0, %s62
      %s63 = sphi 0, %s60
      %s64 = sphi 0, %s63
      %s80 = sphi 0, %s64
      %s84 = sphi 0, %s84
      %s86 = sphi 0, %s84
      %s87 = sphi 0, %s86
      %s101 = sphi 0, %s87
      %s107 = sphi 0, %s109
      %s110 = sphi 0, %s107
      %s111 = sphi 0, %s110
      %s127 = sphi 0, %s111
      %s133 = sphi 0, %s135
      %s136 = sphi 0, %s133
      %s137 = sphi 0, %s136
      %s153 = sphi 0, %s137
    $region4: #{dct_stream_forward.78} parent=1 // loop_header_branch
      %13 = sbr.rel (%p11) target = $region8
    $region5: #{dct_stream_forward.78} parent=1 // loop_body
      %s15 = ssub.s32 %s10, 1
      %s16 = ssub.s32 %s10, 2
      %s23 = sadd.s32 1, %s18
      %p24 = scmp.ge.s32.totalorder %s23, 3
      %s25 = scalar_select %p24, 0, %s23
      %s26 = sadd.s32 1, %s17
      %s27 = scalar_select %p24, %s26, %s17
      %p28 = scmp.ge.s32.totalorder %s27, 1
      %s29 = scalar_select %p28, 0, %s27
      %s30 = ssub.s32 %s17, %s29
      %s31 = ssub.s32 %s18, %s25
      %s32 = sor.u32 %s30, %s31
      %p33 = scmp.eq.s32.totalorder %s32, 0
      %s35 = sadd.s32 %s34, 1
      %s36 = scalar_select %p33, %s34, %s35
      %p39 = pneg %p33
      %p40 = scmp.eq.s32.totalorder %s10, 2
      %p41 = por %p39, %p40
      %p42 = scmp.ne.s32.totalorder %s34, %s37
      %p43 = scmp.eq.s32.totalorder %s10, 0
      %p44 = por %p42, %p43
      %p45 = scmp.ne.s32.totalorder %s34, %s37
      %p46 = scmp.eq.s32.totalorder %s15, 2
      %p47 = por %p45, %p46
      %p48 = scmp.ne.s32.totalorder %s37, %s38
      %p49 = scmp.eq.s32.totalorder %s15, 0
      %p50 = por %p48, %p49
      %p51 = scmp.ne.s32.totalorder %s37, %s38
      %p52 = scmp.eq.s32.totalorder %s16, 2
      %p53 = por %p51, %p52
      %p55 = scmp.ne.s32.totalorder %s38, %s54
      %p56 = scmp.eq.s32.totalorder %s16, 0
      %p57 = por %p55, %p56
      %s58 = ssub.s32 %s18, %s25
      %p59 = scmp.eq.s32.totalorder %s58, 0
      %s61 = sadd.s32 %s60, 1
      %s62 = scalar_select %p59, %s60, %s61
      %p65 = pneg %p59
      %p66 = scmp.eq.s32.totalorder %s10, 2
      %p67 = por %p65, %p66
      %p68 = scmp.ne.s32.totalorder %s60, %s63
      %p69 = scmp.eq.s32.totalorder %s10, 0
      %p70 = por %p68, %p69
      %p71 = scmp.ne.s32.totalorder %s60, %s63
      %p72 = scmp.eq.s32.totalorder %s15, 2
      %p73 = por %p71, %p72
      %p74 = scmp.ne.s32.totalorder %s63, %s64
      %p75 = scmp.eq.s32.totalorder %s15, 0
      %p76 = por %p74, %p75
      %p77 = scmp.ne.s32.totalorder %s63, %s64
      %p78 = scmp.eq.s32.totalorder %s16, 2
      %p79 = por %p77, %p78
      %p81 = scmp.ne.s32.totalorder %s64, %s80
      %p82 = scmp.eq.s32.totalorder %s16, 0
      %p83 = por %p81, %p82
      %s85 = sadd.s32 %s84, 1
      %p88 = scmp.eq.s32.totalorder %s10, 2
      %p89 = scmp.ne.s32.totalorder %s84, %s86
      %p90 = scmp.eq.s32.totalorder %s10, 0
      %p91 = por %p89, %p90
      %p92 = scmp.ne.s32.totalorder %s84, %s86
      %p93 = scmp.eq.s32.totalorder %s15, 2
      %p94 = por %p92, %p93
      %p95 = scmp.ne.s32.totalorder %s86, %s87
      %p96 = scmp.eq.s32.totalorder %s15, 0
      %p97 = por %p95, %p96
      %p98 = scmp.ne.s32.totalorder %s86, %s87
      %p99 = scmp.eq.s32.totalorder %s16, 2
      %p100 = por %p98, %p99
      %p102 = scmp.ne.s32.totalorder %s87, %s101
      %p103 = scmp.eq.s32.totalorder %s16, 0
      %p104 = por %p102, %p103
      %s105 = ssub.s32 %s17, %s29
      %p106 = scmp.eq.s32.totalorder %s105, 0
      %s108 = sadd.s32 %s107, 1
      %s109 = scalar_select %p106, %s107, %s108
      %p112 = pneg %p106
      %p113 = scmp.eq.s32.totalorder %s10, 2
      %p114 = por %p112, %p113
      %p115 = scmp.ne.s32.totalorder %s107, %s110
      %p116 = scmp.eq.s32.totalorder %s10, 0
      %p117 = por %p115, %p116
      %p118 = scmp.ne.s32.totalorder %s107, %s110
      %p119 = scmp.eq.s32.totalorder %s15, 2
      %p120 = por %p118, %p119
      %p121 = scmp.ne.s32.totalorder %s110, %s111
      %p122 = scmp.eq.s32.totalorder %s15, 0
      %p123 = por %p121, %p122
      %p124 = scmp.ne.s32.totalorder %s110, %s111
      %p125 = scmp.eq.s32.totalorder %s16, 2
      %p126 = por %p124, %p125
      %p128 = scmp.ne.s32.totalorder %s111, %s127
      %p129 = scmp.eq.s32.totalorder %s16, 0
      %p130 = por %p128, %p129
      %s131 = ssub.s32 %s17, %s29
      %p132 = scmp.eq.s32.totalorder %s131, 0
      %s134 = sadd.s32 %s133, 1
      %s135 = scalar_select %p132, %s133, %s134
      %p138 = pneg %p132
      %p139 = scmp.eq.s32.totalorder %s10, 2
      %p140 = por %p138, %p139
      %p141 = scmp.ne.s32.totalorder %s133, %s136
      %p142 = scmp.eq.s32.totalorder %s10, 0
      %p143 = por %p141, %p142
      %p144 = scmp.ne.s32.totalorder %s133, %s136
      %p145 = scmp.eq.s32.totalorder %s15, 2
      %p146 = por %p144, %p145
      %p147 = scmp.ne.s32.totalorder %s136, %s137
      %p148 = scmp.eq.s32.totalorder %s15, 0
      %p149 = por %p147, %p148
      %p150 = scmp.ne.s32.totalorder %s136, %s137
      %p151 = scmp.eq.s32.totalorder %s16, 2
      %p152 = por %p150, %p151
      %p154 = scmp.ne.s32.totalorder %s137, %s153
      %p155 = scmp.eq.s32.totalorder %s16, 0
      %p156 = por %p154, %p155
      %p157 = scmp.le.s32.totalorder 1, %s10
      %p158 = scmp.lt.s32.totalorder %s10, 4
      %p159 = pnand %p157, %p158
      %p160 = pneg %p159
      // Predicated region
      $region9: #{dct_stream_forward.78} parent=5 // pred_check
        _
      $region10: #{dct_stream_forward.78} parent=5 // pred_check_branch
        %162 = sbr.rel (%p159) target = $region12
      $region11: #{dct_stream_forward.78} parent=5 // pred_region
        %s163 = ssub.s32 %s10, 1
        // Predicated region
        $region13: #{dct_stream_forward.78} parent=11 // pred_check
          %p164 = pneg %p97
        $region14: #{dct_stream_forward.78} parent=11 // pred_check_branch
          %166 = sbr.rel (%p164) target = $region16
        $region15: #{dct_stream_forward.78} parent=11 // pred_region
          _
        $region16: #{dct_stream_forward.78} parent=11 // pred_fallthru
          _
        // Predicated region
        $region17: #{dct_stream_forward.78} parent=11 // pred_check
          %p167 = pneg %p123
        $region18: #{dct_stream_forward.78} parent=11 // pred_check_branch
          %169 = sbr.rel (%p167) target = $region20
        $region19: #{dct_stream_forward.78} parent=11 // pred_region
          %s170 = smul.u32 2, %s19
          %p171 = scmp.lt.s32.totalorder %s170, 1
          %s172 = scalar_select %p171, %s170, 1
          %s173 = smul.addr %s172, 8
          %s174 = scalar_lea.vmem %s3, %s173
          %s175 = smul.u32 2, %s19
        $region20: #{dct_stream_forward.78} parent=11 // pred_fallthru
          _
      $region12: #{dct_stream_forward.78} parent=5 // pred_fallthru
        _
      %p176 = scmp.lt.s32.totalorder %s10, 3
      // Predicated region
      $region21: #{dct_stream_forward.78} parent=5 // pred_check
        %p177 = pneg %p176
      $region22: #{dct_stream_forward.78} parent=5 // pred_check_branch
        %179 = sbr.rel (%p177) target = $region24
      $region23: #{dct_stream_forward.78} parent=5 // pred_region
        // Predicated region
        $region25: #{dct_stream_forward.78} parent=23 // pred_check
          %p180 = pneg %p44
        $region26: #{dct_stream_forward.78} parent=23 // pred_check_branch
          %182 = sbr.rel (%p180) target = $region28
        $region27: #{dct_stream_forward.78} parent=23 // pred_region
          %s183 = sand.u32 %s34, 1
          %s184 = sand.u32 %s34, 1
          %s185 = smul.addr %s184, 32
          %s186 = scalar_lea.vmem [#allocation3], %s185
          %s187 = smul.u32 2, %s17
          %s188 = smul.u32 4, %s18
          %s189 = smul.addr %s187, 12
          %s190 = sadd.s32 %s188, %s189
          %s191 = smul.addr %s190, 4
          %s192 = scalar_lea.vmem %s0, %s191
          // Predicated region
          $region29: #{dct_stream_forward.78} parent=27 // pred_check
            _
          $region30: #{dct_stream_forward.78} parent=27 // pred_check_branch
            %194 = sbr.rel (0) target = $region32
          $region31: #{dct_stream_forward.78} parent=27 // pred_region
            // Predicated region
            $region33: #{dct_stream_forward.78} parent=31 // pred_check
              _
            $region34: #{dct_stream_forward.78} parent=31 // pred_check_branch
              %196 = sbr.rel (0) target = $region36
            $region35: #{dct_stream_forward.78} parent=31 // pred_region
              loop: start=0, step=1, limit=1
              $region37: #{dct_stream_forward.78} parent=35 // loop_pre_header
                _
              $region38: #{dct_stream_forward.78} parent=35 // loop_header
                %s198 = sphi 0, %s202
                %p199 = scmp.ge.s32.totalorder %s198, 1
                %s203 = sphi %s192, %s192
                %s204 = sphi %s186, %s186
              $region39: #{dct_stream_forward.78} parent=35 // loop_header_branch
                %201 = sbr.rel (%p199) target = $region43
              $region40: #{dct_stream_forward.78} parent=35 // loop_body
                %v205 = vld [vmem:[%s203] sm:$0xff]
                %206 = vst [vmem:[%s204] sm:$0xff] %v205
                %v207 = vld [vmem:[%s203 + $0x8] sm:$0xff]
                %208 = vst [vmem:[%s204 + $0x8] sm:$0xff] %v207
                %v209 = vld [vmem:[%s203 + $0x30] sm:$0xff]
                %210 = vst [vmem:[%s204 + $0x10] sm:$0xff] %v209
                %v211 = vld [vmem:[%s203 + $0x38] sm:$0xff]
                %212 = vst [vmem:[%s204 + $0x18] sm:$0xff] %v211
              $region41: #{dct_stream_forward.78} parent=35 // loop_footer
                %s202 = sadd.s32 1, %s198
              $region42: #{dct_stream_forward.78} parent=35 // loop_footer_branch
                %197 = sbr.rel target = $region38
              $region43: #{dct_stream_forward.78} parent=35 // loop_exit
                _
            $region36: #{dct_stream_forward.78} parent=31 // pred_fallthru
              _
            // Predicated region
            $region44: #{dct_stream_forward.78} parent=31 // pred_check
              _
            $region45: #{dct_stream_forward.78} parent=31 // pred_check_branch
              %214 = sbr.rel target = $region47
            $region46: #{dct_stream_forward.78} parent=31 // pred_region
              _
            $region47: #{dct_stream_forward.78} parent=31 // pred_fallthru
              _
          $region32: #{dct_stream_forward.78} parent=27 // pred_fallthru
            _
          %215 = vnop
        $region28: #{dct_stream_forward.78} parent=23 // pred_fallthru
          _
        // Predicated region
        $region48: #{dct_stream_forward.78} parent=23 // pred_check
          %p216 = pneg %p70
        $region49: #{dct_stream_forward.78} parent=23 // pred_check_branch
          %218 = sbr.rel (%p216) target = $region51
        $region50: #{dct_stream_forward.78} parent=23 // pred_region
          %s219 = smul.u32 64, %s18
          %p220 = scmp.lt.s32.totalorder %s219, 191
          %s221 = scalar_select %p220, %s219, 191
          %s222 = smul.addr %s221, 4
          %s223 = scalar_lea.vmem %s1, %s222
          %s224 = smul.u32 64, %s18
        $region51: #{dct_stream_forward.78} parent=23 // pred_fallthru
          _
      $region24: #{dct_stream_forward.78} parent=5 // pred_fallthru
        _
      %p225 = scmp.le.s32.totalorder 1, %s10
      %p226 = scmp.lt.s32.totalorder %s10, 4
      %p227 = pnand %p225, %p226
      %p228 = pneg %p227
      // Predicated region
      $region52: #{dct_stream_forward.78} parent=5 // pred_check
        _
      $region53: #{dct_stream_forward.78} parent=5 // pred_check_branch
        %230 = sbr.rel (%p227) target = $region55
      $region54: #{dct_stream_forward.78} parent=5 // pred_region
        %s231 = ssub.s32 %s10, 1
        %s232 = sand.u32 %s37, 1
        %s233 = sand.u32 %s37, 1
        %s234 = smul.addr %s233, 32
        %s235 = scalar_lea.vmem [#allocation3], %s234
        // Predicated region
        $region56: #{dct_stream_forward.78} parent=54 // pred_check
          %p236 = pneg %p50
        $region57: #{dct_stream_forward.78} parent=54 // pred_check_branch
          %238 = sbr.rel (%p236) target = $region59
        $region58: #{dct_stream_forward.78} parent=54 // pred_region
          _
        $region59: #{dct_stream_forward.78} parent=54 // pred_fallthru
          _
        %s239 = sand.u32 %s37, 1
        %s240 = sand.u32 %s37, 1
        %s241 = smul.addr %s240, 32
        %s242 = scalar_lea.vmem [#allocation3], %s241
        %p243 = pneg %p50
        %p244 = pneg %p47
        %s245 = smul.u32 64, %s20
        %p246 = scmp.lt.s32.totalorder %s245, 191
        %s247 = scalar_select %p246, %s245, 191
        %s248 = smul.addr %s247, 4
        %s249 = scalar_lea.vmem %s1, %s248
        %p250 = pneg %p76
        %p251 = pneg %p73
        %p252 = pneg %p97
        %p253 = pneg %p94
        %s254 = smul.u32 2, %s19
        %p255 = scmp.lt.s32.totalorder %s254, 1
        %s256 = scalar_select %p255, %s254, 1
        %s257 = smul.addr %s256, 8
        %s258 = scalar_lea.vmem %s3, %s257
        %p259 = pneg %p123
        %p260 = pneg %p120
        %p261 = pneg %p149
        %p262 = pneg %p146
        %s263 = smul.u32 2, %s19
        %p264 = scmp.lt.s32.totalorder %s263, 1
        %s265 = scalar_select %p264, %s263, 1
        %s266 = smul.addr %s265, 8
        %s267 = scalar_lea.vmem %s4, %s266
        %s268 = smul.u32 2, %s19
        %s269 = smul.u32 4, %s20
        %s270 = smul.u32 64, %s20
        %p271 = scmp.lt.s32.totalorder %s270, 191
        %s272 = scalar_select %p271, %s270, 191
        %s273 = smul.addr %s272, 4
        %s274 = scalar_lea.vmem %s1, %s273
        %s275 = smul.u32 64, %s20
        %s276 = smul.u32 2, %s19
        %p277 = scmp.lt.s32.totalorder %s276, 1
        %s278 = scalar_select %p277, %s276, 1
        %s279 = smul.addr %s278, 8
        %s280 = scalar_lea.vmem %s3, %s279
        %s281 = smul.u32 2, %s19
        %s282 = smul.u32 2, %s19
        %p283 = scmp.lt.s32.totalorder %s282, 1
        %s284 = scalar_select %p283, %s282, 1
        %s285 = smul.addr %s284, 8
        %s286 = scalar_lea.vmem %s4, %s285
        %s287 = smul.u32 2, %s19
        %p289 = scmp.eq.s32.totalorder %s20, 0
        // Predicated region
        $region60: #{dct_stream_forward.78} parent=54 // pred_check
          %p290 = pneg %p289
        $region61: #{dct_stream_forward.78} parent=54 // pred_check_branch
          %292 = sbr.rel (%p290) target = $region63
        $region62: #{dct_stream_forward.78} parent=54 // pred_region
          %293 = vst [vmem:[#allocation2] sm:$0xff] 0.0
          %294 = vst [vmem:[#allocation2 + $0x8] sm:$0xff] 0.0
        $region63: #{dct_stream_forward.78} parent=54 // pred_fallthru
          _
        %v295 = vld [vmem:[#allocation2] sm:$0xff]
        %v296 = vld [vmem:[#allocation2 + $0x8] sm:$0xff]
        %v297 = vld [vmem:[%s235] sm:$0xff]
        %v298 = vld [vmem:[%s235 + $0x8] sm:$0xff]
        %v299 = vld [vmem:[%s235 + $0x10] sm:$0xff]
        %v300 = vld [vmem:[%s235 + $0x18] sm:$0xff]
        %v301 = vld [vmem:[%s274] sm:$0xf]
        %v302 = vld [vmem:[%s274 + $0x4] sm:$0xf]
        %v303 = vld [vmem:[%s274 + $0x8] sm:$0xf]
        %v304 = vld [vmem:[%s274 + $0xc] sm:$0xf]
        %v305 = vld [vmem:[%s274 + $0x10] sm:$0xf]
        %v306 = vld [vmem:[%s274 + $0x14] sm:$0xf]
        %v307 = vld [vmem:[%s274 + $0x18] sm:$0xf]
        %v308 = vld [vmem:[%s274 + $0x1c] sm:$0xf]
        %v309 = vld [vmem:[%s274 + $0x20] sm:$0xf]
        %v310 = vld [vmem:[%s274 + $0x24] sm:$0xf]
        %v311 = vld [vmem:[%s274 + $0x28] sm:$0xf]
        %v312 = vld [vmem:[%s274 + $0x2c] sm:$0xf]
        %v313 = vld [vmem:[%s274 + $0x30] sm:$0xf]
        %v314 = vld [vmem:[%s274 + $0x34] sm:$0xf]
        %v315 = vld [vmem:[%s274 + $0x38] sm:$0xf]
        %v316 = vld [vmem:[%s274 + $0x3c] sm:$0xf]
        %v317 = vld [vmem:[%s274 + $0x40] sm:$0xf]
        %v318 = vld [vmem:[%s274 + $0x44] sm:$0xf]
        %v319 = vld [vmem:[%s274 + $0x48] sm:$0xf]
        %v320 = vld [vmem:[%s274 + $0x4c] sm:$0xf]
        %v321 = vld [vmem:[%s274 + $0x50] sm:$0xf]
        %v322 = vld [vmem:[%s274 + $0x54] sm:$0xf]
        %v323 = vld [vmem:[%s274 + $0x58] sm:$0xf]
        %v324 = vld [vmem:[%s274 + $0x5c] sm:$0xf]
        %v325 = vld [vmem:[%s274 + $0x60] sm:$0xf]
        %v326 = vld [vmem:[%s274 + $0x64] sm:$0xf]
        %v327 = vld [vmem:[%s274 + $0x68] sm:$0xf]
        %v328 = vld [vmem:[%s274 + $0x6c] sm:$0xf]
        %v329 = vld [vmem:[%s274 + $0x70] sm:$0xf]
        %v330 = vld [vmem:[%s274 + $0x74] sm:$0xf]
        %v331 = vld [vmem:[%s274 + $0x78] sm:$0xf]
        %v332 = vld [vmem:[%s274 + $0x7c] sm:$0xf]
        %v333 = vld [vmem:[%s274 + $0x80] sm:$0xf]
        %v334 = vld [vmem:[%s274 + $0x84] sm:$0xf]
        %v335 = vld [vmem:[%s274 + $0x88] sm:$0xf]
        %v336 = vld [vmem:[%s274 + $0x8c] sm:$0xf]
        %v337 = vld [vmem:[%s274 + $0x90] sm:$0xf]
        %v338 = vld [vmem:[%s274 + $0x94] sm:$0xf]
        %v339 = vld [vmem:[%s274 + $0x98] sm:$0xf]
        %v340 = vld [vmem:[%s274 + $0x9c] sm:$0xf]
        %v341 = vld [vmem:[%s274 + $0xa0] sm:$0xf]
        %v342 = vld [vmem:[%s274 + $0xa4] sm:$0xf]
        %v343 = vld [vmem:[%s274 + $0xa8] sm:$0xf]
        %v344 = vld [vmem:[%s274 + $0xac] sm:$0xf]
        %v345 = vld [vmem:[%s274 + $0xb0] sm:$0xf]
        %v346 = vld [vmem:[%s274 + $0xb4] sm:$0xf]
        %v347 = vld [vmem:[%s274 + $0xb8] sm:$0xf]
        %v348 = vld [vmem:[%s274 + $0xbc] sm:$0xf]
        %v349 = vld [vmem:[%s274 + $0xc0] sm:$0xf]
        %v350 = vld [vmem:[%s274 + $0xc4] sm:$0xf]
        %v351 = vld [vmem:[%s274 + $0xc8] sm:$0xf]
        %v352 = vld [vmem:[%s274 + $0xcc] sm:$0xf]
        %v353 = vld [vmem:[%s274 + $0xd0] sm:$0xf]
        %v354 = vld [vmem:[%s274 + $0xd4] sm:$0xf]
        %v355 = vld [vmem:[%s274 + $0xd8] sm:$0xf]
        %v356 = vld [vmem:[%s274 + $0xdc] sm:$0xf]
        %v357 = vld [vmem:[%s274 + $0xe0] sm:$0xf]
        %v358 = vld [vmem:[%s274 + $0xe4] sm:$0xf]
        %v359 = vld [vmem:[%s274 + $0xe8] sm:$0xf]
        %v360 = vld [vmem:[%s274 + $0xec] sm:$0xf]
        %v361 = vld [vmem:[%s274 + $0xf0] sm:$0xf]
        %v362 = vld [vmem:[%s274 + $0xf4] sm:$0xf]
        %v363 = vld [vmem:[%s274 + $0xf8] sm:$0xf]
        %v364 = vld [vmem:[%s274 + $0xfc] sm:$0xf]
        %v369 = vunpack.c.l.b16 %v297
        %v370 = vunpack.c.h.b16 %v297
        %v371 = vunpack.c.l.b16 %v298
        %v372 = vunpack.c.h.b16 %v298
        %v373 = vunpack.c.l.b16 %v299
        %v374 = vunpack.c.h.b16 %v299
        %v375 = vunpack.c.l.b16 %v300
        %v376 = vunpack.c.h.b16 %v300
        %v377 = vpack.c.b16 %v373, %v369
        %v378 = vpack.c.b16 %v374, %v370
        %v379 = vpack.c.b16 %v375, %v371
        %v380 = vpack.c.b16 %v376, %v372
        %v449 = vunpack.c.l.b16 %v301
        %v450 = vunpack.c.l.b16 %v302
        %v451 = vunpack.c.l.b16 %v303
        %v452 = vunpack.c.l.b16 %v304
        %v453 = vunpack.c.l.b16 %v305
        %v454 = vunpack.c.l.b16 %v306
        %v455 = vunpack.c.l.b16 %v307
        %v456 = vunpack.c.l.b16 %v308
        %v457 = vunpack.c.l.b16 %v309
        %v458 = vunpack.c.l.b16 %v310
        %v459 = vunpack.c.l.b16 %v311
        %v460 = vunpack.c.l.b16 %v312
        %v461 = vunpack.c.l.b16 %v313
        %v462 = vunpack.c.l.b16 %v314
        %v463 = vunpack.c.l.b16 %v315
        %v464 = vunpack.c.l.b16 %v316
        %v465 = vunpack.c.l.b16 %v317
        %v466 = vunpack.c.l.b16 %v318
        %v467 = vunpack.c.l.b16 %v319
        %v468 = vunpack.c.l.b16 %v320
        %v469 = vunpack.c.l.b16 %v321
        %v470 = vunpack.c.l.b16 %v322
        %v471 = vunpack.c.l.b16 %v323
        %v472 = vunpack.c.l.b16 %v324
        %v473 = vunpack.c.l.b16 %v325
        %v474 = vunpack.c.l.b16 %v326
        %v475 = vunpack.c.l.b16 %v327
        %v476 = vunpack.c.l.b16 %v328
        %v477 = vunpack.c.l.b16 %v329
        %v478 = vunpack.c.l.b16 %v330
        %v479 = vunpack.c.l.b16 %v331
        %v480 = vunpack.c.l.b16 %v332
        %v481 = vunpack.c.l.b16 %v333
        %v482 = vunpack.c.l.b16 %v334
        %v483 = vunpack.c.l.b16 %v335
        %v484 = vunpack.c.l.b16 %v336
        %v485 = vunpack.c.l.b16 %v337
        %v486 = vunpack.c.l.b16 %v338
        %v487 = vunpack.c.l.b16 %v339
        %v488 = vunpack.c.l.b16 %v340
        %v489 = vunpack.c.l.b16 %v341
        %v490 = vunpack.c.l.b16 %v342
        %v491 = vunpack.c.l.b16 %v343
        %v492 = vunpack.c.l.b16 %v344
        %v493 = vunpack.c.l.b16 %v345
        %v494 = vunpack.c.l.b16 %v346
        %v495 = vunpack.c.l.b16 %v347
        %v496 = vunpack.c.l.b16 %v348
        %v497 = vunpack.c.l.b16 %v349
        %v498 = vunpack.c.l.b16 %v350
        %v499 = vunpack.c.l.b16 %v351
        %v500 = vunpack.c.l.b16 %v352
        %v501 = vunpack.c.l.b16 %v353
        %v502 = vunpack.c.l.b16 %v354
        %v503 = vunpack.c.l.b16 %v355
        %v504 = vunpack.c.l.b16 %v356
        %v505 = vunpack.c.l.b16 %v357
        %v506 = vunpack.c.l.b16 %v358
        %v507 = vunpack.c.l.b16 %v359
        %v508 = vunpack.c.l.b16 %v360
        %v509 = vunpack.c.l.b16 %v361
        %v510 = vunpack.c.l.b16 %v362
        %v511 = vunpack.c.l.b16 %v363
        %v512 = vunpack.c.l.b16 %v364
        %v513 = vpack.c.b16 %v450, %v449
        %v514 = vpack.c.b16 %v452, %v451
        %v515 = vpack.c.b16 %v454, %v453
        %v516 = vpack.c.b16 %v456, %v455
        %v517 = vpack.c.b16 %v458, %v457
        %v518 = vpack.c.b16 %v460, %v459
        %v519 = vpack.c.b16 %v462, %v461
        %v520 = vpack.c.b16 %v464, %v463
        %v521 = vpack.c.b16 %v466, %v465
        %v522 = vpack.c.b16 %v468, %v467
        %v523 = vpack.c.b16 %v470, %v469
        %v524 = vpack.c.b16 %v472, %v471
        %v525 = vpack.c.b16 %v474, %v473
        %v526 = vpack.c.b16 %v476, %v475
        %v527 = vpack.c.b16 %v478, %v477
        %v528 = vpack.c.b16 %v480, %v479
        %v529 = vpack.c.b16 %v482, %v481
        %v530 = vpack.c.b16 %v484, %v483
        %v531 = vpack.c.b16 %v486, %v485
        %v532 = vpack.c.b16 %v488, %v487
        %v533 = vpack.c.b16 %v490, %v489
        %v534 = vpack.c.b16 %v492, %v491
        %v535 = vpack.c.b16 %v494, %v493
        %v536 = vpack.c.b16 %v496, %v495
        %v537 = vpack.c.b16 %v498, %v497
        %v538 = vpack.c.b16 %v500, %v499
        %v539 = vpack.c.b16 %v502, %v501
        %v540 = vpack.c.b16 %v504, %v503
        %v541 = vpack.c.b16 %v506, %v505
        %v542 = vpack.c.b16 %v508, %v507
        %v543 = vpack.c.b16 %v510, %v509
        %v544 = vpack.c.b16 %v512, %v511
        %577 = vmatprep.subr.bf16.mxu0 0
        %578 = vmatpush1.bf16.msra.mxu0 %v513
        %579 = vmatprep.subr.bf16.mxu0 0
        %580 = vmatpush1.bf16.msra.mxu0 %v514
        %581 = vmatprep.subr.bf16.mxu0 0
        %582 = vmatpush1.bf16.msra.mxu0 %v515
        %583 = vmatprep.subr.bf16.mxu0 0
        %584 = vmatpush1.bf16.msra.mxu0 %v516
        %585 = vmatprep.subr.bf16.mxu0 0
        %586 = vmatpush1.bf16.msra.mxu0 %v517
        %587 = vmatprep.subr.bf16.mxu0 0
        %588 = vmatpush1.bf16.msra.mxu0 %v518
        %589 = vmatprep.subr.bf16.mxu0 0
        %590 = vmatpush1.bf16.msra.mxu0 %v519
        %591 = vmatprep.subr.bf16.mxu0 0
        %592 = vmatpush1.bf16.msra.mxu0 %v520
        %593 = vmatprep.subr.bf16.mxu0 0
        %594 = vmatpush1.bf16.msra.mxu0 %v521
        %595 = vmatprep.subr.bf16.mxu0 0
        %596 = vmatpush1.bf16.msra.mxu0 %v522
        %597 = vmatprep.subr.bf16.mxu0 0
        %598 = vmatpush1.bf16.msra.mxu0 %v523
        %599 = vmatprep.subr.bf16.mxu0 0
        %600 = vmatpush1.bf16.msra.mxu0 %v524
        %601 = vmatprep.subr.bf16.mxu0 0
        %602 = vmatpush1.bf16.msra.mxu0 %v525
        %603 = vmatprep.subr.bf16.mxu0 0
        %604 = vmatpush1.bf16.msra.mxu0 %v526
        %605 = vmatprep.subr.bf16.mxu0 0
        %606 = vmatpush1.bf16.msra.mxu0 %v527
        %607 = vmatprep.subr.bf16.mxu0 0
        %608 = vmatpush1.bf16.msra.mxu0 %v528
        %609 = vmatprep.mubr.bf16.mxu0 %v378
        %610 = vmatmul.mubr.bf16.gmra.mrb[0].mxu0 %v377
        %v611 = vpop.f32.mrb[0].mxu0
        %v612 = vadd.f32 0.0, %v611
        %v613 = vpop.f32.mrb[0].mxu0
        %v614 = vpop.f32.mrb[0].mxu0
        %v615 = vadd.f32 0.0, %v614
        %v616 = vpop.f32.mrb[0].mxu0
        %617 = vdwg.mxu0
        %618 = vmatprep.subr.bf16.mxu0 0
        %619 = vmatpush1.bf16.msra.mxu0 %v529
        %620 = vmatprep.subr.bf16.mxu0 0
        %621 = vmatpush1.bf16.msra.mxu0 %v530
        %622 = vmatprep.subr.bf16.mxu0 0
        %623 = vmatpush1.bf16.msra.mxu0 %v531
        %624 = vmatprep.subr.bf16.mxu0 0
        %625 = vmatpush1.bf16.msra.mxu0 %v532
        %626 = vmatprep.subr.bf16.mxu0 0
        %627 = vmatpush1.bf16.msra.mxu0 %v533
        %628 = vmatprep.subr.bf16.mxu0 0
        %629 = vmatpush1.bf16.msra.mxu0 %v534
        %630 = vmatprep.subr.bf16.mxu0 0
        %631 = vmatpush1.bf16.msra.mxu0 %v535
        %632 = vmatprep.subr.bf16.mxu0 0
        %633 = vmatpush1.bf16.msra.mxu0 %v536
        %634 = vmatprep.subr.bf16.mxu0 0
        %635 = vmatpush1.bf16.msra.mxu0 %v537
        %636 = vmatprep.subr.bf16.mxu0 0
        %637 = vmatpush1.bf16.msra.mxu0 %v538
        %638 = vmatprep.subr.bf16.mxu0 0
        %639 = vmatpush1.bf16.msra.mxu0 %v539
        %640 = vmatprep.subr.bf16.mxu0 0
        %641 = vmatpush1.bf16.msra.mxu0 %v540
        %642 = vmatprep.subr.bf16.mxu0 0
        %643 = vmatpush1.bf16.msra.mxu0 %v541
        %644 = vmatprep.subr.bf16.mxu0 0
        %645 = vmatpush1.bf16.msra.mxu0 %v542
        %646 = vmatprep.subr.bf16.mxu0 0
        %647 = vmatpush1.bf16.msra.mxu0 %v543
        %648 = vmatprep.subr.bf16.mxu0 0
        %649 = vmatpush1.bf16.msra.mxu0 %v544
        %650 = vmatprep.mubr.bf16.mxu0 %v380
        %651 = vmatmul.mubr.bf16.gmra.mrb[0].mxu0 %v379
        %v652 = vpop.f32.mrb[0].mxu0
        %v653 = vadd.f32 %v612, %v652
        %v654 = vpop.f32.mrb[0].mxu0
        %v655 = vpop.f32.mrb[0].mxu0
        %v656 = vadd.f32 %v615, %v655
        %v657 = vpop.f32.mrb[0].mxu0
        %658 = vdwg.mxu0
        %v659 = vadd.f32 %v295, %v653
        %v660 = vadd.f32 %v296, %v656
        %661 = vst [vmem:[#allocation2] sm:$0xff] %v659
        %662 = vst [vmem:[#allocation2 + $0x8] sm:$0xff] %v660
        %p663 = scmp.eq.s32.totalorder %s20, 2
        // Predicated region
        $region64: #{dct_stream_forward.78} parent=54 // pred_check
          %p664 = pneg %p663
        $region65: #{dct_stream_forward.78} parent=54 // pred_check_branch
          %666 = sbr.rel (%p664) target = $region67
        $region66: #{dct_stream_forward.78} parent=54 // pred_region
          %v667 = vld [vmem:[#allocation2] sm:$0xff]
          %v668 = vld [vmem:[#allocation2 + $0x8] sm:$0xff]
          %v669 = vld [vmem:[%s2] sm:$0x1]
          %v671 = vlaneseq
          %v672 = vshrl.u32 %v671, 7
          %v673 = vsub.s32 0, %v672
          %v674 = vrot.slane %v669, %v673
          %v676 = vadd.f32 %v667, %v674
          %v677 = vadd.f32 %v668, %v674
          %v678 = vld [vmem:[%s280] sm:$0xff]
          %v679 = vld [vmem:[%s280 + $0x8] sm:$0xff]
          %v680 = vadd.f32 %v676, %v678
          %v681 = vadd.f32 %v677, %v679
          %v682 = vmax.f32 %v680, 0.0
          %v683 = vmax.f32 %v681, 0.0
          %684 = vst [vmem:[%s286] sm:$0xff] %v682
          %685 = vst [vmem:[%s286 + $0x8] sm:$0xff] %v683
        $region67: #{dct_stream_forward.78} parent=54 // pred_fallthru
          _
        %s686 = smul.u32 2, %s19
        %p687 = scmp.lt.s32.totalorder %s686, 1
        %s688 = scalar_select %p687, %s686, 1
        %s689 = smul.addr %s688, 8
        %s690 = scalar_lea.vmem %s4, %s689
        // Predicated region
        $region68: #{dct_stream_forward.78} parent=54 // pred_check
          %p691 = pneg %p146
        $region69: #{dct_stream_forward.78} parent=54 // pred_check_branch
          %693 = sbr.rel (%p691) target = $region71
        $region70: #{dct_stream_forward.78} parent=54 // pred_region
          %s694 = smul.u32 2, %s19
        $region71: #{dct_stream_forward.78} parent=54 // pred_fallthru
          _
        // Predicated region
        $region72: #{dct_stream_forward.78} parent=54 // pred_check
          %p695 = pneg %p146
        $region73: #{dct_stream_forward.78} parent=54 // pred_check_branch
          %697 = sbr.rel (%p695) target = $region75
        $region74: #{dct_stream_forward.78} parent=54 // pred_region
          %s698 = smul.u32 2, %s19
          %p699 = scmp.lt.s32.totalorder %s698, 1
          %s700 = scalar_select %p699, %s698, 1
          %s701 = smul.addr %s700, 8
          %s702 = scalar_lea.vmem %s4, %s701
        $region75: #{dct_stream_forward.78} parent=54 // pred_fallthru
          _
      $region55: #{dct_stream_forward.78} parent=5 // pred_fallthru
        _
      %p703 = scmp.le.s32.totalorder 2, %s10
      // Predicated region
      $region76: #{dct_stream_forward.78} parent=5 // pred_check
        %p704 = pneg %p703
      $region77: #{dct_stream_forward.78} parent=5 // pred_check_branch
        %706 = sbr.rel (%p704) target = $region79
      $region78: #{dct_stream_forward.78} parent=5 // pred_region
        %s707 = ssub.s32 %s10, 2
      $region79: #{dct_stream_forward.78} parent=5 // pred_fallthru
        _
    $region6: #{dct_stream_forward.78} parent=1 // loop_footer
      %s14 = sadd.s32 1, %s10
    $region7: #{dct_stream_forward.78} parent=1 // loop_footer_branch
      %9 = sbr.rel target = $region3
    $region8: #{dct_stream_forward.78} parent=1 // loop_exit
      _

</llo_original>
